<compile_context>
chip_gen: v7x
topology: tpu7x:2x2x1
jax: 0.10.0
libtpu: 0.0.40
codegen_flags: <defaults>
</compile_context>

<pallas_src>
import functools

import numpy as np
import jax
import jax.numpy as jnp
from jax import lax
from jax.experimental import pallas as pl
from jax.experimental.pallas import tpu as pltpu


# ----------------------------------------------------------------------------
# Kernel
# ----------------------------------------------------------------------------
def _predictor_kernel(future,
                      x_ref,        # (L, N, 1)   time-major input          f32
                      wih1_ref,     # (1, 4*Hp)   layer-1 input weights     f32
                      whh1_ref,     # (Hp, 4*Hp)  layer-1 recurrent weights mm
                      b1_ref,       # (1, 4*Hp)   layer-1 bias (ih+hh)      f32
                      wih2_ref,     # (Hp, 4*Hp)  layer-2 input weights     mm
                      whh2_ref,     # (Hp, 4*Hp)  layer-2 recurrent weights mm
                      b2_ref,       # (1, 4*Hp)   layer-2 bias (ih+hh)      f32
                      wfold_ref,    # (Hp, 4*Hp)  head folded into layer-1  mm
                      cfold_ref,    # (1, 4*Hp)   folded constant           f32
                      wlin_ref,     # (1, Hp)     linear head weight        f32
                      blin_ref,     # (1, 1)      linear head bias          f32
                      out_ref,      # (L+future, N)
                      in1_ref,      # (L, N, 4*Hp) scratch: seq-phase input term
                      h2hist_ref):  # (L+future, N, Hp) scratch: buffered h2
    L, N, _ = x_ref.shape
    Hp = whh1_ref.shape[0]
    H4 = 4 * Hp
    mm_dtype = whh1_ref.dtype     # f32 or bf16 (MXU operand dtype)

    # ---- hoisted loop-invariant broadcasts (JAX does not CSE these) --------
    b2b = jnp.broadcast_to(b2_ref[...], (N, H4))           # (N, 4Hp)
    wlin_row = wlin_ref[...]                               # (1, Hp)
    blin = blin_ref[...]                                   # (1, 1)

    # ---- prologue: sequence-phase layer-1 input term, one vectorized pass --
    # in1[t] = x[t] * W_ih1 + b1  (kept off the per-step recurrent chain).
    in1_ref[...] = x_ref[...] * wih1_ref[...][None] + b1_ref[...][None]

    def lstm_cell(pre, c_prev):
        # Packed gate order (i, f, o, g): one contiguous sigmoid block and one
        # tanh block -> 2 EUP passes per cell; every slice is vreg-aligned
        # because Hp is a multiple of 128.
        sig = jax.nn.sigmoid(pre[:, :3 * Hp])
        i_g = sig[:, 0 * Hp:1 * Hp]
        f_g = sig[:, 1 * Hp:2 * Hp]
        o_g = sig[:, 2 * Hp:3 * Hp]
        g_g = jnp.tanh(pre[:, 3 * Hp:])
        c_new = f_g * c_prev + i_g * g_g
        h_new = o_g * jnp.tanh(c_new)
        return h_new, c_new

    def step(pre1_in, h1, c1, h2, c2, t_out):
        # layer 1: fused (N,Hp)@(Hp,4Hp) matmul; input term is precomputed.
        pre1 = pre1_in + jnp.dot(h1.astype(mm_dtype), whh1_ref[...],
                                 preferred_element_type=jnp.float32)
        h1, c1 = lstm_cell(pre1, c1)
        # layer 2: two fused matmuls (split kept so dot(h2, whh2) can overlap
        # layer-1 EUP work) + hoisted bias broadcast.
        pre2 = (jnp.dot(h1.astype(mm_dtype), wih2_ref[...],
                        preferred_element_type=jnp.float32)
                + jnp.dot(h2.astype(mm_dtype), whh2_ref[...],
                          preferred_element_type=jnp.float32)
                + b2b)
        h2, c2 = lstm_cell(pre2, c2)
        # deferred head: buffer h2; head runs once in the epilogue.
        # (single per-step store -> friendly to v5e's single vst slot)
        h2hist_ref[t_out] = h2
        return h1, c1, h2, c2

    zeros = jnp.zeros((N, Hp), jnp.float32)

    # ------------------------- sequence phase -------------------------------
    def seq_body(t, carry):
        h1, c1, h2, c2 = carry
        return step(in1_ref[t], h1, c1, h2, c2, t)

    unroll_seq = True if L <= 16 else 8
    carry = lax.fori_loop(0, L, seq_body, (zeros, zeros, zeros, zeros),
                          unroll=unroll_seq)

    # ------------------------- future (autoregressive) phase ----------------
    if future > 0:
        cfoldb = jnp.broadcast_to(cfold_ref[...], (N, H4))  # (N, 4Hp)

        def fut_body(j, carry):
            h1, c1, h2, c2 = carry
            # Head folded into a matmul that rides the existing MXU push:
            #   out_prev*W_ih1 + b1 == h2_prev @ W_fold + c_fold
            pre1_in = cfoldb + jnp.dot(h2.astype(mm_dtype), wfold_ref[...],
                                       preferred_element_type=jnp.float32)
            return step(pre1_in, h1, c1, h2, c2, L + j)

        unroll_fut = True if future <= 16 else 8
        # Final carry is intentionally unused; the loop is kept live by the
        # h2hist_ref state writes inside step() (tracked Pallas effect).
        lax.fori_loop(0, future, fut_body, carry, unroll=unroll_fut)

    # ---- epilogue: one lane-dense deferred head for all L+future steps -----
    # Every index 0..L+future-1 of h2hist_ref was written above (L >= 1 is
    # enforced by the wrapper), so no stale-VMEM read is possible.
    # NOTE: out is (T, N) with tiny N on lanes -> masked store; negligible at
    # this size, switch to an (N, T) lane-dense slab if T/N ever scale up.
    out_ref[...] = jnp.sum(h2hist_ref[...] * wlin_row[None], axis=-1) + blin


# ----------------------------------------------------------------------------
# Wrapper: packing (gate fusion, (i,f,o,g) reorder, H -> Hp padding, head fold)
# ----------------------------------------------------------------------------
def _pack_params(p, H, Hp, matmul_dtype=jnp.float32):
    def pack_cell(w_ih, w_hh, b_ih, b_hh, in_dim, in_p):
        # PyTorch chunk order is (i, f, g, o); reorder to (i, f, o, g).
        def reorder(a):
            i, f, g, o = jnp.split(a, 4, axis=0)
            return (i, f, o, g)

        wih_p = jnp.zeros((in_p, 4 * Hp), jnp.float32)
        whh_p = jnp.zeros((Hp, 4 * Hp), jnp.float32)
        b_p = jnp.zeros((1, 4 * Hp), jnp.float32)
        b = b_ih + b_hh
        for k, (wi, wh, bk) in enumerate(zip(reorder(w_ih), reorder(w_hh),
                                             reorder(b))):
            wih_p = wih_p.at[:in_dim, k * Hp:k * Hp + H].set(wi.T)
            whh_p = whh_p.at[:H, k * Hp:k * Hp + H].set(wh.T)
            b_p = b_p.at[0, k * Hp:k * Hp + H].set(bk)
        return wih_p, whh_p, b_p

    wih1_p, whh1_p, b1_p = pack_cell(p["w_ih1"], p["w_hh1"],
                                     p["b_ih1"], p["b_hh1"], 1, 1)
    wih2_p, whh2_p, b2_p = pack_cell(p["w_ih2"], p["w_hh2"],
                                     p["b_ih2"], p["b_hh2"], H, Hp)
    wlin_p = jnp.zeros((1, Hp), jnp.float32).at[:, :H].set(p["w_lin"])
    blin_p = p["b_lin"].reshape(1, 1).astype(jnp.float32)

    # Head fold for the autoregressive phase:
    #   (h2 @ wlin^T + blin) * W_ih1 + b1  ==  h2 @ W_fold + c_fold
    wfold_p = wlin_p.T @ wih1_p                     # (Hp, 4Hp)
    cfold_p = b1_p + blin_p * wih1_p                # (1, 4Hp)

    # Only the per-step MXU operands are cast (v6e/v7x bf16 path); bias /
    # input-projection terms stay f32.
    whh1_p = whh1_p.astype(matmul_dtype)
    wih2_p = wih2_p.astype(matmul_dtype)
    whh2_p = whh2_p.astype(matmul_dtype)
    wfold_p = wfold_p.astype(matmul_dtype)

    return (wih1_p, whh1_p, b1_p, wih2_p, whh2_p, b2_p,
            wfold_p, cfold_p, wlin_p, blin_p)


def lstm_predictor_forward(x, params, future=0, matmul_dtype=jnp.float32):
    """x: (N, L) float32 -> (N, L + future) float32 (matches PyTorch forward).

    matmul_dtype=jnp.bfloat16 enables bf16 MXU operands (faster on v6e/v7x);
    state/gate math remains f32.
    """
    N, L = x.shape
    assert L >= 1, "need at least one input timestep (matches torch forward)"
    H = params["w_hh1"].shape[1]
    Hp = ((H + 127) // 128) * 128       # gate/state slices whole-vreg aligned
    T = L + int(future)

    packed = _pack_params(params, H, Hp, matmul_dtype)
    x_tm = x.T[:, :, None].astype(jnp.float32)   # (L, N, 1), batch on sublanes

    vmem = pl.BlockSpec(memory_space=pltpu.MemorySpace.VMEM)
    kernel = functools.partial(_predictor_kernel, int(future))

    out_tm = pl.pallas_call(
        kernel,
        out_shape=jax.ShapeDtypeStruct((T, N), jnp.float32),
        in_specs=[vmem] * 11,
        out_specs=vmem,
        scratch_shapes=[
            pltpu.VMEM((L, N, 4 * Hp), jnp.float32),   # precomputed input term
            pltpu.VMEM((T, N, Hp), jnp.float32),       # buffered h2 history
        ],
    )(x_tm, *packed)

    return out_tm.T                     # back to (N, L + future)


# ----------------------------------------------------------------------------
# Parameters (PyTorch-shaped) and pure-JAX reference
# ----------------------------------------------------------------------------
def init_params(key, n_hidden=51):
    H = n_hidden
    bound = 1.0 / np.sqrt(H)
    ks = jax.random.split(key, 10)

    def u(k, shape):
        return jax.random.uniform(k, shape, jnp.float32, -bound, bound)

    return dict(
        w_ih1=u(ks[0], (4 * H, 1)),  w_hh1=u(ks[1], (4 * H, H)),
        b_ih1=u(ks[2], (4 * H,)),    b_hh1=u(ks[3], (4 * H,)),
        w_ih2=u(ks[4], (4 * H, H)),  w_hh2=u(ks[5], (4 * H, H)),
        b_ih2=u(ks[6], (4 * H,)),    b_hh2=u(ks[7], (4 * H,)),
        w_lin=u(ks[8], (1, H)),      b_lin=u(ks[9], (1,)),
    )


def reference_forward(x, p, future=0):
    """Pure-JAX mirror of the PyTorch forward (gate order i, f, g, o)."""
    N, L = x.shape
    H = p["w_hh1"].shape[1]

    def cell(x_t, h, c, w_ih, w_hh, b_ih, b_hh):
        z = x_t @ w_ih.T + h @ w_hh.T + b_ih + b_hh
        i, f, g, o = jnp.split(z, 4, axis=1)
        i = jax.nn.sigmoid(i); f = jax.nn.sigmoid(f)
        g = jnp.tanh(g);       o = jax.nn.sigmoid(o)
        c_new = f * c + i * g
        return o * jnp.tanh(c_new), c_new

    h1 = c1 = h2 = c2 = jnp.zeros((N, H), jnp.float32)
    outs, out = [], None
    for t in range(L):
        x_t = x[:, t:t + 1]
        h1, c1 = cell(x_t, h1, c1, p["w_ih1"], p["w_hh1"], p["b_ih1"], p["b_hh1"])
        h2, c2 = cell(h1, h2, c2, p["w_ih2"], p["w_hh2"], p["b_ih2"], p["b_hh2"])
        out = h2 @ p["w_lin"].T + p["b_lin"]
        outs.append(out)
    for _ in range(future):
        h1, c1 = cell(out, h1, c1, p["w_ih1"], p["w_hh1"], p["b_ih1"], p["b_hh1"])
        h2, c2 = cell(h1, h2, c2, p["w_ih2"], p["w_hh2"], p["b_ih2"], p["b_hh2"])
        out = h2 @ p["w_lin"].T + p["b_lin"]
        outs.append(out)
    return jnp.concatenate(outs, axis=1)


if __name__ == "__main__":
    key = jax.random.PRNGKey(0)
    kp, kx = jax.random.split(key)

    N, L, H, FUTURE = 4, 8, 51, 3     # small shapes; H matches the module default
    params = init_params(kp, n_hidden=H)
    x = jax.random.normal(kx, (N, L), jnp.float32)

    ref = reference_forward(x, params, future=FUTURE)

    # f32 path: must match the reference tightly.
    out = jax.block_until_ready(lstm_predictor_forward(x, params, future=FUTURE))
    assert out.shape == (N, L + FUTURE), out.shape
    np.testing.assert_allclose(np.asarray(out), np.asarray(ref),
                               rtol=1e-4, atol=1e-4)

    # bf16 MXU-operand path (v6e/v7x): looser tolerance due to recurrent
    # bf16 rounding drift; state math stays f32.
    out_bf16 = jax.block_until_ready(
        lstm_predictor_forward(x, params, future=FUTURE,
                               matmul_dtype=jnp.bfloat16))
    np.testing.assert_allclose(np.asarray(out_bf16), np.asarray(ref),
                               rtol=1e-1, atol=1e-1)

    print("KERNEL_OK")
</pallas_src>

<mosaic_0001>
module attributes {stable_mosaic.version = 11 : i64} {
  func.func @_predictor_kernel(%arg0: memref<8x4x1xf32, #tpu.memory_space<vmem>>, %arg1: memref<1x512xf32, #tpu.memory_space<vmem>>, %arg2: memref<128x512xf32, #tpu.memory_space<vmem>>, %arg3: memref<1x512xf32, #tpu.memory_space<vmem>>, %arg4: memref<128x512xf32, #tpu.memory_space<vmem>>, %arg5: memref<128x512xf32, #tpu.memory_space<vmem>>, %arg6: memref<1x512xf32, #tpu.memory_space<vmem>>, %arg7: memref<128x512xf32, #tpu.memory_space<vmem>>, %arg8: memref<1x512xf32, #tpu.memory_space<vmem>>, %arg9: memref<1x128xf32, #tpu.memory_space<vmem>>, %arg10: memref<1x1xf32, #tpu.memory_space<vmem>>, %arg11: memref<11x4xf32, #tpu.memory_space<vmem>>, %arg12: memref<8x4x512xf32, #tpu.memory_space<vmem>>, %arg13: memref<11x4x128xf32, #tpu.memory_space<vmem>>) attributes {dimension_semantics = [], scalar_prefetch = 0 : i64, scratch_operands = 2 : i64, tpu.core_type = #tpu.core_type<tc>} {
    %c0 = arith.constant 0 : index
    %c0_0 = arith.constant 0 : index
    %0 = vector.load %arg6[%c0, %c0_0] : memref<1x512xf32, #tpu.memory_space<vmem>>, vector<1x512xf32>
    %1 = vector.shape_cast %0 : vector<1x512xf32> to vector<1x512xf32>
    %2 = vector.broadcast %1 : vector<1x512xf32> to vector<4x512xf32>
    %c0_1 = arith.constant 0 : index
    %c0_2 = arith.constant 0 : index
    %3 = vector.load %arg9[%c0_1, %c0_2] : memref<1x128xf32, #tpu.memory_space<vmem>>, vector<1x128xf32>
    %c0_3 = arith.constant 0 : index
    %c0_4 = arith.constant 0 : index
    %4 = vector.load %arg10[%c0_3, %c0_4] : memref<1x1xf32, #tpu.memory_space<vmem>>, vector<1x1xf32>
    %c0_5 = arith.constant 0 : index
    %c0_6 = arith.constant 0 : index
    %c0_7 = arith.constant 0 : index
    %5 = vector.load %arg0[%c0_5, %c0_6, %c0_7] : memref<8x4x1xf32, #tpu.memory_space<vmem>>, vector<8x4x1xf32>
    %c0_8 = arith.constant 0 : index
    %c0_9 = arith.constant 0 : index
    %6 = vector.load %arg1[%c0_8, %c0_9] : memref<1x512xf32, #tpu.memory_space<vmem>>, vector<1x512xf32>
    %7 = vector.shape_cast %6 : vector<1x512xf32> to vector<1x1x512xf32>
    %8 = vector.broadcast %5 : vector<8x4x1xf32> to vector<8x4x512xf32>
    %9 = vector.broadcast %7 : vector<1x1x512xf32> to vector<8x4x512xf32>
    %10 = arith.mulf %8, %9 : vector<8x4x512xf32>
    %c0_10 = arith.constant 0 : index
    %c0_11 = arith.constant 0 : index
    %11 = vector.load %arg3[%c0_10, %c0_11] : memref<1x512xf32, #tpu.memory_space<vmem>>, vector<1x512xf32>
    %12 = vector.shape_cast %11 : vector<1x512xf32> to vector<1x1x512xf32>
    %13 = vector.broadcast %12 : vector<1x1x512xf32> to vector<8x4x512xf32>
    %14 = arith.addf %10, %13 : vector<8x4x512xf32>
    %c0_12 = arith.constant 0 : index
    %c0_13 = arith.constant 0 : index
    %c0_14 = arith.constant 0 : index
    %15 = vector.load %arg12[%c0_12, %c0_13, %c0_14] : memref<8x4x512xf32, #tpu.memory_space<vmem>>, vector<8x4x512xf32>
    tpu.vector_store %arg12[%c0_12, %c0_13, %c0_14], %14 {strides = array<i32>} : memref<8x4x512xf32, #tpu.memory_space<vmem>>, vector<8x4x512xf32>,
    %cst = arith.constant 0.000000e+00 : f32
    %16 = vector.broadcast %cst : f32 to vector<4x128xf32>
    %c0_i32 = arith.constant 0 : i32
    %17 = arith.index_cast %c0_i32 : i32 to index
    %c0_15 = arith.constant 0 : index
    %c0_16 = arith.constant 0 : index
    %18 = vector.load %arg12[%17, %c0_15, %c0_16] : memref<8x4x512xf32, #tpu.memory_space<vmem>>, vector<1x4x512xf32>
    %19 = vector.shape_cast %18 : vector<1x4x512xf32> to vector<4x512xf32>
    %c0_17 = arith.constant 0 : index
    %c0_18 = arith.constant 0 : index
    %20 = vector.load %arg2[%c0_17, %c0_18] : memref<128x512xf32, #tpu.memory_space<vmem>>, vector<128x512xf32>
    %cst_19 = arith.constant dense<0.000000e+00> : vector<4x512xf32>
    %21 = tpu.matmul %16, %20, %cst_19 {dimension_numbers = #tpu.dot_dimension_numbers<[1], [0], [0], [1], [0, 0, 1, 1], [], []>} : vector<4x128xf32>, vector<128x512xf32>, vector<4x512xf32> -> vector<4x512xf32>
    %22 = arith.addf %19, %21 : vector<4x512xf32>
    %23 = vector.extract_strided_slice %22 {offsets = [0, 0], sizes = [4, 384], strides = [1, 1]} : vector<4x512xf32> to vector<4x384xf32>
    %24 = arith.negf %23 : vector<4x384xf32>
    %25 = math.exp %24 : vector<4x384xf32>
    %cst_20 = arith.constant 1.000000e+00 : f32
    %26 = vector.broadcast %cst_20 : f32 to vector<4x384xf32>
    %27 = arith.addf %26, %25 : vector<4x384xf32>
    %28 = arith.divf %26, %27 : vector<4x384xf32>
    %29 = vector.extract_strided_slice %28 {offsets = [0, 0], sizes = [4, 128], strides = [1, 1]} : vector<4x384xf32> to vector<4x128xf32>
    %30 = vector.extract_strided_slice %28 {offsets = [0, 128], sizes = [4, 128], strides = [1, 1]} : vector<4x384xf32> to vector<4x128xf32>
    %31 = vector.extract_strided_slice %28 {offsets = [0, 256], sizes = [4, 128], strides = [1, 1]} : vector<4x384xf32> to vector<4x128xf32>
    %32 = vector.extract_strided_slice %22 {offsets = [0, 384], sizes = [4, 128], strides = [1, 1]} : vector<4x512xf32> to vector<4x128xf32>
    %33 = math.tanh %32 : vector<4x128xf32>
    %34 = arith.mulf %30, %16 : vector<4x128xf32>
    %35 = arith.mulf %29, %33 : vector<4x128xf32>
    %36 = arith.addf %34, %35 : vector<4x128xf32>
    %37 = math.tanh %36 : vector<4x128xf32>
    %38 = arith.mulf %31, %37 : vector<4x128xf32>
    %c0_21 = arith.constant 0 : index
    %c0_22 = arith.constant 0 : index
    %39 = vector.load %arg4[%c0_21, %c0_22] : memref<128x512xf32, #tpu.memory_space<vmem>>, vector<128x512xf32>
    %cst_23 = arith.constant dense<0.000000e+00> : vector<4x512xf32>
    %40 = tpu.matmul %38, %39, %cst_23 {dimension_numbers = #tpu.dot_dimension_numbers<[1], [0], [0], [1], [0, 0, 1, 1], [], []>} : vector<4x128xf32>, vector<128x512xf32>, vector<4x512xf32> -> vector<4x512xf32>
    %c0_24 = arith.constant 0 : index
    %c0_25 = arith.constant 0 : index
    %41 = vector.load %arg5[%c0_24, %c0_25] : memref<128x512xf32, #tpu.memory_space<vmem>>, vector<128x512xf32>
    %cst_26 = arith.constant dense<0.000000e+00> : vector<4x512xf32>
    %42 = tpu.matmul %16, %41, %cst_26 {dimension_numbers = #tpu.dot_dimension_numbers<[1], [0], [0], [1], [0, 0, 1, 1], [], []>} : vector<4x128xf32>, vector<128x512xf32>, vector<4x512xf32> -> vector<4x512xf32>
    %43 = arith.addf %40, %42 : vector<4x512xf32>
    %44 = arith.addf %43, %2 : vector<4x512xf32>
    %45 = vector.extract_strided_slice %44 {offsets = [0, 0], sizes = [4, 384], strides = [1, 1]} : vector<4x512xf32> to vector<4x384xf32>
    %46 = arith.negf %45 : vector<4x384xf32>
    %47 = math.exp %46 : vector<4x384xf32>
    %cst_27 = arith.constant 1.000000e+00 : f32
    %48 = vector.broadcast %cst_27 : f32 to vector<4x384xf32>
    %49 = arith.addf %48, %47 : vector<4x384xf32>
    %50 = arith.divf %48, %49 : vector<4x384xf32>
    %51 = vector.extract_strided_slice %50 {offsets = [0, 0], sizes = [4, 128], strides = [1, 1]} : vector<4x384xf32> to vector<4x128xf32>
    %52 = vector.extract_strided_slice %50 {offsets = [0, 128], sizes = [4, 128], strides = [1, 1]} : vector<4x384xf32> to vector<4x128xf32>
    %53 = vector.extract_strided_slice %50 {offsets = [0, 256], sizes = [4, 128], strides = [1, 1]} : vector<4x384xf32> to vector<4x128xf32>
    %54 = vector.extract_strided_slice %44 {offsets = [0, 384], sizes = [4, 128], strides = [1, 1]} : vector<4x512xf32> to vector<4x128xf32>
    %55 = math.tanh %54 : vector<4x128xf32>
    %56 = arith.mulf %52, %16 : vector<4x128xf32>
    %57 = arith.mulf %51, %55 : vector<4x128xf32>
    %58 = arith.addf %56, %57 : vector<4x128xf32>
    %59 = math.tanh %58 : vector<4x128xf32>
    %60 = arith.mulf %53, %59 : vector<4x128xf32>
    %61 = arith.index_cast %c0_i32 : i32 to index
    %c0_28 = arith.constant 0 : index
    %c0_29 = arith.constant 0 : index
    %62 = vector.load %arg13[%61, %c0_28, %c0_29] : memref<11x4x128xf32, #tpu.memory_space<vmem>>, vector<1x4x128xf32>
    %63 = vector.shape_cast %62 : vector<1x4x128xf32> to vector<4x128xf32>
    %64 = vector.shape_cast %60 : vector<4x128xf32> to vector<1x4x128xf32>
    tpu.vector_store %arg13[%61, %c0_28, %c0_29], %64 {strides = array<i32>} : memref<11x4x128xf32, #tpu.memory_space<vmem>>, vector<1x4x128xf32>,
    %c1_i32 = arith.constant 1 : i32
    %65 = arith.index_cast %c1_i32 : i32 to index
    %c0_30 = arith.constant 0 : index
    %c0_31 = arith.constant 0 : index
    %66 = vector.load %arg12[%65, %c0_30, %c0_31] : memref<8x4x512xf32, #tpu.memory_space<vmem>>, vector<1x4x512xf32>
    %67 = vector.shape_cast %66 : vector<1x4x512xf32> to vector<4x512xf32>
    %c0_32 = arith.constant 0 : index
    %c0_33 = arith.constant 0 : index
    %68 = vector.load %arg2[%c0_32, %c0_33] : memref<128x512xf32, #tpu.memory_space<vmem>>, vector<128x512xf32>
    %cst_34 = arith.constant dense<0.000000e+00> : vector<4x512xf32>
    %69 = tpu.matmul %38, %68, %cst_34 {dimension_numbers = #tpu.dot_dimension_numbers<[1], [0], [0], [1], [0, 0, 1, 1], [], []>} : vector<4x128xf32>, vector<128x512xf32>, vector<4x512xf32> -> vector<4x512xf32>
    %70 = arith.addf %67, %69 : vector<4x512xf32>
    %71 = vector.extract_strided_slice %70 {offsets = [0, 0], sizes = [4, 384], strides = [1, 1]} : vector<4x512xf32> to vector<4x384xf32>
    %72 = arith.negf %71 : vector<4x384xf32>
    %73 = math.exp %72 : vector<4x384xf32>
    %cst_35 = arith.constant 1.000000e+00 : f32
    %74 = vector.broadcast %cst_35 : f32 to vector<4x384xf32>
    %75 = arith.addf %74, %73 : vector<4x384xf32>
    %76 = arith.divf %74, %75 : vector<4x384xf32>
    %77 = vector.extract_strided_slice %76 {offsets = [0, 0], sizes = [4, 128], strides = [1, 1]} : vector<4x384xf32> to vector<4x128xf32>
    %78 = vector.extract_strided_slice %76 {offsets = [0, 128], sizes = [4, 128], strides = [1, 1]} : vector<4x384xf32> to vector<4x128xf32>
    %79 = vector.extract_strided_slice %76 {offsets = [0, 256], sizes = [4, 128], strides = [1, 1]} : vector<4x384xf32> to vector<4x128xf32>
    %80 = vector.extract_strided_slice %70 {offsets = [0, 384], sizes = [4, 128], strides = [1, 1]} : vector<4x512xf32> to vector<4x128xf32>
    %81 = math.tanh %80 : vector<4x128xf32>
    %82 = arith.mulf %78, %36 : vector<4x128xf32>
    %83 = arith.mulf %77, %81 : vector<4x128xf32>
    %84 = arith.addf %82, %83 : vector<4x128xf32>
    %85 = math.tanh %84 : vector<4x128xf32>
    %86 = arith.mulf %79, %85 : vector<4x128xf32>
    %c0_36 = arith.constant 0 : index
    %c0_37 = arith.constant 0 : index
    %87 = vector.load %arg4[%c0_36, %c0_37] : memref<128x512xf32, #tpu.memory_space<vmem>>, vector<128x512xf32>
    %cst_38 = arith.constant dense<0.000000e+00> : vector<4x512xf32>
    %88 = tpu.matmul %86, %87, %cst_38 {dimension_numbers = #tpu.dot_dimension_numbers<[1], [0], [0], [1], [0, 0, 1, 1], [], []>} : vector<4x128xf32>, vector<128x512xf32>, vector<4x512xf32> -> vector<4x512xf32>
    %c0_39 = arith.constant 0 : index
    %c0_40 = arith.constant 0 : index
    %89 = vector.load %arg5[%c0_39, %c0_40] : memref<128x512xf32, #tpu.memory_space<vmem>>, vector<128x512xf32>
    %cst_41 = arith.constant dense<0.000000e+00> : vector<4x512xf32>
    %90 = tpu.matmul %60, %89, %cst_41 {dimension_numbers = #tpu.dot_dimension_numbers<[1], [0], [0], [1], [0, 0, 1, 1], [], []>} : vector<4x128xf32>, vector<128x512xf32>, vector<4x512xf32> -> vector<4x512xf32>
    %91 = arith.addf %88, %90 : vector<4x512xf32>
    %92 = arith.addf %91, %2 : vector<4x512xf32>
    %93 = vector.extract_strided_slice %92 {offsets = [0, 0], sizes = [4, 384], strides = [1, 1]} : vector<4x512xf32> to vector<4x384xf32>
    %94 = arith.negf %93 : vector<4x384xf32>
    %95 = math.exp %94 : vector<4x384xf32>
    %cst_42 = arith.constant 1.000000e+00 : f32
    %96 = vector.broadcast %cst_42 : f32 to vector<4x384xf32>
    %97 = arith.addf %96, %95 : vector<4x384xf32>
    %98 = arith.divf %96, %97 : vector<4x384xf32>
    %99 = vector.extract_strided_slice %98 {offsets = [0, 0], sizes = [4, 128], strides = [1, 1]} : vector<4x384xf32> to vector<4x128xf32>
    %100 = vector.extract_strided_slice %98 {offsets = [0, 128], sizes = [4, 128], strides = [1, 1]} : vector<4x384xf32> to vector<4x128xf32>
    %101 = vector.extract_strided_slice %98 {offsets = [0, 256], sizes = [4, 128], strides = [1, 1]} : vector<4x384xf32> to vector<4x128xf32>
    %102 = vector.extract_strided_slice %92 {offsets = [0, 384], sizes = [4, 128], strides = [1, 1]} : vector<4x512xf32> to vector<4x128xf32>
    %103 = math.tanh %102 : vector<4x128xf32>
    %104 = arith.mulf %100, %58 : vector<4x128xf32>
    %105 = arith.mulf %99, %103 : vector<4x128xf32>
    %106 = arith.addf %104, %105 : vector<4x128xf32>
    %107 = math.tanh %106 : vector<4x128xf32>
    %108 = arith.mulf %101, %107 : vector<4x128xf32>
    %109 = arith.index_cast %c1_i32 : i32 to index
    %c0_43 = arith.constant 0 : index
    %c0_44 = arith.constant 0 : index
    %110 = vector.load %arg13[%109, %c0_43, %c0_44] : memref<11x4x128xf32, #tpu.memory_space<vmem>>, vector<1x4x128xf32>
    %111 = vector.shape_cast %110 : vector<1x4x128xf32> to vector<4x128xf32>
    %112 = vector.shape_cast %108 : vector<4x128xf32> to vector<1x4x128xf32>
    tpu.vector_store %arg13[%109, %c0_43, %c0_44], %112 {strides = array<i32>} : memref<11x4x128xf32, #tpu.memory_space<vmem>>, vector<1x4x128xf32>,
    %c2_i32 = arith.constant 2 : i32
    %113 = arith.index_cast %c2_i32 : i32 to index
    %c0_45 = arith.constant 0 : index
    %c0_46 = arith.constant 0 : index
    %114 = vector.load %arg12[%113, %c0_45, %c0_46] : memref<8x4x512xf32, #tpu.memory_space<vmem>>, vector<1x4x512xf32>
    %115 = vector.shape_cast %114 : vector<1x4x512xf32> to vector<4x512xf32>
    %c0_47 = arith.constant 0 : index
    %c0_48 = arith.constant 0 : index
    %116 = vector.load %arg2[%c0_47, %c0_48] : memref<128x512xf32, #tpu.memory_space<vmem>>, vector<128x512xf32>
    %cst_49 = arith.constant dense<0.000000e+00> : vector<4x512xf32>
    %117 = tpu.matmul %86, %116, %cst_49 {dimension_numbers = #tpu.dot_dimension_numbers<[1], [0], [0], [1], [0, 0, 1, 1], [], []>} : vector<4x128xf32>, vector<128x512xf32>, vector<4x512xf32> -> vector<4x512xf32>
    %118 = arith.addf %115, %117 : vector<4x512xf32>
    %119 = vector.extract_strided_slice %118 {offsets = [0, 0], sizes = [4, 384], strides = [1, 1]} : vector<4x512xf32> to vector<4x384xf32>
    %120 = arith.negf %119 : vector<4x384xf32>
    %121 = math.exp %120 : vector<4x384xf32>
    %cst_50 = arith.constant 1.000000e+00 : f32
    %122 = vector.broadcast %cst_50 : f32 to vector<4x384xf32>
    %123 = arith.addf %122, %121 : vector<4x384xf32>
    %124 = arith.divf %122, %123 : vector<4x384xf32>
    %125 = vector.extract_strided_slice %124 {offsets = [0, 0], sizes = [4, 128], strides = [1, 1]} : vector<4x384xf32> to vector<4x128xf32>
    %126 = vector.extract_strided_slice %124 {offsets = [0, 128], sizes = [4, 128], strides = [1, 1]} : vector<4x384xf32> to vector<4x128xf32>
    %127 = vector.extract_strided_slice %124 {offsets = [0, 256], sizes = [4, 128], strides = [1, 1]} : vector<4x384xf32> to vector<4x128xf32>
    %128 = vector.extract_strided_slice %118 {offsets = [0, 384], sizes = [4, 128], strides = [1, 1]} : vector<4x512xf32> to vector<4x128xf32>
    %129 = math.tanh %128 : vector<4x128xf32>
    %130 = arith.mulf %126, %84 : vector<4x128xf32>
    %131 = arith.mulf %125, %129 : vector<4x128xf32>
    %132 = arith.addf %130, %131 : vector<4x128xf32>
    %133 = math.tanh %132 : vector<4x128xf32>
    %134 = arith.mulf %127, %133 : vector<4x128xf32>
    %c0_51 = arith.constant 0 : index
    %c0_52 = arith.constant 0 : index
    %135 = vector.load %arg4[%c0_51, %c0_52] : memref<128x512xf32, #tpu.memory_space<vmem>>, vector<128x512xf32>
    %cst_53 = arith.constant dense<0.000000e+00> : vector<4x512xf32>
    %136 = tpu.matmul %134, %135, %cst_53 {dimension_numbers = #tpu.dot_dimension_numbers<[1], [0], [0], [1], [0, 0, 1, 1], [], []>} : vector<4x128xf32>, vector<128x512xf32>, vector<4x512xf32> -> vector<4x512xf32>
    %c0_54 = arith.constant 0 : index
    %c0_55 = arith.constant 0 : index
    %137 = vector.load %arg5[%c0_54, %c0_55] : memref<128x512xf32, #tpu.memory_space<vmem>>, vector<128x512xf32>
    %cst_56 = arith.constant dense<0.000000e+00> : vector<4x512xf32>
    %138 = tpu.matmul %108, %137, %cst_56 {dimension_numbers = #tpu.dot_dimension_numbers<[1], [0], [0], [1], [0, 0, 1, 1], [], []>} : vector<4x128xf32>, vector<128x512xf32>, vector<4x512xf32> -> vector<4x512xf32>
    %139 = arith.addf %136, %138 : vector<4x512xf32>
    %140 = arith.addf %139, %2 : vector<4x512xf32>
    %141 = vector.extract_strided_slice %140 {offsets = [0, 0], sizes = [4, 384], strides = [1, 1]} : vector<4x512xf32> to vector<4x384xf32>
    %142 = arith.negf %141 : vector<4x384xf32>
    %143 = math.exp %142 : vector<4x384xf32>
    %cst_57 = arith.constant 1.000000e+00 : f32
    %144 = vector.broadcast %cst_57 : f32 to vector<4x384xf32>
    %145 = arith.addf %144, %143 : vector<4x384xf32>
    %146 = arith.divf %144, %145 : vector<4x384xf32>
    %147 = vector.extract_strided_slice %146 {offsets = [0, 0], sizes = [4, 128], strides = [1, 1]} : vector<4x384xf32> to vector<4x128xf32>
    %148 = vector.extract_strided_slice %146 {offsets = [0, 128], sizes = [4, 128], strides = [1, 1]} : vector<4x384xf32> to vector<4x128xf32>
    %149 = vector.extract_strided_slice %146 {offsets = [0, 256], sizes = [4, 128], strides = [1, 1]} : vector<4x384xf32> to vector<4x128xf32>
    %150 = vector.extract_strided_slice %140 {offsets = [0, 384], sizes = [4, 128], strides = [1, 1]} : vector<4x512xf32> to vector<4x128xf32>
    %151 = math.tanh %150 : vector<4x128xf32>
    %152 = arith.mulf %148, %106 : vector<4x128xf32>
    %153 = arith.mulf %147, %151 : vector<4x128xf32>
    %154 = arith.addf %152, %153 : vector<4x128xf32>
    %155 = math.tanh %154 : vector<4x128xf32>
    %156 = arith.mulf %149, %155 : vector<4x128xf32>
    %157 = arith.index_cast %c2_i32 : i32 to index
    %c0_58 = arith.constant 0 : index
    %c0_59 = arith.constant 0 : index
    %158 = vector.load %arg13[%157, %c0_58, %c0_59] : memref<11x4x128xf32, #tpu.memory_space<vmem>>, vector<1x4x128xf32>
    %159 = vector.shape_cast %158 : vector<1x4x128xf32> to vector<4x128xf32>
    %160 = vector.shape_cast %156 : vector<4x128xf32> to vector<1x4x128xf32>
    tpu.vector_store %arg13[%157, %c0_58, %c0_59], %160 {strides = array<i32>} : memref<11x4x128xf32, #tpu.memory_space<vmem>>, vector<1x4x128xf32>,
    %c3_i32 = arith.constant 3 : i32
    %161 = arith.index_cast %c3_i32 : i32 to index
    %c0_60 = arith.constant 0 : index
    %c0_61 = arith.constant 0 : index
    %162 = vector.load %arg12[%161, %c0_60, %c0_61] : memref<8x4x512xf32, #tpu.memory_space<vmem>>, vector<1x4x512xf32>
    %163 = vector.shape_cast %162 : vector<1x4x512xf32> to vector<4x512xf32>
    %c0_62 = arith.constant 0 : index
    %c0_63 = arith.constant 0 : index
    %164 = vector.load %arg2[%c0_62, %c0_63] : memref<128x512xf32, #tpu.memory_space<vmem>>, vector<128x512xf32>
    %cst_64 = arith.constant dense<0.000000e+00> : vector<4x512xf32>
    %165 = tpu.matmul %134, %164, %cst_64 {dimension_numbers = #tpu.dot_dimension_numbers<[1], [0], [0], [1], [0, 0, 1, 1], [], []>} : vector<4x128xf32>, vector<128x512xf32>, vector<4x512xf32> -> vector<4x512xf32>
    %166 = arith.addf %163, %165 : vector<4x512xf32>
    %167 = vector.extract_strided_slice %166 {offsets = [0, 0], sizes = [4, 384], strides = [1, 1]} : vector<4x512xf32> to vector<4x384xf32>
    %168 = arith.negf %167 : vector<4x384xf32>
    %169 = math.exp %168 : vector<4x384xf32>
    %cst_65 = arith.constant 1.000000e+00 : f32
    %170 = vector.broadcast %cst_65 : f32 to vector<4x384xf32>
    %171 = arith.addf %170, %169 : vector<4x384xf32>
    %172 = arith.divf %170, %171 : vector<4x384xf32>
    %173 = vector.extract_strided_slice %172 {offsets = [0, 0], sizes = [4, 128], strides = [1, 1]} : vector<4x384xf32> to vector<4x128xf32>
    %174 = vector.extract_strided_slice %172 {offsets = [0, 128], sizes = [4, 128], strides = [1, 1]} : vector<4x384xf32> to vector<4x128xf32>
    %175 = vector.extract_strided_slice %172 {offsets = [0, 256], sizes = [4, 128], strides = [1, 1]} : vector<4x384xf32> to vector<4x128xf32>
    %176 = vector.extract_strided_slice %166 {offsets = [0, 384], sizes = [4, 128], strides = [1, 1]} : vector<4x512xf32> to vector<4x128xf32>
    %177 = math.tanh %176 : vector<4x128xf32>
    %178 = arith.mulf %174, %132 : vector<4x128xf32>
    %179 = arith.mulf %173, %177 : vector<4x128xf32>
    %180 = arith.addf %178, %179 : vector<4x128xf32>
    %181 = math.tanh %180 : vector<4x128xf32>
    %182 = arith.mulf %175, %181 : vector<4x128xf32>
    %c0_66 = arith.constant 0 : index
    %c0_67 = arith.constant 0 : index
    %183 = vector.load %arg4[%c0_66, %c0_67] : memref<128x512xf32, #tpu.memory_space<vmem>>, vector<128x512xf32>
    %cst_68 = arith.constant dense<0.000000e+00> : vector<4x512xf32>
    %184 = tpu.matmul %182, %183, %cst_68 {dimension_numbers = #tpu.dot_dimension_numbers<[1], [0], [0], [1], [0, 0, 1, 1], [], []>} : vector<4x128xf32>, vector<128x512xf32>, vector<4x512xf32> -> vector<4x512xf32>
    %c0_69 = arith.constant 0 : index
    %c0_70 = arith.constant 0 : index
    %185 = vector.load %arg5[%c0_69, %c0_70] : memref<128x512xf32, #tpu.memory_space<vmem>>, vector<128x512xf32>
    %cst_71 = arith.constant dense<0.000000e+00> : vector<4x512xf32>
    %186 = tpu.matmul %156, %185, %cst_71 {dimension_numbers = #tpu.dot_dimension_numbers<[1], [0], [0], [1], [0, 0, 1, 1], [], []>} : vector<4x128xf32>, vector<128x512xf32>, vector<4x512xf32> -> vector<4x512xf32>
    %187 = arith.addf %184, %186 : vector<4x512xf32>
    %188 = arith.addf %187, %2 : vector<4x512xf32>
    %189 = vector.extract_strided_slice %188 {offsets = [0, 0], sizes = [4, 384], strides = [1, 1]} : vector<4x512xf32> to vector<4x384xf32>
    %190 = arith.negf %189 : vector<4x384xf32>
    %191 = math.exp %190 : vector<4x384xf32>
    %cst_72 = arith.constant 1.000000e+00 : f32
    %192 = vector.broadcast %cst_72 : f32 to vector<4x384xf32>
    %193 = arith.addf %192, %191 : vector<4x384xf32>
    %194 = arith.divf %192, %193 : vector<4x384xf32>
    %195 = vector.extract_strided_slice %194 {offsets = [0, 0], sizes = [4, 128], strides = [1, 1]} : vector<4x384xf32> to vector<4x128xf32>
    %196 = vector.extract_strided_slice %194 {offsets = [0, 128], sizes = [4, 128], strides = [1, 1]} : vector<4x384xf32> to vector<4x128xf32>
    %197 = vector.extract_strided_slice %194 {offsets = [0, 256], sizes = [4, 128], strides = [1, 1]} : vector<4x384xf32> to vector<4x128xf32>
    %198 = vector.extract_strided_slice %188 {offsets = [0, 384], sizes = [4, 128], strides = [1, 1]} : vector<4x512xf32> to vector<4x128xf32>
    %199 = math.tanh %198 : vector<4x128xf32>
    %200 = arith.mulf %196, %154 : vector<4x128xf32>
    %201 = arith.mulf %195, %199 : vector<4x128xf32>
    %202 = arith.addf %200, %201 : vector<4x128xf32>
    %203 = math.tanh %202 : vector<4x128xf32>
    %204 = arith.mulf %197, %203 : vector<4x128xf32>
    %205 = arith.index_cast %c3_i32 : i32 to index
    %c0_73 = arith.constant 0 : index
    %c0_74 = arith.constant 0 : index
    %206 = vector.load %arg13[%205, %c0_73, %c0_74] : memref<11x4x128xf32, #tpu.memory_space<vmem>>, vector<1x4x128xf32>
    %207 = vector.shape_cast %206 : vector<1x4x128xf32> to vector<4x128xf32>
    %208 = vector.shape_cast %204 : vector<4x128xf32> to vector<1x4x128xf32>
    tpu.vector_store %arg13[%205, %c0_73, %c0_74], %208 {strides = array<i32>} : memref<11x4x128xf32, #tpu.memory_space<vmem>>, vector<1x4x128xf32>,
    %c4_i32 = arith.constant 4 : i32
    %209 = arith.index_cast %c4_i32 : i32 to index
    %c0_75 = arith.constant 0 : index
    %c0_76 = arith.constant 0 : index
    %210 = vector.load %arg12[%209, %c0_75, %c0_76] : memref<8x4x512xf32, #tpu.memory_space<vmem>>, vector<1x4x512xf32>
    %211 = vector.shape_cast %210 : vector<1x4x512xf32> to vector<4x512xf32>
    %c0_77 = arith.constant 0 : index
    %c0_78 = arith.constant 0 : index
    %212 = vector.load %arg2[%c0_77, %c0_78] : memref<128x512xf32, #tpu.memory_space<vmem>>, vector<128x512xf32>
    %cst_79 = arith.constant dense<0.000000e+00> : vector<4x512xf32>
    %213 = tpu.matmul %182, %212, %cst_79 {dimension_numbers = #tpu.dot_dimension_numbers<[1], [0], [0], [1], [0, 0, 1, 1], [], []>} : vector<4x128xf32>, vector<128x512xf32>, vector<4x512xf32> -> vector<4x512xf32>
    %214 = arith.addf %211, %213 : vector<4x512xf32>
    %215 = vector.extract_strided_slice %214 {offsets = [0, 0], sizes = [4, 384], strides = [1, 1]} : vector<4x512xf32> to vector<4x384xf32>
    %216 = arith.negf %215 : vector<4x384xf32>
    %217 = math.exp %216 : vector<4x384xf32>
    %cst_80 = arith.constant 1.000000e+00 : f32
    %218 = vector.broadcast %cst_80 : f32 to vector<4x384xf32>
    %219 = arith.addf %218, %217 : vector<4x384xf32>
    %220 = arith.divf %218, %219 : vector<4x384xf32>
    %221 = vector.extract_strided_slice %220 {offsets = [0, 0], sizes = [4, 128], strides = [1, 1]} : vector<4x384xf32> to vector<4x128xf32>
    %222 = vector.extract_strided_slice %220 {offsets = [0, 128], sizes = [4, 128], strides = [1, 1]} : vector<4x384xf32> to vector<4x128xf32>
    %223 = vector.extract_strided_slice %220 {offsets = [0, 256], sizes = [4, 128], strides = [1, 1]} : vector<4x384xf32> to vector<4x128xf32>
    %224 = vector.extract_strided_slice %214 {offsets = [0, 384], sizes = [4, 128], strides = [1, 1]} : vector<4x512xf32> to vector<4x128xf32>
    %225 = math.tanh %224 : vector<4x128xf32>
    %226 = arith.mulf %222, %180 : vector<4x128xf32>
    %227 = arith.mulf %221, %225 : vector<4x128xf32>
    %228 = arith.addf %226, %227 : vector<4x128xf32>
    %229 = math.tanh %228 : vector<4x128xf32>
    %230 = arith.mulf %223, %229 : vector<4x128xf32>
    %c0_81 = arith.constant 0 : index
    %c0_82 = arith.constant 0 : index
    %231 = vector.load %arg4[%c0_81, %c0_82] : memref<128x512xf32, #tpu.memory_space<vmem>>, vector<128x512xf32>
    %cst_83 = arith.constant dense<0.000000e+00> : vector<4x512xf32>
    %232 = tpu.matmul %230, %231, %cst_83 {dimension_numbers = #tpu.dot_dimension_numbers<[1], [0], [0], [1], [0, 0, 1, 1], [], []>} : vector<4x128xf32>, vector<128x512xf32>, vector<4x512xf32> -> vector<4x512xf32>
    %c0_84 = arith.constant 0 : index
    %c0_85 = arith.constant 0 : index
    %233 = vector.load %arg5[%c0_84, %c0_85] : memref<128x512xf32, #tpu.memory_space<vmem>>, vector<128x512xf32>
    %cst_86 = arith.constant dense<0.000000e+00> : vector<4x512xf32>
    %234 = tpu.matmul %204, %233, %cst_86 {dimension_numbers = #tpu.dot_dimension_numbers<[1], [0], [0], [1], [0, 0, 1, 1], [], []>} : vector<4x128xf32>, vector<128x512xf32>, vector<4x512xf32> -> vector<4x512xf32>
    %235 = arith.addf %232, %234 : vector<4x512xf32>
    %236 = arith.addf %235, %2 : vector<4x512xf32>
    %237 = vector.extract_strided_slice %236 {offsets = [0, 0], sizes = [4, 384], strides = [1, 1]} : vector<4x512xf32> to vector<4x384xf32>
    %238 = arith.negf %237 : vector<4x384xf32>
    %239 = math.exp %238 : vector<4x384xf32>
    %cst_87 = arith.constant 1.000000e+00 : f32
    %240 = vector.broadcast %cst_87 : f32 to vector<4x384xf32>
    %241 = arith.addf %240, %239 : vector<4x384xf32>
    %242 = arith.divf %240, %241 : vector<4x384xf32>
    %243 = vector.extract_strided_slice %242 {offsets = [0, 0], sizes = [4, 128], strides = [1, 1]} : vector<4x384xf32> to vector<4x128xf32>
    %244 = vector.extract_strided_slice %242 {offsets = [0, 128], sizes = [4, 128], strides = [1, 1]} : vector<4x384xf32> to vector<4x128xf32>
    %245 = vector.extract_strided_slice %242 {offsets = [0, 256], sizes = [4, 128], strides = [1, 1]} : vector<4x384xf32> to vector<4x128xf32>
    %246 = vector.extract_strided_slice %236 {offsets = [0, 384], sizes = [4, 128], strides = [1, 1]} : vector<4x512xf32> to vector<4x128xf32>
    %247 = math.tanh %246 : vector<4x128xf32>
    %248 = arith.mulf %244, %202 : vector<4x128xf32>
    %249 = arith.mulf %243, %247 : vector<4x128xf32>
    %250 = arith.addf %248, %249 : vector<4x128xf32>
    %251 = math.tanh %250 : vector<4x128xf32>
    %252 = arith.mulf %245, %251 : vector<4x128xf32>
    %253 = arith.index_cast %c4_i32 : i32 to index
    %c0_88 = arith.constant 0 : index
    %c0_89 = arith.constant 0 : index
    %254 = vector.load %arg13[%253, %c0_88, %c0_89] : memref<11x4x128xf32, #tpu.memory_space<vmem>>, vector<1x4x128xf32>
    %255 = vector.shape_cast %254 : vector<1x4x128xf32> to vector<4x128xf32>
    %256 = vector.shape_cast %252 : vector<4x128xf32> to vector<1x4x128xf32>
    tpu.vector_store %arg13[%253, %c0_88, %c0_89], %256 {strides = array<i32>} : memref<11x4x128xf32, #tpu.memory_space<vmem>>, vector<1x4x128xf32>,
    %c5_i32 = arith.constant 5 : i32
    %257 = arith.index_cast %c5_i32 : i32 to index
    %c0_90 = arith.constant 0 : index
    %c0_91 = arith.constant 0 : index
    %258 = vector.load %arg12[%257, %c0_90, %c0_91] : memref<8x4x512xf32, #tpu.memory_space<vmem>>, vector<1x4x512xf32>
    %259 = vector.shape_cast %258 : vector<1x4x512xf32> to vector<4x512xf32>
    %c0_92 = arith.constant 0 : index
    %c0_93 = arith.constant 0 : index
    %260 = vector.load %arg2[%c0_92, %c0_93] : memref<128x512xf32, #tpu.memory_space<vmem>>, vector<128x512xf32>
    %cst_94 = arith.constant dense<0.000000e+00> : vector<4x512xf32>
    %261 = tpu.matmul %230, %260, %cst_94 {dimension_numbers = #tpu.dot_dimension_numbers<[1], [0], [0], [1], [0, 0, 1, 1], [], []>} : vector<4x128xf32>, vector<128x512xf32>, vector<4x512xf32> -> vector<4x512xf32>
    %262 = arith.addf %259, %261 : vector<4x512xf32>
    %263 = vector.extract_strided_slice %262 {offsets = [0, 0], sizes = [4, 384], strides = [1, 1]} : vector<4x512xf32> to vector<4x384xf32>
    %264 = arith.negf %263 : vector<4x384xf32>
    %265 = math.exp %264 : vector<4x384xf32>
    %cst_95 = arith.constant 1.000000e+00 : f32
    %266 = vector.broadcast %cst_95 : f32 to vector<4x384xf32>
    %267 = arith.addf %266, %265 : vector<4x384xf32>
    %268 = arith.divf %266, %267 : vector<4x384xf32>
    %269 = vector.extract_strided_slice %268 {offsets = [0, 0], sizes = [4, 128], strides = [1, 1]} : vector<4x384xf32> to vector<4x128xf32>
    %270 = vector.extract_strided_slice %268 {offsets = [0, 128], sizes = [4, 128], strides = [1, 1]} : vector<4x384xf32> to vector<4x128xf32>
    %271 = vector.extract_strided_slice %268 {offsets = [0, 256], sizes = [4, 128], strides = [1, 1]} : vector<4x384xf32> to vector<4x128xf32>
    %272 = vector.extract_strided_slice %262 {offsets = [0, 384], sizes = [4, 128], strides = [1, 1]} : vector<4x512xf32> to vector<4x128xf32>
    %273 = math.tanh %272 : vector<4x128xf32>
    %274 = arith.mulf %270, %228 : vector<4x128xf32>
    %275 = arith.mulf %269, %273 : vector<4x128xf32>
    %276 = arith.addf %274, %275 : vector<4x128xf32>
    %277 = math.tanh %276 : vector<4x128xf32>
    %278 = arith.mulf %271, %277 : vector<4x128xf32>
    %c0_96 = arith.constant 0 : index
    %c0_97 = arith.constant 0 : index
    %279 = vector.load %arg4[%c0_96, %c0_97] : memref<128x512xf32, #tpu.memory_space<vmem>>, vector<128x512xf32>
    %cst_98 = arith.constant dense<0.000000e+00> : vector<4x512xf32>
    %280 = tpu.matmul %278, %279, %cst_98 {dimension_numbers = #tpu.dot_dimension_numbers<[1], [0], [0], [1], [0, 0, 1, 1], [], []>} : vector<4x128xf32>, vector<128x512xf32>, vector<4x512xf32> -> vector<4x512xf32>
    %c0_99 = arith.constant 0 : index
    %c0_100 = arith.constant 0 : index
    %281 = vector.load %arg5[%c0_99, %c0_100] : memref<128x512xf32, #tpu.memory_space<vmem>>, vector<128x512xf32>
    %cst_101 = arith.constant dense<0.000000e+00> : vector<4x512xf32>
    %282 = tpu.matmul %252, %281, %cst_101 {dimension_numbers = #tpu.dot_dimension_numbers<[1], [0], [0], [1], [0, 0, 1, 1], [], []>} : vector<4x128xf32>, vector<128x512xf32>, vector<4x512xf32> -> vector<4x512xf32>
    %283 = arith.addf %280, %282 : vector<4x512xf32>
    %284 = arith.addf %283, %2 : vector<4x512xf32>
    %285 = vector.extract_strided_slice %284 {offsets = [0, 0], sizes = [4, 384], strides = [1, 1]} : vector<4x512xf32> to vector<4x384xf32>
    %286 = arith.negf %285 : vector<4x384xf32>
    %287 = math.exp %286 : vector<4x384xf32>
    %cst_102 = arith.constant 1.000000e+00 : f32
    %288 = vector.broadcast %cst_102 : f32 to vector<4x384xf32>
    %289 = arith.addf %288, %287 : vector<4x384xf32>
    %290 = arith.divf %288, %289 : vector<4x384xf32>
    %291 = vector.extract_strided_slice %290 {offsets = [0, 0], sizes = [4, 128], strides = [1, 1]} : vector<4x384xf32> to vector<4x128xf32>
    %292 = vector.extract_strided_slice %290 {offsets = [0, 128], sizes = [4, 128], strides = [1, 1]} : vector<4x384xf32> to vector<4x128xf32>
    %293 = vector.extract_strided_slice %290 {offsets = [0, 256], sizes = [4, 128], strides = [1, 1]} : vector<4x384xf32> to vector<4x128xf32>
    %294 = vector.extract_strided_slice %284 {offsets = [0, 384], sizes = [4, 128], strides = [1, 1]} : vector<4x512xf32> to vector<4x128xf32>
    %295 = math.tanh %294 : vector<4x128xf32>
    %296 = arith.mulf %292, %250 : vector<4x128xf32>
    %297 = arith.mulf %291, %295 : vector<4x128xf32>
    %298 = arith.addf %296, %297 : vector<4x128xf32>
    %299 = math.tanh %298 : vector<4x128xf32>
    %300 = arith.mulf %293, %299 : vector<4x128xf32>
    %301 = arith.index_cast %c5_i32 : i32 to index
    %c0_103 = arith.constant 0 : index
    %c0_104 = arith.constant 0 : index
    %302 = vector.load %arg13[%301, %c0_103, %c0_104] : memref<11x4x128xf32, #tpu.memory_space<vmem>>, vector<1x4x128xf32>
    %303 = vector.shape_cast %302 : vector<1x4x128xf32> to vector<4x128xf32>
    %304 = vector.shape_cast %300 : vector<4x128xf32> to vector<1x4x128xf32>
    tpu.vector_store %arg13[%301, %c0_103, %c0_104], %304 {strides = array<i32>} : memref<11x4x128xf32, #tpu.memory_space<vmem>>, vector<1x4x128xf32>,
    %c6_i32 = arith.constant 6 : i32
    %305 = arith.index_cast %c6_i32 : i32 to index
    %c0_105 = arith.constant 0 : index
    %c0_106 = arith.constant 0 : index
    %306 = vector.load %arg12[%305, %c0_105, %c0_106] : memref<8x4x512xf32, #tpu.memory_space<vmem>>, vector<1x4x512xf32>
    %307 = vector.shape_cast %306 : vector<1x4x512xf32> to vector<4x512xf32>
    %c0_107 = arith.constant 0 : index
    %c0_108 = arith.constant 0 : index
    %308 = vector.load %arg2[%c0_107, %c0_108] : memref<128x512xf32, #tpu.memory_space<vmem>>, vector<128x512xf32>
    %cst_109 = arith.constant dense<0.000000e+00> : vector<4x512xf32>
    %309 = tpu.matmul %278, %308, %cst_109 {dimension_numbers = #tpu.dot_dimension_numbers<[1], [0], [0], [1], [0, 0, 1, 1], [], []>} : vector<4x128xf32>, vector<128x512xf32>, vector<4x512xf32> -> vector<4x512xf32>
    %310 = arith.addf %307, %309 : vector<4x512xf32>
    %311 = vector.extract_strided_slice %310 {offsets = [0, 0], sizes = [4, 384], strides = [1, 1]} : vector<4x512xf32> to vector<4x384xf32>
    %312 = arith.negf %311 : vector<4x384xf32>
    %313 = math.exp %312 : vector<4x384xf32>
    %cst_110 = arith.constant 1.000000e+00 : f32
    %314 = vector.broadcast %cst_110 : f32 to vector<4x384xf32>
    %315 = arith.addf %314, %313 : vector<4x384xf32>
    %316 = arith.divf %314, %315 : vector<4x384xf32>
    %317 = vector.extract_strided_slice %316 {offsets = [0, 0], sizes = [4, 128], strides = [1, 1]} : vector<4x384xf32> to vector<4x128xf32>
    %318 = vector.extract_strided_slice %316 {offsets = [0, 128], sizes = [4, 128], strides = [1, 1]} : vector<4x384xf32> to vector<4x128xf32>
    %319 = vector.extract_strided_slice %316 {offsets = [0, 256], sizes = [4, 128], strides = [1, 1]} : vector<4x384xf32> to vector<4x128xf32>
    %320 = vector.extract_strided_slice %310 {offsets = [0, 384], sizes = [4, 128], strides = [1, 1]} : vector<4x512xf32> to vector<4x128xf32>
    %321 = math.tanh %320 : vector<4x128xf32>
    %322 = arith.mulf %318, %276 : vector<4x128xf32>
    %323 = arith.mulf %317, %321 : vector<4x128xf32>
    %324 = arith.addf %322, %323 : vector<4x128xf32>
    %325 = math.tanh %324 : vector<4x128xf32>
    %326 = arith.mulf %319, %325 : vector<4x128xf32>
    %c0_111 = arith.constant 0 : index
    %c0_112 = arith.constant 0 : index
    %327 = vector.load %arg4[%c0_111, %c0_112] : memref<128x512xf32, #tpu.memory_space<vmem>>, vector<128x512xf32>
    %cst_113 = arith.constant dense<0.000000e+00> : vector<4x512xf32>
    %328 = tpu.matmul %326, %327, %cst_113 {dimension_numbers = #tpu.dot_dimension_numbers<[1], [0], [0], [1], [0, 0, 1, 1], [], []>} : vector<4x128xf32>, vector<128x512xf32>, vector<4x512xf32> -> vector<4x512xf32>
    %c0_114 = arith.constant 0 : index
    %c0_115 = arith.constant 0 : index
    %329 = vector.load %arg5[%c0_114, %c0_115] : memref<128x512xf32, #tpu.memory_space<vmem>>, vector<128x512xf32>
    %cst_116 = arith.constant dense<0.000000e+00> : vector<4x512xf32>
    %330 = tpu.matmul %300, %329, %cst_116 {dimension_numbers = #tpu.dot_dimension_numbers<[1], [0], [0], [1], [0, 0, 1, 1], [], []>} : vector<4x128xf32>, vector<128x512xf32>, vector<4x512xf32> -> vector<4x512xf32>
    %331 = arith.addf %328, %330 : vector<4x512xf32>
    %332 = arith.addf %331, %2 : vector<4x512xf32>
    %333 = vector.extract_strided_slice %332 {offsets = [0, 0], sizes = [4, 384], strides = [1, 1]} : vector<4x512xf32> to vector<4x384xf32>
    %334 = arith.negf %333 : vector<4x384xf32>
    %335 = math.exp %334 : vector<4x384xf32>
    %cst_117 = arith.constant 1.000000e+00 : f32
    %336 = vector.broadcast %cst_117 : f32 to vector<4x384xf32>
    %337 = arith.addf %336, %335 : vector<4x384xf32>
    %338 = arith.divf %336, %337 : vector<4x384xf32>
    %339 = vector.extract_strided_slice %338 {offsets = [0, 0], sizes = [4, 128], strides = [1, 1]} : vector<4x384xf32> to vector<4x128xf32>
    %340 = vector.extract_strided_slice %338 {offsets = [0, 128], sizes = [4, 128], strides = [1, 1]} : vector<4x384xf32> to vector<4x128xf32>
    %341 = vector.extract_strided_slice %338 {offsets = [0, 256], sizes = [4, 128], strides = [1, 1]} : vector<4x384xf32> to vector<4x128xf32>
    %342 = vector.extract_strided_slice %332 {offsets = [0, 384], sizes = [4, 128], strides = [1, 1]} : vector<4x512xf32> to vector<4x128xf32>
    %343 = math.tanh %342 : vector<4x128xf32>
    %344 = arith.mulf %340, %298 : vector<4x128xf32>
    %345 = arith.mulf %339, %343 : vector<4x128xf32>
    %346 = arith.addf %344, %345 : vector<4x128xf32>
    %347 = math.tanh %346 : vector<4x128xf32>
    %348 = arith.mulf %341, %347 : vector<4x128xf32>
    %349 = arith.index_cast %c6_i32 : i32 to index
    %c0_118 = arith.constant 0 : index
    %c0_119 = arith.constant 0 : index
    %350 = vector.load %arg13[%349, %c0_118, %c0_119] : memref<11x4x128xf32, #tpu.memory_space<vmem>>, vector<1x4x128xf32>
    %351 = vector.shape_cast %350 : vector<1x4x128xf32> to vector<4x128xf32>
    %352 = vector.shape_cast %348 : vector<4x128xf32> to vector<1x4x128xf32>
    tpu.vector_store %arg13[%349, %c0_118, %c0_119], %352 {strides = array<i32>} : memref<11x4x128xf32, #tpu.memory_space<vmem>>, vector<1x4x128xf32>,
    %c7_i32 = arith.constant 7 : i32
    %353 = arith.index_cast %c7_i32 : i32 to index
    %c0_120 = arith.constant 0 : index
    %c0_121 = arith.constant 0 : index
    %354 = vector.load %arg12[%353, %c0_120, %c0_121] : memref<8x4x512xf32, #tpu.memory_space<vmem>>, vector<1x4x512xf32>
    %355 = vector.shape_cast %354 : vector<1x4x512xf32> to vector<4x512xf32>
    %c0_122 = arith.constant 0 : index
    %c0_123 = arith.constant 0 : index
    %356 = vector.load %arg2[%c0_122, %c0_123] : memref<128x512xf32, #tpu.memory_space<vmem>>, vector<128x512xf32>
    %cst_124 = arith.constant dense<0.000000e+00> : vector<4x512xf32>
    %357 = tpu.matmul %326, %356, %cst_124 {dimension_numbers = #tpu.dot_dimension_numbers<[1], [0], [0], [1], [0, 0, 1, 1], [], []>} : vector<4x128xf32>, vector<128x512xf32>, vector<4x512xf32> -> vector<4x512xf32>
    %358 = arith.addf %355, %357 : vector<4x512xf32>
    %359 = vector.extract_strided_slice %358 {offsets = [0, 0], sizes = [4, 384], strides = [1, 1]} : vector<4x512xf32> to vector<4x384xf32>
    %360 = arith.negf %359 : vector<4x384xf32>
    %361 = math.exp %360 : vector<4x384xf32>
    %cst_125 = arith.constant 1.000000e+00 : f32
    %362 = vector.broadcast %cst_125 : f32 to vector<4x384xf32>
    %363 = arith.addf %362, %361 : vector<4x384xf32>
    %364 = arith.divf %362, %363 : vector<4x384xf32>
    %365 = vector.extract_strided_slice %364 {offsets = [0, 0], sizes = [4, 128], strides = [1, 1]} : vector<4x384xf32> to vector<4x128xf32>
    %366 = vector.extract_strided_slice %364 {offsets = [0, 128], sizes = [4, 128], strides = [1, 1]} : vector<4x384xf32> to vector<4x128xf32>
    %367 = vector.extract_strided_slice %364 {offsets = [0, 256], sizes = [4, 128], strides = [1, 1]} : vector<4x384xf32> to vector<4x128xf32>
    %368 = vector.extract_strided_slice %358 {offsets = [0, 384], sizes = [4, 128], strides = [1, 1]} : vector<4x512xf32> to vector<4x128xf32>
    %369 = math.tanh %368 : vector<4x128xf32>
    %370 = arith.mulf %366, %324 : vector<4x128xf32>
    %371 = arith.mulf %365, %369 : vector<4x128xf32>
    %372 = arith.addf %370, %371 : vector<4x128xf32>
    %373 = math.tanh %372 : vector<4x128xf32>
    %374 = arith.mulf %367, %373 : vector<4x128xf32>
    %c0_126 = arith.constant 0 : index
    %c0_127 = arith.constant 0 : index
    %375 = vector.load %arg4[%c0_126, %c0_127] : memref<128x512xf32, #tpu.memory_space<vmem>>, vector<128x512xf32>
    %cst_128 = arith.constant dense<0.000000e+00> : vector<4x512xf32>
    %376 = tpu.matmul %374, %375, %cst_128 {dimension_numbers = #tpu.dot_dimension_numbers<[1], [0], [0], [1], [0, 0, 1, 1], [], []>} : vector<4x128xf32>, vector<128x512xf32>, vector<4x512xf32> -> vector<4x512xf32>
    %c0_129 = arith.constant 0 : index
    %c0_130 = arith.constant 0 : index
    %377 = vector.load %arg5[%c0_129, %c0_130] : memref<128x512xf32, #tpu.memory_space<vmem>>, vector<128x512xf32>
    %cst_131 = arith.constant dense<0.000000e+00> : vector<4x512xf32>
    %378 = tpu.matmul %348, %377, %cst_131 {dimension_numbers = #tpu.dot_dimension_numbers<[1], [0], [0], [1], [0, 0, 1, 1], [], []>} : vector<4x128xf32>, vector<128x512xf32>, vector<4x512xf32> -> vector<4x512xf32>
    %379 = arith.addf %376, %378 : vector<4x512xf32>
    %380 = arith.addf %379, %2 : vector<4x512xf32>
    %381 = vector.extract_strided_slice %380 {offsets = [0, 0], sizes = [4, 384], strides = [1, 1]} : vector<4x512xf32> to vector<4x384xf32>
    %382 = arith.negf %381 : vector<4x384xf32>
    %383 = math.exp %382 : vector<4x384xf32>
    %cst_132 = arith.constant 1.000000e+00 : f32
    %384 = vector.broadcast %cst_132 : f32 to vector<4x384xf32>
    %385 = arith.addf %384, %383 : vector<4x384xf32>
    %386 = arith.divf %384, %385 : vector<4x384xf32>
    %387 = vector.extract_strided_slice %386 {offsets = [0, 0], sizes = [4, 128], strides = [1, 1]} : vector<4x384xf32> to vector<4x128xf32>
    %388 = vector.extract_strided_slice %386 {offsets = [0, 128], sizes = [4, 128], strides = [1, 1]} : vector<4x384xf32> to vector<4x128xf32>
    %389 = vector.extract_strided_slice %386 {offsets = [0, 256], sizes = [4, 128], strides = [1, 1]} : vector<4x384xf32> to vector<4x128xf32>
    %390 = vector.extract_strided_slice %380 {offsets = [0, 384], sizes = [4, 128], strides = [1, 1]} : vector<4x512xf32> to vector<4x128xf32>
    %391 = math.tanh %390 : vector<4x128xf32>
    %392 = arith.mulf %388, %346 : vector<4x128xf32>
    %393 = arith.mulf %387, %391 : vector<4x128xf32>
    %394 = arith.addf %392, %393 : vector<4x128xf32>
    %395 = math.tanh %394 : vector<4x128xf32>
    %396 = arith.mulf %389, %395 : vector<4x128xf32>
    %397 = arith.index_cast %c7_i32 : i32 to index
    %c0_133 = arith.constant 0 : index
    %c0_134 = arith.constant 0 : index
    %398 = vector.load %arg13[%397, %c0_133, %c0_134] : memref<11x4x128xf32, #tpu.memory_space<vmem>>, vector<1x4x128xf32>
    %399 = vector.shape_cast %398 : vector<1x4x128xf32> to vector<4x128xf32>
    %400 = vector.shape_cast %396 : vector<4x128xf32> to vector<1x4x128xf32>
    tpu.vector_store %arg13[%397, %c0_133, %c0_134], %400 {strides = array<i32>} : memref<11x4x128xf32, #tpu.memory_space<vmem>>, vector<1x4x128xf32>,
    %c8_i32 = arith.constant 8 : i32
    %c0_135 = arith.constant 0 : index
    %c0_136 = arith.constant 0 : index
    %401 = vector.load %arg8[%c0_135, %c0_136] : memref<1x512xf32, #tpu.memory_space<vmem>>, vector<1x512xf32>
    %402 = vector.shape_cast %401 : vector<1x512xf32> to vector<1x512xf32>
    %403 = vector.broadcast %402 : vector<1x512xf32> to vector<4x512xf32>
    %c0_i32_137 = arith.constant 0 : i32
    %c0_138 = arith.constant 0 : index
    %c0_139 = arith.constant 0 : index
    %404 = vector.load %arg7[%c0_138, %c0_139] : memref<128x512xf32, #tpu.memory_space<vmem>>, vector<128x512xf32>
    %cst_140 = arith.constant dense<0.000000e+00> : vector<4x512xf32>
    %405 = tpu.matmul %396, %404, %cst_140 {dimension_numbers = #tpu.dot_dimension_numbers<[1], [0], [0], [1], [0, 0, 1, 1], [], []>} : vector<4x128xf32>, vector<128x512xf32>, vector<4x512xf32> -> vector<4x512xf32>
    %406 = arith.addf %403, %405 : vector<4x512xf32>
    %c8_i32_141 = arith.constant 8 : i32
    %407 = arith.addi %c8_i32_141, %c0_i32_137 : i32
    %c0_142 = arith.constant 0 : index
    %c0_143 = arith.constant 0 : index
    %408 = vector.load %arg2[%c0_142, %c0_143] : memref<128x512xf32, #tpu.memory_space<vmem>>, vector<128x512xf32>
    %cst_144 = arith.constant dense<0.000000e+00> : vector<4x512xf32>
    %409 = tpu.matmul %374, %408, %cst_144 {dimension_numbers = #tpu.dot_dimension_numbers<[1], [0], [0], [1], [0, 0, 1, 1], [], []>} : vector<4x128xf32>, vector<128x512xf32>, vector<4x512xf32> -> vector<4x512xf32>
    %410 = arith.addf %406, %409 : vector<4x512xf32>
    %411 = vector.extract_strided_slice %410 {offsets = [0, 0], sizes = [4, 384], strides = [1, 1]} : vector<4x512xf32> to vector<4x384xf32>
    %412 = arith.negf %411 : vector<4x384xf32>
    %413 = math.exp %412 : vector<4x384xf32>
    %cst_145 = arith.constant 1.000000e+00 : f32
    %414 = vector.broadcast %cst_145 : f32 to vector<4x384xf32>
    %415 = arith.addf %414, %413 : vector<4x384xf32>
    %416 = arith.divf %414, %415 : vector<4x384xf32>
    %417 = vector.extract_strided_slice %416 {offsets = [0, 0], sizes = [4, 128], strides = [1, 1]} : vector<4x384xf32> to vector<4x128xf32>
    %418 = vector.extract_strided_slice %416 {offsets = [0, 128], sizes = [4, 128], strides = [1, 1]} : vector<4x384xf32> to vector<4x128xf32>
    %419 = vector.extract_strided_slice %416 {offsets = [0, 256], sizes = [4, 128], strides = [1, 1]} : vector<4x384xf32> to vector<4x128xf32>
    %420 = vector.extract_strided_slice %410 {offsets = [0, 384], sizes = [4, 128], strides = [1, 1]} : vector<4x512xf32> to vector<4x128xf32>
    %421 = math.tanh %420 : vector<4x128xf32>
    %422 = arith.mulf %418, %372 : vector<4x128xf32>
    %423 = arith.mulf %417, %421 : vector<4x128xf32>
    %424 = arith.addf %422, %423 : vector<4x128xf32>
    %425 = math.tanh %424 : vector<4x128xf32>
    %426 = arith.mulf %419, %425 : vector<4x128xf32>
    %c0_146 = arith.constant 0 : index
    %c0_147 = arith.constant 0 : index
    %427 = vector.load %arg4[%c0_146, %c0_147] : memref<128x512xf32, #tpu.memory_space<vmem>>, vector<128x512xf32>
    %cst_148 = arith.constant dense<0.000000e+00> : vector<4x512xf32>
    %428 = tpu.matmul %426, %427, %cst_148 {dimension_numbers = #tpu.dot_dimension_numbers<[1], [0], [0], [1], [0, 0, 1, 1], [], []>} : vector<4x128xf32>, vector<128x512xf32>, vector<4x512xf32> -> vector<4x512xf32>
    %c0_149 = arith.constant 0 : index
    %c0_150 = arith.constant 0 : index
    %429 = vector.load %arg5[%c0_149, %c0_150] : memref<128x512xf32, #tpu.memory_space<vmem>>, vector<128x512xf32>
    %cst_151 = arith.constant dense<0.000000e+00> : vector<4x512xf32>
    %430 = tpu.matmul %396, %429, %cst_151 {dimension_numbers = #tpu.dot_dimension_numbers<[1], [0], [0], [1], [0, 0, 1, 1], [], []>} : vector<4x128xf32>, vector<128x512xf32>, vector<4x512xf32> -> vector<4x512xf32>
    %431 = arith.addf %428, %430 : vector<4x512xf32>
    %432 = arith.addf %431, %2 : vector<4x512xf32>
    %433 = vector.extract_strided_slice %432 {offsets = [0, 0], sizes = [4, 384], strides = [1, 1]} : vector<4x512xf32> to vector<4x384xf32>
    %434 = arith.negf %433 : vector<4x384xf32>
    %435 = math.exp %434 : vector<4x384xf32>
    %cst_152 = arith.constant 1.000000e+00 : f32
    %436 = vector.broadcast %cst_152 : f32 to vector<4x384xf32>
    %437 = arith.addf %436, %435 : vector<4x384xf32>
    %438 = arith.divf %436, %437 : vector<4x384xf32>
    %439 = vector.extract_strided_slice %438 {offsets = [0, 0], sizes = [4, 128], strides = [1, 1]} : vector<4x384xf32> to vector<4x128xf32>
    %440 = vector.extract_strided_slice %438 {offsets = [0, 128], sizes = [4, 128], strides = [1, 1]} : vector<4x384xf32> to vector<4x128xf32>
    %441 = vector.extract_strided_slice %438 {offsets = [0, 256], sizes = [4, 128], strides = [1, 1]} : vector<4x384xf32> to vector<4x128xf32>
    %442 = vector.extract_strided_slice %432 {offsets = [0, 384], sizes = [4, 128], strides = [1, 1]} : vector<4x512xf32> to vector<4x128xf32>
    %443 = math.tanh %442 : vector<4x128xf32>
    %444 = arith.mulf %440, %394 : vector<4x128xf32>
    %445 = arith.mulf %439, %443 : vector<4x128xf32>
    %446 = arith.addf %444, %445 : vector<4x128xf32>
    %447 = math.tanh %446 : vector<4x128xf32>
    %448 = arith.mulf %441, %447 : vector<4x128xf32>
    %449 = arith.index_cast %407 : i32 to index
    %c0_153 = arith.constant 0 : index
    %c0_154 = arith.constant 0 : index
    %450 = vector.load %arg13[%449, %c0_153, %c0_154] : memref<11x4x128xf32, #tpu.memory_space<vmem>>, vector<1x4x128xf32>
    %451 = vector.shape_cast %450 : vector<1x4x128xf32> to vector<4x128xf32>
    %452 = vector.shape_cast %448 : vector<4x128xf32> to vector<1x4x128xf32>
    tpu.vector_store %arg13[%449, %c0_153, %c0_154], %452 {strides = array<i32>} : memref<11x4x128xf32, #tpu.memory_space<vmem>>, vector<1x4x128xf32>,
    %c1_i32_155 = arith.constant 1 : i32
    %c0_156 = arith.constant 0 : index
    %c0_157 = arith.constant 0 : index
    %453 = vector.load %arg7[%c0_156, %c0_157] : memref<128x512xf32, #tpu.memory_space<vmem>>, vector<128x512xf32>
    %cst_158 = arith.constant dense<0.000000e+00> : vector<4x512xf32>
    %454 = tpu.matmul %448, %453, %cst_158 {dimension_numbers = #tpu.dot_dimension_numbers<[1], [0], [0], [1], [0, 0, 1, 1], [], []>} : vector<4x128xf32>, vector<128x512xf32>, vector<4x512xf32> -> vector<4x512xf32>
    %455 = arith.addf %403, %454 : vector<4x512xf32>
    %c8_i32_159 = arith.constant 8 : i32
    %456 = arith.addi %c8_i32_159, %c1_i32_155 : i32
    %c0_160 = arith.constant 0 : index
    %c0_161 = arith.constant 0 : index
    %457 = vector.load %arg2[%c0_160, %c0_161] : memref<128x512xf32, #tpu.memory_space<vmem>>, vector<128x512xf32>
    %cst_162 = arith.constant dense<0.000000e+00> : vector<4x512xf32>
    %458 = tpu.matmul %426, %457, %cst_162 {dimension_numbers = #tpu.dot_dimension_numbers<[1], [0], [0], [1], [0, 0, 1, 1], [], []>} : vector<4x128xf32>, vector<128x512xf32>, vector<4x512xf32> -> vector<4x512xf32>
    %459 = arith.addf %455, %458 : vector<4x512xf32>
    %460 = vector.extract_strided_slice %459 {offsets = [0, 0], sizes = [4, 384], strides = [1, 1]} : vector<4x512xf32> to vector<4x384xf32>
    %461 = arith.negf %460 : vector<4x384xf32>
    %462 = math.exp %461 : vector<4x384xf32>
    %cst_163 = arith.constant 1.000000e+00 : f32
    %463 = vector.broadcast %cst_163 : f32 to vector<4x384xf32>
    %464 = arith.addf %463, %462 : vector<4x384xf32>
    %465 = arith.divf %463, %464 : vector<4x384xf32>
    %466 = vector.extract_strided_slice %465 {offsets = [0, 0], sizes = [4, 128], strides = [1, 1]} : vector<4x384xf32> to vector<4x128xf32>
    %467 = vector.extract_strided_slice %465 {offsets = [0, 128], sizes = [4, 128], strides = [1, 1]} : vector<4x384xf32> to vector<4x128xf32>
    %468 = vector.extract_strided_slice %465 {offsets = [0, 256], sizes = [4, 128], strides = [1, 1]} : vector<4x384xf32> to vector<4x128xf32>
    %469 = vector.extract_strided_slice %459 {offsets = [0, 384], sizes = [4, 128], strides = [1, 1]} : vector<4x512xf32> to vector<4x128xf32>
    %470 = math.tanh %469 : vector<4x128xf32>
    %471 = arith.mulf %467, %424 : vector<4x128xf32>
    %472 = arith.mulf %466, %470 : vector<4x128xf32>
    %473 = arith.addf %471, %472 : vector<4x128xf32>
    %474 = math.tanh %473 : vector<4x128xf32>
    %475 = arith.mulf %468, %474 : vector<4x128xf32>
    %c0_164 = arith.constant 0 : index
    %c0_165 = arith.constant 0 : index
    %476 = vector.load %arg4[%c0_164, %c0_165] : memref<128x512xf32, #tpu.memory_space<vmem>>, vector<128x512xf32>
    %cst_166 = arith.constant dense<0.000000e+00> : vector<4x512xf32>
    %477 = tpu.matmul %475, %476, %cst_166 {dimension_numbers = #tpu.dot_dimension_numbers<[1], [0], [0], [1], [0, 0, 1, 1], [], []>} : vector<4x128xf32>, vector<128x512xf32>, vector<4x512xf32> -> vector<4x512xf32>
    %c0_167 = arith.constant 0 : index
    %c0_168 = arith.constant 0 : index
    %478 = vector.load %arg5[%c0_167, %c0_168] : memref<128x512xf32, #tpu.memory_space<vmem>>, vector<128x512xf32>
    %cst_169 = arith.constant dense<0.000000e+00> : vector<4x512xf32>
    %479 = tpu.matmul %448, %478, %cst_169 {dimension_numbers = #tpu.dot_dimension_numbers<[1], [0], [0], [1], [0, 0, 1, 1], [], []>} : vector<4x128xf32>, vector<128x512xf32>, vector<4x512xf32> -> vector<4x512xf32>
    %480 = arith.addf %477, %479 : vector<4x512xf32>
    %481 = arith.addf %480, %2 : vector<4x512xf32>
    %482 = vector.extract_strided_slice %481 {offsets = [0, 0], sizes = [4, 384], strides = [1, 1]} : vector<4x512xf32> to vector<4x384xf32>
    %483 = arith.negf %482 : vector<4x384xf32>
    %484 = math.exp %483 : vector<4x384xf32>
    %cst_170 = arith.constant 1.000000e+00 : f32
    %485 = vector.broadcast %cst_170 : f32 to vector<4x384xf32>
    %486 = arith.addf %485, %484 : vector<4x384xf32>
    %487 = arith.divf %485, %486 : vector<4x384xf32>
    %488 = vector.extract_strided_slice %487 {offsets = [0, 0], sizes = [4, 128], strides = [1, 1]} : vector<4x384xf32> to vector<4x128xf32>
    %489 = vector.extract_strided_slice %487 {offsets = [0, 128], sizes = [4, 128], strides = [1, 1]} : vector<4x384xf32> to vector<4x128xf32>
    %490 = vector.extract_strided_slice %487 {offsets = [0, 256], sizes = [4, 128], strides = [1, 1]} : vector<4x384xf32> to vector<4x128xf32>
    %491 = vector.extract_strided_slice %481 {offsets = [0, 384], sizes = [4, 128], strides = [1, 1]} : vector<4x512xf32> to vector<4x128xf32>
    %492 = math.tanh %491 : vector<4x128xf32>
    %493 = arith.mulf %489, %446 : vector<4x128xf32>
    %494 = arith.mulf %488, %492 : vector<4x128xf32>
    %495 = arith.addf %493, %494 : vector<4x128xf32>
    %496 = math.tanh %495 : vector<4x128xf32>
    %497 = arith.mulf %490, %496 : vector<4x128xf32>
    %498 = arith.index_cast %456 : i32 to index
    %c0_171 = arith.constant 0 : index
    %c0_172 = arith.constant 0 : index
    %499 = vector.load %arg13[%498, %c0_171, %c0_172] : memref<11x4x128xf32, #tpu.memory_space<vmem>>, vector<1x4x128xf32>
    %500 = vector.shape_cast %499 : vector<1x4x128xf32> to vector<4x128xf32>
    %501 = vector.shape_cast %497 : vector<4x128xf32> to vector<1x4x128xf32>
    tpu.vector_store %arg13[%498, %c0_171, %c0_172], %501 {strides = array<i32>} : memref<11x4x128xf32, #tpu.memory_space<vmem>>, vector<1x4x128xf32>,
    %c2_i32_173 = arith.constant 2 : i32
    %c0_174 = arith.constant 0 : index
    %c0_175 = arith.constant 0 : index
    %502 = vector.load %arg7[%c0_174, %c0_175] : memref<128x512xf32, #tpu.memory_space<vmem>>, vector<128x512xf32>
    %cst_176 = arith.constant dense<0.000000e+00> : vector<4x512xf32>
    %503 = tpu.matmul %497, %502, %cst_176 {dimension_numbers = #tpu.dot_dimension_numbers<[1], [0], [0], [1], [0, 0, 1, 1], [], []>} : vector<4x128xf32>, vector<128x512xf32>, vector<4x512xf32> -> vector<4x512xf32>
    %504 = arith.addf %403, %503 : vector<4x512xf32>
    %c8_i32_177 = arith.constant 8 : i32
    %505 = arith.addi %c8_i32_177, %c2_i32_173 : i32
    %c0_178 = arith.constant 0 : index
    %c0_179 = arith.constant 0 : index
    %506 = vector.load %arg2[%c0_178, %c0_179] : memref<128x512xf32, #tpu.memory_space<vmem>>, vector<128x512xf32>
    %cst_180 = arith.constant dense<0.000000e+00> : vector<4x512xf32>
    %507 = tpu.matmul %475, %506, %cst_180 {dimension_numbers = #tpu.dot_dimension_numbers<[1], [0], [0], [1], [0, 0, 1, 1], [], []>} : vector<4x128xf32>, vector<128x512xf32>, vector<4x512xf32> -> vector<4x512xf32>
    %508 = arith.addf %504, %507 : vector<4x512xf32>
    %509 = vector.extract_strided_slice %508 {offsets = [0, 0], sizes = [4, 384], strides = [1, 1]} : vector<4x512xf32> to vector<4x384xf32>
    %510 = arith.negf %509 : vector<4x384xf32>
    %511 = math.exp %510 : vector<4x384xf32>
    %cst_181 = arith.constant 1.000000e+00 : f32
    %512 = vector.broadcast %cst_181 : f32 to vector<4x384xf32>
    %513 = arith.addf %512, %511 : vector<4x384xf32>
    %514 = arith.divf %512, %513 : vector<4x384xf32>
    %515 = vector.extract_strided_slice %514 {offsets = [0, 0], sizes = [4, 128], strides = [1, 1]} : vector<4x384xf32> to vector<4x128xf32>
    %516 = vector.extract_strided_slice %514 {offsets = [0, 128], sizes = [4, 128], strides = [1, 1]} : vector<4x384xf32> to vector<4x128xf32>
    %517 = vector.extract_strided_slice %514 {offsets = [0, 256], sizes = [4, 128], strides = [1, 1]} : vector<4x384xf32> to vector<4x128xf32>
    %518 = vector.extract_strided_slice %508 {offsets = [0, 384], sizes = [4, 128], strides = [1, 1]} : vector<4x512xf32> to vector<4x128xf32>
    %519 = math.tanh %518 : vector<4x128xf32>
    %520 = arith.mulf %516, %473 : vector<4x128xf32>
    %521 = arith.mulf %515, %519 : vector<4x128xf32>
    %522 = arith.addf %520, %521 : vector<4x128xf32>
    %523 = math.tanh %522 : vector<4x128xf32>
    %524 = arith.mulf %517, %523 : vector<4x128xf32>
    %c0_182 = arith.constant 0 : index
    %c0_183 = arith.constant 0 : index
    %525 = vector.load %arg4[%c0_182, %c0_183] : memref<128x512xf32, #tpu.memory_space<vmem>>, vector<128x512xf32>
    %cst_184 = arith.constant dense<0.000000e+00> : vector<4x512xf32>
    %526 = tpu.matmul %524, %525, %cst_184 {dimension_numbers = #tpu.dot_dimension_numbers<[1], [0], [0], [1], [0, 0, 1, 1], [], []>} : vector<4x128xf32>, vector<128x512xf32>, vector<4x512xf32> -> vector<4x512xf32>
    %c0_185 = arith.constant 0 : index
    %c0_186 = arith.constant 0 : index
    %527 = vector.load %arg5[%c0_185, %c0_186] : memref<128x512xf32, #tpu.memory_space<vmem>>, vector<128x512xf32>
    %cst_187 = arith.constant dense<0.000000e+00> : vector<4x512xf32>
    %528 = tpu.matmul %497, %527, %cst_187 {dimension_numbers = #tpu.dot_dimension_numbers<[1], [0], [0], [1], [0, 0, 1, 1], [], []>} : vector<4x128xf32>, vector<128x512xf32>, vector<4x512xf32> -> vector<4x512xf32>
    %529 = arith.addf %526, %528 : vector<4x512xf32>
    %530 = arith.addf %529, %2 : vector<4x512xf32>
    %531 = vector.extract_strided_slice %530 {offsets = [0, 0], sizes = [4, 384], strides = [1, 1]} : vector<4x512xf32> to vector<4x384xf32>
    %532 = arith.negf %531 : vector<4x384xf32>
    %533 = math.exp %532 : vector<4x384xf32>
    %cst_188 = arith.constant 1.000000e+00 : f32
    %534 = vector.broadcast %cst_188 : f32 to vector<4x384xf32>
    %535 = arith.addf %534, %533 : vector<4x384xf32>
    %536 = arith.divf %534, %535 : vector<4x384xf32>
    %537 = vector.extract_strided_slice %536 {offsets = [0, 0], sizes = [4, 128], strides = [1, 1]} : vector<4x384xf32> to vector<4x128xf32>
    %538 = vector.extract_strided_slice %536 {offsets = [0, 128], sizes = [4, 128], strides = [1, 1]} : vector<4x384xf32> to vector<4x128xf32>
    %539 = vector.extract_strided_slice %536 {offsets = [0, 256], sizes = [4, 128], strides = [1, 1]} : vector<4x384xf32> to vector<4x128xf32>
    %540 = vector.extract_strided_slice %530 {offsets = [0, 384], sizes = [4, 128], strides = [1, 1]} : vector<4x512xf32> to vector<4x128xf32>
    %541 = math.tanh %540 : vector<4x128xf32>
    %542 = arith.mulf %538, %495 : vector<4x128xf32>
    %543 = arith.mulf %537, %541 : vector<4x128xf32>
    %544 = arith.addf %542, %543 : vector<4x128xf32>
    %545 = math.tanh %544 : vector<4x128xf32>
    %546 = arith.mulf %539, %545 : vector<4x128xf32>
    %547 = arith.index_cast %505 : i32 to index
    %c0_189 = arith.constant 0 : index
    %c0_190 = arith.constant 0 : index
    %548 = vector.load %arg13[%547, %c0_189, %c0_190] : memref<11x4x128xf32, #tpu.memory_space<vmem>>, vector<1x4x128xf32>
    %549 = vector.shape_cast %548 : vector<1x4x128xf32> to vector<4x128xf32>
    %550 = vector.shape_cast %546 : vector<4x128xf32> to vector<1x4x128xf32>
    tpu.vector_store %arg13[%547, %c0_189, %c0_190], %550 {strides = array<i32>} : memref<11x4x128xf32, #tpu.memory_space<vmem>>, vector<1x4x128xf32>,
    %c3_i32_191 = arith.constant 3 : i32
    %c0_192 = arith.constant 0 : index
    %c0_193 = arith.constant 0 : index
    %c0_194 = arith.constant 0 : index
    %551 = vector.load %arg13[%c0_192, %c0_193, %c0_194] : memref<11x4x128xf32, #tpu.memory_space<vmem>>, vector<11x4x128xf32>
    %552 = vector.shape_cast %3 : vector<1x128xf32> to vector<1x1x128xf32>
    %553 = vector.broadcast %552 : vector<1x1x128xf32> to vector<11x4x128xf32>
    %554 = arith.mulf %551, %553 : vector<11x4x128xf32>
    %cst_195 = arith.constant dense<0.000000e+00> : vector<11x4xf32>
    %555 = vector.multi_reduction <add>, %554, %cst_195 [2] : vector<11x4x128xf32> to vector<11x4xf32>
    %556 = vector.broadcast %4 : vector<1x1xf32> to vector<11x4xf32>
    %557 = arith.addf %555, %556 : vector<11x4xf32>
    %c0_196 = arith.constant 0 : index
    %c0_197 = arith.constant 0 : index
    %558 = vector.load %arg11[%c0_196, %c0_197] : memref<11x4xf32, #tpu.memory_space<vmem>>, vector<11x4xf32>
    tpu.vector_store %arg11[%c0_196, %c0_197], %557 {strides = array<i32>} : memref<11x4xf32, #tpu.memory_space<vmem>>, vector<11x4xf32>,
    return
  }
}

</mosaic_0001>

<llo_original>
// kernel: tpu_custom_call.1
$region0: #{tpu_custom_call.1}
  #allocation0 [shape = 'u32[]', space=smem, size = 0x4, offset = 0x4, fixed_abs, tag = 'smem constant byte address 0x4 - core index']
  #allocation1 [shape = 'u32[144,128]{1,0:T(1,128)}', space=vmem, size = 0x12000, scoped, tag = 'internal scratch']
  #allocation2 [shape = 'f32[8,4,512]{2,1,0:T(4,128)}', space=vmem, size = 0x10000, scoped, tag = 'scratch operand']
  #allocation3 [shape = 'f32[11,4,128]{2,1,0:T(4,128)}', space=vmem, size = 0x5800, scoped, tag = 'scratch operand']
  #allocation4 [shape = 'f32[1,1]{1,0:T(1,128)S(1)}', space=vmem, size = 0x200, scoped, tag = 'scoped memory for tpu_custom_call.1']
  %s0 = inlined_call_operand.vmem [shape: f32[8,4,1], index: 0, kind: input, shape index: {}]
  %s1 = inlined_call_operand.vmem [shape: f32[1,512], index: 1, kind: input, shape index: {}]
  %s2 = inlined_call_operand.hbm [shape: f32[128,512], index: 2, kind: input, shape index: {}]
  %s3 = inlined_call_operand.vmem [shape: f32[1,512], index: 3, kind: input, shape index: {}]
  %s4 = inlined_call_operand.hbm [shape: f32[128,512], index: 4, kind: input, shape index: {}]
  %s5 = inlined_call_operand.hbm [shape: f32[128,512], index: 5, kind: input, shape index: {}]
  %s6 = inlined_call_operand.vmem [shape: f32[1,512], index: 6, kind: input, shape index: {}]
  %s7 = inlined_call_operand.hbm [shape: f32[128,512], index: 7, kind: input, shape index: {}]
  %s8 = inlined_call_operand.vmem [shape: f32[1,512], index: 8, kind: input, shape index: {}]
  %s9 = inlined_call_operand.vmem [shape: f32[1,128], index: 9, kind: input, shape index: {}]
  %s10 = inlined_call_operand.<no memory space> [shape: f32[1,1], index: 10, kind: input, shape index: {}]
  %s11 = inlined_call_operand.vmem [shape: f32[11,4], index: 11, kind: output, shape index: {}]
  %s12 = sld [smem:[#allocation0]]
  $region70: #{tpu_custom_call.1} parent=0
    _
  %s14 = ssub.s32 1, %s12
  %s15 = scalar_select 0, %s14, %s12
  %v16 = vstv %s10
  %17 = vst [vmem:[#allocation4] sm:$0x1] %v16
  $region1: #{tpu_custom_call.1} parent=0
    #allocation5 [shape = 'u8[262144]{0}', space=vmem, size = 0x40000, scoped, tag = 'input window, operand 2, single buffered']
    #allocation6 [shape = 's32[1]{0}', space=sflag, size = 0x4, scoped, tag = 'scoped memory for tpu_custom_call.1']
    #allocation7 [shape = 'u8[262144]{0}', space=vmem, size = 0x40000, scoped, tag = 'input window, operand 4, single buffered']
    #allocation8 [shape = 's32[1]{0}', space=sflag, size = 0x4, scoped, tag = 'scoped memory for tpu_custom_call.1']
    #allocation9 [shape = 'u8[262144]{0}', space=vmem, size = 0x40000, scoped, tag = 'input window, operand 5, single buffered']
    #allocation10 [shape = 'u8[262144]{0}', space=vmem, size = 0x40000, scoped, tag = 'input window, operand 7, single buffered']
    #allocation11 [shape = 's32[1]{0}', space=sflag, size = 0x4, scoped, tag = 'scoped memory for tpu_custom_call.1']
    %18 = vsyncpa [#allocation6], 0
    %19 = vsyncpa [#allocation8], 0
    %20 = vsyncpa [#allocation11], 0
    // Predicated region
    $region2: #{tpu_custom_call.1} parent=1 // pred_check
      _
    $region3: #{tpu_custom_call.1} parent=1 // pred_check_branch
      %22 = sbr.rel (0) target = $region5
    $region4: #{tpu_custom_call.1} parent=1 // pred_region
      _
    $region5: #{tpu_custom_call.1} parent=1 // pred_fallthru
      _
    // Predicated region
    $region6: #{tpu_custom_call.1} parent=1 // pred_check
      _
    $region7: #{tpu_custom_call.1} parent=1 // pred_check_branch
      %24 = sbr.rel (0) target = $region9
    $region8: #{tpu_custom_call.1} parent=1 // pred_region
      _
    $region9: #{tpu_custom_call.1} parent=1 // pred_fallthru
      _
    // Predicated region
    $region10: #{tpu_custom_call.1} parent=1 // pred_check
      _
    $region11: #{tpu_custom_call.1} parent=1 // pred_check_branch
      %26 = sbr.rel (0) target = $region13
    $region12: #{tpu_custom_call.1} parent=1 // pred_region
      %s28 = ssub.s32 8192, 8192
      %29 = vsyncadd [#allocation6], %s28
      %s30 = sshll.u32 [#allocation5], 4
      %s31 = int_to_ptr.vmem [resolvable:$true] %s30
      %36 = dma.hbm_to_vmem [thread:$0]  %s2, 8192, %s31, [#allocation6], 512, 512, 32
    $region13: #{tpu_custom_call.1} parent=1 // pred_fallthru
      _
    // Predicated region
    $region14: #{tpu_custom_call.1} parent=1 // pred_check
      _
    $region15: #{tpu_custom_call.1} parent=1 // pred_check_branch
      %38 = sbr.rel (0) target = $region17
    $region16: #{tpu_custom_call.1} parent=1 // pred_region
      _
    $region17: #{tpu_custom_call.1} parent=1 // pred_fallthru
      _
    // Predicated region
    $region18: #{tpu_custom_call.1} parent=1 // pred_check
      _
    $region19: #{tpu_custom_call.1} parent=1 // pred_check_branch
      %40 = sbr.rel (0) target = $region21
    $region20: #{tpu_custom_call.1} parent=1 // pred_region
      %s42 = ssub.s32 8192, 8192
      %43 = vsyncadd [#allocation8], %s42
      %s44 = sshll.u32 [#allocation7], 4
      %s45 = int_to_ptr.vmem [resolvable:$true] %s44
      %50 = dma.hbm_to_vmem [thread:$0]  %s4, 8192, %s45, [#allocation8], 512, 512, 32
    $region21: #{tpu_custom_call.1} parent=1 // pred_fallthru
      _
    // Predicated region
    $region22: #{tpu_custom_call.1} parent=1 // pred_check
      _
    $region23: #{tpu_custom_call.1} parent=1 // pred_check_branch
      %52 = sbr.rel (0) target = $region25
    $region24: #{tpu_custom_call.1} parent=1 // pred_region
      %s54 = ssub.s32 8192, 8192
      %55 = vsyncadd [#allocation8], %s54
      %s56 = sshll.u32 [#allocation9], 4
      %s57 = int_to_ptr.vmem [resolvable:$true] %s56
      %62 = dma.hbm_to_vmem [thread:$0]  %s5, 8192, %s57, [#allocation8], 512, 512, 32
    $region25: #{tpu_custom_call.1} parent=1 // pred_fallthru
      _
    // Predicated region
    $region26: #{tpu_custom_call.1} parent=1 // pred_check
      _
    $region27: #{tpu_custom_call.1} parent=1 // pred_check_branch
      %64 = sbr.rel (0) target = $region29
    $region28: #{tpu_custom_call.1} parent=1 // pred_region
      _
    $region29: #{tpu_custom_call.1} parent=1 // pred_fallthru
      _
    // Predicated region
    $region30: #{tpu_custom_call.1} parent=1 // pred_check
      _
    $region31: #{tpu_custom_call.1} parent=1 // pred_check_branch
      %66 = sbr.rel (0) target = $region33
    $region32: #{tpu_custom_call.1} parent=1 // pred_region
      %s68 = ssub.s32 8192, 8192
      %69 = vsyncadd [#allocation11], %s68
      %s70 = sshll.u32 [#allocation10], 4
      %s71 = int_to_ptr.vmem [resolvable:$true] %s70
      %76 = dma.hbm_to_vmem [thread:$0]  %s7, 8192, %s71, [#allocation11], 512, 512, 32
    $region33: #{tpu_custom_call.1} parent=1 // pred_fallthru
      _
    // Predicated region
    $region34: #{tpu_custom_call.1} parent=1 // pred_check
      _
    $region35: #{tpu_custom_call.1} parent=1 // pred_check_branch
      %78 = sbr.rel (0) target = $region37
    $region36: #{tpu_custom_call.1} parent=1 // pred_region
      _
    $region37: #{tpu_custom_call.1} parent=1 // pred_fallthru
      _
    // Predicated region
    $region38: #{tpu_custom_call.1} parent=1 // pred_check
      _
    $region39: #{tpu_custom_call.1} parent=1 // pred_check_branch
      %80 = sbr.rel (0) target = $region41
    $region40: #{tpu_custom_call.1} parent=1 // pred_region
      _
    $region41: #{tpu_custom_call.1} parent=1 // pred_fallthru
      _
    // Predicated region
    $region42: #{tpu_custom_call.1} parent=1 // pred_check
      _
    $region43: #{tpu_custom_call.1} parent=1 // pred_check_branch
      %82 = sbr.rel (0) target = $region45
    $region44: #{tpu_custom_call.1} parent=1 // pred_region
      _
    $region45: #{tpu_custom_call.1} parent=1 // pred_fallthru
      _
    // Predicated region
    $region46: #{tpu_custom_call.1} parent=1 // pred_check
      _
    $region47: #{tpu_custom_call.1} parent=1 // pred_check_branch
      %84 = sbr.rel (0) target = $region49
    $region48: #{tpu_custom_call.1} parent=1 // pred_region
      %85 = dma.done [#allocation6], 8192
    $region49: #{tpu_custom_call.1} parent=1 // pred_fallthru
      _
    // Predicated region
    $region50: #{tpu_custom_call.1} parent=1 // pred_check
      _
    $region51: #{tpu_custom_call.1} parent=1 // pred_check_branch
      %87 = sbr.rel (0) target = $region53
    $region52: #{tpu_custom_call.1} parent=1 // pred_region
      %88 = dma.done [#allocation8], 8192
    $region53: #{tpu_custom_call.1} parent=1 // pred_fallthru
      _
    // Predicated region
    $region54: #{tpu_custom_call.1} parent=1 // pred_check
      _
    $region55: #{tpu_custom_call.1} parent=1 // pred_check_branch
      %90 = sbr.rel (0) target = $region57
    $region56: #{tpu_custom_call.1} parent=1 // pred_region
      %91 = dma.done [#allocation8], 8192
    $region57: #{tpu_custom_call.1} parent=1 // pred_fallthru
      _
    // Predicated region
    $region58: #{tpu_custom_call.1} parent=1 // pred_check
      _
    $region59: #{tpu_custom_call.1} parent=1 // pred_check_branch
      %93 = sbr.rel (0) target = $region61
    $region60: #{tpu_custom_call.1} parent=1 // pred_region
      %94 = dma.done [#allocation11], 8192
    $region61: #{tpu_custom_call.1} parent=1 // pred_fallthru
      _
    %v95 = vld [vmem:[%s6] sm:$0xf]
    %v97 = vlaneseq
    %v98 = vshrl.u32 %v97, 7
    %v99 = vsub.s32 0, %v98
    %v100 = vrot.slane %v95, %v99
    %v101 = vlaneseq
    %v102 = vshrl.u32 %v101, 7
    %v103 = vsub.s32 1, %v102
    %v104 = vrot.slane %v95, %v103
    %v105 = vlaneseq
    %v106 = vshrl.u32 %v105, 7
    %v107 = vsub.s32 2, %v106
    %v108 = vrot.slane %v95, %v107
    %v109 = vlaneseq
    %v110 = vshrl.u32 %v109, 7
    %v111 = vsub.s32 3, %v110
    %v112 = vrot.slane %v95, %v111
    %v117 = vld [vmem:[%s9] sm:$0x1]
    %v118 = vld [vmem:[#allocation4] sm:$0x1]
    %v119 = vld [vmem:[%s0] sm:$0xf]
    %v120 = vld [vmem:[%s0 + $0x4] sm:$0xf]
    %v121 = vld [vmem:[%s0 + $0x8] sm:$0xf]
    %v122 = vld [vmem:[%s0 + $0xc] sm:$0xf]
    %v123 = vld [vmem:[%s0 + $0x10] sm:$0xf]
    %v124 = vld [vmem:[%s0 + $0x14] sm:$0xf]
    %v125 = vld [vmem:[%s0 + $0x18] sm:$0xf]
    %v126 = vld [vmem:[%s0 + $0x1c] sm:$0xf]
    %v127 = vld [vmem:[%s1] sm:$0xf]
    %129 = vset.pattern.permute.xlu0 0
    %130 = vperm.xlu0 %129, %v119
    %v131 = vpop.permute.xlu0 %130
    %134 = vset.pattern.permute.xlu0 0
    %135 = vperm.xlu0 %134, %v120
    %v136 = vpop.permute.xlu0 %135
    %139 = vset.pattern.permute.xlu0 0
    %140 = vperm.xlu0 %139, %v121
    %v141 = vpop.permute.xlu0 %140
    %144 = vset.pattern.permute.xlu0 0
    %145 = vperm.xlu0 %144, %v122
    %v146 = vpop.permute.xlu0 %145
    %149 = vset.pattern.permute.xlu0 0
    %150 = vperm.xlu0 %149, %v123
    %v151 = vpop.permute.xlu0 %150
    %154 = vset.pattern.permute.xlu0 0
    %155 = vperm.xlu0 %154, %v124
    %v156 = vpop.permute.xlu0 %155
    %159 = vset.pattern.permute.xlu0 0
    %160 = vperm.xlu0 %159, %v125
    %v161 = vpop.permute.xlu0 %160
    %164 = vset.pattern.permute.xlu0 0
    %165 = vperm.xlu0 %164, %v126
    %v166 = vpop.permute.xlu0 %165
    %v169 = vlaneseq
    %v170 = vshrl.u32 %v169, 7
    %v171 = vsub.s32 0, %v170
    %v172 = vrot.slane %v127, %v171
    %v173 = vlaneseq
    %v174 = vshrl.u32 %v173, 7
    %v175 = vsub.s32 1, %v174
    %v176 = vrot.slane %v127, %v175
    %v177 = vlaneseq
    %v178 = vshrl.u32 %v177, 7
    %v179 = vsub.s32 2, %v178
    %v180 = vrot.slane %v127, %v179
    %v181 = vlaneseq
    %v182 = vshrl.u32 %v181, 7
    %v183 = vsub.s32 3, %v182
    %v184 = vrot.slane %v127, %v183
    %v189 = vmul.f32 %v131, %v172
    %v190 = vmul.f32 %v131, %v176
    %v191 = vmul.f32 %v131, %v180
    %v192 = vmul.f32 %v131, %v184
    %v193 = vmul.f32 %v136, %v172
    %v194 = vmul.f32 %v136, %v176
    %v195 = vmul.f32 %v136, %v180
    %v196 = vmul.f32 %v136, %v184
    %v197 = vmul.f32 %v141, %v172
    %v198 = vmul.f32 %v141, %v176
    %v199 = vmul.f32 %v141, %v180
    %v200 = vmul.f32 %v141, %v184
    %v201 = vmul.f32 %v146, %v172
    %v202 = vmul.f32 %v146, %v176
    %v203 = vmul.f32 %v146, %v180
    %v204 = vmul.f32 %v146, %v184
    %v205 = vmul.f32 %v151, %v172
    %v206 = vmul.f32 %v151, %v176
    %v207 = vmul.f32 %v151, %v180
    %v208 = vmul.f32 %v151, %v184
    %v209 = vmul.f32 %v156, %v172
    %v210 = vmul.f32 %v156, %v176
    %v211 = vmul.f32 %v156, %v180
    %v212 = vmul.f32 %v156, %v184
    %v213 = vmul.f32 %v161, %v172
    %v214 = vmul.f32 %v161, %v176
    %v215 = vmul.f32 %v161, %v180
    %v216 = vmul.f32 %v161, %v184
    %v217 = vmul.f32 %v166, %v172
    %v218 = vmul.f32 %v166, %v176
    %v219 = vmul.f32 %v166, %v180
    %v220 = vmul.f32 %v166, %v184
    %v221 = vld [vmem:[%s3] sm:$0xf]
    %v223 = vlaneseq
    %v224 = vshrl.u32 %v223, 7
    %v225 = vsub.s32 0, %v224
    %v226 = vrot.slane %v221, %v225
    %v227 = vlaneseq
    %v228 = vshrl.u32 %v227, 7
    %v229 = vsub.s32 1, %v228
    %v230 = vrot.slane %v221, %v229
    %v231 = vlaneseq
    %v232 = vshrl.u32 %v231, 7
    %v233 = vsub.s32 2, %v232
    %v234 = vrot.slane %v221, %v233
    %v235 = vlaneseq
    %v236 = vshrl.u32 %v235, 7
    %v237 = vsub.s32 3, %v236
    %v238 = vrot.slane %v221, %v237
    %v243 = vadd.f32 %v189, %v226
    %v244 = vadd.f32 %v190, %v230
    %v245 = vadd.f32 %v191, %v234
    %v246 = vadd.f32 %v192, %v238
    %v247 = vadd.f32 %v193, %v226
    %v248 = vadd.f32 %v194, %v230
    %v249 = vadd.f32 %v195, %v234
    %v250 = vadd.f32 %v196, %v238
    %v251 = vadd.f32 %v197, %v226
    %v252 = vadd.f32 %v198, %v230
    %v253 = vadd.f32 %v199, %v234
    %v254 = vadd.f32 %v200, %v238
    %v255 = vadd.f32 %v201, %v226
    %v256 = vadd.f32 %v202, %v230
    %v257 = vadd.f32 %v203, %v234
    %v258 = vadd.f32 %v204, %v238
    %v259 = vadd.f32 %v205, %v226
    %v260 = vadd.f32 %v206, %v230
    %v261 = vadd.f32 %v207, %v234
    %v262 = vadd.f32 %v208, %v238
    %v263 = vadd.f32 %v209, %v226
    %v264 = vadd.f32 %v210, %v230
    %v265 = vadd.f32 %v211, %v234
    %v266 = vadd.f32 %v212, %v238
    %v267 = vadd.f32 %v213, %v226
    %v268 = vadd.f32 %v214, %v230
    %v269 = vadd.f32 %v215, %v234
    %v270 = vadd.f32 %v216, %v238
    %v271 = vadd.f32 %v217, %v226
    %v272 = vadd.f32 %v218, %v230
    %v273 = vadd.f32 %v219, %v234
    %v274 = vadd.f32 %v220, %v238
    %v307 = vcombine.low %v243, %v244
    %v308 = vcombine.low %v245, %v246
    %v309 = vcombine.low %v247, %v248
    %v310 = vcombine.low %v249, %v250
    %v311 = vcombine.low %v251, %v252
    %v312 = vcombine.low %v253, %v254
    %v313 = vcombine.low %v255, %v256
    %v314 = vcombine.low %v257, %v258
    %v315 = vcombine.low %v259, %v260
    %v316 = vcombine.low %v261, %v262
    %v317 = vcombine.low %v263, %v264
    %v318 = vcombine.low %v265, %v266
    %v319 = vcombine.low %v267, %v268
    %v320 = vcombine.low %v269, %v270
    %v321 = vcombine.low %v271, %v272
    %v322 = vcombine.low %v273, %v274
    %339 = vst [vmem:[#allocation2] sm:$0xff] %v307
    %340 = vst [vmem:[#allocation2 + $0x8] sm:$0xff] %v308
    %341 = vst [vmem:[#allocation2 + $0x10] sm:$0xff] %v309
    %342 = vst [vmem:[#allocation2 + $0x18] sm:$0xff] %v310
    %343 = vst [vmem:[#allocation2 + $0x20] sm:$0xff] %v311
    %344 = vst [vmem:[#allocation2 + $0x28] sm:$0xff] %v312
    %345 = vst [vmem:[#allocation2 + $0x30] sm:$0xff] %v313
    %346 = vst [vmem:[#allocation2 + $0x38] sm:$0xff] %v314
    %347 = vst [vmem:[#allocation2 + $0x40] sm:$0xff] %v315
    %348 = vst [vmem:[#allocation2 + $0x48] sm:$0xff] %v316
    %349 = vst [vmem:[#allocation2 + $0x50] sm:$0xff] %v317
    %350 = vst [vmem:[#allocation2 + $0x58] sm:$0xff] %v318
    %351 = vst [vmem:[#allocation2 + $0x60] sm:$0xff] %v319
    %352 = vst [vmem:[#allocation2 + $0x68] sm:$0xff] %v320
    %353 = vst [vmem:[#allocation2 + $0x70] sm:$0xff] %v321
    %354 = vst [vmem:[#allocation2 + $0x78] sm:$0xff] %v322
    %v355 = vld [vmem:[#allocation2] sm:$0xff]
    %v356 = vld [vmem:[#allocation2 + $0x8] sm:$0xff]
    %v357 = vld [vmem:[#allocation5] sm:$0xff]
    %v358 = vld [vmem:[#allocation5 + $0x8] sm:$0xff]
    %v359 = vld [vmem:[#allocation5 + $0x10] sm:$0xff]
    %v360 = vld [vmem:[#allocation5 + $0x18] sm:$0xff]
    %v361 = vld [vmem:[#allocation5 + $0x20] sm:$0xff]
    %v362 = vld [vmem:[#allocation5 + $0x28] sm:$0xff]
    %v363 = vld [vmem:[#allocation5 + $0x30] sm:$0xff]
    %v364 = vld [vmem:[#allocation5 + $0x38] sm:$0xff]
    %v365 = vld [vmem:[#allocation5 + $0x40] sm:$0xff]
    %v366 = vld [vmem:[#allocation5 + $0x48] sm:$0xff]
    %v367 = vld [vmem:[#allocation5 + $0x50] sm:$0xff]
    %v368 = vld [vmem:[#allocation5 + $0x58] sm:$0xff]
    %v369 = vld [vmem:[#allocation5 + $0x60] sm:$0xff]
    %v370 = vld [vmem:[#allocation5 + $0x68] sm:$0xff]
    %v371 = vld [vmem:[#allocation5 + $0x70] sm:$0xff]
    %v372 = vld [vmem:[#allocation5 + $0x78] sm:$0xff]
    %v373 = vld [vmem:[#allocation5 + $0x80] sm:$0xff]
    %v374 = vld [vmem:[#allocation5 + $0x88] sm:$0xff]
    %v375 = vld [vmem:[#allocation5 + $0x90] sm:$0xff]
    %v376 = vld [vmem:[#allocation5 + $0x98] sm:$0xff]
    %v377 = vld [vmem:[#allocation5 + $0xa0] sm:$0xff]
    %v378 = vld [vmem:[#allocation5 + $0xa8] sm:$0xff]
    %v379 = vld [vmem:[#allocation5 + $0xb0] sm:$0xff]
    %v380 = vld [vmem:[#allocation5 + $0xb8] sm:$0xff]
    %v381 = vld [vmem:[#allocation5 + $0xc0] sm:$0xff]
    %v382 = vld [vmem:[#allocation5 + $0xc8] sm:$0xff]
    %v383 = vld [vmem:[#allocation5 + $0xd0] sm:$0xff]
    %v384 = vld [vmem:[#allocation5 + $0xd8] sm:$0xff]
    %v385 = vld [vmem:[#allocation5 + $0xe0] sm:$0xff]
    %v386 = vld [vmem:[#allocation5 + $0xe8] sm:$0xff]
    %v387 = vld [vmem:[#allocation5 + $0xf0] sm:$0xff]
    %v388 = vld [vmem:[#allocation5 + $0xf8] sm:$0xff]
    %v389 = vld [vmem:[#allocation5 + $0x100] sm:$0xff]
    %v390 = vld [vmem:[#allocation5 + $0x108] sm:$0xff]
    %v391 = vld [vmem:[#allocation5 + $0x110] sm:$0xff]
    %v392 = vld [vmem:[#allocation5 + $0x118] sm:$0xff]
    %v393 = vld [vmem:[#allocation5 + $0x120] sm:$0xff]
    %v394 = vld [vmem:[#allocation5 + $0x128] sm:$0xff]
    %v395 = vld [vmem:[#allocation5 + $0x130] sm:$0xff]
    %v396 = vld [vmem:[#allocation5 + $0x138] sm:$0xff]
    %v397 = vld [vmem:[#allocation5 + $0x140] sm:$0xff]
    %v398 = vld [vmem:[#allocation5 + $0x148] sm:$0xff]
    %v399 = vld [vmem:[#allocation5 + $0x150] sm:$0xff]
    %v400 = vld [vmem:[#allocation5 + $0x158] sm:$0xff]
    %v401 = vld [vmem:[#allocation5 + $0x160] sm:$0xff]
    %v402 = vld [vmem:[#allocation5 + $0x168] sm:$0xff]
    %v403 = vld [vmem:[#allocation5 + $0x170] sm:$0xff]
    %v404 = vld [vmem:[#allocation5 + $0x178] sm:$0xff]
    %v405 = vld [vmem:[#allocation5 + $0x180] sm:$0xff]
    %v406 = vld [vmem:[#allocation5 + $0x188] sm:$0xff]
    %v407 = vld [vmem:[#allocation5 + $0x190] sm:$0xff]
    %v408 = vld [vmem:[#allocation5 + $0x198] sm:$0xff]
    %v409 = vld [vmem:[#allocation5 + $0x1a0] sm:$0xff]
    %v410 = vld [vmem:[#allocation5 + $0x1a8] sm:$0xff]
    %v411 = vld [vmem:[#allocation5 + $0x1b0] sm:$0xff]
    %v412 = vld [vmem:[#allocation5 + $0x1b8] sm:$0xff]
    %v413 = vld [vmem:[#allocation5 + $0x1c0] sm:$0xff]
    %v414 = vld [vmem:[#allocation5 + $0x1c8] sm:$0xff]
    %v415 = vld [vmem:[#allocation5 + $0x1d0] sm:$0xff]
    %v416 = vld [vmem:[#allocation5 + $0x1d8] sm:$0xff]
    %v417 = vld [vmem:[#allocation5 + $0x1e0] sm:$0xff]
    %v418 = vld [vmem:[#allocation5 + $0x1e8] sm:$0xff]
    %v419 = vld [vmem:[#allocation5 + $0x1f0] sm:$0xff]
    %v420 = vld [vmem:[#allocation5 + $0x1f8] sm:$0xff]
    %421 = vmatprep.subr.mxu0 %v358
    %422 = vmatpush1.msra.mxu0 %v357
    %423 = vmatprep.subr.mxu0 %v362
    %424 = vmatpush1.msra.mxu0 %v361
    %425 = vmatprep.subr.mxu0 %v366
    %426 = vmatpush1.msra.mxu0 %v365
    %427 = vmatprep.subr.mxu0 %v370
    %428 = vmatpush1.msra.mxu0 %v369
    %429 = vmatprep.subr.mxu0 %v374
    %430 = vmatpush1.msra.mxu0 %v373
    %431 = vmatprep.subr.mxu0 %v378
    %432 = vmatpush1.msra.mxu0 %v377
    %433 = vmatprep.subr.mxu0 %v382
    %434 = vmatpush1.msra.mxu0 %v381
    %435 = vmatprep.subr.mxu0 %v386
    %436 = vmatpush1.msra.mxu0 %v385
    %437 = vmatprep.subr.mxu0 %v390
    %438 = vmatpush1.msra.mxu0 %v389
    %439 = vmatprep.subr.mxu0 %v394
    %440 = vmatpush1.msra.mxu0 %v393
    %441 = vmatprep.subr.mxu0 %v398
    %442 = vmatpush1.msra.mxu0 %v397
    %443 = vmatprep.subr.mxu0 %v402
    %444 = vmatpush1.msra.mxu0 %v401
    %445 = vmatprep.subr.mxu0 %v406
    %446 = vmatpush1.msra.mxu0 %v405
    %447 = vmatprep.subr.mxu0 %v410
    %448 = vmatpush1.msra.mxu0 %v409
    %449 = vmatprep.subr.mxu0 %v414
    %450 = vmatpush1.msra.mxu0 %v413
    %451 = vmatprep.subr.mxu0 %v418
    %452 = vmatpush1.msra.mxu0 %v417
    %453 = vmatprep.subr.mxu0 0.0
    %454 = vmatpush1.msra.mxu0 0.0
    %455 = vmatprep.subr.mxu0 0.0
    %456 = vmatpush1.msra.mxu0 0.0
    %457 = vmatprep.subr.mxu0 0.0
    %458 = vmatpush1.msra.mxu0 0.0
    %459 = vmatprep.subr.mxu0 0.0
    %460 = vmatpush1.msra.mxu0 0.0
    %461 = vmatprep.subr.mxu0 0.0
    %462 = vmatpush1.msra.mxu0 0.0
    %463 = vmatprep.subr.mxu0 0.0
    %464 = vmatpush1.msra.mxu0 0.0
    %465 = vmatprep.subr.mxu0 0.0
    %466 = vmatpush1.msra.mxu0 0.0
    %467 = vmatprep.subr.mxu0 0.0
    %468 = vmatpush1.msra.mxu0 0.0
    %469 = vmatprep.subr.mxu0 0.0
    %470 = vmatpush1.msra.mxu0 0.0
    %471 = vmatprep.subr.mxu0 0.0
    %472 = vmatpush1.msra.mxu0 0.0
    %473 = vmatprep.subr.mxu0 0.0
    %474 = vmatpush1.msra.mxu0 0.0
    %475 = vmatprep.subr.mxu0 0.0
    %476 = vmatpush1.msra.mxu0 0.0
    %477 = vmatprep.subr.mxu0 0.0
    %478 = vmatpush1.msra.mxu0 0.0
    %479 = vmatprep.subr.mxu0 0.0
    %480 = vmatpush1.msra.mxu0 0.0
    %481 = vmatprep.subr.mxu0 0.0
    %482 = vmatpush1.msra.mxu0 0.0
    %483 = vmatprep.subr.mxu0 0.0
    %484 = vmatpush1.msra.mxu0 0.0
    %485 = vmatprep.mubr.f32.mxu0 0.0
    %486 = vmatmul.mubr.f32.gmra.mrb[0].mxu0 0.0
    %v487 = vpop.f32.mrb[0].mxu0
    %v488 = vadd.f32 0.0, %v487
    %v489 = vpop.f32.mrb[0].mxu0
    %v490 = vadd.f32 0.0, %v489
    %491 = vdwg.mxu0
    %492 = vmatprep.subr.mxu0 %v360
    %493 = vmatpush1.msra.mxu0 %v359
    %494 = vmatprep.subr.mxu0 %v364
    %495 = vmatpush1.msra.mxu0 %v363
    %496 = vmatprep.subr.mxu0 %v368
    %497 = vmatpush1.msra.mxu0 %v367
    %498 = vmatprep.subr.mxu0 %v372
    %499 = vmatpush1.msra.mxu0 %v371
    %500 = vmatprep.subr.mxu0 %v376
    %501 = vmatpush1.msra.mxu0 %v375
    %502 = vmatprep.subr.mxu0 %v380
    %503 = vmatpush1.msra.mxu0 %v379
    %504 = vmatprep.subr.mxu0 %v384
    %505 = vmatpush1.msra.mxu0 %v383
    %506 = vmatprep.subr.mxu0 %v388
    %507 = vmatpush1.msra.mxu0 %v387
    %508 = vmatprep.subr.mxu0 %v392
    %509 = vmatpush1.msra.mxu0 %v391
    %510 = vmatprep.subr.mxu0 %v396
    %511 = vmatpush1.msra.mxu0 %v395
    %512 = vmatprep.subr.mxu0 %v400
    %513 = vmatpush1.msra.mxu0 %v399
    %514 = vmatprep.subr.mxu0 %v404
    %515 = vmatpush1.msra.mxu0 %v403
    %516 = vmatprep.subr.mxu0 %v408
    %517 = vmatpush1.msra.mxu0 %v407
    %518 = vmatprep.subr.mxu0 %v412
    %519 = vmatpush1.msra.mxu0 %v411
    %520 = vmatprep.subr.mxu0 %v416
    %521 = vmatpush1.msra.mxu0 %v415
    %522 = vmatprep.subr.mxu0 %v420
    %523 = vmatpush1.msra.mxu0 %v419
    %524 = vmatprep.subr.mxu0 0.0
    %525 = vmatpush1.msra.mxu0 0.0
    %526 = vmatprep.subr.mxu0 0.0
    %527 = vmatpush1.msra.mxu0 0.0
    %528 = vmatprep.subr.mxu0 0.0
    %529 = vmatpush1.msra.mxu0 0.0
    %530 = vmatprep.subr.mxu0 0.0
    %531 = vmatpush1.msra.mxu0 0.0
    %532 = vmatprep.subr.mxu0 0.0
    %533 = vmatpush1.msra.mxu0 0.0
    %534 = vmatprep.subr.mxu0 0.0
    %535 = vmatpush1.msra.mxu0 0.0
    %536 = vmatprep.subr.mxu0 0.0
    %537 = vmatpush1.msra.mxu0 0.0
    %538 = vmatprep.subr.mxu0 0.0
    %539 = vmatpush1.msra.mxu0 0.0
    %540 = vmatprep.subr.mxu0 0.0
    %541 = vmatpush1.msra.mxu0 0.0
    %542 = vmatprep.subr.mxu0 0.0
    %543 = vmatpush1.msra.mxu0 0.0
    %544 = vmatprep.subr.mxu0 0.0
    %545 = vmatpush1.msra.mxu0 0.0
    %546 = vmatprep.subr.mxu0 0.0
    %547 = vmatpush1.msra.mxu0 0.0
    %548 = vmatprep.subr.mxu0 0.0
    %549 = vmatpush1.msra.mxu0 0.0
    %550 = vmatprep.subr.mxu0 0.0
    %551 = vmatpush1.msra.mxu0 0.0
    %552 = vmatprep.subr.mxu0 0.0
    %553 = vmatpush1.msra.mxu0 0.0
    %554 = vmatprep.subr.mxu0 0.0
    %555 = vmatpush1.msra.mxu0 0.0
    %556 = vmatprep.mubr.f32.mxu0 0.0
    %557 = vmatmul.mubr.f32.gmra.mrb[0].mxu0 0.0
    %v558 = vpop.f32.mrb[0].mxu0
    %v559 = vadd.f32 0.0, %v558
    %v560 = vpop.f32.mrb[0].mxu0
    %v561 = vadd.f32 0.0, %v560
    %562 = vdwg.mxu0
    %v567 = vcombine.low %v488, %v490
    %v568 = vcombine.low %v559, %v561
    %v571 = vadd.f32 %v355, %v567
    %v572 = vadd.f32 %v356, %v568
    %v573 = vxor.u32 %v571, 2147483648
    %v574 = vxor.u32 %v572, 2147483648
    %v575 = vmul.f32 %v573, 1.442695
    %v576 = vpow.pop %v575
    %v577 = vmul.f32 %v574, 1.442695
    %v578 = vpow.pop %v577
    %v579 = vadd.f32 %v576, 1.0
    %v580 = vadd.f32 %v578, 1.0
    %v581 = vrcp.pop %v579
    %v582 = vmul.f32 1.0, %v581
    %v583 = vrcp.pop %v580
    %v584 = vmul.f32 1.0, %v583
    %v586 = vrot.slane %v572, 4
    %v588 = vtanh.pop %v586
    %v590 = vrot.slane %v582, 4
    %v592 = vmul.f32 %v590, 0.0
    %v593 = vmul.f32 %v582, %v588
    %v594 = vadd.f32 %v592, %v593
    %v595 = vtanh.pop %v594
    %v596 = vmul.f32 %v584, %v595
    %v597 = vld [vmem:[#allocation7] sm:$0xff]
    %v598 = vld [vmem:[#allocation7 + $0x8] sm:$0xff]
    %v599 = vld [vmem:[#allocation7 + $0x10] sm:$0xff]
    %v600 = vld [vmem:[#allocation7 + $0x18] sm:$0xff]
    %v601 = vld [vmem:[#allocation7 + $0x20] sm:$0xff]
    %v602 = vld [vmem:[#allocation7 + $0x28] sm:$0xff]
    %v603 = vld [vmem:[#allocation7 + $0x30] sm:$0xff]
    %v604 = vld [vmem:[#allocation7 + $0x38] sm:$0xff]
    %v605 = vld [vmem:[#allocation7 + $0x40] sm:$0xff]
    %v606 = vld [vmem:[#allocation7 + $0x48] sm:$0xff]
    %v607 = vld [vmem:[#allocation7 + $0x50] sm:$0xff]
    %v608 = vld [vmem:[#allocation7 + $0x58] sm:$0xff]
    %v609 = vld [vmem:[#allocation7 + $0x60] sm:$0xff]
    %v610 = vld [vmem:[#allocation7 + $0x68] sm:$0xff]
    %v611 = vld [vmem:[#allocation7 + $0x70] sm:$0xff]
    %v612 = vld [vmem:[#allocation7 + $0x78] sm:$0xff]
    %v613 = vld [vmem:[#allocation7 + $0x80] sm:$0xff]
    %v614 = vld [vmem:[#allocation7 + $0x88] sm:$0xff]
    %v615 = vld [vmem:[#allocation7 + $0x90] sm:$0xff]
    %v616 = vld [vmem:[#allocation7 + $0x98] sm:$0xff]
    %v617 = vld [vmem:[#allocation7 + $0xa0] sm:$0xff]
    %v618 = vld [vmem:[#allocation7 + $0xa8] sm:$0xff]
    %v619 = vld [vmem:[#allocation7 + $0xb0] sm:$0xff]
    %v620 = vld [vmem:[#allocation7 + $0xb8] sm:$0xff]
    %v621 = vld [vmem:[#allocation7 + $0xc0] sm:$0xff]
    %v622 = vld [vmem:[#allocation7 + $0xc8] sm:$0xff]
    %v623 = vld [vmem:[#allocation7 + $0xd0] sm:$0xff]
    %v624 = vld [vmem:[#allocation7 + $0xd8] sm:$0xff]
    %v625 = vld [vmem:[#allocation7 + $0xe0] sm:$0xff]
    %v626 = vld [vmem:[#allocation7 + $0xe8] sm:$0xff]
    %v627 = vld [vmem:[#allocation7 + $0xf0] sm:$0xff]
    %v628 = vld [vmem:[#allocation7 + $0xf8] sm:$0xff]
    %v629 = vld [vmem:[#allocation7 + $0x100] sm:$0xff]
    %v630 = vld [vmem:[#allocation7 + $0x108] sm:$0xff]
    %v631 = vld [vmem:[#allocation7 + $0x110] sm:$0xff]
    %v632 = vld [vmem:[#allocation7 + $0x118] sm:$0xff]
    %v633 = vld [vmem:[#allocation7 + $0x120] sm:$0xff]
    %v634 = vld [vmem:[#allocation7 + $0x128] sm:$0xff]
    %v635 = vld [vmem:[#allocation7 + $0x130] sm:$0xff]
    %v636 = vld [vmem:[#allocation7 + $0x138] sm:$0xff]
    %v637 = vld [vmem:[#allocation7 + $0x140] sm:$0xff]
    %v638 = vld [vmem:[#allocation7 + $0x148] sm:$0xff]
    %v639 = vld [vmem:[#allocation7 + $0x150] sm:$0xff]
    %v640 = vld [vmem:[#allocation7 + $0x158] sm:$0xff]
    %v641 = vld [vmem:[#allocation7 + $0x160] sm:$0xff]
    %v642 = vld [vmem:[#allocation7 + $0x168] sm:$0xff]
    %v643 = vld [vmem:[#allocation7 + $0x170] sm:$0xff]
    %v644 = vld [vmem:[#allocation7 + $0x178] sm:$0xff]
    %v645 = vld [vmem:[#allocation7 + $0x180] sm:$0xff]
    %v646 = vld [vmem:[#allocation7 + $0x188] sm:$0xff]
    %v647 = vld [vmem:[#allocation7 + $0x190] sm:$0xff]
    %v648 = vld [vmem:[#allocation7 + $0x198] sm:$0xff]
    %v649 = vld [vmem:[#allocation7 + $0x1a0] sm:$0xff]
    %v650 = vld [vmem:[#allocation7 + $0x1a8] sm:$0xff]
    %v651 = vld [vmem:[#allocation7 + $0x1b0] sm:$0xff]
    %v652 = vld [vmem:[#allocation7 + $0x1b8] sm:$0xff]
    %v653 = vld [vmem:[#allocation7 + $0x1c0] sm:$0xff]
    %v654 = vld [vmem:[#allocation7 + $0x1c8] sm:$0xff]
    %v655 = vld [vmem:[#allocation7 + $0x1d0] sm:$0xff]
    %v656 = vld [vmem:[#allocation7 + $0x1d8] sm:$0xff]
    %v657 = vld [vmem:[#allocation7 + $0x1e0] sm:$0xff]
    %v658 = vld [vmem:[#allocation7 + $0x1e8] sm:$0xff]
    %v659 = vld [vmem:[#allocation7 + $0x1f0] sm:$0xff]
    %v660 = vld [vmem:[#allocation7 + $0x1f8] sm:$0xff]
    %v661 = vld [vmem:[#allocation9] sm:$0xff]
    %v662 = vld [vmem:[#allocation9 + $0x8] sm:$0xff]
    %v663 = vld [vmem:[#allocation9 + $0x10] sm:$0xff]
    %v664 = vld [vmem:[#allocation9 + $0x18] sm:$0xff]
    %v665 = vld [vmem:[#allocation9 + $0x20] sm:$0xff]
    %v666 = vld [vmem:[#allocation9 + $0x28] sm:$0xff]
    %v667 = vld [vmem:[#allocation9 + $0x30] sm:$0xff]
    %v668 = vld [vmem:[#allocation9 + $0x38] sm:$0xff]
    %v669 = vld [vmem:[#allocation9 + $0x40] sm:$0xff]
    %v670 = vld [vmem:[#allocation9 + $0x48] sm:$0xff]
    %v671 = vld [vmem:[#allocation9 + $0x50] sm:$0xff]
    %v672 = vld [vmem:[#allocation9 + $0x58] sm:$0xff]
    %v673 = vld [vmem:[#allocation9 + $0x60] sm:$0xff]
    %v674 = vld [vmem:[#allocation9 + $0x68] sm:$0xff]
    %v675 = vld [vmem:[#allocation9 + $0x70] sm:$0xff]
    %v676 = vld [vmem:[#allocation9 + $0x78] sm:$0xff]
    %v677 = vld [vmem:[#allocation9 + $0x80] sm:$0xff]
    %v678 = vld [vmem:[#allocation9 + $0x88] sm:$0xff]
    %v679 = vld [vmem:[#allocation9 + $0x90] sm:$0xff]
    %v680 = vld [vmem:[#allocation9 + $0x98] sm:$0xff]
    %v681 = vld [vmem:[#allocation9 + $0xa0] sm:$0xff]
    %v682 = vld [vmem:[#allocation9 + $0xa8] sm:$0xff]
    %v683 = vld [vmem:[#allocation9 + $0xb0] sm:$0xff]
    %v684 = vld [vmem:[#allocation9 + $0xb8] sm:$0xff]
    %v685 = vld [vmem:[#allocation9 + $0xc0] sm:$0xff]
    %v686 = vld [vmem:[#allocation9 + $0xc8] sm:$0xff]
    %v687 = vld [vmem:[#allocation9 + $0xd0] sm:$0xff]
    %v688 = vld [vmem:[#allocation9 + $0xd8] sm:$0xff]
    %v689 = vld [vmem:[#allocation9 + $0xe0] sm:$0xff]
    %v690 = vld [vmem:[#allocation9 + $0xe8] sm:$0xff]
    %v691 = vld [vmem:[#allocation9 + $0xf0] sm:$0xff]
    %v692 = vld [vmem:[#allocation9 + $0xf8] sm:$0xff]
    %v693 = vld [vmem:[#allocation9 + $0x100] sm:$0xff]
    %v694 = vld [vmem:[#allocation9 + $0x108] sm:$0xff]
    %v695 = vld [vmem:[#allocation9 + $0x110] sm:$0xff]
    %v696 = vld [vmem:[#allocation9 + $0x118] sm:$0xff]
    %v697 = vld [vmem:[#allocation9 + $0x120] sm:$0xff]
    %v698 = vld [vmem:[#allocation9 + $0x128] sm:$0xff]
    %v699 = vld [vmem:[#allocation9 + $0x130] sm:$0xff]
    %v700 = vld [vmem:[#allocation9 + $0x138] sm:$0xff]
    %v701 = vld [vmem:[#allocation9 + $0x140] sm:$0xff]
    %v702 = vld [vmem:[#allocation9 + $0x148] sm:$0xff]
    %v703 = vld [vmem:[#allocation9 + $0x150] sm:$0xff]
    %v704 = vld [vmem:[#allocation9 + $0x158] sm:$0xff]
    %v705 = vld [vmem:[#allocation9 + $0x160] sm:$0xff]
    %v706 = vld [vmem:[#allocation9 + $0x168] sm:$0xff]
    %v707 = vld [vmem:[#allocation9 + $0x170] sm:$0xff]
    %v708 = vld [vmem:[#allocation9 + $0x178] sm:$0xff]
    %v709 = vld [vmem:[#allocation9 + $0x180] sm:$0xff]
    %v710 = vld [vmem:[#allocation9 + $0x188] sm:$0xff]
    %v711 = vld [vmem:[#allocation9 + $0x190] sm:$0xff]
    %v712 = vld [vmem:[#allocation9 + $0x198] sm:$0xff]
    %v713 = vld [vmem:[#allocation9 + $0x1a0] sm:$0xff]
    %v714 = vld [vmem:[#allocation9 + $0x1a8] sm:$0xff]
    %v715 = vld [vmem:[#allocation9 + $0x1b0] sm:$0xff]
    %v716 = vld [vmem:[#allocation9 + $0x1b8] sm:$0xff]
    %v717 = vld [vmem:[#allocation9 + $0x1c0] sm:$0xff]
    %v718 = vld [vmem:[#allocation9 + $0x1c8] sm:$0xff]
    %v719 = vld [vmem:[#allocation9 + $0x1d0] sm:$0xff]
    %v720 = vld [vmem:[#allocation9 + $0x1d8] sm:$0xff]
    %v721 = vld [vmem:[#allocation9 + $0x1e0] sm:$0xff]
    %v722 = vld [vmem:[#allocation9 + $0x1e8] sm:$0xff]
    %v723 = vld [vmem:[#allocation9 + $0x1f0] sm:$0xff]
    %v724 = vld [vmem:[#allocation9 + $0x1f8] sm:$0xff]
    %725 = vmatprep.subr.mxu0 %v662
    %726 = vmatpush1.msra.mxu0 %v661
    %727 = vmatprep.subr.mxu0 %v666
    %728 = vmatpush1.msra.mxu0 %v665
    %729 = vmatprep.subr.mxu0 %v670
    %730 = vmatpush1.msra.mxu0 %v669
    %731 = vmatprep.subr.mxu0 %v674
    %732 = vmatpush1.msra.mxu0 %v673
    %733 = vmatprep.subr.mxu0 %v678
    %734 = vmatpush1.msra.mxu0 %v677
    %735 = vmatprep.subr.mxu0 %v682
    %736 = vmatpush1.msra.mxu0 %v681
    %737 = vmatprep.subr.mxu0 %v686
    %738 = vmatpush1.msra.mxu0 %v685
    %739 = vmatprep.subr.mxu0 %v690
    %740 = vmatpush1.msra.mxu0 %v689
    %741 = vmatprep.subr.mxu0 %v694
    %742 = vmatpush1.msra.mxu0 %v693
    %743 = vmatprep.subr.mxu0 %v698
    %744 = vmatpush1.msra.mxu0 %v697
    %745 = vmatprep.subr.mxu0 %v702
    %746 = vmatpush1.msra.mxu0 %v701
    %747 = vmatprep.subr.mxu0 %v706
    %748 = vmatpush1.msra.mxu0 %v705
    %749 = vmatprep.subr.mxu0 %v710
    %750 = vmatpush1.msra.mxu0 %v709
    %751 = vmatprep.subr.mxu0 %v714
    %752 = vmatpush1.msra.mxu0 %v713
    %753 = vmatprep.subr.mxu0 %v718
    %754 = vmatpush1.msra.mxu0 %v717
    %755 = vmatprep.subr.mxu0 %v722
    %756 = vmatpush1.msra.mxu0 %v721
    %757 = vmatprep.subr.mxu0 0.0
    %758 = vmatpush1.msra.mxu0 0.0
    %759 = vmatprep.subr.mxu0 0.0
    %760 = vmatpush1.msra.mxu0 0.0
    %761 = vmatprep.subr.mxu0 0.0
    %762 = vmatpush1.msra.mxu0 0.0
    %763 = vmatprep.subr.mxu0 0.0
    %764 = vmatpush1.msra.mxu0 0.0
    %765 = vmatprep.subr.mxu0 0.0
    %766 = vmatpush1.msra.mxu0 0.0
    %767 = vmatprep.subr.mxu0 0.0
    %768 = vmatpush1.msra.mxu0 0.0
    %769 = vmatprep.subr.mxu0 0.0
    %770 = vmatpush1.msra.mxu0 0.0
    %771 = vmatprep.subr.mxu0 0.0
    %772 = vmatpush1.msra.mxu0 0.0
    %773 = vmatprep.subr.mxu0 0.0
    %774 = vmatpush1.msra.mxu0 0.0
    %775 = vmatprep.subr.mxu0 0.0
    %776 = vmatpush1.msra.mxu0 0.0
    %777 = vmatprep.subr.mxu0 0.0
    %778 = vmatpush1.msra.mxu0 0.0
    %779 = vmatprep.subr.mxu0 0.0
    %780 = vmatpush1.msra.mxu0 0.0
    %781 = vmatprep.subr.mxu0 0.0
    %782 = vmatpush1.msra.mxu0 0.0
    %783 = vmatprep.subr.mxu0 0.0
    %784 = vmatpush1.msra.mxu0 0.0
    %785 = vmatprep.subr.mxu0 0.0
    %786 = vmatpush1.msra.mxu0 0.0
    %787 = vmatprep.subr.mxu0 0.0
    %788 = vmatpush1.msra.mxu0 0.0
    %789 = vmatprep.mubr.f32.mxu0 0.0
    %790 = vmatmul.mubr.f32.gmra.mrb[0].mxu0 0.0
    %v791 = vpop.f32.mrb[0].mxu0
    %v792 = vadd.f32 0.0, %v791
    %v793 = vpop.f32.mrb[0].mxu0
    %v794 = vadd.f32 0.0, %v793
    %795 = vdwg.mxu0
    %796 = vmatprep.subr.mxu0 %v664
    %797 = vmatpush1.msra.mxu0 %v663
    %798 = vmatprep.subr.mxu0 %v668
    %799 = vmatpush1.msra.mxu0 %v667
    %800 = vmatprep.subr.mxu0 %v672
    %801 = vmatpush1.msra.mxu0 %v671
    %802 = vmatprep.subr.mxu0 %v676
    %803 = vmatpush1.msra.mxu0 %v675
    %804 = vmatprep.subr.mxu0 %v680
    %805 = vmatpush1.msra.mxu0 %v679
    %806 = vmatprep.subr.mxu0 %v684
    %807 = vmatpush1.msra.mxu0 %v683
    %808 = vmatprep.subr.mxu0 %v688
    %809 = vmatpush1.msra.mxu0 %v687
    %810 = vmatprep.subr.mxu0 %v692
    %811 = vmatpush1.msra.mxu0 %v691
    %812 = vmatprep.subr.mxu0 %v696
    %813 = vmatpush1.msra.mxu0 %v695
    %814 = vmatprep.subr.mxu0 %v700
    %815 = vmatpush1.msra.mxu0 %v699
    %816 = vmatprep.subr.mxu0 %v704
    %817 = vmatpush1.msra.mxu0 %v703
    %818 = vmatprep.subr.mxu0 %v708
    %819 = vmatpush1.msra.mxu0 %v707
    %820 = vmatprep.subr.mxu0 %v712
    %821 = vmatpush1.msra.mxu0 %v711
    %822 = vmatprep.subr.mxu0 %v716
    %823 = vmatpush1.msra.mxu0 %v715
    %824 = vmatprep.subr.mxu0 %v720
    %825 = vmatpush1.msra.mxu0 %v719
    %826 = vmatprep.subr.mxu0 %v724
    %827 = vmatpush1.msra.mxu0 %v723
    %828 = vmatprep.subr.mxu0 0.0
    %829 = vmatpush1.msra.mxu0 0.0
    %830 = vmatprep.subr.mxu0 0.0
    %831 = vmatpush1.msra.mxu0 0.0
    %832 = vmatprep.subr.mxu0 0.0
    %833 = vmatpush1.msra.mxu0 0.0
    %834 = vmatprep.subr.mxu0 0.0
    %835 = vmatpush1.msra.mxu0 0.0
    %836 = vmatprep.subr.mxu0 0.0
    %837 = vmatpush1.msra.mxu0 0.0
    %838 = vmatprep.subr.mxu0 0.0
    %839 = vmatpush1.msra.mxu0 0.0
    %840 = vmatprep.subr.mxu0 0.0
    %841 = vmatpush1.msra.mxu0 0.0
    %842 = vmatprep.subr.mxu0 0.0
    %843 = vmatpush1.msra.mxu0 0.0
    %844 = vmatprep.subr.mxu0 0.0
    %845 = vmatpush1.msra.mxu0 0.0
    %846 = vmatprep.subr.mxu0 0.0
    %847 = vmatpush1.msra.mxu0 0.0
    %848 = vmatprep.subr.mxu0 0.0
    %849 = vmatpush1.msra.mxu0 0.0
    %850 = vmatprep.subr.mxu0 0.0
    %851 = vmatpush1.msra.mxu0 0.0
    %852 = vmatprep.subr.mxu0 0.0
    %853 = vmatpush1.msra.mxu0 0.0
    %854 = vmatprep.subr.mxu0 0.0
    %855 = vmatpush1.msra.mxu0 0.0
    %856 = vmatprep.subr.mxu0 0.0
    %857 = vmatpush1.msra.mxu0 0.0
    %858 = vmatprep.subr.mxu0 0.0
    %859 = vmatpush1.msra.mxu0 0.0
    %860 = vmatprep.mubr.f32.mxu0 0.0
    %861 = vmatmul.mubr.f32.gmra.mrb[0].mxu0 0.0
    %v862 = vpop.f32.mrb[0].mxu0
    %v863 = vadd.f32 0.0, %v862
    %v864 = vpop.f32.mrb[0].mxu0
    %v865 = vadd.f32 0.0, %v864
    %866 = vdwg.mxu0
    %867 = vmatprep.subr.mxu0 %v598
    %868 = vmatpush1.msra.mxu0 %v597
    %869 = vmatprep.subr.mxu0 %v602
    %870 = vmatpush1.msra.mxu0 %v601
    %871 = vmatprep.subr.mxu0 %v606
    %872 = vmatpush1.msra.mxu0 %v605
    %873 = vmatprep.subr.mxu0 %v610
    %874 = vmatpush1.msra.mxu0 %v609
    %875 = vmatprep.subr.mxu0 %v614
    %876 = vmatpush1.msra.mxu0 %v613
    %877 = vmatprep.subr.mxu0 %v618
    %878 = vmatpush1.msra.mxu0 %v617
    %879 = vmatprep.subr.mxu0 %v622
    %880 = vmatpush1.msra.mxu0 %v621
    %881 = vmatprep.subr.mxu0 %v626
    %882 = vmatpush1.msra.mxu0 %v625
    %883 = vmatprep.subr.mxu0 %v630
    %884 = vmatpush1.msra.mxu0 %v629
    %885 = vmatprep.subr.mxu0 %v634
    %886 = vmatpush1.msra.mxu0 %v633
    %887 = vmatprep.subr.mxu0 %v638
    %888 = vmatpush1.msra.mxu0 %v637
    %889 = vmatprep.subr.mxu0 %v642
    %890 = vmatpush1.msra.mxu0 %v641
    %891 = vmatprep.subr.mxu0 %v646
    %892 = vmatpush1.msra.mxu0 %v645
    %893 = vmatprep.subr.mxu0 %v650
    %894 = vmatpush1.msra.mxu0 %v649
    %895 = vmatprep.subr.mxu0 %v654
    %896 = vmatpush1.msra.mxu0 %v653
    %897 = vmatprep.subr.mxu0 %v658
    %898 = vmatpush1.msra.mxu0 %v657
    %899 = vmatprep.subr.mxu0 0.0
    %900 = vmatpush1.msra.mxu0 0.0
    %901 = vmatprep.subr.mxu0 0.0
    %902 = vmatpush1.msra.mxu0 0.0
    %903 = vmatprep.subr.mxu0 0.0
    %904 = vmatpush1.msra.mxu0 0.0
    %905 = vmatprep.subr.mxu0 0.0
    %906 = vmatpush1.msra.mxu0 0.0
    %907 = vmatprep.subr.mxu0 0.0
    %908 = vmatpush1.msra.mxu0 0.0
    %909 = vmatprep.subr.mxu0 0.0
    %910 = vmatpush1.msra.mxu0 0.0
    %911 = vmatprep.subr.mxu0 0.0
    %912 = vmatpush1.msra.mxu0 0.0
    %913 = vmatprep.subr.mxu0 0.0
    %914 = vmatpush1.msra.mxu0 0.0
    %915 = vmatprep.subr.mxu0 0.0
    %916 = vmatpush1.msra.mxu0 0.0
    %917 = vmatprep.subr.mxu0 0.0
    %918 = vmatpush1.msra.mxu0 0.0
    %919 = vmatprep.subr.mxu0 0.0
    %920 = vmatpush1.msra.mxu0 0.0
    %921 = vmatprep.subr.mxu0 0.0
    %922 = vmatpush1.msra.mxu0 0.0
    %923 = vmatprep.subr.mxu0 0.0
    %924 = vmatpush1.msra.mxu0 0.0
    %925 = vmatprep.subr.mxu0 0.0
    %926 = vmatpush1.msra.mxu0 0.0
    %927 = vmatprep.subr.mxu0 0.0
    %928 = vmatpush1.msra.mxu0 0.0
    %929 = vmatprep.subr.mxu0 0.0
    %930 = vmatpush1.msra.mxu0 0.0
    %931 = vmatprep.mubr.f32.mxu0 0.0
    %932 = vmatmul.mubr.f32.gmra.mrb[0].mxu0 %v596
    %v933 = vpop.f32.mrb[0].mxu0
    %v934 = vadd.f32 %v792, %v933
    %v935 = vpop.f32.mrb[0].mxu0
    %v936 = vadd.f32 %v794, %v935
    %937 = vdwg.mxu0
    %938 = vmatprep.subr.mxu0 %v600
    %939 = vmatpush1.msra.mxu0 %v599
    %940 = vmatprep.subr.mxu0 %v604
    %941 = vmatpush1.msra.mxu0 %v603
    %942 = vmatprep.subr.mxu0 %v608
    %943 = vmatpush1.msra.mxu0 %v607
    %944 = vmatprep.subr.mxu0 %v612
    %945 = vmatpush1.msra.mxu0 %v611
    %946 = vmatprep.subr.mxu0 %v616
    %947 = vmatpush1.msra.mxu0 %v615
    %948 = vmatprep.subr.mxu0 %v620
    %949 = vmatpush1.msra.mxu0 %v619
    %950 = vmatprep.subr.mxu0 %v624
    %951 = vmatpush1.msra.mxu0 %v623
    %952 = vmatprep.subr.mxu0 %v628
    %953 = vmatpush1.msra.mxu0 %v627
    %954 = vmatprep.subr.mxu0 %v632
    %955 = vmatpush1.msra.mxu0 %v631
    %956 = vmatprep.subr.mxu0 %v636
    %957 = vmatpush1.msra.mxu0 %v635
    %958 = vmatprep.subr.mxu0 %v640
    %959 = vmatpush1.msra.mxu0 %v639
    %960 = vmatprep.subr.mxu0 %v644
    %961 = vmatpush1.msra.mxu0 %v643
    %962 = vmatprep.subr.mxu0 %v648
    %963 = vmatpush1.msra.mxu0 %v647
    %964 = vmatprep.subr.mxu0 %v652
    %965 = vmatpush1.msra.mxu0 %v651
    %966 = vmatprep.subr.mxu0 %v656
    %967 = vmatpush1.msra.mxu0 %v655
    %968 = vmatprep.subr.mxu0 %v660
    %969 = vmatpush1.msra.mxu0 %v659
    %970 = vmatprep.subr.mxu0 0.0
    %971 = vmatpush1.msra.mxu0 0.0
    %972 = vmatprep.subr.mxu0 0.0
    %973 = vmatpush1.msra.mxu0 0.0
    %974 = vmatprep.subr.mxu0 0.0
    %975 = vmatpush1.msra.mxu0 0.0
    %976 = vmatprep.subr.mxu0 0.0
    %977 = vmatpush1.msra.mxu0 0.0
    %978 = vmatprep.subr.mxu0 0.0
    %979 = vmatpush1.msra.mxu0 0.0
    %980 = vmatprep.subr.mxu0 0.0
    %981 = vmatpush1.msra.mxu0 0.0
    %982 = vmatprep.subr.mxu0 0.0
    %983 = vmatpush1.msra.mxu0 0.0
    %984 = vmatprep.subr.mxu0 0.0
    %985 = vmatpush1.msra.mxu0 0.0
    %986 = vmatprep.subr.mxu0 0.0
    %987 = vmatpush1.msra.mxu0 0.0
    %988 = vmatprep.subr.mxu0 0.0
    %989 = vmatpush1.msra.mxu0 0.0
    %990 = vmatprep.subr.mxu0 0.0
    %991 = vmatpush1.msra.mxu0 0.0
    %992 = vmatprep.subr.mxu0 0.0
    %993 = vmatpush1.msra.mxu0 0.0
    %994 = vmatprep.subr.mxu0 0.0
    %995 = vmatpush1.msra.mxu0 0.0
    %996 = vmatprep.subr.mxu0 0.0
    %997 = vmatpush1.msra.mxu0 0.0
    %998 = vmatprep.subr.mxu0 0.0
    %999 = vmatpush1.msra.mxu0 0.0
    %1000 = vmatprep.subr.mxu0 0.0
    %1001 = vmatpush1.msra.mxu0 0.0
    %1002 = vmatprep.mubr.f32.mxu0 0.0
    %1003 = vmatmul.mubr.f32.gmra.mrb[0].mxu0 %v596
    %v1004 = vpop.f32.mrb[0].mxu0
    %v1005 = vadd.f32 %v863, %v1004
    %v1006 = vpop.f32.mrb[0].mxu0
    %v1007 = vadd.f32 %v865, %v1006
    %1008 = vdwg.mxu0
    %v1009 = vadd.f32 %v934, %v100
    %v1010 = vadd.f32 %v936, %v104
    %v1011 = vadd.f32 %v1005, %v108
    %v1012 = vadd.f32 %v1007, %v112
    %v1013 = vxor.u32 %v1009, 2147483648
    %v1014 = vxor.u32 %v1010, 2147483648
    %v1015 = vxor.u32 %v1011, 2147483648
    %v1016 = vmul.f32 %v1013, 1.442695
    %v1017 = vpow.pop %v1016
    %v1018 = vmul.f32 %v1014, 1.442695
    %v1019 = vpow.pop %v1018
    %v1020 = vmul.f32 %v1015, 1.442695
    %v1021 = vpow.pop %v1020
    %v1022 = vadd.f32 %v1017, 1.0
    %v1023 = vadd.f32 %v1019, 1.0
    %v1024 = vadd.f32 %v1021, 1.0
    %v1025 = vrcp.pop %v1022
    %v1026 = vmul.f32 1.0, %v1025
    %v1027 = vrcp.pop %v1023
    %v1028 = vmul.f32 1.0, %v1027
    %v1029 = vrcp.pop %v1024
    %v1030 = vmul.f32 1.0, %v1029
    %v1031 = vtanh.pop %v1012
    %v1032 = vmul.f32 %v1028, 0.0
    %v1033 = vmul.f32 %v1026, %v1031
    %v1034 = vadd.f32 %v1032, %v1033
    %v1035 = vtanh.pop %v1034
    %v1036 = vmul.f32 %v1030, %v1035
    %1037 = vst [vmem:[#allocation3] sm:$0xf] %v1036
    %s1038 = scalar_lea.vmem [#allocation2], 16
    %v1039 = vld [vmem:[%s1038] sm:$0xff]
    %v1040 = vld [vmem:[%s1038 + $0x8] sm:$0xff]
    %v1041 = vld [vmem:[#allocation5] sm:$0xff]
    %v1042 = vld [vmem:[#allocation5 + $0x8] sm:$0xff]
    %v1043 = vld [vmem:[#allocation5 + $0x10] sm:$0xff]
    %v1044 = vld [vmem:[#allocation5 + $0x18] sm:$0xff]
    %v1045 = vld [vmem:[#allocation5 + $0x20] sm:$0xff]
    %v1046 = vld [vmem:[#allocation5 + $0x28] sm:$0xff]
    %v1047 = vld [vmem:[#allocation5 + $0x30] sm:$0xff]
    %v1048 = vld [vmem:[#allocation5 + $0x38] sm:$0xff]
    %v1049 = vld [vmem:[#allocation5 + $0x40] sm:$0xff]
    %v1050 = vld [vmem:[#allocation5 + $0x48] sm:$0xff]
    %v1051 = vld [vmem:[#allocation5 + $0x50] sm:$0xff]
    %v1052 = vld [vmem:[#allocation5 + $0x58] sm:$0xff]
    %v1053 = vld [vmem:[#allocation5 + $0x60] sm:$0xff]
    %v1054 = vld [vmem:[#allocation5 + $0x68] sm:$0xff]
    %v1055 = vld [vmem:[#allocation5 + $0x70] sm:$0xff]
    %v1056 = vld [vmem:[#allocation5 + $0x78] sm:$0xff]
    %v1057 = vld [vmem:[#allocation5 + $0x80] sm:$0xff]
    %v1058 = vld [vmem:[#allocation5 + $0x88] sm:$0xff]
    %v1059 = vld [vmem:[#allocation5 + $0x90] sm:$0xff]
    %v1060 = vld [vmem:[#allocation5 + $0x98] sm:$0xff]
    %v1061 = vld [vmem:[#allocation5 + $0xa0] sm:$0xff]
    %v1062 = vld [vmem:[#allocation5 + $0xa8] sm:$0xff]
    %v1063 = vld [vmem:[#allocation5 + $0xb0] sm:$0xff]
    %v1064 = vld [vmem:[#allocation5 + $0xb8] sm:$0xff]
    %v1065 = vld [vmem:[#allocation5 + $0xc0] sm:$0xff]
    %v1066 = vld [vmem:[#allocation5 + $0xc8] sm:$0xff]
    %v1067 = vld [vmem:[#allocation5 + $0xd0] sm:$0xff]
    %v1068 = vld [vmem:[#allocation5 + $0xd8] sm:$0xff]
    %v1069 = vld [vmem:[#allocation5 + $0xe0] sm:$0xff]
    %v1070 = vld [vmem:[#allocation5 + $0xe8] sm:$0xff]
    %v1071 = vld [vmem:[#allocation5 + $0xf0] sm:$0xff]
    %v1072 = vld [vmem:[#allocation5 + $0xf8] sm:$0xff]
    %v1073 = vld [vmem:[#allocation5 + $0x100] sm:$0xff]
    %v1074 = vld [vmem:[#allocation5 + $0x108] sm:$0xff]
    %v1075 = vld [vmem:[#allocation5 + $0x110] sm:$0xff]
    %v1076 = vld [vmem:[#allocation5 + $0x118] sm:$0xff]
    %v1077 = vld [vmem:[#allocation5 + $0x120] sm:$0xff]
    %v1078 = vld [vmem:[#allocation5 + $0x128] sm:$0xff]
    %v1079 = vld [vmem:[#allocation5 + $0x130] sm:$0xff]
    %v1080 = vld [vmem:[#allocation5 + $0x138] sm:$0xff]
    %v1081 = vld [vmem:[#allocation5 + $0x140] sm:$0xff]
    %v1082 = vld [vmem:[#allocation5 + $0x148] sm:$0xff]
    %v1083 = vld [vmem:[#allocation5 + $0x150] sm:$0xff]
    %v1084 = vld [vmem:[#allocation5 + $0x158] sm:$0xff]
    %v1085 = vld [vmem:[#allocation5 + $0x160] sm:$0xff]
    %v1086 = vld [vmem:[#allocation5 + $0x168] sm:$0xff]
    %v1087 = vld [vmem:[#allocation5 + $0x170] sm:$0xff]
    %v1088 = vld [vmem:[#allocation5 + $0x178] sm:$0xff]
    %v1089 = vld [vmem:[#allocation5 + $0x180] sm:$0xff]
    %v1090 = vld [vmem:[#allocation5 + $0x188] sm:$0xff]
    %v1091 = vld [vmem:[#allocation5 + $0x190] sm:$0xff]
    %v1092 = vld [vmem:[#allocation5 + $0x198] sm:$0xff]
    %v1093 = vld [vmem:[#allocation5 + $0x1a0] sm:$0xff]
    %v1094 = vld [vmem:[#allocation5 + $0x1a8] sm:$0xff]
    %v1095 = vld [vmem:[#allocation5 + $0x1b0] sm:$0xff]
    %v1096 = vld [vmem:[#allocation5 + $0x1b8] sm:$0xff]
    %v1097 = vld [vmem:[#allocation5 + $0x1c0] sm:$0xff]
    %v1098 = vld [vmem:[#allocation5 + $0x1c8] sm:$0xff]
    %v1099 = vld [vmem:[#allocation5 + $0x1d0] sm:$0xff]
    %v1100 = vld [vmem:[#allocation5 + $0x1d8] sm:$0xff]
    %v1101 = vld [vmem:[#allocation5 + $0x1e0] sm:$0xff]
    %v1102 = vld [vmem:[#allocation5 + $0x1e8] sm:$0xff]
    %v1103 = vld [vmem:[#allocation5 + $0x1f0] sm:$0xff]
    %v1104 = vld [vmem:[#allocation5 + $0x1f8] sm:$0xff]
    %1105 = vmatprep.subr.mxu0 %v1042
    %1106 = vmatpush1.msra.mxu0 %v1041
    %1107 = vmatprep.subr.mxu0 %v1046
    %1108 = vmatpush1.msra.mxu0 %v1045
    %1109 = vmatprep.subr.mxu0 %v1050
    %1110 = vmatpush1.msra.mxu0 %v1049
    %1111 = vmatprep.subr.mxu0 %v1054
    %1112 = vmatpush1.msra.mxu0 %v1053
    %1113 = vmatprep.subr.mxu0 %v1058
    %1114 = vmatpush1.msra.mxu0 %v1057
    %1115 = vmatprep.subr.mxu0 %v1062
    %1116 = vmatpush1.msra.mxu0 %v1061
    %1117 = vmatprep.subr.mxu0 %v1066
    %1118 = vmatpush1.msra.mxu0 %v1065
    %1119 = vmatprep.subr.mxu0 %v1070
    %1120 = vmatpush1.msra.mxu0 %v1069
    %1121 = vmatprep.subr.mxu0 %v1074
    %1122 = vmatpush1.msra.mxu0 %v1073
    %1123 = vmatprep.subr.mxu0 %v1078
    %1124 = vmatpush1.msra.mxu0 %v1077
    %1125 = vmatprep.subr.mxu0 %v1082
    %1126 = vmatpush1.msra.mxu0 %v1081
    %1127 = vmatprep.subr.mxu0 %v1086
    %1128 = vmatpush1.msra.mxu0 %v1085
    %1129 = vmatprep.subr.mxu0 %v1090
    %1130 = vmatpush1.msra.mxu0 %v1089
    %1131 = vmatprep.subr.mxu0 %v1094
    %1132 = vmatpush1.msra.mxu0 %v1093
    %1133 = vmatprep.subr.mxu0 %v1098
    %1134 = vmatpush1.msra.mxu0 %v1097
    %1135 = vmatprep.subr.mxu0 %v1102
    %1136 = vmatpush1.msra.mxu0 %v1101
    %1137 = vmatprep.subr.mxu0 0.0
    %1138 = vmatpush1.msra.mxu0 0.0
    %1139 = vmatprep.subr.mxu0 0.0
    %1140 = vmatpush1.msra.mxu0 0.0
    %1141 = vmatprep.subr.mxu0 0.0
    %1142 = vmatpush1.msra.mxu0 0.0
    %1143 = vmatprep.subr.mxu0 0.0
    %1144 = vmatpush1.msra.mxu0 0.0
    %1145 = vmatprep.subr.mxu0 0.0
    %1146 = vmatpush1.msra.mxu0 0.0
    %1147 = vmatprep.subr.mxu0 0.0
    %1148 = vmatpush1.msra.mxu0 0.0
    %1149 = vmatprep.subr.mxu0 0.0
    %1150 = vmatpush1.msra.mxu0 0.0
    %1151 = vmatprep.subr.mxu0 0.0
    %1152 = vmatpush1.msra.mxu0 0.0
    %1153 = vmatprep.subr.mxu0 0.0
    %1154 = vmatpush1.msra.mxu0 0.0
    %1155 = vmatprep.subr.mxu0 0.0
    %1156 = vmatpush1.msra.mxu0 0.0
    %1157 = vmatprep.subr.mxu0 0.0
    %1158 = vmatpush1.msra.mxu0 0.0
    %1159 = vmatprep.subr.mxu0 0.0
    %1160 = vmatpush1.msra.mxu0 0.0
    %1161 = vmatprep.subr.mxu0 0.0
    %1162 = vmatpush1.msra.mxu0 0.0
    %1163 = vmatprep.subr.mxu0 0.0
    %1164 = vmatpush1.msra.mxu0 0.0
    %1165 = vmatprep.subr.mxu0 0.0
    %1166 = vmatpush1.msra.mxu0 0.0
    %1167 = vmatprep.subr.mxu0 0.0
    %1168 = vmatpush1.msra.mxu0 0.0
    %1169 = vmatprep.mubr.f32.mxu0 0.0
    %1170 = vmatmul.mubr.f32.gmra.mrb[0].mxu0 %v596
    %v1171 = vpop.f32.mrb[0].mxu0
    %v1172 = vadd.f32 0.0, %v1171
    %v1173 = vpop.f32.mrb[0].mxu0
    %v1174 = vadd.f32 0.0, %v1173
    %1175 = vdwg.mxu0
    %1176 = vmatprep.subr.mxu0 %v1044
    %1177 = vmatpush1.msra.mxu0 %v1043
    %1178 = vmatprep.subr.mxu0 %v1048
    %1179 = vmatpush1.msra.mxu0 %v1047
    %1180 = vmatprep.subr.mxu0 %v1052
    %1181 = vmatpush1.msra.mxu0 %v1051
    %1182 = vmatprep.subr.mxu0 %v1056
    %1183 = vmatpush1.msra.mxu0 %v1055
    %1184 = vmatprep.subr.mxu0 %v1060
    %1185 = vmatpush1.msra.mxu0 %v1059
    %1186 = vmatprep.subr.mxu0 %v1064
    %1187 = vmatpush1.msra.mxu0 %v1063
    %1188 = vmatprep.subr.mxu0 %v1068
    %1189 = vmatpush1.msra.mxu0 %v1067
    %1190 = vmatprep.subr.mxu0 %v1072
    %1191 = vmatpush1.msra.mxu0 %v1071
    %1192 = vmatprep.subr.mxu0 %v1076
    %1193 = vmatpush1.msra.mxu0 %v1075
    %1194 = vmatprep.subr.mxu0 %v1080
    %1195 = vmatpush1.msra.mxu0 %v1079
    %1196 = vmatprep.subr.mxu0 %v1084
    %1197 = vmatpush1.msra.mxu0 %v1083
    %1198 = vmatprep.subr.mxu0 %v1088
    %1199 = vmatpush1.msra.mxu0 %v1087
    %1200 = vmatprep.subr.mxu0 %v1092
    %1201 = vmatpush1.msra.mxu0 %v1091
    %1202 = vmatprep.subr.mxu0 %v1096
    %1203 = vmatpush1.msra.mxu0 %v1095
    %1204 = vmatprep.subr.mxu0 %v1100
    %1205 = vmatpush1.msra.mxu0 %v1099
    %1206 = vmatprep.subr.mxu0 %v1104
    %1207 = vmatpush1.msra.mxu0 %v1103
    %1208 = vmatprep.subr.mxu0 0.0
    %1209 = vmatpush1.msra.mxu0 0.0
    %1210 = vmatprep.subr.mxu0 0.0
    %1211 = vmatpush1.msra.mxu0 0.0
    %1212 = vmatprep.subr.mxu0 0.0
    %1213 = vmatpush1.msra.mxu0 0.0
    %1214 = vmatprep.subr.mxu0 0.0
    %1215 = vmatpush1.msra.mxu0 0.0
    %1216 = vmatprep.subr.mxu0 0.0
    %1217 = vmatpush1.msra.mxu0 0.0
    %1218 = vmatprep.subr.mxu0 0.0
    %1219 = vmatpush1.msra.mxu0 0.0
    %1220 = vmatprep.subr.mxu0 0.0
    %1221 = vmatpush1.msra.mxu0 0.0
    %1222 = vmatprep.subr.mxu0 0.0
    %1223 = vmatpush1.msra.mxu0 0.0
    %1224 = vmatprep.subr.mxu0 0.0
    %1225 = vmatpush1.msra.mxu0 0.0
    %1226 = vmatprep.subr.mxu0 0.0
    %1227 = vmatpush1.msra.mxu0 0.0
    %1228 = vmatprep.subr.mxu0 0.0
    %1229 = vmatpush1.msra.mxu0 0.0
    %1230 = vmatprep.subr.mxu0 0.0
    %1231 = vmatpush1.msra.mxu0 0.0
    %1232 = vmatprep.subr.mxu0 0.0
    %1233 = vmatpush1.msra.mxu0 0.0
    %1234 = vmatprep.subr.mxu0 0.0
    %1235 = vmatpush1.msra.mxu0 0.0
    %1236 = vmatprep.subr.mxu0 0.0
    %1237 = vmatpush1.msra.mxu0 0.0
    %1238 = vmatprep.subr.mxu0 0.0
    %1239 = vmatpush1.msra.mxu0 0.0
    %1240 = vmatprep.mubr.f32.mxu0 0.0
    %1241 = vmatmul.mubr.f32.gmra.mrb[0].mxu0 %v596
    %v1242 = vpop.f32.mrb[0].mxu0
    %v1243 = vadd.f32 0.0, %v1242
    %v1244 = vpop.f32.mrb[0].mxu0
    %v1245 = vadd.f32 0.0, %v1244
    %1246 = vdwg.mxu0
    %v1251 = vcombine.low %v1172, %v1174
    %v1252 = vcombine.low %v1243, %v1245
    %v1255 = vadd.f32 %v1039, %v1251
    %v1256 = vadd.f32 %v1040, %v1252
    %v1257 = vxor.u32 %v1255, 2147483648
    %v1258 = vxor.u32 %v1256, 2147483648
    %v1259 = vmul.f32 %v1257, 1.442695
    %v1260 = vpow.pop %v1259
    %v1261 = vmul.f32 %v1258, 1.442695
    %v1262 = vpow.pop %v1261
    %v1263 = vadd.f32 %v1260, 1.0
    %v1264 = vadd.f32 %v1262, 1.0
    %v1265 = vrcp.pop %v1263
    %v1266 = vmul.f32 1.0, %v1265
    %v1267 = vrcp.pop %v1264
    %v1268 = vmul.f32 1.0, %v1267
    %v1270 = vrot.slane %v1256, 4
    %v1272 = vtanh.pop %v1270
    %v1274 = vrot.slane %v1266, 4
    %v1276 = vmul.f32 %v1274, %v594
    %v1277 = vmul.f32 %v1266, %v1272
    %v1278 = vadd.f32 %v1276, %v1277
    %v1279 = vtanh.pop %v1278
    %v1280 = vmul.f32 %v1268, %v1279
    %v1281 = vld [vmem:[#allocation7] sm:$0xff]
    %v1282 = vld [vmem:[#allocation7 + $0x8] sm:$0xff]
    %v1283 = vld [vmem:[#allocation7 + $0x10] sm:$0xff]
    %v1284 = vld [vmem:[#allocation7 + $0x18] sm:$0xff]
    %v1285 = vld [vmem:[#allocation7 + $0x20] sm:$0xff]
    %v1286 = vld [vmem:[#allocation7 + $0x28] sm:$0xff]
    %v1287 = vld [vmem:[#allocation7 + $0x30] sm:$0xff]
    %v1288 = vld [vmem:[#allocation7 + $0x38] sm:$0xff]
    %v1289 = vld [vmem:[#allocation7 + $0x40] sm:$0xff]
    %v1290 = vld [vmem:[#allocation7 + $0x48] sm:$0xff]
    %v1291 = vld [vmem:[#allocation7 + $0x50] sm:$0xff]
    %v1292 = vld [vmem:[#allocation7 + $0x58] sm:$0xff]
    %v1293 = vld [vmem:[#allocation7 + $0x60] sm:$0xff]
    %v1294 = vld [vmem:[#allocation7 + $0x68] sm:$0xff]
    %v1295 = vld [vmem:[#allocation7 + $0x70] sm:$0xff]
    %v1296 = vld [vmem:[#allocation7 + $0x78] sm:$0xff]
    %v1297 = vld [vmem:[#allocation7 + $0x80] sm:$0xff]
    %v1298 = vld [vmem:[#allocation7 + $0x88] sm:$0xff]
    %v1299 = vld [vmem:[#allocation7 + $0x90] sm:$0xff]
    %v1300 = vld [vmem:[#allocation7 + $0x98] sm:$0xff]
    %v1301 = vld [vmem:[#allocation7 + $0xa0] sm:$0xff]
    %v1302 = vld [vmem:[#allocation7 + $0xa8] sm:$0xff]
    %v1303 = vld [vmem:[#allocation7 + $0xb0] sm:$0xff]
    %v1304 = vld [vmem:[#allocation7 + $0xb8] sm:$0xff]
    %v1305 = vld [vmem:[#allocation7 + $0xc0] sm:$0xff]
    %v1306 = vld [vmem:[#allocation7 + $0xc8] sm:$0xff]
    %v1307 = vld [vmem:[#allocation7 + $0xd0] sm:$0xff]
    %v1308 = vld [vmem:[#allocation7 + $0xd8] sm:$0xff]
    %v1309 = vld [vmem:[#allocation7 + $0xe0] sm:$0xff]
    %v1310 = vld [vmem:[#allocation7 + $0xe8] sm:$0xff]
    %v1311 = vld [vmem:[#allocation7 + $0xf0] sm:$0xff]
    %v1312 = vld [vmem:[#allocation7 + $0xf8] sm:$0xff]
    %v1313 = vld [vmem:[#allocation7 + $0x100] sm:$0xff]
    %v1314 = vld [vmem:[#allocation7 + $0x108] sm:$0xff]
    %v1315 = vld [vmem:[#allocation7 + $0x110] sm:$0xff]
    %v1316 = vld [vmem:[#allocation7 + $0x118] sm:$0xff]
    %v1317 = vld [vmem:[#allocation7 + $0x120] sm:$0xff]
    %v1318 = vld [vmem:[#allocation7 + $0x128] sm:$0xff]
    %v1319 = vld [vmem:[#allocation7 + $0x130] sm:$0xff]
    %v1320 = vld [vmem:[#allocation7 + $0x138] sm:$0xff]
    %v1321 = vld [vmem:[#allocation7 + $0x140] sm:$0xff]
    %v1322 = vld [vmem:[#allocation7 + $0x148] sm:$0xff]
    %v1323 = vld [vmem:[#allocation7 + $0x150] sm:$0xff]
    %v1324 = vld [vmem:[#allocation7 + $0x158] sm:$0xff]
    %v1325 = vld [vmem:[#allocation7 + $0x160] sm:$0xff]
    %v1326 = vld [vmem:[#allocation7 + $0x168] sm:$0xff]
    %v1327 = vld [vmem:[#allocation7 + $0x170] sm:$0xff]
    %v1328 = vld [vmem:[#allocation7 + $0x178] sm:$0xff]
    %v1329 = vld [vmem:[#allocation7 + $0x180] sm:$0xff]
    %v1330 = vld [vmem:[#allocation7 + $0x188] sm:$0xff]
    %v1331 = vld [vmem:[#allocation7 + $0x190] sm:$0xff]
    %v1332 = vld [vmem:[#allocation7 + $0x198] sm:$0xff]
    %v1333 = vld [vmem:[#allocation7 + $0x1a0] sm:$0xff]
    %v1334 = vld [vmem:[#allocation7 + $0x1a8] sm:$0xff]
    %v1335 = vld [vmem:[#allocation7 + $0x1b0] sm:$0xff]
    %v1336 = vld [vmem:[#allocation7 + $0x1b8] sm:$0xff]
    %v1337 = vld [vmem:[#allocation7 + $0x1c0] sm:$0xff]
    %v1338 = vld [vmem:[#allocation7 + $0x1c8] sm:$0xff]
    %v1339 = vld [vmem:[#allocation7 + $0x1d0] sm:$0xff]
    %v1340 = vld [vmem:[#allocation7 + $0x1d8] sm:$0xff]
    %v1341 = vld [vmem:[#allocation7 + $0x1e0] sm:$0xff]
    %v1342 = vld [vmem:[#allocation7 + $0x1e8] sm:$0xff]
    %v1343 = vld [vmem:[#allocation7 + $0x1f0] sm:$0xff]
    %v1344 = vld [vmem:[#allocation7 + $0x1f8] sm:$0xff]
    %v1345 = vld [vmem:[#allocation9] sm:$0xff]
    %v1346 = vld [vmem:[#allocation9 + $0x8] sm:$0xff]
    %v1347 = vld [vmem:[#allocation9 + $0x10] sm:$0xff]
    %v1348 = vld [vmem:[#allocation9 + $0x18] sm:$0xff]
    %v1349 = vld [vmem:[#allocation9 + $0x20] sm:$0xff]
    %v1350 = vld [vmem:[#allocation9 + $0x28] sm:$0xff]
    %v1351 = vld [vmem:[#allocation9 + $0x30] sm:$0xff]
    %v1352 = vld [vmem:[#allocation9 + $0x38] sm:$0xff]
    %v1353 = vld [vmem:[#allocation9 + $0x40] sm:$0xff]
    %v1354 = vld [vmem:[#allocation9 + $0x48] sm:$0xff]
    %v1355 = vld [vmem:[#allocation9 + $0x50] sm:$0xff]
    %v1356 = vld [vmem:[#allocation9 + $0x58] sm:$0xff]
    %v1357 = vld [vmem:[#allocation9 + $0x60] sm:$0xff]
    %v1358 = vld [vmem:[#allocation9 + $0x68] sm:$0xff]
    %v1359 = vld [vmem:[#allocation9 + $0x70] sm:$0xff]
    %v1360 = vld [vmem:[#allocation9 + $0x78] sm:$0xff]
    %v1361 = vld [vmem:[#allocation9 + $0x80] sm:$0xff]
    %v1362 = vld [vmem:[#allocation9 + $0x88] sm:$0xff]
    %v1363 = vld [vmem:[#allocation9 + $0x90] sm:$0xff]
    %v1364 = vld [vmem:[#allocation9 + $0x98] sm:$0xff]
    %v1365 = vld [vmem:[#allocation9 + $0xa0] sm:$0xff]
    %v1366 = vld [vmem:[#allocation9 + $0xa8] sm:$0xff]
    %v1367 = vld [vmem:[#allocation9 + $0xb0] sm:$0xff]
    %v1368 = vld [vmem:[#allocation9 + $0xb8] sm:$0xff]
    %v1369 = vld [vmem:[#allocation9 + $0xc0] sm:$0xff]
    %v1370 = vld [vmem:[#allocation9 + $0xc8] sm:$0xff]
    %v1371 = vld [vmem:[#allocation9 + $0xd0] sm:$0xff]
    %v1372 = vld [vmem:[#allocation9 + $0xd8] sm:$0xff]
    %v1373 = vld [vmem:[#allocation9 + $0xe0] sm:$0xff]
    %v1374 = vld [vmem:[#allocation9 + $0xe8] sm:$0xff]
    %v1375 = vld [vmem:[#allocation9 + $0xf0] sm:$0xff]
    %v1376 = vld [vmem:[#allocation9 + $0xf8] sm:$0xff]
    %v1377 = vld [vmem:[#allocation9 + $0x100] sm:$0xff]
    %v1378 = vld [vmem:[#allocation9 + $0x108] sm:$0xff]
    %v1379 = vld [vmem:[#allocation9 + $0x110] sm:$0xff]
    %v1380 = vld [vmem:[#allocation9 + $0x118] sm:$0xff]
    %v1381 = vld [vmem:[#allocation9 + $0x120] sm:$0xff]
    %v1382 = vld [vmem:[#allocation9 + $0x128] sm:$0xff]
    %v1383 = vld [vmem:[#allocation9 + $0x130] sm:$0xff]
    %v1384 = vld [vmem:[#allocation9 + $0x138] sm:$0xff]
    %v1385 = vld [vmem:[#allocation9 + $0x140] sm:$0xff]
    %v1386 = vld [vmem:[#allocation9 + $0x148] sm:$0xff]
    %v1387 = vld [vmem:[#allocation9 + $0x150] sm:$0xff]
    %v1388 = vld [vmem:[#allocation9 + $0x158] sm:$0xff]
    %v1389 = vld [vmem:[#allocation9 + $0x160] sm:$0xff]
    %v1390 = vld [vmem:[#allocation9 + $0x168] sm:$0xff]
    %v1391 = vld [vmem:[#allocation9 + $0x170] sm:$0xff]
    %v1392 = vld [vmem:[#allocation9 + $0x178] sm:$0xff]
    %v1393 = vld [vmem:[#allocation9 + $0x180] sm:$0xff]
    %v1394 = vld [vmem:[#allocation9 + $0x188] sm:$0xff]
    %v1395 = vld [vmem:[#allocation9 + $0x190] sm:$0xff]
    %v1396 = vld [vmem:[#allocation9 + $0x198] sm:$0xff]
    %v1397 = vld [vmem:[#allocation9 + $0x1a0] sm:$0xff]
    %v1398 = vld [vmem:[#allocation9 + $0x1a8] sm:$0xff]
    %v1399 = vld [vmem:[#allocation9 + $0x1b0] sm:$0xff]
    %v1400 = vld [vmem:[#allocation9 + $0x1b8] sm:$0xff]
    %v1401 = vld [vmem:[#allocation9 + $0x1c0] sm:$0xff]
    %v1402 = vld [vmem:[#allocation9 + $0x1c8] sm:$0xff]
    %v1403 = vld [vmem:[#allocation9 + $0x1d0] sm:$0xff]
    %v1404 = vld [vmem:[#allocation9 + $0x1d8] sm:$0xff]
    %v1405 = vld [vmem:[#allocation9 + $0x1e0] sm:$0xff]
    %v1406 = vld [vmem:[#allocation9 + $0x1e8] sm:$0xff]
    %v1407 = vld [vmem:[#allocation9 + $0x1f0] sm:$0xff]
    %v1408 = vld [vmem:[#allocation9 + $0x1f8] sm:$0xff]
    %1409 = vmatprep.subr.mxu0 %v1346
    %1410 = vmatpush1.msra.mxu0 %v1345
    %1411 = vmatprep.subr.mxu0 %v1350
    %1412 = vmatpush1.msra.mxu0 %v1349
    %1413 = vmatprep.subr.mxu0 %v1354
    %1414 = vmatpush1.msra.mxu0 %v1353
    %1415 = vmatprep.subr.mxu0 %v1358
    %1416 = vmatpush1.msra.mxu0 %v1357
    %1417 = vmatprep.subr.mxu0 %v1362
    %1418 = vmatpush1.msra.mxu0 %v1361
    %1419 = vmatprep.subr.mxu0 %v1366
    %1420 = vmatpush1.msra.mxu0 %v1365
    %1421 = vmatprep.subr.mxu0 %v1370
    %1422 = vmatpush1.msra.mxu0 %v1369
    %1423 = vmatprep.subr.mxu0 %v1374
    %1424 = vmatpush1.msra.mxu0 %v1373
    %1425 = vmatprep.subr.mxu0 %v1378
    %1426 = vmatpush1.msra.mxu0 %v1377
    %1427 = vmatprep.subr.mxu0 %v1382
    %1428 = vmatpush1.msra.mxu0 %v1381
    %1429 = vmatprep.subr.mxu0 %v1386
    %1430 = vmatpush1.msra.mxu0 %v1385
    %1431 = vmatprep.subr.mxu0 %v1390
    %1432 = vmatpush1.msra.mxu0 %v1389
    %1433 = vmatprep.subr.mxu0 %v1394
    %1434 = vmatpush1.msra.mxu0 %v1393
    %1435 = vmatprep.subr.mxu0 %v1398
    %1436 = vmatpush1.msra.mxu0 %v1397
    %1437 = vmatprep.subr.mxu0 %v1402
    %1438 = vmatpush1.msra.mxu0 %v1401
    %1439 = vmatprep.subr.mxu0 %v1406
    %1440 = vmatpush1.msra.mxu0 %v1405
    %1441 = vmatprep.subr.mxu0 0.0
    %1442 = vmatpush1.msra.mxu0 0.0
    %1443 = vmatprep.subr.mxu0 0.0
    %1444 = vmatpush1.msra.mxu0 0.0
    %1445 = vmatprep.subr.mxu0 0.0
    %1446 = vmatpush1.msra.mxu0 0.0
    %1447 = vmatprep.subr.mxu0 0.0
    %1448 = vmatpush1.msra.mxu0 0.0
    %1449 = vmatprep.subr.mxu0 0.0
    %1450 = vmatpush1.msra.mxu0 0.0
    %1451 = vmatprep.subr.mxu0 0.0
    %1452 = vmatpush1.msra.mxu0 0.0
    %1453 = vmatprep.subr.mxu0 0.0
    %1454 = vmatpush1.msra.mxu0 0.0
    %1455 = vmatprep.subr.mxu0 0.0
    %1456 = vmatpush1.msra.mxu0 0.0
    %1457 = vmatprep.subr.mxu0 0.0
    %1458 = vmatpush1.msra.mxu0 0.0
    %1459 = vmatprep.subr.mxu0 0.0
    %1460 = vmatpush1.msra.mxu0 0.0
    %1461 = vmatprep.subr.mxu0 0.0
    %1462 = vmatpush1.msra.mxu0 0.0
    %1463 = vmatprep.subr.mxu0 0.0
    %1464 = vmatpush1.msra.mxu0 0.0
    %1465 = vmatprep.subr.mxu0 0.0
    %1466 = vmatpush1.msra.mxu0 0.0
    %1467 = vmatprep.subr.mxu0 0.0
    %1468 = vmatpush1.msra.mxu0 0.0
    %1469 = vmatprep.subr.mxu0 0.0
    %1470 = vmatpush1.msra.mxu0 0.0
    %1471 = vmatprep.subr.mxu0 0.0
    %1472 = vmatpush1.msra.mxu0 0.0
    %1473 = vmatprep.mubr.f32.mxu0 0.0
    %1474 = vmatmul.mubr.f32.gmra.mrb[0].mxu0 %v1036
    %v1475 = vpop.f32.mrb[0].mxu0
    %v1476 = vadd.f32 0.0, %v1475
    %v1477 = vpop.f32.mrb[0].mxu0
    %v1478 = vadd.f32 0.0, %v1477
    %1479 = vdwg.mxu0
    %1480 = vmatprep.subr.mxu0 %v1348
    %1481 = vmatpush1.msra.mxu0 %v1347
    %1482 = vmatprep.subr.mxu0 %v1352
    %1483 = vmatpush1.msra.mxu0 %v1351
    %1484 = vmatprep.subr.mxu0 %v1356
    %1485 = vmatpush1.msra.mxu0 %v1355
    %1486 = vmatprep.subr.mxu0 %v1360
    %1487 = vmatpush1.msra.mxu0 %v1359
    %1488 = vmatprep.subr.mxu0 %v1364
    %1489 = vmatpush1.msra.mxu0 %v1363
    %1490 = vmatprep.subr.mxu0 %v1368
    %1491 = vmatpush1.msra.mxu0 %v1367
    %1492 = vmatprep.subr.mxu0 %v1372
    %1493 = vmatpush1.msra.mxu0 %v1371
    %1494 = vmatprep.subr.mxu0 %v1376
    %1495 = vmatpush1.msra.mxu0 %v1375
    %1496 = vmatprep.subr.mxu0 %v1380
    %1497 = vmatpush1.msra.mxu0 %v1379
    %1498 = vmatprep.subr.mxu0 %v1384
    %1499 = vmatpush1.msra.mxu0 %v1383
    %1500 = vmatprep.subr.mxu0 %v1388
    %1501 = vmatpush1.msra.mxu0 %v1387
    %1502 = vmatprep.subr.mxu0 %v1392
    %1503 = vmatpush1.msra.mxu0 %v1391
    %1504 = vmatprep.subr.mxu0 %v1396
    %1505 = vmatpush1.msra.mxu0 %v1395
    %1506 = vmatprep.subr.mxu0 %v1400
    %1507 = vmatpush1.msra.mxu0 %v1399
    %1508 = vmatprep.subr.mxu0 %v1404
    %1509 = vmatpush1.msra.mxu0 %v1403
    %1510 = vmatprep.subr.mxu0 %v1408
    %1511 = vmatpush1.msra.mxu0 %v1407
    %1512 = vmatprep.subr.mxu0 0.0
    %1513 = vmatpush1.msra.mxu0 0.0
    %1514 = vmatprep.subr.mxu0 0.0
    %1515 = vmatpush1.msra.mxu0 0.0
    %1516 = vmatprep.subr.mxu0 0.0
    %1517 = vmatpush1.msra.mxu0 0.0
    %1518 = vmatprep.subr.mxu0 0.0
    %1519 = vmatpush1.msra.mxu0 0.0
    %1520 = vmatprep.subr.mxu0 0.0
    %1521 = vmatpush1.msra.mxu0 0.0
    %1522 = vmatprep.subr.mxu0 0.0
    %1523 = vmatpush1.msra.mxu0 0.0
    %1524 = vmatprep.subr.mxu0 0.0
    %1525 = vmatpush1.msra.mxu0 0.0
    %1526 = vmatprep.subr.mxu0 0.0
    %1527 = vmatpush1.msra.mxu0 0.0
    %1528 = vmatprep.subr.mxu0 0.0
    %1529 = vmatpush1.msra.mxu0 0.0
    %1530 = vmatprep.subr.mxu0 0.0
    %1531 = vmatpush1.msra.mxu0 0.0
    %1532 = vmatprep.subr.mxu0 0.0
    %1533 = vmatpush1.msra.mxu0 0.0
    %1534 = vmatprep.subr.mxu0 0.0
    %1535 = vmatpush1.msra.mxu0 0.0
    %1536 = vmatprep.subr.mxu0 0.0
    %1537 = vmatpush1.msra.mxu0 0.0
    %1538 = vmatprep.subr.mxu0 0.0
    %1539 = vmatpush1.msra.mxu0 0.0
    %1540 = vmatprep.subr.mxu0 0.0
    %1541 = vmatpush1.msra.mxu0 0.0
    %1542 = vmatprep.subr.mxu0 0.0
    %1543 = vmatpush1.msra.mxu0 0.0
    %1544 = vmatprep.mubr.f32.mxu0 0.0
    %1545 = vmatmul.mubr.f32.gmra.mrb[0].mxu0 %v1036
    %v1546 = vpop.f32.mrb[0].mxu0
    %v1547 = vadd.f32 0.0, %v1546
    %v1548 = vpop.f32.mrb[0].mxu0
    %v1549 = vadd.f32 0.0, %v1548
    %1550 = vdwg.mxu0
    %1551 = vmatprep.subr.mxu0 %v1282
    %1552 = vmatpush1.msra.mxu0 %v1281
    %1553 = vmatprep.subr.mxu0 %v1286
    %1554 = vmatpush1.msra.mxu0 %v1285
    %1555 = vmatprep.subr.mxu0 %v1290
    %1556 = vmatpush1.msra.mxu0 %v1289
    %1557 = vmatprep.subr.mxu0 %v1294
    %1558 = vmatpush1.msra.mxu0 %v1293
    %1559 = vmatprep.subr.mxu0 %v1298
    %1560 = vmatpush1.msra.mxu0 %v1297
    %1561 = vmatprep.subr.mxu0 %v1302
    %1562 = vmatpush1.msra.mxu0 %v1301
    %1563 = vmatprep.subr.mxu0 %v1306
    %1564 = vmatpush1.msra.mxu0 %v1305
    %1565 = vmatprep.subr.mxu0 %v1310
    %1566 = vmatpush1.msra.mxu0 %v1309
    %1567 = vmatprep.subr.mxu0 %v1314
    %1568 = vmatpush1.msra.mxu0 %v1313
    %1569 = vmatprep.subr.mxu0 %v1318
    %1570 = vmatpush1.msra.mxu0 %v1317
    %1571 = vmatprep.subr.mxu0 %v1322
    %1572 = vmatpush1.msra.mxu0 %v1321
    %1573 = vmatprep.subr.mxu0 %v1326
    %1574 = vmatpush1.msra.mxu0 %v1325
    %1575 = vmatprep.subr.mxu0 %v1330
    %1576 = vmatpush1.msra.mxu0 %v1329
    %1577 = vmatprep.subr.mxu0 %v1334
    %1578 = vmatpush1.msra.mxu0 %v1333
    %1579 = vmatprep.subr.mxu0 %v1338
    %1580 = vmatpush1.msra.mxu0 %v1337
    %1581 = vmatprep.subr.mxu0 %v1342
    %1582 = vmatpush1.msra.mxu0 %v1341
    %1583 = vmatprep.subr.mxu0 0.0
    %1584 = vmatpush1.msra.mxu0 0.0
    %1585 = vmatprep.subr.mxu0 0.0
    %1586 = vmatpush1.msra.mxu0 0.0
    %1587 = vmatprep.subr.mxu0 0.0
    %1588 = vmatpush1.msra.mxu0 0.0
    %1589 = vmatprep.subr.mxu0 0.0
    %1590 = vmatpush1.msra.mxu0 0.0
    %1591 = vmatprep.subr.mxu0 0.0
    %1592 = vmatpush1.msra.mxu0 0.0
    %1593 = vmatprep.subr.mxu0 0.0
    %1594 = vmatpush1.msra.mxu0 0.0
    %1595 = vmatprep.subr.mxu0 0.0
    %1596 = vmatpush1.msra.mxu0 0.0
    %1597 = vmatprep.subr.mxu0 0.0
    %1598 = vmatpush1.msra.mxu0 0.0
    %1599 = vmatprep.subr.mxu0 0.0
    %1600 = vmatpush1.msra.mxu0 0.0
    %1601 = vmatprep.subr.mxu0 0.0
    %1602 = vmatpush1.msra.mxu0 0.0
    %1603 = vmatprep.subr.mxu0 0.0
    %1604 = vmatpush1.msra.mxu0 0.0
    %1605 = vmatprep.subr.mxu0 0.0
    %1606 = vmatpush1.msra.mxu0 0.0
    %1607 = vmatprep.subr.mxu0 0.0
    %1608 = vmatpush1.msra.mxu0 0.0
    %1609 = vmatprep.subr.mxu0 0.0
    %1610 = vmatpush1.msra.mxu0 0.0
    %1611 = vmatprep.subr.mxu0 0.0
    %1612 = vmatpush1.msra.mxu0 0.0
    %1613 = vmatprep.subr.mxu0 0.0
    %1614 = vmatpush1.msra.mxu0 0.0
    %1615 = vmatprep.mubr.f32.mxu0 0.0
    %1616 = vmatmul.mubr.f32.gmra.mrb[0].mxu0 %v1280
    %v1617 = vpop.f32.mrb[0].mxu0
    %v1618 = vadd.f32 %v1476, %v1617
    %v1619 = vpop.f32.mrb[0].mxu0
    %v1620 = vadd.f32 %v1478, %v1619
    %1621 = vdwg.mxu0
    %1622 = vmatprep.subr.mxu0 %v1284
    %1623 = vmatpush1.msra.mxu0 %v1283
    %1624 = vmatprep.subr.mxu0 %v1288
    %1625 = vmatpush1.msra.mxu0 %v1287
    %1626 = vmatprep.subr.mxu0 %v1292
    %1627 = vmatpush1.msra.mxu0 %v1291
    %1628 = vmatprep.subr.mxu0 %v1296
    %1629 = vmatpush1.msra.mxu0 %v1295
    %1630 = vmatprep.subr.mxu0 %v1300
    %1631 = vmatpush1.msra.mxu0 %v1299
    %1632 = vmatprep.subr.mxu0 %v1304
    %1633 = vmatpush1.msra.mxu0 %v1303
    %1634 = vmatprep.subr.mxu0 %v1308
    %1635 = vmatpush1.msra.mxu0 %v1307
    %1636 = vmatprep.subr.mxu0 %v1312
    %1637 = vmatpush1.msra.mxu0 %v1311
    %1638 = vmatprep.subr.mxu0 %v1316
    %1639 = vmatpush1.msra.mxu0 %v1315
    %1640 = vmatprep.subr.mxu0 %v1320
    %1641 = vmatpush1.msra.mxu0 %v1319
    %1642 = vmatprep.subr.mxu0 %v1324
    %1643 = vmatpush1.msra.mxu0 %v1323
    %1644 = vmatprep.subr.mxu0 %v1328
    %1645 = vmatpush1.msra.mxu0 %v1327
    %1646 = vmatprep.subr.mxu0 %v1332
    %1647 = vmatpush1.msra.mxu0 %v1331
    %1648 = vmatprep.subr.mxu0 %v1336
    %1649 = vmatpush1.msra.mxu0 %v1335
    %1650 = vmatprep.subr.mxu0 %v1340
    %1651 = vmatpush1.msra.mxu0 %v1339
    %1652 = vmatprep.subr.mxu0 %v1344
    %1653 = vmatpush1.msra.mxu0 %v1343
    %1654 = vmatprep.subr.mxu0 0.0
    %1655 = vmatpush1.msra.mxu0 0.0
    %1656 = vmatprep.subr.mxu0 0.0
    %1657 = vmatpush1.msra.mxu0 0.0
    %1658 = vmatprep.subr.mxu0 0.0
    %1659 = vmatpush1.msra.mxu0 0.0
    %1660 = vmatprep.subr.mxu0 0.0
    %1661 = vmatpush1.msra.mxu0 0.0
    %1662 = vmatprep.subr.mxu0 0.0
    %1663 = vmatpush1.msra.mxu0 0.0
    %1664 = vmatprep.subr.mxu0 0.0
    %1665 = vmatpush1.msra.mxu0 0.0
    %1666 = vmatprep.subr.mxu0 0.0
    %1667 = vmatpush1.msra.mxu0 0.0
    %1668 = vmatprep.subr.mxu0 0.0
    %1669 = vmatpush1.msra.mxu0 0.0
    %1670 = vmatprep.subr.mxu0 0.0
    %1671 = vmatpush1.msra.mxu0 0.0
    %1672 = vmatprep.subr.mxu0 0.0
    %1673 = vmatpush1.msra.mxu0 0.0
    %1674 = vmatprep.subr.mxu0 0.0
    %1675 = vmatpush1.msra.mxu0 0.0
    %1676 = vmatprep.subr.mxu0 0.0
    %1677 = vmatpush1.msra.mxu0 0.0
    %1678 = vmatprep.subr.mxu0 0.0
    %1679 = vmatpush1.msra.mxu0 0.0
    %1680 = vmatprep.subr.mxu0 0.0
    %1681 = vmatpush1.msra.mxu0 0.0
    %1682 = vmatprep.subr.mxu0 0.0
    %1683 = vmatpush1.msra.mxu0 0.0
    %1684 = vmatprep.subr.mxu0 0.0
    %1685 = vmatpush1.msra.mxu0 0.0
    %1686 = vmatprep.mubr.f32.mxu0 0.0
    %1687 = vmatmul.mubr.f32.gmra.mrb[0].mxu0 %v1280
    %v1688 = vpop.f32.mrb[0].mxu0
    %v1689 = vadd.f32 %v1547, %v1688
    %v1690 = vpop.f32.mrb[0].mxu0
    %v1691 = vadd.f32 %v1549, %v1690
    %1692 = vdwg.mxu0
    %v1693 = vadd.f32 %v1618, %v100
    %v1694 = vadd.f32 %v1620, %v104
    %v1695 = vadd.f32 %v1689, %v108
    %v1696 = vadd.f32 %v1691, %v112
    %v1697 = vxor.u32 %v1693, 2147483648
    %v1698 = vxor.u32 %v1694, 2147483648
    %v1699 = vxor.u32 %v1695, 2147483648
    %v1700 = vmul.f32 %v1697, 1.442695
    %v1701 = vpow.pop %v1700
    %v1702 = vmul.f32 %v1698, 1.442695
    %v1703 = vpow.pop %v1702
    %v1704 = vmul.f32 %v1699, 1.442695
    %v1705 = vpow.pop %v1704
    %v1706 = vadd.f32 %v1701, 1.0
    %v1707 = vadd.f32 %v1703, 1.0
    %v1708 = vadd.f32 %v1705, 1.0
    %v1709 = vrcp.pop %v1706
    %v1710 = vmul.f32 1.0, %v1709
    %v1711 = vrcp.pop %v1707
    %v1712 = vmul.f32 1.0, %v1711
    %v1713 = vrcp.pop %v1708
    %v1714 = vmul.f32 1.0, %v1713
    %v1715 = vtanh.pop %v1696
    %v1716 = vmul.f32 %v1712, %v1034
    %v1717 = vmul.f32 %v1710, %v1715
    %v1718 = vadd.f32 %v1716, %v1717
    %v1719 = vtanh.pop %v1718
    %v1720 = vmul.f32 %v1714, %v1719
    %s1721 = scalar_lea.vmem [#allocation3], 4
    %1722 = vst [vmem:[%s1721] sm:$0xf] %v1720
    %s1723 = scalar_lea.vmem [#allocation2], 32
    %v1724 = vld [vmem:[%s1723] sm:$0xff]
    %v1725 = vld [vmem:[%s1723 + $0x8] sm:$0xff]
    %v1726 = vld [vmem:[#allocation5] sm:$0xff]
    %v1727 = vld [vmem:[#allocation5 + $0x8] sm:$0xff]
    %v1728 = vld [vmem:[#allocation5 + $0x10] sm:$0xff]
    %v1729 = vld [vmem:[#allocation5 + $0x18] sm:$0xff]
    %v1730 = vld [vmem:[#allocation5 + $0x20] sm:$0xff]
    %v1731 = vld [vmem:[#allocation5 + $0x28] sm:$0xff]
    %v1732 = vld [vmem:[#allocation5 + $0x30] sm:$0xff]
    %v1733 = vld [vmem:[#allocation5 + $0x38] sm:$0xff]
    %v1734 = vld [vmem:[#allocation5 + $0x40] sm:$0xff]
    %v1735 = vld [vmem:[#allocation5 + $0x48] sm:$0xff]
    %v1736 = vld [vmem:[#allocation5 + $0x50] sm:$0xff]
    %v1737 = vld [vmem:[#allocation5 + $0x58] sm:$0xff]
    %v1738 = vld [vmem:[#allocation5 + $0x60] sm:$0xff]
    %v1739 = vld [vmem:[#allocation5 + $0x68] sm:$0xff]
    %v1740 = vld [vmem:[#allocation5 + $0x70] sm:$0xff]
    %v1741 = vld [vmem:[#allocation5 + $0x78] sm:$0xff]
    %v1742 = vld [vmem:[#allocation5 + $0x80] sm:$0xff]
    %v1743 = vld [vmem:[#allocation5 + $0x88] sm:$0xff]
    %v1744 = vld [vmem:[#allocation5 + $0x90] sm:$0xff]
    %v1745 = vld [vmem:[#allocation5 + $0x98] sm:$0xff]
    %v1746 = vld [vmem:[#allocation5 + $0xa0] sm:$0xff]
    %v1747 = vld [vmem:[#allocation5 + $0xa8] sm:$0xff]
    %v1748 = vld [vmem:[#allocation5 + $0xb0] sm:$0xff]
    %v1749 = vld [vmem:[#allocation5 + $0xb8] sm:$0xff]
    %v1750 = vld [vmem:[#allocation5 + $0xc0] sm:$0xff]
    %v1751 = vld [vmem:[#allocation5 + $0xc8] sm:$0xff]
    %v1752 = vld [vmem:[#allocation5 + $0xd0] sm:$0xff]
    %v1753 = vld [vmem:[#allocation5 + $0xd8] sm:$0xff]
    %v1754 = vld [vmem:[#allocation5 + $0xe0] sm:$0xff]
    %v1755 = vld [vmem:[#allocation5 + $0xe8] sm:$0xff]
    %v1756 = vld [vmem:[#allocation5 + $0xf0] sm:$0xff]
    %v1757 = vld [vmem:[#allocation5 + $0xf8] sm:$0xff]
    %v1758 = vld [vmem:[#allocation5 + $0x100] sm:$0xff]
    %v1759 = vld [vmem:[#allocation5 + $0x108] sm:$0xff]
    %v1760 = vld [vmem:[#allocation5 + $0x110] sm:$0xff]
    %v1761 = vld [vmem:[#allocation5 + $0x118] sm:$0xff]
    %v1762 = vld [vmem:[#allocation5 + $0x120] sm:$0xff]
    %v1763 = vld [vmem:[#allocation5 + $0x128] sm:$0xff]
    %v1764 = vld [vmem:[#allocation5 + $0x130] sm:$0xff]
    %v1765 = vld [vmem:[#allocation5 + $0x138] sm:$0xff]
    %v1766 = vld [vmem:[#allocation5 + $0x140] sm:$0xff]
    %v1767 = vld [vmem:[#allocation5 + $0x148] sm:$0xff]
    %v1768 = vld [vmem:[#allocation5 + $0x150] sm:$0xff]
    %v1769 = vld [vmem:[#allocation5 + $0x158] sm:$0xff]
    %v1770 = vld [vmem:[#allocation5 + $0x160] sm:$0xff]
    %v1771 = vld [vmem:[#allocation5 + $0x168] sm:$0xff]
    %v1772 = vld [vmem:[#allocation5 + $0x170] sm:$0xff]
    %v1773 = vld [vmem:[#allocation5 + $0x178] sm:$0xff]
    %v1774 = vld [vmem:[#allocation5 + $0x180] sm:$0xff]
    %v1775 = vld [vmem:[#allocation5 + $0x188] sm:$0xff]
    %v1776 = vld [vmem:[#allocation5 + $0x190] sm:$0xff]
    %v1777 = vld [vmem:[#allocation5 + $0x198] sm:$0xff]
    %v1778 = vld [vmem:[#allocation5 + $0x1a0] sm:$0xff]
    %v1779 = vld [vmem:[#allocation5 + $0x1a8] sm:$0xff]
    %v1780 = vld [vmem:[#allocation5 + $0x1b0] sm:$0xff]
    %v1781 = vld [vmem:[#allocation5 + $0x1b8] sm:$0xff]
    %v1782 = vld [vmem:[#allocation5 + $0x1c0] sm:$0xff]
    %v1783 = vld [vmem:[#allocation5 + $0x1c8] sm:$0xff]
    %v1784 = vld [vmem:[#allocation5 + $0x1d0] sm:$0xff]
    %v1785 = vld [vmem:[#allocation5 + $0x1d8] sm:$0xff]
    %v1786 = vld [vmem:[#allocation5 + $0x1e0] sm:$0xff]
    %v1787 = vld [vmem:[#allocation5 + $0x1e8] sm:$0xff]
    %v1788 = vld [vmem:[#allocation5 + $0x1f0] sm:$0xff]
    %v1789 = vld [vmem:[#allocation5 + $0x1f8] sm:$0xff]
    %1790 = vmatprep.subr.mxu0 %v1727
    %1791 = vmatpush1.msra.mxu0 %v1726
    %1792 = vmatprep.subr.mxu0 %v1731
    %1793 = vmatpush1.msra.mxu0 %v1730
    %1794 = vmatprep.subr.mxu0 %v1735
    %1795 = vmatpush1.msra.mxu0 %v1734
    %1796 = vmatprep.subr.mxu0 %v1739
    %1797 = vmatpush1.msra.mxu0 %v1738
    %1798 = vmatprep.subr.mxu0 %v1743
    %1799 = vmatpush1.msra.mxu0 %v1742
    %1800 = vmatprep.subr.mxu0 %v1747
    %1801 = vmatpush1.msra.mxu0 %v1746
    %1802 = vmatprep.subr.mxu0 %v1751
    %1803 = vmatpush1.msra.mxu0 %v1750
    %1804 = vmatprep.subr.mxu0 %v1755
    %1805 = vmatpush1.msra.mxu0 %v1754
    %1806 = vmatprep.subr.mxu0 %v1759
    %1807 = vmatpush1.msra.mxu0 %v1758
    %1808 = vmatprep.subr.mxu0 %v1763
    %1809 = vmatpush1.msra.mxu0 %v1762
    %1810 = vmatprep.subr.mxu0 %v1767
    %1811 = vmatpush1.msra.mxu0 %v1766
    %1812 = vmatprep.subr.mxu0 %v1771
    %1813 = vmatpush1.msra.mxu0 %v1770
    %1814 = vmatprep.subr.mxu0 %v1775
    %1815 = vmatpush1.msra.mxu0 %v1774
    %1816 = vmatprep.subr.mxu0 %v1779
    %1817 = vmatpush1.msra.mxu0 %v1778
    %1818 = vmatprep.subr.mxu0 %v1783
    %1819 = vmatpush1.msra.mxu0 %v1782
    %1820 = vmatprep.subr.mxu0 %v1787
    %1821 = vmatpush1.msra.mxu0 %v1786
    %1822 = vmatprep.subr.mxu0 0.0
    %1823 = vmatpush1.msra.mxu0 0.0
    %1824 = vmatprep.subr.mxu0 0.0
    %1825 = vmatpush1.msra.mxu0 0.0
    %1826 = vmatprep.subr.mxu0 0.0
    %1827 = vmatpush1.msra.mxu0 0.0
    %1828 = vmatprep.subr.mxu0 0.0
    %1829 = vmatpush1.msra.mxu0 0.0
    %1830 = vmatprep.subr.mxu0 0.0
    %1831 = vmatpush1.msra.mxu0 0.0
    %1832 = vmatprep.subr.mxu0 0.0
    %1833 = vmatpush1.msra.mxu0 0.0
    %1834 = vmatprep.subr.mxu0 0.0
    %1835 = vmatpush1.msra.mxu0 0.0
    %1836 = vmatprep.subr.mxu0 0.0
    %1837 = vmatpush1.msra.mxu0 0.0
    %1838 = vmatprep.subr.mxu0 0.0
    %1839 = vmatpush1.msra.mxu0 0.0
    %1840 = vmatprep.subr.mxu0 0.0
    %1841 = vmatpush1.msra.mxu0 0.0
    %1842 = vmatprep.subr.mxu0 0.0
    %1843 = vmatpush1.msra.mxu0 0.0
    %1844 = vmatprep.subr.mxu0 0.0
    %1845 = vmatpush1.msra.mxu0 0.0
    %1846 = vmatprep.subr.mxu0 0.0
    %1847 = vmatpush1.msra.mxu0 0.0
    %1848 = vmatprep.subr.mxu0 0.0
    %1849 = vmatpush1.msra.mxu0 0.0
    %1850 = vmatprep.subr.mxu0 0.0
    %1851 = vmatpush1.msra.mxu0 0.0
    %1852 = vmatprep.subr.mxu0 0.0
    %1853 = vmatpush1.msra.mxu0 0.0
    %1854 = vmatprep.mubr.f32.mxu0 0.0
    %1855 = vmatmul.mubr.f32.gmra.mrb[0].mxu0 %v1280
    %v1856 = vpop.f32.mrb[0].mxu0
    %v1857 = vadd.f32 0.0, %v1856
    %v1858 = vpop.f32.mrb[0].mxu0
    %v1859 = vadd.f32 0.0, %v1858
    %1860 = vdwg.mxu0
    %1861 = vmatprep.subr.mxu0 %v1729
    %1862 = vmatpush1.msra.mxu0 %v1728
    %1863 = vmatprep.subr.mxu0 %v1733
    %1864 = vmatpush1.msra.mxu0 %v1732
    %1865 = vmatprep.subr.mxu0 %v1737
    %1866 = vmatpush1.msra.mxu0 %v1736
    %1867 = vmatprep.subr.mxu0 %v1741
    %1868 = vmatpush1.msra.mxu0 %v1740
    %1869 = vmatprep.subr.mxu0 %v1745
    %1870 = vmatpush1.msra.mxu0 %v1744
    %1871 = vmatprep.subr.mxu0 %v1749
    %1872 = vmatpush1.msra.mxu0 %v1748
    %1873 = vmatprep.subr.mxu0 %v1753
    %1874 = vmatpush1.msra.mxu0 %v1752
    %1875 = vmatprep.subr.mxu0 %v1757
    %1876 = vmatpush1.msra.mxu0 %v1756
    %1877 = vmatprep.subr.mxu0 %v1761
    %1878 = vmatpush1.msra.mxu0 %v1760
    %1879 = vmatprep.subr.mxu0 %v1765
    %1880 = vmatpush1.msra.mxu0 %v1764
    %1881 = vmatprep.subr.mxu0 %v1769
    %1882 = vmatpush1.msra.mxu0 %v1768
    %1883 = vmatprep.subr.mxu0 %v1773
    %1884 = vmatpush1.msra.mxu0 %v1772
    %1885 = vmatprep.subr.mxu0 %v1777
    %1886 = vmatpush1.msra.mxu0 %v1776
    %1887 = vmatprep.subr.mxu0 %v1781
    %1888 = vmatpush1.msra.mxu0 %v1780
    %1889 = vmatprep.subr.mxu0 %v1785
    %1890 = vmatpush1.msra.mxu0 %v1784
    %1891 = vmatprep.subr.mxu0 %v1789
    %1892 = vmatpush1.msra.mxu0 %v1788
    %1893 = vmatprep.subr.mxu0 0.0
    %1894 = vmatpush1.msra.mxu0 0.0
    %1895 = vmatprep.subr.mxu0 0.0
    %1896 = vmatpush1.msra.mxu0 0.0
    %1897 = vmatprep.subr.mxu0 0.0
    %1898 = vmatpush1.msra.mxu0 0.0
    %1899 = vmatprep.subr.mxu0 0.0
    %1900 = vmatpush1.msra.mxu0 0.0
    %1901 = vmatprep.subr.mxu0 0.0
    %1902 = vmatpush1.msra.mxu0 0.0
    %1903 = vmatprep.subr.mxu0 0.0
    %1904 = vmatpush1.msra.mxu0 0.0
    %1905 = vmatprep.subr.mxu0 0.0
    %1906 = vmatpush1.msra.mxu0 0.0
    %1907 = vmatprep.subr.mxu0 0.0
    %1908 = vmatpush1.msra.mxu0 0.0
    %1909 = vmatprep.subr.mxu0 0.0
    %1910 = vmatpush1.msra.mxu0 0.0
    %1911 = vmatprep.subr.mxu0 0.0
    %1912 = vmatpush1.msra.mxu0 0.0
    %1913 = vmatprep.subr.mxu0 0.0
    %1914 = vmatpush1.msra.mxu0 0.0
    %1915 = vmatprep.subr.mxu0 0.0
    %1916 = vmatpush1.msra.mxu0 0.0
    %1917 = vmatprep.subr.mxu0 0.0
    %1918 = vmatpush1.msra.mxu0 0.0
    %1919 = vmatprep.subr.mxu0 0.0
    %1920 = vmatpush1.msra.mxu0 0.0
    %1921 = vmatprep.subr.mxu0 0.0
    %1922 = vmatpush1.msra.mxu0 0.0
    %1923 = vmatprep.subr.mxu0 0.0
    %1924 = vmatpush1.msra.mxu0 0.0
    %1925 = vmatprep.mubr.f32.mxu0 0.0
    %1926 = vmatmul.mubr.f32.gmra.mrb[0].mxu0 %v1280
    %v1927 = vpop.f32.mrb[0].mxu0
    %v1928 = vadd.f32 0.0, %v1927
    %v1929 = vpop.f32.mrb[0].mxu0
    %v1930 = vadd.f32 0.0, %v1929
    %1931 = vdwg.mxu0
    %v1936 = vcombine.low %v1857, %v1859
    %v1937 = vcombine.low %v1928, %v1930
    %v1940 = vadd.f32 %v1724, %v1936
    %v1941 = vadd.f32 %v1725, %v1937
    %v1942 = vxor.u32 %v1940, 2147483648
    %v1943 = vxor.u32 %v1941, 2147483648
    %v1944 = vmul.f32 %v1942, 1.442695
    %v1945 = vpow.pop %v1944
    %v1946 = vmul.f32 %v1943, 1.442695
    %v1947 = vpow.pop %v1946
    %v1948 = vadd.f32 %v1945, 1.0
    %v1949 = vadd.f32 %v1947, 1.0
    %v1950 = vrcp.pop %v1948
    %v1951 = vmul.f32 1.0, %v1950
    %v1952 = vrcp.pop %v1949
    %v1953 = vmul.f32 1.0, %v1952
    %v1955 = vrot.slane %v1941, 4
    %v1957 = vtanh.pop %v1955
    %v1959 = vrot.slane %v1951, 4
    %v1961 = vmul.f32 %v1959, %v1278
    %v1962 = vmul.f32 %v1951, %v1957
    %v1963 = vadd.f32 %v1961, %v1962
    %v1964 = vtanh.pop %v1963
    %v1965 = vmul.f32 %v1953, %v1964
    %v1966 = vld [vmem:[#allocation7] sm:$0xff]
    %v1967 = vld [vmem:[#allocation7 + $0x8] sm:$0xff]
    %v1968 = vld [vmem:[#allocation7 + $0x10] sm:$0xff]
    %v1969 = vld [vmem:[#allocation7 + $0x18] sm:$0xff]
    %v1970 = vld [vmem:[#allocation7 + $0x20] sm:$0xff]
    %v1971 = vld [vmem:[#allocation7 + $0x28] sm:$0xff]
    %v1972 = vld [vmem:[#allocation7 + $0x30] sm:$0xff]
    %v1973 = vld [vmem:[#allocation7 + $0x38] sm:$0xff]
    %v1974 = vld [vmem:[#allocation7 + $0x40] sm:$0xff]
    %v1975 = vld [vmem:[#allocation7 + $0x48] sm:$0xff]
    %v1976 = vld [vmem:[#allocation7 + $0x50] sm:$0xff]
    %v1977 = vld [vmem:[#allocation7 + $0x58] sm:$0xff]
    %v1978 = vld [vmem:[#allocation7 + $0x60] sm:$0xff]
    %v1979 = vld [vmem:[#allocation7 + $0x68] sm:$0xff]
    %v1980 = vld [vmem:[#allocation7 + $0x70] sm:$0xff]
    %v1981 = vld [vmem:[#allocation7 + $0x78] sm:$0xff]
    %v1982 = vld [vmem:[#allocation7 + $0x80] sm:$0xff]
    %v1983 = vld [vmem:[#allocation7 + $0x88] sm:$0xff]
    %v1984 = vld [vmem:[#allocation7 + $0x90] sm:$0xff]
    %v1985 = vld [vmem:[#allocation7 + $0x98] sm:$0xff]
    %v1986 = vld [vmem:[#allocation7 + $0xa0] sm:$0xff]
    %v1987 = vld [vmem:[#allocation7 + $0xa8] sm:$0xff]
    %v1988 = vld [vmem:[#allocation7 + $0xb0] sm:$0xff]
    %v1989 = vld [vmem:[#allocation7 + $0xb8] sm:$0xff]
    %v1990 = vld [vmem:[#allocation7 + $0xc0] sm:$0xff]
    %v1991 = vld [vmem:[#allocation7 + $0xc8] sm:$0xff]
    %v1992 = vld [vmem:[#allocation7 + $0xd0] sm:$0xff]
    %v1993 = vld [vmem:[#allocation7 + $0xd8] sm:$0xff]
    %v1994 = vld [vmem:[#allocation7 + $0xe0] sm:$0xff]
    %v1995 = vld [vmem:[#allocation7 + $0xe8] sm:$0xff]
    %v1996 = vld [vmem:[#allocation7 + $0xf0] sm:$0xff]
    %v1997 = vld [vmem:[#allocation7 + $0xf8] sm:$0xff]
    %v1998 = vld [vmem:[#allocation7 + $0x100] sm:$0xff]
    %v1999 = vld [vmem:[#allocation7 + $0x108] sm:$0xff]
    %v2000 = vld [vmem:[#allocation7 + $0x110] sm:$0xff]
    %v2001 = vld [vmem:[#allocation7 + $0x118] sm:$0xff]
    %v2002 = vld [vmem:[#allocation7 + $0x120] sm:$0xff]
    %v2003 = vld [vmem:[#allocation7 + $0x128] sm:$0xff]
    %v2004 = vld [vmem:[#allocation7 + $0x130] sm:$0xff]
    %v2005 = vld [vmem:[#allocation7 + $0x138] sm:$0xff]
    %v2006 = vld [vmem:[#allocation7 + $0x140] sm:$0xff]
    %v2007 = vld [vmem:[#allocation7 + $0x148] sm:$0xff]
    %v2008 = vld [vmem:[#allocation7 + $0x150] sm:$0xff]
    %v2009 = vld [vmem:[#allocation7 + $0x158] sm:$0xff]
    %v2010 = vld [vmem:[#allocation7 + $0x160] sm:$0xff]
    %v2011 = vld [vmem:[#allocation7 + $0x168] sm:$0xff]
    %v2012 = vld [vmem:[#allocation7 + $0x170] sm:$0xff]
    %v2013 = vld [vmem:[#allocation7 + $0x178] sm:$0xff]
    %v2014 = vld [vmem:[#allocation7 + $0x180] sm:$0xff]
    %v2015 = vld [vmem:[#allocation7 + $0x188] sm:$0xff]
    %v2016 = vld [vmem:[#allocation7 + $0x190] sm:$0xff]
    %v2017 = vld [vmem:[#allocation7 + $0x198] sm:$0xff]
    %v2018 = vld [vmem:[#allocation7 + $0x1a0] sm:$0xff]
    %v2019 = vld [vmem:[#allocation7 + $0x1a8] sm:$0xff]
    %v2020 = vld [vmem:[#allocation7 + $0x1b0] sm:$0xff]
    %v2021 = vld [vmem:[#allocation7 + $0x1b8] sm:$0xff]
    %v2022 = vld [vmem:[#allocation7 + $0x1c0] sm:$0xff]
    %v2023 = vld [vmem:[#allocation7 + $0x1c8] sm:$0xff]
    %v2024 = vld [vmem:[#allocation7 + $0x1d0] sm:$0xff]
    %v2025 = vld [vmem:[#allocation7 + $0x1d8] sm:$0xff]
    %v2026 = vld [vmem:[#allocation7 + $0x1e0] sm:$0xff]
    %v2027 = vld [vmem:[#allocation7 + $0x1e8] sm:$0xff]
    %v2028 = vld [vmem:[#allocation7 + $0x1f0] sm:$0xff]
    %v2029 = vld [vmem:[#allocation7 + $0x1f8] sm:$0xff]
    %v2030 = vld [vmem:[#allocation9] sm:$0xff]
    %v2031 = vld [vmem:[#allocation9 + $0x8] sm:$0xff]
    %v2032 = vld [vmem:[#allocation9 + $0x10] sm:$0xff]
    %v2033 = vld [vmem:[#allocation9 + $0x18] sm:$0xff]
    %v2034 = vld [vmem:[#allocation9 + $0x20] sm:$0xff]
    %v2035 = vld [vmem:[#allocation9 + $0x28] sm:$0xff]
    %v2036 = vld [vmem:[#allocation9 + $0x30] sm:$0xff]
    %v2037 = vld [vmem:[#allocation9 + $0x38] sm:$0xff]
    %v2038 = vld [vmem:[#allocation9 + $0x40] sm:$0xff]
    %v2039 = vld [vmem:[#allocation9 + $0x48] sm:$0xff]
    %v2040 = vld [vmem:[#allocation9 + $0x50] sm:$0xff]
    %v2041 = vld [vmem:[#allocation9 + $0x58] sm:$0xff]
    %v2042 = vld [vmem:[#allocation9 + $0x60] sm:$0xff]
    %v2043 = vld [vmem:[#allocation9 + $0x68] sm:$0xff]
    %v2044 = vld [vmem:[#allocation9 + $0x70] sm:$0xff]
    %v2045 = vld [vmem:[#allocation9 + $0x78] sm:$0xff]
    %v2046 = vld [vmem:[#allocation9 + $0x80] sm:$0xff]
    %v2047 = vld [vmem:[#allocation9 + $0x88] sm:$0xff]
    %v2048 = vld [vmem:[#allocation9 + $0x90] sm:$0xff]
    %v2049 = vld [vmem:[#allocation9 + $0x98] sm:$0xff]
    %v2050 = vld [vmem:[#allocation9 + $0xa0] sm:$0xff]
    %v2051 = vld [vmem:[#allocation9 + $0xa8] sm:$0xff]
    %v2052 = vld [vmem:[#allocation9 + $0xb0] sm:$0xff]
    %v2053 = vld [vmem:[#allocation9 + $0xb8] sm:$0xff]
    %v2054 = vld [vmem:[#allocation9 + $0xc0] sm:$0xff]
    %v2055 = vld [vmem:[#allocation9 + $0xc8] sm:$0xff]
    %v2056 = vld [vmem:[#allocation9 + $0xd0] sm:$0xff]
    %v2057 = vld [vmem:[#allocation9 + $0xd8] sm:$0xff]
    %v2058 = vld [vmem:[#allocation9 + $0xe0] sm:$0xff]
    %v2059 = vld [vmem:[#allocation9 + $0xe8] sm:$0xff]
    %v2060 = vld [vmem:[#allocation9 + $0xf0] sm:$0xff]
    %v2061 = vld [vmem:[#allocation9 + $0xf8] sm:$0xff]
    %v2062 = vld [vmem:[#allocation9 + $0x100] sm:$0xff]
    %v2063 = vld [vmem:[#allocation9 + $0x108] sm:$0xff]
    %v2064 = vld [vmem:[#allocation9 + $0x110] sm:$0xff]
    %v2065 = vld [vmem:[#allocation9 + $0x118] sm:$0xff]
    %v2066 = vld [vmem:[#allocation9 + $0x120] sm:$0xff]
    %v2067 = vld [vmem:[#allocation9 + $0x128] sm:$0xff]
    %v2068 = vld [vmem:[#allocation9 + $0x130] sm:$0xff]
    %v2069 = vld [vmem:[#allocation9 + $0x138] sm:$0xff]
    %v2070 = vld [vmem:[#allocation9 + $0x140] sm:$0xff]
    %v2071 = vld [vmem:[#allocation9 + $0x148] sm:$0xff]
    %v2072 = vld [vmem:[#allocation9 + $0x150] sm:$0xff]
    %v2073 = vld [vmem:[#allocation9 + $0x158] sm:$0xff]
    %v2074 = vld [vmem:[#allocation9 + $0x160] sm:$0xff]
    %v2075 = vld [vmem:[#allocation9 + $0x168] sm:$0xff]
    %v2076 = vld [vmem:[#allocation9 + $0x170] sm:$0xff]
    %v2077 = vld [vmem:[#allocation9 + $0x178] sm:$0xff]
    %v2078 = vld [vmem:[#allocation9 + $0x180] sm:$0xff]
    %v2079 = vld [vmem:[#allocation9 + $0x188] sm:$0xff]
    %v2080 = vld [vmem:[#allocation9 + $0x190] sm:$0xff]
    %v2081 = vld [vmem:[#allocation9 + $0x198] sm:$0xff]
    %v2082 = vld [vmem:[#allocation9 + $0x1a0] sm:$0xff]
    %v2083 = vld [vmem:[#allocation9 + $0x1a8] sm:$0xff]
    %v2084 = vld [vmem:[#allocation9 + $0x1b0] sm:$0xff]
    %v2085 = vld [vmem:[#allocation9 + $0x1b8] sm:$0xff]
    %v2086 = vld [vmem:[#allocation9 + $0x1c0] sm:$0xff]
    %v2087 = vld [vmem:[#allocation9 + $0x1c8] sm:$0xff]
    %v2088 = vld [vmem:[#allocation9 + $0x1d0] sm:$0xff]
    %v2089 = vld [vmem:[#allocation9 + $0x1d8] sm:$0xff]
    %v2090 = vld [vmem:[#allocation9 + $0x1e0] sm:$0xff]
    %v2091 = vld [vmem:[#allocation9 + $0x1e8] sm:$0xff]
    %v2092 = vld [vmem:[#allocation9 + $0x1f0] sm:$0xff]
    %v2093 = vld [vmem:[#allocation9 + $0x1f8] sm:$0xff]
    %2094 = vmatprep.subr.mxu0 %v2031
    %2095 = vmatpush1.msra.mxu0 %v2030
    %2096 = vmatprep.subr.mxu0 %v2035
    %2097 = vmatpush1.msra.mxu0 %v2034
    %2098 = vmatprep.subr.mxu0 %v2039
    %2099 = vmatpush1.msra.mxu0 %v2038
    %2100 = vmatprep.subr.mxu0 %v2043
    %2101 = vmatpush1.msra.mxu0 %v2042
    %2102 = vmatprep.subr.mxu0 %v2047
    %2103 = vmatpush1.msra.mxu0 %v2046
    %2104 = vmatprep.subr.mxu0 %v2051
    %2105 = vmatpush1.msra.mxu0 %v2050
    %2106 = vmatprep.subr.mxu0 %v2055
    %2107 = vmatpush1.msra.mxu0 %v2054
    %2108 = vmatprep.subr.mxu0 %v2059
    %2109 = vmatpush1.msra.mxu0 %v2058
    %2110 = vmatprep.subr.mxu0 %v2063
    %2111 = vmatpush1.msra.mxu0 %v2062
    %2112 = vmatprep.subr.mxu0 %v2067
    %2113 = vmatpush1.msra.mxu0 %v2066
    %2114 = vmatprep.subr.mxu0 %v2071
    %2115 = vmatpush1.msra.mxu0 %v2070
    %2116 = vmatprep.subr.mxu0 %v2075
    %2117 = vmatpush1.msra.mxu0 %v2074
    %2118 = vmatprep.subr.mxu0 %v2079
    %2119 = vmatpush1.msra.mxu0 %v2078
    %2120 = vmatprep.subr.mxu0 %v2083
    %2121 = vmatpush1.msra.mxu0 %v2082
    %2122 = vmatprep.subr.mxu0 %v2087
    %2123 = vmatpush1.msra.mxu0 %v2086
    %2124 = vmatprep.subr.mxu0 %v2091
    %2125 = vmatpush1.msra.mxu0 %v2090
    %2126 = vmatprep.subr.mxu0 0.0
    %2127 = vmatpush1.msra.mxu0 0.0
    %2128 = vmatprep.subr.mxu0 0.0
    %2129 = vmatpush1.msra.mxu0 0.0
    %2130 = vmatprep.subr.mxu0 0.0
    %2131 = vmatpush1.msra.mxu0 0.0
    %2132 = vmatprep.subr.mxu0 0.0
    %2133 = vmatpush1.msra.mxu0 0.0
    %2134 = vmatprep.subr.mxu0 0.0
    %2135 = vmatpush1.msra.mxu0 0.0
    %2136 = vmatprep.subr.mxu0 0.0
    %2137 = vmatpush1.msra.mxu0 0.0
    %2138 = vmatprep.subr.mxu0 0.0
    %2139 = vmatpush1.msra.mxu0 0.0
    %2140 = vmatprep.subr.mxu0 0.0
    %2141 = vmatpush1.msra.mxu0 0.0
    %2142 = vmatprep.subr.mxu0 0.0
    %2143 = vmatpush1.msra.mxu0 0.0
    %2144 = vmatprep.subr.mxu0 0.0
    %2145 = vmatpush1.msra.mxu0 0.0
    %2146 = vmatprep.subr.mxu0 0.0
    %2147 = vmatpush1.msra.mxu0 0.0
    %2148 = vmatprep.subr.mxu0 0.0
    %2149 = vmatpush1.msra.mxu0 0.0
    %2150 = vmatprep.subr.mxu0 0.0
    %2151 = vmatpush1.msra.mxu0 0.0
    %2152 = vmatprep.subr.mxu0 0.0
    %2153 = vmatpush1.msra.mxu0 0.0
    %2154 = vmatprep.subr.mxu0 0.0
    %2155 = vmatpush1.msra.mxu0 0.0
    %2156 = vmatprep.subr.mxu0 0.0
    %2157 = vmatpush1.msra.mxu0 0.0
    %2158 = vmatprep.mubr.f32.mxu0 0.0
    %2159 = vmatmul.mubr.f32.gmra.mrb[0].mxu0 %v1720
    %v2160 = vpop.f32.mrb[0].mxu0
    %v2161 = vadd.f32 0.0, %v2160
    %v2162 = vpop.f32.mrb[0].mxu0
    %v2163 = vadd.f32 0.0, %v2162
    %2164 = vdwg.mxu0
    %2165 = vmatprep.subr.mxu0 %v2033
    %2166 = vmatpush1.msra.mxu0 %v2032
    %2167 = vmatprep.subr.mxu0 %v2037
    %2168 = vmatpush1.msra.mxu0 %v2036
    %2169 = vmatprep.subr.mxu0 %v2041
    %2170 = vmatpush1.msra.mxu0 %v2040
    %2171 = vmatprep.subr.mxu0 %v2045
    %2172 = vmatpush1.msra.mxu0 %v2044
    %2173 = vmatprep.subr.mxu0 %v2049
    %2174 = vmatpush1.msra.mxu0 %v2048
    %2175 = vmatprep.subr.mxu0 %v2053
    %2176 = vmatpush1.msra.mxu0 %v2052
    %2177 = vmatprep.subr.mxu0 %v2057
    %2178 = vmatpush1.msra.mxu0 %v2056
    %2179 = vmatprep.subr.mxu0 %v2061
    %2180 = vmatpush1.msra.mxu0 %v2060
    %2181 = vmatprep.subr.mxu0 %v2065
    %2182 = vmatpush1.msra.mxu0 %v2064
    %2183 = vmatprep.subr.mxu0 %v2069
    %2184 = vmatpush1.msra.mxu0 %v2068
    %2185 = vmatprep.subr.mxu0 %v2073
    %2186 = vmatpush1.msra.mxu0 %v2072
    %2187 = vmatprep.subr.mxu0 %v2077
    %2188 = vmatpush1.msra.mxu0 %v2076
    %2189 = vmatprep.subr.mxu0 %v2081
    %2190 = vmatpush1.msra.mxu0 %v2080
    %2191 = vmatprep.subr.mxu0 %v2085
    %2192 = vmatpush1.msra.mxu0 %v2084
    %2193 = vmatprep.subr.mxu0 %v2089
    %2194 = vmatpush1.msra.mxu0 %v2088
    %2195 = vmatprep.subr.mxu0 %v2093
    %2196 = vmatpush1.msra.mxu0 %v2092
    %2197 = vmatprep.subr.mxu0 0.0
    %2198 = vmatpush1.msra.mxu0 0.0
    %2199 = vmatprep.subr.mxu0 0.0
    %2200 = vmatpush1.msra.mxu0 0.0
    %2201 = vmatprep.subr.mxu0 0.0
    %2202 = vmatpush1.msra.mxu0 0.0
    %2203 = vmatprep.subr.mxu0 0.0
    %2204 = vmatpush1.msra.mxu0 0.0
    %2205 = vmatprep.subr.mxu0 0.0
    %2206 = vmatpush1.msra.mxu0 0.0
    %2207 = vmatprep.subr.mxu0 0.0
    %2208 = vmatpush1.msra.mxu0 0.0
    %2209 = vmatprep.subr.mxu0 0.0
    %2210 = vmatpush1.msra.mxu0 0.0
    %2211 = vmatprep.subr.mxu0 0.0
    %2212 = vmatpush1.msra.mxu0 0.0
    %2213 = vmatprep.subr.mxu0 0.0
    %2214 = vmatpush1.msra.mxu0 0.0
    %2215 = vmatprep.subr.mxu0 0.0
    %2216 = vmatpush1.msra.mxu0 0.0
    %2217 = vmatprep.subr.mxu0 0.0
    %2218 = vmatpush1.msra.mxu0 0.0
    %2219 = vmatprep.subr.mxu0 0.0
    %2220 = vmatpush1.msra.mxu0 0.0
    %2221 = vmatprep.subr.mxu0 0.0
    %2222 = vmatpush1.msra.mxu0 0.0
    %2223 = vmatprep.subr.mxu0 0.0
    %2224 = vmatpush1.msra.mxu0 0.0
    %2225 = vmatprep.subr.mxu0 0.0
    %2226 = vmatpush1.msra.mxu0 0.0
    %2227 = vmatprep.subr.mxu0 0.0
    %2228 = vmatpush1.msra.mxu0 0.0
    %2229 = vmatprep.mubr.f32.mxu0 0.0
    %2230 = vmatmul.mubr.f32.gmra.mrb[0].mxu0 %v1720
    %v2231 = vpop.f32.mrb[0].mxu0
    %v2232 = vadd.f32 0.0, %v2231
    %v2233 = vpop.f32.mrb[0].mxu0
    %v2234 = vadd.f32 0.0, %v2233
    %2235 = vdwg.mxu0
    %2236 = vmatprep.subr.mxu0 %v1967
    %2237 = vmatpush1.msra.mxu0 %v1966
    %2238 = vmatprep.subr.mxu0 %v1971
    %2239 = vmatpush1.msra.mxu0 %v1970
    %2240 = vmatprep.subr.mxu0 %v1975
    %2241 = vmatpush1.msra.mxu0 %v1974
    %2242 = vmatprep.subr.mxu0 %v1979
    %2243 = vmatpush1.msra.mxu0 %v1978
    %2244 = vmatprep.subr.mxu0 %v1983
    %2245 = vmatpush1.msra.mxu0 %v1982
    %2246 = vmatprep.subr.mxu0 %v1987
    %2247 = vmatpush1.msra.mxu0 %v1986
    %2248 = vmatprep.subr.mxu0 %v1991
    %2249 = vmatpush1.msra.mxu0 %v1990
    %2250 = vmatprep.subr.mxu0 %v1995
    %2251 = vmatpush1.msra.mxu0 %v1994
    %2252 = vmatprep.subr.mxu0 %v1999
    %2253 = vmatpush1.msra.mxu0 %v1998
    %2254 = vmatprep.subr.mxu0 %v2003
    %2255 = vmatpush1.msra.mxu0 %v2002
    %2256 = vmatprep.subr.mxu0 %v2007
    %2257 = vmatpush1.msra.mxu0 %v2006
    %2258 = vmatprep.subr.mxu0 %v2011
    %2259 = vmatpush1.msra.mxu0 %v2010
    %2260 = vmatprep.subr.mxu0 %v2015
    %2261 = vmatpush1.msra.mxu0 %v2014
    %2262 = vmatprep.subr.mxu0 %v2019
    %2263 = vmatpush1.msra.mxu0 %v2018
    %2264 = vmatprep.subr.mxu0 %v2023
    %2265 = vmatpush1.msra.mxu0 %v2022
    %2266 = vmatprep.subr.mxu0 %v2027
    %2267 = vmatpush1.msra.mxu0 %v2026
    %2268 = vmatprep.subr.mxu0 0.0
    %2269 = vmatpush1.msra.mxu0 0.0
    %2270 = vmatprep.subr.mxu0 0.0
    %2271 = vmatpush1.msra.mxu0 0.0
    %2272 = vmatprep.subr.mxu0 0.0
    %2273 = vmatpush1.msra.mxu0 0.0
    %2274 = vmatprep.subr.mxu0 0.0
    %2275 = vmatpush1.msra.mxu0 0.0
    %2276 = vmatprep.subr.mxu0 0.0
    %2277 = vmatpush1.msra.mxu0 0.0
    %2278 = vmatprep.subr.mxu0 0.0
    %2279 = vmatpush1.msra.mxu0 0.0
    %2280 = vmatprep.subr.mxu0 0.0
    %2281 = vmatpush1.msra.mxu0 0.0
    %2282 = vmatprep.subr.mxu0 0.0
    %2283 = vmatpush1.msra.mxu0 0.0
    %2284 = vmatprep.subr.mxu0 0.0
    %2285 = vmatpush1.msra.mxu0 0.0
    %2286 = vmatprep.subr.mxu0 0.0
    %2287 = vmatpush1.msra.mxu0 0.0
    %2288 = vmatprep.subr.mxu0 0.0
    %2289 = vmatpush1.msra.mxu0 0.0
    %2290 = vmatprep.subr.mxu0 0.0
    %2291 = vmatpush1.msra.mxu0 0.0
    %2292 = vmatprep.subr.mxu0 0.0
    %2293 = vmatpush1.msra.mxu0 0.0
    %2294 = vmatprep.subr.mxu0 0.0
    %2295 = vmatpush1.msra.mxu0 0.0
    %2296 = vmatprep.subr.mxu0 0.0
    %2297 = vmatpush1.msra.mxu0 0.0
    %2298 = vmatprep.subr.mxu0 0.0
    %2299 = vmatpush1.msra.mxu0 0.0
    %2300 = vmatprep.mubr.f32.mxu0 0.0
    %2301 = vmatmul.mubr.f32.gmra.mrb[0].mxu0 %v1965
    %v2302 = vpop.f32.mrb[0].mxu0
    %v2303 = vadd.f32 %v2161, %v2302
    %v2304 = vpop.f32.mrb[0].mxu0
    %v2305 = vadd.f32 %v2163, %v2304
    %2306 = vdwg.mxu0
    %2307 = vmatprep.subr.mxu0 %v1969
    %2308 = vmatpush1.msra.mxu0 %v1968
    %2309 = vmatprep.subr.mxu0 %v1973
    %2310 = vmatpush1.msra.mxu0 %v1972
    %2311 = vmatprep.subr.mxu0 %v1977
    %2312 = vmatpush1.msra.mxu0 %v1976
    %2313 = vmatprep.subr.mxu0 %v1981
    %2314 = vmatpush1.msra.mxu0 %v1980
    %2315 = vmatprep.subr.mxu0 %v1985
    %2316 = vmatpush1.msra.mxu0 %v1984
    %2317 = vmatprep.subr.mxu0 %v1989
    %2318 = vmatpush1.msra.mxu0 %v1988
    %2319 = vmatprep.subr.mxu0 %v1993
    %2320 = vmatpush1.msra.mxu0 %v1992
    %2321 = vmatprep.subr.mxu0 %v1997
    %2322 = vmatpush1.msra.mxu0 %v1996
    %2323 = vmatprep.subr.mxu0 %v2001
    %2324 = vmatpush1.msra.mxu0 %v2000
    %2325 = vmatprep.subr.mxu0 %v2005
    %2326 = vmatpush1.msra.mxu0 %v2004
    %2327 = vmatprep.subr.mxu0 %v2009
    %2328 = vmatpush1.msra.mxu0 %v2008
    %2329 = vmatprep.subr.mxu0 %v2013
    %2330 = vmatpush1.msra.mxu0 %v2012
    %2331 = vmatprep.subr.mxu0 %v2017
    %2332 = vmatpush1.msra.mxu0 %v2016
    %2333 = vmatprep.subr.mxu0 %v2021
    %2334 = vmatpush1.msra.mxu0 %v2020
    %2335 = vmatprep.subr.mxu0 %v2025
    %2336 = vmatpush1.msra.mxu0 %v2024
    %2337 = vmatprep.subr.mxu0 %v2029
    %2338 = vmatpush1.msra.mxu0 %v2028
    %2339 = vmatprep.subr.mxu0 0.0
    %2340 = vmatpush1.msra.mxu0 0.0
    %2341 = vmatprep.subr.mxu0 0.0
    %2342 = vmatpush1.msra.mxu0 0.0
    %2343 = vmatprep.subr.mxu0 0.0
    %2344 = vmatpush1.msra.mxu0 0.0
    %2345 = vmatprep.subr.mxu0 0.0
    %2346 = vmatpush1.msra.mxu0 0.0
    %2347 = vmatprep.subr.mxu0 0.0
    %2348 = vmatpush1.msra.mxu0 0.0
    %2349 = vmatprep.subr.mxu0 0.0
    %2350 = vmatpush1.msra.mxu0 0.0
    %2351 = vmatprep.subr.mxu0 0.0
    %2352 = vmatpush1.msra.mxu0 0.0
    %2353 = vmatprep.subr.mxu0 0.0
    %2354 = vmatpush1.msra.mxu0 0.0
    %2355 = vmatprep.subr.mxu0 0.0
    %2356 = vmatpush1.msra.mxu0 0.0
    %2357 = vmatprep.subr.mxu0 0.0
    %2358 = vmatpush1.msra.mxu0 0.0
    %2359 = vmatprep.subr.mxu0 0.0
    %2360 = vmatpush1.msra.mxu0 0.0
    %2361 = vmatprep.subr.mxu0 0.0
    %2362 = vmatpush1.msra.mxu0 0.0
    %2363 = vmatprep.subr.mxu0 0.0
    %2364 = vmatpush1.msra.mxu0 0.0
    %2365 = vmatprep.subr.mxu0 0.0
    %2366 = vmatpush1.msra.mxu0 0.0
    %2367 = vmatprep.subr.mxu0 0.0
    %2368 = vmatpush1.msra.mxu0 0.0
    %2369 = vmatprep.subr.mxu0 0.0
    %2370 = vmatpush1.msra.mxu0 0.0
    %2371 = vmatprep.mubr.f32.mxu0 0.0
    %2372 = vmatmul.mubr.f32.gmra.mrb[0].mxu0 %v1965
    %v2373 = vpop.f32.mrb[0].mxu0
    %v2374 = vadd.f32 %v2232, %v2373
    %v2375 = vpop.f32.mrb[0].mxu0
    %v2376 = vadd.f32 %v2234, %v2375
    %2377 = vdwg.mxu0
    %v2378 = vadd.f32 %v2303, %v100
    %v2379 = vadd.f32 %v2305, %v104
    %v2380 = vadd.f32 %v2374, %v108
    %v2381 = vadd.f32 %v2376, %v112
    %v2382 = vxor.u32 %v2378, 2147483648
    %v2383 = vxor.u32 %v2379, 2147483648
    %v2384 = vxor.u32 %v2380, 2147483648
    %v2385 = vmul.f32 %v2382, 1.442695
    %v2386 = vpow.pop %v2385
    %v2387 = vmul.f32 %v2383, 1.442695
    %v2388 = vpow.pop %v2387
    %v2389 = vmul.f32 %v2384, 1.442695
    %v2390 = vpow.pop %v2389
    %v2391 = vadd.f32 %v2386, 1.0
    %v2392 = vadd.f32 %v2388, 1.0
    %v2393 = vadd.f32 %v2390, 1.0
    %v2394 = vrcp.pop %v2391
    %v2395 = vmul.f32 1.0, %v2394
    %v2396 = vrcp.pop %v2392
    %v2397 = vmul.f32 1.0, %v2396
    %v2398 = vrcp.pop %v2393
    %v2399 = vmul.f32 1.0, %v2398
    %v2400 = vtanh.pop %v2381
    %v2401 = vmul.f32 %v2397, %v1718
    %v2402 = vmul.f32 %v2395, %v2400
    %v2403 = vadd.f32 %v2401, %v2402
    %v2404 = vtanh.pop %v2403
    %v2405 = vmul.f32 %v2399, %v2404
    %s2406 = scalar_lea.vmem [#allocation3], 8
    %2407 = vst [vmem:[%s2406] sm:$0xf] %v2405
    %s2408 = scalar_lea.vmem [#allocation2], 48
    %v2409 = vld [vmem:[%s2408] sm:$0xff]
    %v2410 = vld [vmem:[%s2408 + $0x8] sm:$0xff]
    %v2411 = vld [vmem:[#allocation5] sm:$0xff]
    %v2412 = vld [vmem:[#allocation5 + $0x8] sm:$0xff]
    %v2413 = vld [vmem:[#allocation5 + $0x10] sm:$0xff]
    %v2414 = vld [vmem:[#allocation5 + $0x18] sm:$0xff]
    %v2415 = vld [vmem:[#allocation5 + $0x20] sm:$0xff]
    %v2416 = vld [vmem:[#allocation5 + $0x28] sm:$0xff]
    %v2417 = vld [vmem:[#allocation5 + $0x30] sm:$0xff]
    %v2418 = vld [vmem:[#allocation5 + $0x38] sm:$0xff]
    %v2419 = vld [vmem:[#allocation5 + $0x40] sm:$0xff]
    %v2420 = vld [vmem:[#allocation5 + $0x48] sm:$0xff]
    %v2421 = vld [vmem:[#allocation5 + $0x50] sm:$0xff]
    %v2422 = vld [vmem:[#allocation5 + $0x58] sm:$0xff]
    %v2423 = vld [vmem:[#allocation5 + $0x60] sm:$0xff]
    %v2424 = vld [vmem:[#allocation5 + $0x68] sm:$0xff]
    %v2425 = vld [vmem:[#allocation5 + $0x70] sm:$0xff]
    %v2426 = vld [vmem:[#allocation5 + $0x78] sm:$0xff]
    %v2427 = vld [vmem:[#allocation5 + $0x80] sm:$0xff]
    %v2428 = vld [vmem:[#allocation5 + $0x88] sm:$0xff]
    %v2429 = vld [vmem:[#allocation5 + $0x90] sm:$0xff]
    %v2430 = vld [vmem:[#allocation5 + $0x98] sm:$0xff]
    %v2431 = vld [vmem:[#allocation5 + $0xa0] sm:$0xff]
    %v2432 = vld [vmem:[#allocation5 + $0xa8] sm:$0xff]
    %v2433 = vld [vmem:[#allocation5 + $0xb0] sm:$0xff]
    %v2434 = vld [vmem:[#allocation5 + $0xb8] sm:$0xff]
    %v2435 = vld [vmem:[#allocation5 + $0xc0] sm:$0xff]
    %v2436 = vld [vmem:[#allocation5 + $0xc8] sm:$0xff]
    %v2437 = vld [vmem:[#allocation5 + $0xd0] sm:$0xff]
    %v2438 = vld [vmem:[#allocation5 + $0xd8] sm:$0xff]
    %v2439 = vld [vmem:[#allocation5 + $0xe0] sm:$0xff]
    %v2440 = vld [vmem:[#allocation5 + $0xe8] sm:$0xff]
    %v2441 = vld [vmem:[#allocation5 + $0xf0] sm:$0xff]
    %v2442 = vld [vmem:[#allocation5 + $0xf8] sm:$0xff]
    %v2443 = vld [vmem:[#allocation5 + $0x100] sm:$0xff]
    %v2444 = vld [vmem:[#allocation5 + $0x108] sm:$0xff]
    %v2445 = vld [vmem:[#allocation5 + $0x110] sm:$0xff]
    %v2446 = vld [vmem:[#allocation5 + $0x118] sm:$0xff]
    %v2447 = vld [vmem:[#allocation5 + $0x120] sm:$0xff]
    %v2448 = vld [vmem:[#allocation5 + $0x128] sm:$0xff]
    %v2449 = vld [vmem:[#allocation5 + $0x130] sm:$0xff]
    %v2450 = vld [vmem:[#allocation5 + $0x138] sm:$0xff]
    %v2451 = vld [vmem:[#allocation5 + $0x140] sm:$0xff]
    %v2452 = vld [vmem:[#allocation5 + $0x148] sm:$0xff]
    %v2453 = vld [vmem:[#allocation5 + $0x150] sm:$0xff]
    %v2454 = vld [vmem:[#allocation5 + $0x158] sm:$0xff]
    %v2455 = vld [vmem:[#allocation5 + $0x160] sm:$0xff]
    %v2456 = vld [vmem:[#allocation5 + $0x168] sm:$0xff]
    %v2457 = vld [vmem:[#allocation5 + $0x170] sm:$0xff]
    %v2458 = vld [vmem:[#allocation5 + $0x178] sm:$0xff]
    %v2459 = vld [vmem:[#allocation5 + $0x180] sm:$0xff]
    %v2460 = vld [vmem:[#allocation5 + $0x188] sm:$0xff]
    %v2461 = vld [vmem:[#allocation5 + $0x190] sm:$0xff]
    %v2462 = vld [vmem:[#allocation5 + $0x198] sm:$0xff]
    %v2463 = vld [vmem:[#allocation5 + $0x1a0] sm:$0xff]
    %v2464 = vld [vmem:[#allocation5 + $0x1a8] sm:$0xff]
    %v2465 = vld [vmem:[#allocation5 + $0x1b0] sm:$0xff]
    %v2466 = vld [vmem:[#allocation5 + $0x1b8] sm:$0xff]
    %v2467 = vld [vmem:[#allocation5 + $0x1c0] sm:$0xff]
    %v2468 = vld [vmem:[#allocation5 + $0x1c8] sm:$0xff]
    %v2469 = vld [vmem:[#allocation5 + $0x1d0] sm:$0xff]
    %v2470 = vld [vmem:[#allocation5 + $0x1d8] sm:$0xff]
    %v2471 = vld [vmem:[#allocation5 + $0x1e0] sm:$0xff]
    %v2472 = vld [vmem:[#allocation5 + $0x1e8] sm:$0xff]
    %v2473 = vld [vmem:[#allocation5 + $0x1f0] sm:$0xff]
    %v2474 = vld [vmem:[#allocation5 + $0x1f8] sm:$0xff]
    %2475 = vmatprep.subr.mxu0 %v2412
    %2476 = vmatpush1.msra.mxu0 %v2411
    %2477 = vmatprep.subr.mxu0 %v2416
    %2478 = vmatpush1.msra.mxu0 %v2415
    %2479 = vmatprep.subr.mxu0 %v2420
    %2480 = vmatpush1.msra.mxu0 %v2419
    %2481 = vmatprep.subr.mxu0 %v2424
    %2482 = vmatpush1.msra.mxu0 %v2423
    %2483 = vmatprep.subr.mxu0 %v2428
    %2484 = vmatpush1.msra.mxu0 %v2427
    %2485 = vmatprep.subr.mxu0 %v2432
    %2486 = vmatpush1.msra.mxu0 %v2431
    %2487 = vmatprep.subr.mxu0 %v2436
    %2488 = vmatpush1.msra.mxu0 %v2435
    %2489 = vmatprep.subr.mxu0 %v2440
    %2490 = vmatpush1.msra.mxu0 %v2439
    %2491 = vmatprep.subr.mxu0 %v2444
    %2492 = vmatpush1.msra.mxu0 %v2443
    %2493 = vmatprep.subr.mxu0 %v2448
    %2494 = vmatpush1.msra.mxu0 %v2447
    %2495 = vmatprep.subr.mxu0 %v2452
    %2496 = vmatpush1.msra.mxu0 %v2451
    %2497 = vmatprep.subr.mxu0 %v2456
    %2498 = vmatpush1.msra.mxu0 %v2455
    %2499 = vmatprep.subr.mxu0 %v2460
    %2500 = vmatpush1.msra.mxu0 %v2459
    %2501 = vmatprep.subr.mxu0 %v2464
    %2502 = vmatpush1.msra.mxu0 %v2463
    %2503 = vmatprep.subr.mxu0 %v2468
    %2504 = vmatpush1.msra.mxu0 %v2467
    %2505 = vmatprep.subr.mxu0 %v2472
    %2506 = vmatpush1.msra.mxu0 %v2471
    %2507 = vmatprep.subr.mxu0 0.0
    %2508 = vmatpush1.msra.mxu0 0.0
    %2509 = vmatprep.subr.mxu0 0.0
    %2510 = vmatpush1.msra.mxu0 0.0
    %2511 = vmatprep.subr.mxu0 0.0
    %2512 = vmatpush1.msra.mxu0 0.0
    %2513 = vmatprep.subr.mxu0 0.0
    %2514 = vmatpush1.msra.mxu0 0.0
    %2515 = vmatprep.subr.mxu0 0.0
    %2516 = vmatpush1.msra.mxu0 0.0
    %2517 = vmatprep.subr.mxu0 0.0
    %2518 = vmatpush1.msra.mxu0 0.0
    %2519 = vmatprep.subr.mxu0 0.0
    %2520 = vmatpush1.msra.mxu0 0.0
    %2521 = vmatprep.subr.mxu0 0.0
    %2522 = vmatpush1.msra.mxu0 0.0
    %2523 = vmatprep.subr.mxu0 0.0
    %2524 = vmatpush1.msra.mxu0 0.0
    %2525 = vmatprep.subr.mxu0 0.0
    %2526 = vmatpush1.msra.mxu0 0.0
    %2527 = vmatprep.subr.mxu0 0.0
    %2528 = vmatpush1.msra.mxu0 0.0
    %2529 = vmatprep.subr.mxu0 0.0
    %2530 = vmatpush1.msra.mxu0 0.0
    %2531 = vmatprep.subr.mxu0 0.0
    %2532 = vmatpush1.msra.mxu0 0.0
    %2533 = vmatprep.subr.mxu0 0.0
    %2534 = vmatpush1.msra.mxu0 0.0
    %2535 = vmatprep.subr.mxu0 0.0
    %2536 = vmatpush1.msra.mxu0 0.0
    %2537 = vmatprep.subr.mxu0 0.0
    %2538 = vmatpush1.msra.mxu0 0.0
    %2539 = vmatprep.mubr.f32.mxu0 0.0
    %2540 = vmatmul.mubr.f32.gmra.mrb[0].mxu0 %v1965
    %v2541 = vpop.f32.mrb[0].mxu0
    %v2542 = vadd.f32 0.0, %v2541
    %v2543 = vpop.f32.mrb[0].mxu0
    %v2544 = vadd.f32 0.0, %v2543
    %2545 = vdwg.mxu0
    %2546 = vmatprep.subr.mxu0 %v2414
    %2547 = vmatpush1.msra.mxu0 %v2413
    %2548 = vmatprep.subr.mxu0 %v2418
    %2549 = vmatpush1.msra.mxu0 %v2417
    %2550 = vmatprep.subr.mxu0 %v2422
    %2551 = vmatpush1.msra.mxu0 %v2421
    %2552 = vmatprep.subr.mxu0 %v2426
    %2553 = vmatpush1.msra.mxu0 %v2425
    %2554 = vmatprep.subr.mxu0 %v2430
    %2555 = vmatpush1.msra.mxu0 %v2429
    %2556 = vmatprep.subr.mxu0 %v2434
    %2557 = vmatpush1.msra.mxu0 %v2433
    %2558 = vmatprep.subr.mxu0 %v2438
    %2559 = vmatpush1.msra.mxu0 %v2437
    %2560 = vmatprep.subr.mxu0 %v2442
    %2561 = vmatpush1.msra.mxu0 %v2441
    %2562 = vmatprep.subr.mxu0 %v2446
    %2563 = vmatpush1.msra.mxu0 %v2445
    %2564 = vmatprep.subr.mxu0 %v2450
    %2565 = vmatpush1.msra.mxu0 %v2449
    %2566 = vmatprep.subr.mxu0 %v2454
    %2567 = vmatpush1.msra.mxu0 %v2453
    %2568 = vmatprep.subr.mxu0 %v2458
    %2569 = vmatpush1.msra.mxu0 %v2457
    %2570 = vmatprep.subr.mxu0 %v2462
    %2571 = vmatpush1.msra.mxu0 %v2461
    %2572 = vmatprep.subr.mxu0 %v2466
    %2573 = vmatpush1.msra.mxu0 %v2465
    %2574 = vmatprep.subr.mxu0 %v2470
    %2575 = vmatpush1.msra.mxu0 %v2469
    %2576 = vmatprep.subr.mxu0 %v2474
    %2577 = vmatpush1.msra.mxu0 %v2473
    %2578 = vmatprep.subr.mxu0 0.0
    %2579 = vmatpush1.msra.mxu0 0.0
    %2580 = vmatprep.subr.mxu0 0.0
    %2581 = vmatpush1.msra.mxu0 0.0
    %2582 = vmatprep.subr.mxu0 0.0
    %2583 = vmatpush1.msra.mxu0 0.0
    %2584 = vmatprep.subr.mxu0 0.0
    %2585 = vmatpush1.msra.mxu0 0.0
    %2586 = vmatprep.subr.mxu0 0.0
    %2587 = vmatpush1.msra.mxu0 0.0
    %2588 = vmatprep.subr.mxu0 0.0
    %2589 = vmatpush1.msra.mxu0 0.0
    %2590 = vmatprep.subr.mxu0 0.0
    %2591 = vmatpush1.msra.mxu0 0.0
    %2592 = vmatprep.subr.mxu0 0.0
    %2593 = vmatpush1.msra.mxu0 0.0
    %2594 = vmatprep.subr.mxu0 0.0
    %2595 = vmatpush1.msra.mxu0 0.0
    %2596 = vmatprep.subr.mxu0 0.0
    %2597 = vmatpush1.msra.mxu0 0.0
    %2598 = vmatprep.subr.mxu0 0.0
    %2599 = vmatpush1.msra.mxu0 0.0
    %2600 = vmatprep.subr.mxu0 0.0
    %2601 = vmatpush1.msra.mxu0 0.0
    %2602 = vmatprep.subr.mxu0 0.0
    %2603 = vmatpush1.msra.mxu0 0.0
    %2604 = vmatprep.subr.mxu0 0.0
    %2605 = vmatpush1.msra.mxu0 0.0
    %2606 = vmatprep.subr.mxu0 0.0
    %2607 = vmatpush1.msra.mxu0 0.0
    %2608 = vmatprep.subr.mxu0 0.0
    %2609 = vmatpush1.msra.mxu0 0.0
    %2610 = vmatprep.mubr.f32.mxu0 0.0
    %2611 = vmatmul.mubr.f32.gmra.mrb[0].mxu0 %v1965
    %v2612 = vpop.f32.mrb[0].mxu0
    %v2613 = vadd.f32 0.0, %v2612
    %v2614 = vpop.f32.mrb[0].mxu0
    %v2615 = vadd.f32 0.0, %v2614
    %2616 = vdwg.mxu0
    %v2621 = vcombine.low %v2542, %v2544
    %v2622 = vcombine.low %v2613, %v2615
    %v2625 = vadd.f32 %v2409, %v2621
    %v2626 = vadd.f32 %v2410, %v2622
    %v2627 = vxor.u32 %v2625, 2147483648
    %v2628 = vxor.u32 %v2626, 2147483648
    %v2629 = vmul.f32 %v2627, 1.442695
    %v2630 = vpow.pop %v2629
    %v2631 = vmul.f32 %v2628, 1.442695
    %v2632 = vpow.pop %v2631
    %v2633 = vadd.f32 %v2630, 1.0
    %v2634 = vadd.f32 %v2632, 1.0
    %v2635 = vrcp.pop %v2633
    %v2636 = vmul.f32 1.0, %v2635
    %v2637 = vrcp.pop %v2634
    %v2638 = vmul.f32 1.0, %v2637
    %v2640 = vrot.slane %v2626, 4
    %v2642 = vtanh.pop %v2640
    %v2644 = vrot.slane %v2636, 4
    %v2646 = vmul.f32 %v2644, %v1963
    %v2647 = vmul.f32 %v2636, %v2642
    %v2648 = vadd.f32 %v2646, %v2647
    %v2649 = vtanh.pop %v2648
    %v2650 = vmul.f32 %v2638, %v2649
    %v2651 = vld [vmem:[#allocation7] sm:$0xff]
    %v2652 = vld [vmem:[#allocation7 + $0x8] sm:$0xff]
    %v2653 = vld [vmem:[#allocation7 + $0x10] sm:$0xff]
    %v2654 = vld [vmem:[#allocation7 + $0x18] sm:$0xff]
    %v2655 = vld [vmem:[#allocation7 + $0x20] sm:$0xff]
    %v2656 = vld [vmem:[#allocation7 + $0x28] sm:$0xff]
    %v2657 = vld [vmem:[#allocation7 + $0x30] sm:$0xff]
    %v2658 = vld [vmem:[#allocation7 + $0x38] sm:$0xff]
    %v2659 = vld [vmem:[#allocation7 + $0x40] sm:$0xff]
    %v2660 = vld [vmem:[#allocation7 + $0x48] sm:$0xff]
    %v2661 = vld [vmem:[#allocation7 + $0x50] sm:$0xff]
    %v2662 = vld [vmem:[#allocation7 + $0x58] sm:$0xff]
    %v2663 = vld [vmem:[#allocation7 + $0x60] sm:$0xff]
    %v2664 = vld [vmem:[#allocation7 + $0x68] sm:$0xff]
    %v2665 = vld [vmem:[#allocation7 + $0x70] sm:$0xff]
    %v2666 = vld [vmem:[#allocation7 + $0x78] sm:$0xff]
    %v2667 = vld [vmem:[#allocation7 + $0x80] sm:$0xff]
    %v2668 = vld [vmem:[#allocation7 + $0x88] sm:$0xff]
    %v2669 = vld [vmem:[#allocation7 + $0x90] sm:$0xff]
    %v2670 = vld [vmem:[#allocation7 + $0x98] sm:$0xff]
    %v2671 = vld [vmem:[#allocation7 + $0xa0] sm:$0xff]
    %v2672 = vld [vmem:[#allocation7 + $0xa8] sm:$0xff]
    %v2673 = vld [vmem:[#allocation7 + $0xb0] sm:$0xff]
    %v2674 = vld [vmem:[#allocation7 + $0xb8] sm:$0xff]
    %v2675 = vld [vmem:[#allocation7 + $0xc0] sm:$0xff]
    %v2676 = vld [vmem:[#allocation7 + $0xc8] sm:$0xff]
    %v2677 = vld [vmem:[#allocation7 + $0xd0] sm:$0xff]
    %v2678 = vld [vmem:[#allocation7 + $0xd8] sm:$0xff]
    %v2679 = vld [vmem:[#allocation7 + $0xe0] sm:$0xff]
    %v2680 = vld [vmem:[#allocation7 + $0xe8] sm:$0xff]
    %v2681 = vld [vmem:[#allocation7 + $0xf0] sm:$0xff]
    %v2682 = vld [vmem:[#allocation7 + $0xf8] sm:$0xff]
    %v2683 = vld [vmem:[#allocation7 + $0x100] sm:$0xff]
    %v2684 = vld [vmem:[#allocation7 + $0x108] sm:$0xff]
    %v2685 = vld [vmem:[#allocation7 + $0x110] sm:$0xff]
    %v2686 = vld [vmem:[#allocation7 + $0x118] sm:$0xff]
    %v2687 = vld [vmem:[#allocation7 + $0x120] sm:$0xff]
    %v2688 = vld [vmem:[#allocation7 + $0x128] sm:$0xff]
    %v2689 = vld [vmem:[#allocation7 + $0x130] sm:$0xff]
    %v2690 = vld [vmem:[#allocation7 + $0x138] sm:$0xff]
    %v2691 = vld [vmem:[#allocation7 + $0x140] sm:$0xff]
    %v2692 = vld [vmem:[#allocation7 + $0x148] sm:$0xff]
    %v2693 = vld [vmem:[#allocation7 + $0x150] sm:$0xff]
    %v2694 = vld [vmem:[#allocation7 + $0x158] sm:$0xff]
    %v2695 = vld [vmem:[#allocation7 + $0x160] sm:$0xff]
    %v2696 = vld [vmem:[#allocation7 + $0x168] sm:$0xff]
    %v2697 = vld [vmem:[#allocation7 + $0x170] sm:$0xff]
    %v2698 = vld [vmem:[#allocation7 + $0x178] sm:$0xff]
    %v2699 = vld [vmem:[#allocation7 + $0x180] sm:$0xff]
    %v2700 = vld [vmem:[#allocation7 + $0x188] sm:$0xff]
    %v2701 = vld [vmem:[#allocation7 + $0x190] sm:$0xff]
    %v2702 = vld [vmem:[#allocation7 + $0x198] sm:$0xff]
    %v2703 = vld [vmem:[#allocation7 + $0x1a0] sm:$0xff]
    %v2704 = vld [vmem:[#allocation7 + $0x1a8] sm:$0xff]
    %v2705 = vld [vmem:[#allocation7 + $0x1b0] sm:$0xff]
    %v2706 = vld [vmem:[#allocation7 + $0x1b8] sm:$0xff]
    %v2707 = vld [vmem:[#allocation7 + $0x1c0] sm:$0xff]
    %v2708 = vld [vmem:[#allocation7 + $0x1c8] sm:$0xff]
    %v2709 = vld [vmem:[#allocation7 + $0x1d0] sm:$0xff]
    %v2710 = vld [vmem:[#allocation7 + $0x1d8] sm:$0xff]
    %v2711 = vld [vmem:[#allocation7 + $0x1e0] sm:$0xff]
    %v2712 = vld [vmem:[#allocation7 + $0x1e8] sm:$0xff]
    %v2713 = vld [vmem:[#allocation7 + $0x1f0] sm:$0xff]
    %v2714 = vld [vmem:[#allocation7 + $0x1f8] sm:$0xff]
    %v2715 = vld [vmem:[#allocation9] sm:$0xff]
    %v2716 = vld [vmem:[#allocation9 + $0x8] sm:$0xff]
    %v2717 = vld [vmem:[#allocation9 + $0x10] sm:$0xff]
    %v2718 = vld [vmem:[#allocation9 + $0x18] sm:$0xff]
    %v2719 = vld [vmem:[#allocation9 + $0x20] sm:$0xff]
    %v2720 = vld [vmem:[#allocation9 + $0x28] sm:$0xff]
    %v2721 = vld [vmem:[#allocation9 + $0x30] sm:$0xff]
    %v2722 = vld [vmem:[#allocation9 + $0x38] sm:$0xff]
    %v2723 = vld [vmem:[#allocation9 + $0x40] sm:$0xff]
    %v2724 = vld [vmem:[#allocation9 + $0x48] sm:$0xff]
    %v2725 = vld [vmem:[#allocation9 + $0x50] sm:$0xff]
    %v2726 = vld [vmem:[#allocation9 + $0x58] sm:$0xff]
    %v2727 = vld [vmem:[#allocation9 + $0x60] sm:$0xff]
    %v2728 = vld [vmem:[#allocation9 + $0x68] sm:$0xff]
    %v2729 = vld [vmem:[#allocation9 + $0x70] sm:$0xff]
    %v2730 = vld [vmem:[#allocation9 + $0x78] sm:$0xff]
    %v2731 = vld [vmem:[#allocation9 + $0x80] sm:$0xff]
    %v2732 = vld [vmem:[#allocation9 + $0x88] sm:$0xff]
    %v2733 = vld [vmem:[#allocation9 + $0x90] sm:$0xff]
    %v2734 = vld [vmem:[#allocation9 + $0x98] sm:$0xff]
    %v2735 = vld [vmem:[#allocation9 + $0xa0] sm:$0xff]
    %v2736 = vld [vmem:[#allocation9 + $0xa8] sm:$0xff]
    %v2737 = vld [vmem:[#allocation9 + $0xb0] sm:$0xff]
    %v2738 = vld [vmem:[#allocation9 + $0xb8] sm:$0xff]
    %v2739 = vld [vmem:[#allocation9 + $0xc0] sm:$0xff]
    %v2740 = vld [vmem:[#allocation9 + $0xc8] sm:$0xff]
    %v2741 = vld [vmem:[#allocation9 + $0xd0] sm:$0xff]
    %v2742 = vld [vmem:[#allocation9 + $0xd8] sm:$0xff]
    %v2743 = vld [vmem:[#allocation9 + $0xe0] sm:$0xff]
    %v2744 = vld [vmem:[#allocation9 + $0xe8] sm:$0xff]
    %v2745 = vld [vmem:[#allocation9 + $0xf0] sm:$0xff]
    %v2746 = vld [vmem:[#allocation9 + $0xf8] sm:$0xff]
    %v2747 = vld [vmem:[#allocation9 + $0x100] sm:$0xff]
    %v2748 = vld [vmem:[#allocation9 + $0x108] sm:$0xff]
    %v2749 = vld [vmem:[#allocation9 + $0x110] sm:$0xff]
    %v2750 = vld [vmem:[#allocation9 + $0x118] sm:$0xff]
    %v2751 = vld [vmem:[#allocation9 + $0x120] sm:$0xff]
    %v2752 = vld [vmem:[#allocation9 + $0x128] sm:$0xff]
    %v2753 = vld [vmem:[#allocation9 + $0x130] sm:$0xff]
    %v2754 = vld [vmem:[#allocation9 + $0x138] sm:$0xff]
    %v2755 = vld [vmem:[#allocation9 + $0x140] sm:$0xff]
    %v2756 = vld [vmem:[#allocation9 + $0x148] sm:$0xff]
    %v2757 = vld [vmem:[#allocation9 + $0x150] sm:$0xff]
    %v2758 = vld [vmem:[#allocation9 + $0x158] sm:$0xff]
    %v2759 = vld [vmem:[#allocation9 + $0x160] sm:$0xff]
    %v2760 = vld [vmem:[#allocation9 + $0x168] sm:$0xff]
    %v2761 = vld [vmem:[#allocation9 + $0x170] sm:$0xff]
    %v2762 = vld [vmem:[#allocation9 + $0x178] sm:$0xff]
    %v2763 = vld [vmem:[#allocation9 + $0x180] sm:$0xff]
    %v2764 = vld [vmem:[#allocation9 + $0x188] sm:$0xff]
    %v2765 = vld [vmem:[#allocation9 + $0x190] sm:$0xff]
    %v2766 = vld [vmem:[#allocation9 + $0x198] sm:$0xff]
    %v2767 = vld [vmem:[#allocation9 + $0x1a0] sm:$0xff]
    %v2768 = vld [vmem:[#allocation9 + $0x1a8] sm:$0xff]
    %v2769 = vld [vmem:[#allocation9 + $0x1b0] sm:$0xff]
    %v2770 = vld [vmem:[#allocation9 + $0x1b8] sm:$0xff]
    %v2771 = vld [vmem:[#allocation9 + $0x1c0] sm:$0xff]
    %v2772 = vld [vmem:[#allocation9 + $0x1c8] sm:$0xff]
    %v2773 = vld [vmem:[#allocation9 + $0x1d0] sm:$0xff]
    %v2774 = vld [vmem:[#allocation9 + $0x1d8] sm:$0xff]
    %v2775 = vld [vmem:[#allocation9 + $0x1e0] sm:$0xff]
    %v2776 = vld [vmem:[#allocation9 + $0x1e8] sm:$0xff]
    %v2777 = vld [vmem:[#allocation9 + $0x1f0] sm:$0xff]
    %v2778 = vld [vmem:[#allocation9 + $0x1f8] sm:$0xff]
    %2779 = vmatprep.subr.mxu0 %v2716
    %2780 = vmatpush1.msra.mxu0 %v2715
    %2781 = vmatprep.subr.mxu0 %v2720
    %2782 = vmatpush1.msra.mxu0 %v2719
    %2783 = vmatprep.subr.mxu0 %v2724
    %2784 = vmatpush1.msra.mxu0 %v2723
    %2785 = vmatprep.subr.mxu0 %v2728
    %2786 = vmatpush1.msra.mxu0 %v2727
    %2787 = vmatprep.subr.mxu0 %v2732
    %2788 = vmatpush1.msra.mxu0 %v2731
    %2789 = vmatprep.subr.mxu0 %v2736
    %2790 = vmatpush1.msra.mxu0 %v2735
    %2791 = vmatprep.subr.mxu0 %v2740
    %2792 = vmatpush1.msra.mxu0 %v2739
    %2793 = vmatprep.subr.mxu0 %v2744
    %2794 = vmatpush1.msra.mxu0 %v2743
    %2795 = vmatprep.subr.mxu0 %v2748
    %2796 = vmatpush1.msra.mxu0 %v2747
    %2797 = vmatprep.subr.mxu0 %v2752
    %2798 = vmatpush1.msra.mxu0 %v2751
    %2799 = vmatprep.subr.mxu0 %v2756
    %2800 = vmatpush1.msra.mxu0 %v2755
    %2801 = vmatprep.subr.mxu0 %v2760
    %2802 = vmatpush1.msra.mxu0 %v2759
    %2803 = vmatprep.subr.mxu0 %v2764
    %2804 = vmatpush1.msra.mxu0 %v2763
    %2805 = vmatprep.subr.mxu0 %v2768
    %2806 = vmatpush1.msra.mxu0 %v2767
    %2807 = vmatprep.subr.mxu0 %v2772
    %2808 = vmatpush1.msra.mxu0 %v2771
    %2809 = vmatprep.subr.mxu0 %v2776
    %2810 = vmatpush1.msra.mxu0 %v2775
    %2811 = vmatprep.subr.mxu0 0.0
    %2812 = vmatpush1.msra.mxu0 0.0
    %2813 = vmatprep.subr.mxu0 0.0
    %2814 = vmatpush1.msra.mxu0 0.0
    %2815 = vmatprep.subr.mxu0 0.0
    %2816 = vmatpush1.msra.mxu0 0.0
    %2817 = vmatprep.subr.mxu0 0.0
    %2818 = vmatpush1.msra.mxu0 0.0
    %2819 = vmatprep.subr.mxu0 0.0
    %2820 = vmatpush1.msra.mxu0 0.0
    %2821 = vmatprep.subr.mxu0 0.0
    %2822 = vmatpush1.msra.mxu0 0.0
    %2823 = vmatprep.subr.mxu0 0.0
    %2824 = vmatpush1.msra.mxu0 0.0
    %2825 = vmatprep.subr.mxu0 0.0
    %2826 = vmatpush1.msra.mxu0 0.0
    %2827 = vmatprep.subr.mxu0 0.0
    %2828 = vmatpush1.msra.mxu0 0.0
    %2829 = vmatprep.subr.mxu0 0.0
    %2830 = vmatpush1.msra.mxu0 0.0
    %2831 = vmatprep.subr.mxu0 0.0
    %2832 = vmatpush1.msra.mxu0 0.0
    %2833 = vmatprep.subr.mxu0 0.0
    %2834 = vmatpush1.msra.mxu0 0.0
    %2835 = vmatprep.subr.mxu0 0.0
    %2836 = vmatpush1.msra.mxu0 0.0
    %2837 = vmatprep.subr.mxu0 0.0
    %2838 = vmatpush1.msra.mxu0 0.0
    %2839 = vmatprep.subr.mxu0 0.0
    %2840 = vmatpush1.msra.mxu0 0.0
    %2841 = vmatprep.subr.mxu0 0.0
    %2842 = vmatpush1.msra.mxu0 0.0
    %2843 = vmatprep.mubr.f32.mxu0 0.0
    %2844 = vmatmul.mubr.f32.gmra.mrb[0].mxu0 %v2405
    %v2845 = vpop.f32.mrb[0].mxu0
    %v2846 = vadd.f32 0.0, %v2845
    %v2847 = vpop.f32.mrb[0].mxu0
    %v2848 = vadd.f32 0.0, %v2847
    %2849 = vdwg.mxu0
    %2850 = vmatprep.subr.mxu0 %v2718
    %2851 = vmatpush1.msra.mxu0 %v2717
    %2852 = vmatprep.subr.mxu0 %v2722
    %2853 = vmatpush1.msra.mxu0 %v2721
    %2854 = vmatprep.subr.mxu0 %v2726
    %2855 = vmatpush1.msra.mxu0 %v2725
    %2856 = vmatprep.subr.mxu0 %v2730
    %2857 = vmatpush1.msra.mxu0 %v2729
    %2858 = vmatprep.subr.mxu0 %v2734
    %2859 = vmatpush1.msra.mxu0 %v2733
    %2860 = vmatprep.subr.mxu0 %v2738
    %2861 = vmatpush1.msra.mxu0 %v2737
    %2862 = vmatprep.subr.mxu0 %v2742
    %2863 = vmatpush1.msra.mxu0 %v2741
    %2864 = vmatprep.subr.mxu0 %v2746
    %2865 = vmatpush1.msra.mxu0 %v2745
    %2866 = vmatprep.subr.mxu0 %v2750
    %2867 = vmatpush1.msra.mxu0 %v2749
    %2868 = vmatprep.subr.mxu0 %v2754
    %2869 = vmatpush1.msra.mxu0 %v2753
    %2870 = vmatprep.subr.mxu0 %v2758
    %2871 = vmatpush1.msra.mxu0 %v2757
    %2872 = vmatprep.subr.mxu0 %v2762
    %2873 = vmatpush1.msra.mxu0 %v2761
    %2874 = vmatprep.subr.mxu0 %v2766
    %2875 = vmatpush1.msra.mxu0 %v2765
    %2876 = vmatprep.subr.mxu0 %v2770
    %2877 = vmatpush1.msra.mxu0 %v2769
    %2878 = vmatprep.subr.mxu0 %v2774
    %2879 = vmatpush1.msra.mxu0 %v2773
    %2880 = vmatprep.subr.mxu0 %v2778
    %2881 = vmatpush1.msra.mxu0 %v2777
    %2882 = vmatprep.subr.mxu0 0.0
    %2883 = vmatpush1.msra.mxu0 0.0
    %2884 = vmatprep.subr.mxu0 0.0
    %2885 = vmatpush1.msra.mxu0 0.0
    %2886 = vmatprep.subr.mxu0 0.0
    %2887 = vmatpush1.msra.mxu0 0.0
    %2888 = vmatprep.subr.mxu0 0.0
    %2889 = vmatpush1.msra.mxu0 0.0
    %2890 = vmatprep.subr.mxu0 0.0
    %2891 = vmatpush1.msra.mxu0 0.0
    %2892 = vmatprep.subr.mxu0 0.0
    %2893 = vmatpush1.msra.mxu0 0.0
    %2894 = vmatprep.subr.mxu0 0.0
    %2895 = vmatpush1.msra.mxu0 0.0
    %2896 = vmatprep.subr.mxu0 0.0
    %2897 = vmatpush1.msra.mxu0 0.0
    %2898 = vmatprep.subr.mxu0 0.0
    %2899 = vmatpush1.msra.mxu0 0.0
    %2900 = vmatprep.subr.mxu0 0.0
    %2901 = vmatpush1.msra.mxu0 0.0
    %2902 = vmatprep.subr.mxu0 0.0
    %2903 = vmatpush1.msra.mxu0 0.0
    %2904 = vmatprep.subr.mxu0 0.0
    %2905 = vmatpush1.msra.mxu0 0.0
    %2906 = vmatprep.subr.mxu0 0.0
    %2907 = vmatpush1.msra.mxu0 0.0
    %2908 = vmatprep.subr.mxu0 0.0
    %2909 = vmatpush1.msra.mxu0 0.0
    %2910 = vmatprep.subr.mxu0 0.0
    %2911 = vmatpush1.msra.mxu0 0.0
    %2912 = vmatprep.subr.mxu0 0.0
    %2913 = vmatpush1.msra.mxu0 0.0
    %2914 = vmatprep.mubr.f32.mxu0 0.0
    %2915 = vmatmul.mubr.f32.gmra.mrb[0].mxu0 %v2405
    %v2916 = vpop.f32.mrb[0].mxu0
    %v2917 = vadd.f32 0.0, %v2916
    %v2918 = vpop.f32.mrb[0].mxu0
    %v2919 = vadd.f32 0.0, %v2918
    %2920 = vdwg.mxu0
    %2921 = vmatprep.subr.mxu0 %v2652
    %2922 = vmatpush1.msra.mxu0 %v2651
    %2923 = vmatprep.subr.mxu0 %v2656
    %2924 = vmatpush1.msra.mxu0 %v2655
    %2925 = vmatprep.subr.mxu0 %v2660
    %2926 = vmatpush1.msra.mxu0 %v2659
    %2927 = vmatprep.subr.mxu0 %v2664
    %2928 = vmatpush1.msra.mxu0 %v2663
    %2929 = vmatprep.subr.mxu0 %v2668
    %2930 = vmatpush1.msra.mxu0 %v2667
    %2931 = vmatprep.subr.mxu0 %v2672
    %2932 = vmatpush1.msra.mxu0 %v2671
    %2933 = vmatprep.subr.mxu0 %v2676
    %2934 = vmatpush1.msra.mxu0 %v2675
    %2935 = vmatprep.subr.mxu0 %v2680
    %2936 = vmatpush1.msra.mxu0 %v2679
    %2937 = vmatprep.subr.mxu0 %v2684
    %2938 = vmatpush1.msra.mxu0 %v2683
    %2939 = vmatprep.subr.mxu0 %v2688
    %2940 = vmatpush1.msra.mxu0 %v2687
    %2941 = vmatprep.subr.mxu0 %v2692
    %2942 = vmatpush1.msra.mxu0 %v2691
    %2943 = vmatprep.subr.mxu0 %v2696
    %2944 = vmatpush1.msra.mxu0 %v2695
    %2945 = vmatprep.subr.mxu0 %v2700
    %2946 = vmatpush1.msra.mxu0 %v2699
    %2947 = vmatprep.subr.mxu0 %v2704
    %2948 = vmatpush1.msra.mxu0 %v2703
    %2949 = vmatprep.subr.mxu0 %v2708
    %2950 = vmatpush1.msra.mxu0 %v2707
    %2951 = vmatprep.subr.mxu0 %v2712
    %2952 = vmatpush1.msra.mxu0 %v2711
    %2953 = vmatprep.subr.mxu0 0.0
    %2954 = vmatpush1.msra.mxu0 0.0
    %2955 = vmatprep.subr.mxu0 0.0
    %2956 = vmatpush1.msra.mxu0 0.0
    %2957 = vmatprep.subr.mxu0 0.0
    %2958 = vmatpush1.msra.mxu0 0.0
    %2959 = vmatprep.subr.mxu0 0.0
    %2960 = vmatpush1.msra.mxu0 0.0
    %2961 = vmatprep.subr.mxu0 0.0
    %2962 = vmatpush1.msra.mxu0 0.0
    %2963 = vmatprep.subr.mxu0 0.0
    %2964 = vmatpush1.msra.mxu0 0.0
    %2965 = vmatprep.subr.mxu0 0.0
    %2966 = vmatpush1.msra.mxu0 0.0
    %2967 = vmatprep.subr.mxu0 0.0
    %2968 = vmatpush1.msra.mxu0 0.0
    %2969 = vmatprep.subr.mxu0 0.0
    %2970 = vmatpush1.msra.mxu0 0.0
    %2971 = vmatprep.subr.mxu0 0.0
    %2972 = vmatpush1.msra.mxu0 0.0
    %2973 = vmatprep.subr.mxu0 0.0
    %2974 = vmatpush1.msra.mxu0 0.0
    %2975 = vmatprep.subr.mxu0 0.0
    %2976 = vmatpush1.msra.mxu0 0.0
    %2977 = vmatprep.subr.mxu0 0.0
    %2978 = vmatpush1.msra.mxu0 0.0
    %2979 = vmatprep.subr.mxu0 0.0
    %2980 = vmatpush1.msra.mxu0 0.0
    %2981 = vmatprep.subr.mxu0 0.0
    %2982 = vmatpush1.msra.mxu0 0.0
    %2983 = vmatprep.subr.mxu0 0.0
    %2984 = vmatpush1.msra.mxu0 0.0
    %2985 = vmatprep.mubr.f32.mxu0 0.0
    %2986 = vmatmul.mubr.f32.gmra.mrb[0].mxu0 %v2650
    %v2987 = vpop.f32.mrb[0].mxu0
    %v2988 = vadd.f32 %v2846, %v2987
    %v2989 = vpop.f32.mrb[0].mxu0
    %v2990 = vadd.f32 %v2848, %v2989
    %2991 = vdwg.mxu0
    %2992 = vmatprep.subr.mxu0 %v2654
    %2993 = vmatpush1.msra.mxu0 %v2653
    %2994 = vmatprep.subr.mxu0 %v2658
    %2995 = vmatpush1.msra.mxu0 %v2657
    %2996 = vmatprep.subr.mxu0 %v2662
    %2997 = vmatpush1.msra.mxu0 %v2661
    %2998 = vmatprep.subr.mxu0 %v2666
    %2999 = vmatpush1.msra.mxu0 %v2665
    %3000 = vmatprep.subr.mxu0 %v2670
    %3001 = vmatpush1.msra.mxu0 %v2669
    %3002 = vmatprep.subr.mxu0 %v2674
    %3003 = vmatpush1.msra.mxu0 %v2673
    %3004 = vmatprep.subr.mxu0 %v2678
    %3005 = vmatpush1.msra.mxu0 %v2677
    %3006 = vmatprep.subr.mxu0 %v2682
    %3007 = vmatpush1.msra.mxu0 %v2681
    %3008 = vmatprep.subr.mxu0 %v2686
    %3009 = vmatpush1.msra.mxu0 %v2685
    %3010 = vmatprep.subr.mxu0 %v2690
    %3011 = vmatpush1.msra.mxu0 %v2689
    %3012 = vmatprep.subr.mxu0 %v2694
    %3013 = vmatpush1.msra.mxu0 %v2693
    %3014 = vmatprep.subr.mxu0 %v2698
    %3015 = vmatpush1.msra.mxu0 %v2697
    %3016 = vmatprep.subr.mxu0 %v2702
    %3017 = vmatpush1.msra.mxu0 %v2701
    %3018 = vmatprep.subr.mxu0 %v2706
    %3019 = vmatpush1.msra.mxu0 %v2705
    %3020 = vmatprep.subr.mxu0 %v2710
    %3021 = vmatpush1.msra.mxu0 %v2709
    %3022 = vmatprep.subr.mxu0 %v2714
    %3023 = vmatpush1.msra.mxu0 %v2713
    %3024 = vmatprep.subr.mxu0 0.0
    %3025 = vmatpush1.msra.mxu0 0.0
    %3026 = vmatprep.subr.mxu0 0.0
    %3027 = vmatpush1.msra.mxu0 0.0
    %3028 = vmatprep.subr.mxu0 0.0
    %3029 = vmatpush1.msra.mxu0 0.0
    %3030 = vmatprep.subr.mxu0 0.0
    %3031 = vmatpush1.msra.mxu0 0.0
    %3032 = vmatprep.subr.mxu0 0.0
    %3033 = vmatpush1.msra.mxu0 0.0
    %3034 = vmatprep.subr.mxu0 0.0
    %3035 = vmatpush1.msra.mxu0 0.0
    %3036 = vmatprep.subr.mxu0 0.0
    %3037 = vmatpush1.msra.mxu0 0.0
    %3038 = vmatprep.subr.mxu0 0.0
    %3039 = vmatpush1.msra.mxu0 0.0
    %3040 = vmatprep.subr.mxu0 0.0
    %3041 = vmatpush1.msra.mxu0 0.0
    %3042 = vmatprep.subr.mxu0 0.0
    %3043 = vmatpush1.msra.mxu0 0.0
    %3044 = vmatprep.subr.mxu0 0.0
    %3045 = vmatpush1.msra.mxu0 0.0
    %3046 = vmatprep.subr.mxu0 0.0
    %3047 = vmatpush1.msra.mxu0 0.0
    %3048 = vmatprep.subr.mxu0 0.0
    %3049 = vmatpush1.msra.mxu0 0.0
    %3050 = vmatprep.subr.mxu0 0.0
    %3051 = vmatpush1.msra.mxu0 0.0
    %3052 = vmatprep.subr.mxu0 0.0
    %3053 = vmatpush1.msra.mxu0 0.0
    %3054 = vmatprep.subr.mxu0 0.0
    %3055 = vmatpush1.msra.mxu0 0.0
    %3056 = vmatprep.mubr.f32.mxu0 0.0
    %3057 = vmatmul.mubr.f32.gmra.mrb[0].mxu0 %v2650
    %v3058 = vpop.f32.mrb[0].mxu0
    %v3059 = vadd.f32 %v2917, %v3058
    %v3060 = vpop.f32.mrb[0].mxu0
    %v3061 = vadd.f32 %v2919, %v3060
    %3062 = vdwg.mxu0
    %v3063 = vadd.f32 %v2988, %v100
    %v3064 = vadd.f32 %v2990, %v104
    %v3065 = vadd.f32 %v3059, %v108
    %v3066 = vadd.f32 %v3061, %v112
    %v3067 = vxor.u32 %v3063, 2147483648
    %v3068 = vxor.u32 %v3064, 2147483648
    %v3069 = vxor.u32 %v3065, 2147483648
    %v3070 = vmul.f32 %v3067, 1.442695
    %v3071 = vpow.pop %v3070
    %v3072 = vmul.f32 %v3068, 1.442695
    %v3073 = vpow.pop %v3072
    %v3074 = vmul.f32 %v3069, 1.442695
    %v3075 = vpow.pop %v3074
    %v3076 = vadd.f32 %v3071, 1.0
    %v3077 = vadd.f32 %v3073, 1.0
    %v3078 = vadd.f32 %v3075, 1.0
    %v3079 = vrcp.pop %v3076
    %v3080 = vmul.f32 1.0, %v3079
    %v3081 = vrcp.pop %v3077
    %v3082 = vmul.f32 1.0, %v3081
    %v3083 = vrcp.pop %v3078
    %v3084 = vmul.f32 1.0, %v3083
    %v3085 = vtanh.pop %v3066
    %v3086 = vmul.f32 %v3082, %v2403
    %v3087 = vmul.f32 %v3080, %v3085
    %v3088 = vadd.f32 %v3086, %v3087
    %v3089 = vtanh.pop %v3088
    %v3090 = vmul.f32 %v3084, %v3089
    %s3091 = scalar_lea.vmem [#allocation3], 12
    %3092 = vst [vmem:[%s3091] sm:$0xf] %v3090
    %s3093 = scalar_lea.vmem [#allocation2], 64
    %v3094 = vld [vmem:[%s3093] sm:$0xff]
    %v3095 = vld [vmem:[%s3093 + $0x8] sm:$0xff]
    %v3096 = vld [vmem:[#allocation5] sm:$0xff]
    %v3097 = vld [vmem:[#allocation5 + $0x8] sm:$0xff]
    %v3098 = vld [vmem:[#allocation5 + $0x10] sm:$0xff]
    %v3099 = vld [vmem:[#allocation5 + $0x18] sm:$0xff]
    %v3100 = vld [vmem:[#allocation5 + $0x20] sm:$0xff]
    %v3101 = vld [vmem:[#allocation5 + $0x28] sm:$0xff]
    %v3102 = vld [vmem:[#allocation5 + $0x30] sm:$0xff]
    %v3103 = vld [vmem:[#allocation5 + $0x38] sm:$0xff]
    %v3104 = vld [vmem:[#allocation5 + $0x40] sm:$0xff]
    %v3105 = vld [vmem:[#allocation5 + $0x48] sm:$0xff]
    %v3106 = vld [vmem:[#allocation5 + $0x50] sm:$0xff]
    %v3107 = vld [vmem:[#allocation5 + $0x58] sm:$0xff]
    %v3108 = vld [vmem:[#allocation5 + $0x60] sm:$0xff]
    %v3109 = vld [vmem:[#allocation5 + $0x68] sm:$0xff]
    %v3110 = vld [vmem:[#allocation5 + $0x70] sm:$0xff]
    %v3111 = vld [vmem:[#allocation5 + $0x78] sm:$0xff]
    %v3112 = vld [vmem:[#allocation5 + $0x80] sm:$0xff]
    %v3113 = vld [vmem:[#allocation5 + $0x88] sm:$0xff]
    %v3114 = vld [vmem:[#allocation5 + $0x90] sm:$0xff]
    %v3115 = vld [vmem:[#allocation5 + $0x98] sm:$0xff]
    %v3116 = vld [vmem:[#allocation5 + $0xa0] sm:$0xff]
    %v3117 = vld [vmem:[#allocation5 + $0xa8] sm:$0xff]
    %v3118 = vld [vmem:[#allocation5 + $0xb0] sm:$0xff]
    %v3119 = vld [vmem:[#allocation5 + $0xb8] sm:$0xff]
    %v3120 = vld [vmem:[#allocation5 + $0xc0] sm:$0xff]
    %v3121 = vld [vmem:[#allocation5 + $0xc8] sm:$0xff]
    %v3122 = vld [vmem:[#allocation5 + $0xd0] sm:$0xff]
    %v3123 = vld [vmem:[#allocation5 + $0xd8] sm:$0xff]
    %v3124 = vld [vmem:[#allocation5 + $0xe0] sm:$0xff]
    %v3125 = vld [vmem:[#allocation5 + $0xe8] sm:$0xff]
    %v3126 = vld [vmem:[#allocation5 + $0xf0] sm:$0xff]
    %v3127 = vld [vmem:[#allocation5 + $0xf8] sm:$0xff]
    %v3128 = vld [vmem:[#allocation5 + $0x100] sm:$0xff]
    %v3129 = vld [vmem:[#allocation5 + $0x108] sm:$0xff]
    %v3130 = vld [vmem:[#allocation5 + $0x110] sm:$0xff]
    %v3131 = vld [vmem:[#allocation5 + $0x118] sm:$0xff]
    %v3132 = vld [vmem:[#allocation5 + $0x120] sm:$0xff]
    %v3133 = vld [vmem:[#allocation5 + $0x128] sm:$0xff]
    %v3134 = vld [vmem:[#allocation5 + $0x130] sm:$0xff]
    %v3135 = vld [vmem:[#allocation5 + $0x138] sm:$0xff]
    %v3136 = vld [vmem:[#allocation5 + $0x140] sm:$0xff]
    %v3137 = vld [vmem:[#allocation5 + $0x148] sm:$0xff]
    %v3138 = vld [vmem:[#allocation5 + $0x150] sm:$0xff]
    %v3139 = vld [vmem:[#allocation5 + $0x158] sm:$0xff]
    %v3140 = vld [vmem:[#allocation5 + $0x160] sm:$0xff]
    %v3141 = vld [vmem:[#allocation5 + $0x168] sm:$0xff]
    %v3142 = vld [vmem:[#allocation5 + $0x170] sm:$0xff]
    %v3143 = vld [vmem:[#allocation5 + $0x178] sm:$0xff]
    %v3144 = vld [vmem:[#allocation5 + $0x180] sm:$0xff]
    %v3145 = vld [vmem:[#allocation5 + $0x188] sm:$0xff]
    %v3146 = vld [vmem:[#allocation5 + $0x190] sm:$0xff]
    %v3147 = vld [vmem:[#allocation5 + $0x198] sm:$0xff]
    %v3148 = vld [vmem:[#allocation5 + $0x1a0] sm:$0xff]
    %v3149 = vld [vmem:[#allocation5 + $0x1a8] sm:$0xff]
    %v3150 = vld [vmem:[#allocation5 + $0x1b0] sm:$0xff]
    %v3151 = vld [vmem:[#allocation5 + $0x1b8] sm:$0xff]
    %v3152 = vld [vmem:[#allocation5 + $0x1c0] sm:$0xff]
    %v3153 = vld [vmem:[#allocation5 + $0x1c8] sm:$0xff]
    %v3154 = vld [vmem:[#allocation5 + $0x1d0] sm:$0xff]
    %v3155 = vld [vmem:[#allocation5 + $0x1d8] sm:$0xff]
    %v3156 = vld [vmem:[#allocation5 + $0x1e0] sm:$0xff]
    %v3157 = vld [vmem:[#allocation5 + $0x1e8] sm:$0xff]
    %v3158 = vld [vmem:[#allocation5 + $0x1f0] sm:$0xff]
    %v3159 = vld [vmem:[#allocation5 + $0x1f8] sm:$0xff]
    %3160 = vmatprep.subr.mxu0 %v3097
    %3161 = vmatpush1.msra.mxu0 %v3096
    %3162 = vmatprep.subr.mxu0 %v3101
    %3163 = vmatpush1.msra.mxu0 %v3100
    %3164 = vmatprep.subr.mxu0 %v3105
    %3165 = vmatpush1.msra.mxu0 %v3104
    %3166 = vmatprep.subr.mxu0 %v3109
    %3167 = vmatpush1.msra.mxu0 %v3108
    %3168 = vmatprep.subr.mxu0 %v3113
    %3169 = vmatpush1.msra.mxu0 %v3112
    %3170 = vmatprep.subr.mxu0 %v3117
    %3171 = vmatpush1.msra.mxu0 %v3116
    %3172 = vmatprep.subr.mxu0 %v3121
    %3173 = vmatpush1.msra.mxu0 %v3120
    %3174 = vmatprep.subr.mxu0 %v3125
    %3175 = vmatpush1.msra.mxu0 %v3124
    %3176 = vmatprep.subr.mxu0 %v3129
    %3177 = vmatpush1.msra.mxu0 %v3128
    %3178 = vmatprep.subr.mxu0 %v3133
    %3179 = vmatpush1.msra.mxu0 %v3132
    %3180 = vmatprep.subr.mxu0 %v3137
    %3181 = vmatpush1.msra.mxu0 %v3136
    %3182 = vmatprep.subr.mxu0 %v3141
    %3183 = vmatpush1.msra.mxu0 %v3140
    %3184 = vmatprep.subr.mxu0 %v3145
    %3185 = vmatpush1.msra.mxu0 %v3144
    %3186 = vmatprep.subr.mxu0 %v3149
    %3187 = vmatpush1.msra.mxu0 %v3148
    %3188 = vmatprep.subr.mxu0 %v3153
    %3189 = vmatpush1.msra.mxu0 %v3152
    %3190 = vmatprep.subr.mxu0 %v3157
    %3191 = vmatpush1.msra.mxu0 %v3156
    %3192 = vmatprep.subr.mxu0 0.0
    %3193 = vmatpush1.msra.mxu0 0.0
    %3194 = vmatprep.subr.mxu0 0.0
    %3195 = vmatpush1.msra.mxu0 0.0
    %3196 = vmatprep.subr.mxu0 0.0
    %3197 = vmatpush1.msra.mxu0 0.0
    %3198 = vmatprep.subr.mxu0 0.0
    %3199 = vmatpush1.msra.mxu0 0.0
    %3200 = vmatprep.subr.mxu0 0.0
    %3201 = vmatpush1.msra.mxu0 0.0
    %3202 = vmatprep.subr.mxu0 0.0
    %3203 = vmatpush1.msra.mxu0 0.0
    %3204 = vmatprep.subr.mxu0 0.0
    %3205 = vmatpush1.msra.mxu0 0.0
    %3206 = vmatprep.subr.mxu0 0.0
    %3207 = vmatpush1.msra.mxu0 0.0
    %3208 = vmatprep.subr.mxu0 0.0
    %3209 = vmatpush1.msra.mxu0 0.0
    %3210 = vmatprep.subr.mxu0 0.0
    %3211 = vmatpush1.msra.mxu0 0.0
    %3212 = vmatprep.subr.mxu0 0.0
    %3213 = vmatpush1.msra.mxu0 0.0
    %3214 = vmatprep.subr.mxu0 0.0
    %3215 = vmatpush1.msra.mxu0 0.0
    %3216 = vmatprep.subr.mxu0 0.0
    %3217 = vmatpush1.msra.mxu0 0.0
    %3218 = vmatprep.subr.mxu0 0.0
    %3219 = vmatpush1.msra.mxu0 0.0
    %3220 = vmatprep.subr.mxu0 0.0
    %3221 = vmatpush1.msra.mxu0 0.0
    %3222 = vmatprep.subr.mxu0 0.0
    %3223 = vmatpush1.msra.mxu0 0.0
    %3224 = vmatprep.mubr.f32.mxu0 0.0
    %3225 = vmatmul.mubr.f32.gmra.mrb[0].mxu0 %v2650
    %v3226 = vpop.f32.mrb[0].mxu0
    %v3227 = vadd.f32 0.0, %v3226
    %v3228 = vpop.f32.mrb[0].mxu0
    %v3229 = vadd.f32 0.0, %v3228
    %3230 = vdwg.mxu0
    %3231 = vmatprep.subr.mxu0 %v3099
    %3232 = vmatpush1.msra.mxu0 %v3098
    %3233 = vmatprep.subr.mxu0 %v3103
    %3234 = vmatpush1.msra.mxu0 %v3102
    %3235 = vmatprep.subr.mxu0 %v3107
    %3236 = vmatpush1.msra.mxu0 %v3106
    %3237 = vmatprep.subr.mxu0 %v3111
    %3238 = vmatpush1.msra.mxu0 %v3110
    %3239 = vmatprep.subr.mxu0 %v3115
    %3240 = vmatpush1.msra.mxu0 %v3114
    %3241 = vmatprep.subr.mxu0 %v3119
    %3242 = vmatpush1.msra.mxu0 %v3118
    %3243 = vmatprep.subr.mxu0 %v3123
    %3244 = vmatpush1.msra.mxu0 %v3122
    %3245 = vmatprep.subr.mxu0 %v3127
    %3246 = vmatpush1.msra.mxu0 %v3126
    %3247 = vmatprep.subr.mxu0 %v3131
    %3248 = vmatpush1.msra.mxu0 %v3130
    %3249 = vmatprep.subr.mxu0 %v3135
    %3250 = vmatpush1.msra.mxu0 %v3134
    %3251 = vmatprep.subr.mxu0 %v3139
    %3252 = vmatpush1.msra.mxu0 %v3138
    %3253 = vmatprep.subr.mxu0 %v3143
    %3254 = vmatpush1.msra.mxu0 %v3142
    %3255 = vmatprep.subr.mxu0 %v3147
    %3256 = vmatpush1.msra.mxu0 %v3146
    %3257 = vmatprep.subr.mxu0 %v3151
    %3258 = vmatpush1.msra.mxu0 %v3150
    %3259 = vmatprep.subr.mxu0 %v3155
    %3260 = vmatpush1.msra.mxu0 %v3154
    %3261 = vmatprep.subr.mxu0 %v3159
    %3262 = vmatpush1.msra.mxu0 %v3158
    %3263 = vmatprep.subr.mxu0 0.0
    %3264 = vmatpush1.msra.mxu0 0.0
    %3265 = vmatprep.subr.mxu0 0.0
    %3266 = vmatpush1.msra.mxu0 0.0
    %3267 = vmatprep.subr.mxu0 0.0
    %3268 = vmatpush1.msra.mxu0 0.0
    %3269 = vmatprep.subr.mxu0 0.0
    %3270 = vmatpush1.msra.mxu0 0.0
    %3271 = vmatprep.subr.mxu0 0.0
    %3272 = vmatpush1.msra.mxu0 0.0
    %3273 = vmatprep.subr.mxu0 0.0
    %3274 = vmatpush1.msra.mxu0 0.0
    %3275 = vmatprep.subr.mxu0 0.0
    %3276 = vmatpush1.msra.mxu0 0.0
    %3277 = vmatprep.subr.mxu0 0.0
    %3278 = vmatpush1.msra.mxu0 0.0
    %3279 = vmatprep.subr.mxu0 0.0
    %3280 = vmatpush1.msra.mxu0 0.0
    %3281 = vmatprep.subr.mxu0 0.0
    %3282 = vmatpush1.msra.mxu0 0.0
    %3283 = vmatprep.subr.mxu0 0.0
    %3284 = vmatpush1.msra.mxu0 0.0
    %3285 = vmatprep.subr.mxu0 0.0
    %3286 = vmatpush1.msra.mxu0 0.0
    %3287 = vmatprep.subr.mxu0 0.0
    %3288 = vmatpush1.msra.mxu0 0.0
    %3289 = vmatprep.subr.mxu0 0.0
    %3290 = vmatpush1.msra.mxu0 0.0
    %3291 = vmatprep.subr.mxu0 0.0
    %3292 = vmatpush1.msra.mxu0 0.0
    %3293 = vmatprep.subr.mxu0 0.0
    %3294 = vmatpush1.msra.mxu0 0.0
    %3295 = vmatprep.mubr.f32.mxu0 0.0
    %3296 = vmatmul.mubr.f32.gmra.mrb[0].mxu0 %v2650
    %v3297 = vpop.f32.mrb[0].mxu0
    %v3298 = vadd.f32 0.0, %v3297
    %v3299 = vpop.f32.mrb[0].mxu0
    %v3300 = vadd.f32 0.0, %v3299
    %3301 = vdwg.mxu0
    %v3306 = vcombine.low %v3227, %v3229
    %v3307 = vcombine.low %v3298, %v3300
    %v3310 = vadd.f32 %v3094, %v3306
    %v3311 = vadd.f32 %v3095, %v3307
    %v3312 = vxor.u32 %v3310, 2147483648
    %v3313 = vxor.u32 %v3311, 2147483648
    %v3314 = vmul.f32 %v3312, 1.442695
    %v3315 = vpow.pop %v3314
    %v3316 = vmul.f32 %v3313, 1.442695
    %v3317 = vpow.pop %v3316
    %v3318 = vadd.f32 %v3315, 1.0
    %v3319 = vadd.f32 %v3317, 1.0
    %v3320 = vrcp.pop %v3318
    %v3321 = vmul.f32 1.0, %v3320
    %v3322 = vrcp.pop %v3319
    %v3323 = vmul.f32 1.0, %v3322
    %v3325 = vrot.slane %v3311, 4
    %v3327 = vtanh.pop %v3325
    %v3329 = vrot.slane %v3321, 4
    %v3331 = vmul.f32 %v3329, %v2648
    %v3332 = vmul.f32 %v3321, %v3327
    %v3333 = vadd.f32 %v3331, %v3332
    %v3334 = vtanh.pop %v3333
    %v3335 = vmul.f32 %v3323, %v3334
    %v3336 = vld [vmem:[#allocation7] sm:$0xff]
    %v3337 = vld [vmem:[#allocation7 + $0x8] sm:$0xff]
    %v3338 = vld [vmem:[#allocation7 + $0x10] sm:$0xff]
    %v3339 = vld [vmem:[#allocation7 + $0x18] sm:$0xff]
    %v3340 = vld [vmem:[#allocation7 + $0x20] sm:$0xff]
    %v3341 = vld [vmem:[#allocation7 + $0x28] sm:$0xff]
    %v3342 = vld [vmem:[#allocation7 + $0x30] sm:$0xff]
    %v3343 = vld [vmem:[#allocation7 + $0x38] sm:$0xff]
    %v3344 = vld [vmem:[#allocation7 + $0x40] sm:$0xff]
    %v3345 = vld [vmem:[#allocation7 + $0x48] sm:$0xff]
    %v3346 = vld [vmem:[#allocation7 + $0x50] sm:$0xff]
    %v3347 = vld [vmem:[#allocation7 + $0x58] sm:$0xff]
    %v3348 = vld [vmem:[#allocation7 + $0x60] sm:$0xff]
    %v3349 = vld [vmem:[#allocation7 + $0x68] sm:$0xff]
    %v3350 = vld [vmem:[#allocation7 + $0x70] sm:$0xff]
    %v3351 = vld [vmem:[#allocation7 + $0x78] sm:$0xff]
    %v3352 = vld [vmem:[#allocation7 + $0x80] sm:$0xff]
    %v3353 = vld [vmem:[#allocation7 + $0x88] sm:$0xff]
    %v3354 = vld [vmem:[#allocation7 + $0x90] sm:$0xff]
    %v3355 = vld [vmem:[#allocation7 + $0x98] sm:$0xff]
    %v3356 = vld [vmem:[#allocation7 + $0xa0] sm:$0xff]
    %v3357 = vld [vmem:[#allocation7 + $0xa8] sm:$0xff]
    %v3358 = vld [vmem:[#allocation7 + $0xb0] sm:$0xff]
    %v3359 = vld [vmem:[#allocation7 + $0xb8] sm:$0xff]
    %v3360 = vld [vmem:[#allocation7 + $0xc0] sm:$0xff]
    %v3361 = vld [vmem:[#allocation7 + $0xc8] sm:$0xff]
    %v3362 = vld [vmem:[#allocation7 + $0xd0] sm:$0xff]
    %v3363 = vld [vmem:[#allocation7 + $0xd8] sm:$0xff]
    %v3364 = vld [vmem:[#allocation7 + $0xe0] sm:$0xff]
    %v3365 = vld [vmem:[#allocation7 + $0xe8] sm:$0xff]
    %v3366 = vld [vmem:[#allocation7 + $0xf0] sm:$0xff]
    %v3367 = vld [vmem:[#allocation7 + $0xf8] sm:$0xff]
    %v3368 = vld [vmem:[#allocation7 + $0x100] sm:$0xff]
    %v3369 = vld [vmem:[#allocation7 + $0x108] sm:$0xff]
    %v3370 = vld [vmem:[#allocation7 + $0x110] sm:$0xff]
    %v3371 = vld [vmem:[#allocation7 + $0x118] sm:$0xff]
    %v3372 = vld [vmem:[#allocation7 + $0x120] sm:$0xff]
    %v3373 = vld [vmem:[#allocation7 + $0x128] sm:$0xff]
    %v3374 = vld [vmem:[#allocation7 + $0x130] sm:$0xff]
    %v3375 = vld [vmem:[#allocation7 + $0x138] sm:$0xff]
    %v3376 = vld [vmem:[#allocation7 + $0x140] sm:$0xff]
    %v3377 = vld [vmem:[#allocation7 + $0x148] sm:$0xff]
    %v3378 = vld [vmem:[#allocation7 + $0x150] sm:$0xff]
    %v3379 = vld [vmem:[#allocation7 + $0x158] sm:$0xff]
    %v3380 = vld [vmem:[#allocation7 + $0x160] sm:$0xff]
    %v3381 = vld [vmem:[#allocation7 + $0x168] sm:$0xff]
    %v3382 = vld [vmem:[#allocation7 + $0x170] sm:$0xff]
    %v3383 = vld [vmem:[#allocation7 + $0x178] sm:$0xff]
    %v3384 = vld [vmem:[#allocation7 + $0x180] sm:$0xff]
    %v3385 = vld [vmem:[#allocation7 + $0x188] sm:$0xff]
    %v3386 = vld [vmem:[#allocation7 + $0x190] sm:$0xff]
    %v3387 = vld [vmem:[#allocation7 + $0x198] sm:$0xff]
    %v3388 = vld [vmem:[#allocation7 + $0x1a0] sm:$0xff]
    %v3389 = vld [vmem:[#allocation7 + $0x1a8] sm:$0xff]
    %v3390 = vld [vmem:[#allocation7 + $0x1b0] sm:$0xff]
    %v3391 = vld [vmem:[#allocation7 + $0x1b8] sm:$0xff]
    %v3392 = vld [vmem:[#allocation7 + $0x1c0] sm:$0xff]
    %v3393 = vld [vmem:[#allocation7 + $0x1c8] sm:$0xff]
    %v3394 = vld [vmem:[#allocation7 + $0x1d0] sm:$0xff]
    %v3395 = vld [vmem:[#allocation7 + $0x1d8] sm:$0xff]
    %v3396 = vld [vmem:[#allocation7 + $0x1e0] sm:$0xff]
    %v3397 = vld [vmem:[#allocation7 + $0x1e8] sm:$0xff]
    %v3398 = vld [vmem:[#allocation7 + $0x1f0] sm:$0xff]
    %v3399 = vld [vmem:[#allocation7 + $0x1f8] sm:$0xff]
    %v3400 = vld [vmem:[#allocation9] sm:$0xff]
    %v3401 = vld [vmem:[#allocation9 + $0x8] sm:$0xff]
    %v3402 = vld [vmem:[#allocation9 + $0x10] sm:$0xff]
    %v3403 = vld [vmem:[#allocation9 + $0x18] sm:$0xff]
    %v3404 = vld [vmem:[#allocation9 + $0x20] sm:$0xff]
    %v3405 = vld [vmem:[#allocation9 + $0x28] sm:$0xff]
    %v3406 = vld [vmem:[#allocation9 + $0x30] sm:$0xff]
    %v3407 = vld [vmem:[#allocation9 + $0x38] sm:$0xff]
    %v3408 = vld [vmem:[#allocation9 + $0x40] sm:$0xff]
    %v3409 = vld [vmem:[#allocation9 + $0x48] sm:$0xff]
    %v3410 = vld [vmem:[#allocation9 + $0x50] sm:$0xff]
    %v3411 = vld [vmem:[#allocation9 + $0x58] sm:$0xff]
    %v3412 = vld [vmem:[#allocation9 + $0x60] sm:$0xff]
    %v3413 = vld [vmem:[#allocation9 + $0x68] sm:$0xff]
    %v3414 = vld [vmem:[#allocation9 + $0x70] sm:$0xff]
    %v3415 = vld [vmem:[#allocation9 + $0x78] sm:$0xff]
    %v3416 = vld [vmem:[#allocation9 + $0x80] sm:$0xff]
    %v3417 = vld [vmem:[#allocation9 + $0x88] sm:$0xff]
    %v3418 = vld [vmem:[#allocation9 + $0x90] sm:$0xff]
    %v3419 = vld [vmem:[#allocation9 + $0x98] sm:$0xff]
    %v3420 = vld [vmem:[#allocation9 + $0xa0] sm:$0xff]
    %v3421 = vld [vmem:[#allocation9 + $0xa8] sm:$0xff]
    %v3422 = vld [vmem:[#allocation9 + $0xb0] sm:$0xff]
    %v3423 = vld [vmem:[#allocation9 + $0xb8] sm:$0xff]
    %v3424 = vld [vmem:[#allocation9 + $0xc0] sm:$0xff]
    %v3425 = vld [vmem:[#allocation9 + $0xc8] sm:$0xff]
    %v3426 = vld [vmem:[#allocation9 + $0xd0] sm:$0xff]
    %v3427 = vld [vmem:[#allocation9 + $0xd8] sm:$0xff]
    %v3428 = vld [vmem:[#allocation9 + $0xe0] sm:$0xff]
    %v3429 = vld [vmem:[#allocation9 + $0xe8] sm:$0xff]
    %v3430 = vld [vmem:[#allocation9 + $0xf0] sm:$0xff]
    %v3431 = vld [vmem:[#allocation9 + $0xf8] sm:$0xff]
    %v3432 = vld [vmem:[#allocation9 + $0x100] sm:$0xff]
    %v3433 = vld [vmem:[#allocation9 + $0x108] sm:$0xff]
    %v3434 = vld [vmem:[#allocation9 + $0x110] sm:$0xff]
    %v3435 = vld [vmem:[#allocation9 + $0x118] sm:$0xff]
    %v3436 = vld [vmem:[#allocation9 + $0x120] sm:$0xff]
    %v3437 = vld [vmem:[#allocation9 + $0x128] sm:$0xff]
    %v3438 = vld [vmem:[#allocation9 + $0x130] sm:$0xff]
    %v3439 = vld [vmem:[#allocation9 + $0x138] sm:$0xff]
    %v3440 = vld [vmem:[#allocation9 + $0x140] sm:$0xff]
    %v3441 = vld [vmem:[#allocation9 + $0x148] sm:$0xff]
    %v3442 = vld [vmem:[#allocation9 + $0x150] sm:$0xff]
    %v3443 = vld [vmem:[#allocation9 + $0x158] sm:$0xff]
    %v3444 = vld [vmem:[#allocation9 + $0x160] sm:$0xff]
    %v3445 = vld [vmem:[#allocation9 + $0x168] sm:$0xff]
    %v3446 = vld [vmem:[#allocation9 + $0x170] sm:$0xff]
    %v3447 = vld [vmem:[#allocation9 + $0x178] sm:$0xff]
    %v3448 = vld [vmem:[#allocation9 + $0x180] sm:$0xff]
    %v3449 = vld [vmem:[#allocation9 + $0x188] sm:$0xff]
    %v3450 = vld [vmem:[#allocation9 + $0x190] sm:$0xff]
    %v3451 = vld [vmem:[#allocation9 + $0x198] sm:$0xff]
    %v3452 = vld [vmem:[#allocation9 + $0x1a0] sm:$0xff]
    %v3453 = vld [vmem:[#allocation9 + $0x1a8] sm:$0xff]
    %v3454 = vld [vmem:[#allocation9 + $0x1b0] sm:$0xff]
    %v3455 = vld [vmem:[#allocation9 + $0x1b8] sm:$0xff]
    %v3456 = vld [vmem:[#allocation9 + $0x1c0] sm:$0xff]
    %v3457 = vld [vmem:[#allocation9 + $0x1c8] sm:$0xff]
    %v3458 = vld [vmem:[#allocation9 + $0x1d0] sm:$0xff]
    %v3459 = vld [vmem:[#allocation9 + $0x1d8] sm:$0xff]
    %v3460 = vld [vmem:[#allocation9 + $0x1e0] sm:$0xff]
    %v3461 = vld [vmem:[#allocation9 + $0x1e8] sm:$0xff]
    %v3462 = vld [vmem:[#allocation9 + $0x1f0] sm:$0xff]
    %v3463 = vld [vmem:[#allocation9 + $0x1f8] sm:$0xff]
    %3464 = vmatprep.subr.mxu0 %v3401
    %3465 = vmatpush1.msra.mxu0 %v3400
    %3466 = vmatprep.subr.mxu0 %v3405
    %3467 = vmatpush1.msra.mxu0 %v3404
    %3468 = vmatprep.subr.mxu0 %v3409
    %3469 = vmatpush1.msra.mxu0 %v3408
    %3470 = vmatprep.subr.mxu0 %v3413
    %3471 = vmatpush1.msra.mxu0 %v3412
    %3472 = vmatprep.subr.mxu0 %v3417
    %3473 = vmatpush1.msra.mxu0 %v3416
    %3474 = vmatprep.subr.mxu0 %v3421
    %3475 = vmatpush1.msra.mxu0 %v3420
    %3476 = vmatprep.subr.mxu0 %v3425
    %3477 = vmatpush1.msra.mxu0 %v3424
    %3478 = vmatprep.subr.mxu0 %v3429
    %3479 = vmatpush1.msra.mxu0 %v3428
    %3480 = vmatprep.subr.mxu0 %v3433
    %3481 = vmatpush1.msra.mxu0 %v3432
    %3482 = vmatprep.subr.mxu0 %v3437
    %3483 = vmatpush1.msra.mxu0 %v3436
    %3484 = vmatprep.subr.mxu0 %v3441
    %3485 = vmatpush1.msra.mxu0 %v3440
    %3486 = vmatprep.subr.mxu0 %v3445
    %3487 = vmatpush1.msra.mxu0 %v3444
    %3488 = vmatprep.subr.mxu0 %v3449
    %3489 = vmatpush1.msra.mxu0 %v3448
    %3490 = vmatprep.subr.mxu0 %v3453
    %3491 = vmatpush1.msra.mxu0 %v3452
    %3492 = vmatprep.subr.mxu0 %v3457
    %3493 = vmatpush1.msra.mxu0 %v3456
    %3494 = vmatprep.subr.mxu0 %v3461
    %3495 = vmatpush1.msra.mxu0 %v3460
    %3496 = vmatprep.subr.mxu0 0.0
    %3497 = vmatpush1.msra.mxu0 0.0
    %3498 = vmatprep.subr.mxu0 0.0
    %3499 = vmatpush1.msra.mxu0 0.0
    %3500 = vmatprep.subr.mxu0 0.0
    %3501 = vmatpush1.msra.mxu0 0.0
    %3502 = vmatprep.subr.mxu0 0.0
    %3503 = vmatpush1.msra.mxu0 0.0
    %3504 = vmatprep.subr.mxu0 0.0
    %3505 = vmatpush1.msra.mxu0 0.0
    %3506 = vmatprep.subr.mxu0 0.0
    %3507 = vmatpush1.msra.mxu0 0.0
    %3508 = vmatprep.subr.mxu0 0.0
    %3509 = vmatpush1.msra.mxu0 0.0
    %3510 = vmatprep.subr.mxu0 0.0
    %3511 = vmatpush1.msra.mxu0 0.0
    %3512 = vmatprep.subr.mxu0 0.0
    %3513 = vmatpush1.msra.mxu0 0.0
    %3514 = vmatprep.subr.mxu0 0.0
    %3515 = vmatpush1.msra.mxu0 0.0
    %3516 = vmatprep.subr.mxu0 0.0
    %3517 = vmatpush1.msra.mxu0 0.0
    %3518 = vmatprep.subr.mxu0 0.0
    %3519 = vmatpush1.msra.mxu0 0.0
    %3520 = vmatprep.subr.mxu0 0.0
    %3521 = vmatpush1.msra.mxu0 0.0
    %3522 = vmatprep.subr.mxu0 0.0
    %3523 = vmatpush1.msra.mxu0 0.0
    %3524 = vmatprep.subr.mxu0 0.0
    %3525 = vmatpush1.msra.mxu0 0.0
    %3526 = vmatprep.subr.mxu0 0.0
    %3527 = vmatpush1.msra.mxu0 0.0
    %3528 = vmatprep.mubr.f32.mxu0 0.0
    %3529 = vmatmul.mubr.f32.gmra.mrb[0].mxu0 %v3090
    %v3530 = vpop.f32.mrb[0].mxu0
    %v3531 = vadd.f32 0.0, %v3530
    %v3532 = vpop.f32.mrb[0].mxu0
    %v3533 = vadd.f32 0.0, %v3532
    %3534 = vdwg.mxu0
    %3535 = vmatprep.subr.mxu0 %v3403
    %3536 = vmatpush1.msra.mxu0 %v3402
    %3537 = vmatprep.subr.mxu0 %v3407
    %3538 = vmatpush1.msra.mxu0 %v3406
    %3539 = vmatprep.subr.mxu0 %v3411
    %3540 = vmatpush1.msra.mxu0 %v3410
    %3541 = vmatprep.subr.mxu0 %v3415
    %3542 = vmatpush1.msra.mxu0 %v3414
    %3543 = vmatprep.subr.mxu0 %v3419
    %3544 = vmatpush1.msra.mxu0 %v3418
    %3545 = vmatprep.subr.mxu0 %v3423
    %3546 = vmatpush1.msra.mxu0 %v3422
    %3547 = vmatprep.subr.mxu0 %v3427
    %3548 = vmatpush1.msra.mxu0 %v3426
    %3549 = vmatprep.subr.mxu0 %v3431
    %3550 = vmatpush1.msra.mxu0 %v3430
    %3551 = vmatprep.subr.mxu0 %v3435
    %3552 = vmatpush1.msra.mxu0 %v3434
    %3553 = vmatprep.subr.mxu0 %v3439
    %3554 = vmatpush1.msra.mxu0 %v3438
    %3555 = vmatprep.subr.mxu0 %v3443
    %3556 = vmatpush1.msra.mxu0 %v3442
    %3557 = vmatprep.subr.mxu0 %v3447
    %3558 = vmatpush1.msra.mxu0 %v3446
    %3559 = vmatprep.subr.mxu0 %v3451
    %3560 = vmatpush1.msra.mxu0 %v3450
    %3561 = vmatprep.subr.mxu0 %v3455
    %3562 = vmatpush1.msra.mxu0 %v3454
    %3563 = vmatprep.subr.mxu0 %v3459
    %3564 = vmatpush1.msra.mxu0 %v3458
    %3565 = vmatprep.subr.mxu0 %v3463
    %3566 = vmatpush1.msra.mxu0 %v3462
    %3567 = vmatprep.subr.mxu0 0.0
    %3568 = vmatpush1.msra.mxu0 0.0
    %3569 = vmatprep.subr.mxu0 0.0
    %3570 = vmatpush1.msra.mxu0 0.0
    %3571 = vmatprep.subr.mxu0 0.0
    %3572 = vmatpush1.msra.mxu0 0.0
    %3573 = vmatprep.subr.mxu0 0.0
    %3574 = vmatpush1.msra.mxu0 0.0
    %3575 = vmatprep.subr.mxu0 0.0
    %3576 = vmatpush1.msra.mxu0 0.0
    %3577 = vmatprep.subr.mxu0 0.0
    %3578 = vmatpush1.msra.mxu0 0.0
    %3579 = vmatprep.subr.mxu0 0.0
    %3580 = vmatpush1.msra.mxu0 0.0
    %3581 = vmatprep.subr.mxu0 0.0
    %3582 = vmatpush1.msra.mxu0 0.0
    %3583 = vmatprep.subr.mxu0 0.0
    %3584 = vmatpush1.msra.mxu0 0.0
    %3585 = vmatprep.subr.mxu0 0.0
    %3586 = vmatpush1.msra.mxu0 0.0
    %3587 = vmatprep.subr.mxu0 0.0
    %3588 = vmatpush1.msra.mxu0 0.0
    %3589 = vmatprep.subr.mxu0 0.0
    %3590 = vmatpush1.msra.mxu0 0.0
    %3591 = vmatprep.subr.mxu0 0.0
    %3592 = vmatpush1.msra.mxu0 0.0
    %3593 = vmatprep.subr.mxu0 0.0
    %3594 = vmatpush1.msra.mxu0 0.0
    %3595 = vmatprep.subr.mxu0 0.0
    %3596 = vmatpush1.msra.mxu0 0.0
    %3597 = vmatprep.subr.mxu0 0.0
    %3598 = vmatpush1.msra.mxu0 0.0
    %3599 = vmatprep.mubr.f32.mxu0 0.0
    %3600 = vmatmul.mubr.f32.gmra.mrb[0].mxu0 %v3090
    %v3601 = vpop.f32.mrb[0].mxu0
    %v3602 = vadd.f32 0.0, %v3601
    %v3603 = vpop.f32.mrb[0].mxu0
    %v3604 = vadd.f32 0.0, %v3603
    %3605 = vdwg.mxu0
    %3606 = vmatprep.subr.mxu0 %v3337
    %3607 = vmatpush1.msra.mxu0 %v3336
    %3608 = vmatprep.subr.mxu0 %v3341
    %3609 = vmatpush1.msra.mxu0 %v3340
    %3610 = vmatprep.subr.mxu0 %v3345
    %3611 = vmatpush1.msra.mxu0 %v3344
    %3612 = vmatprep.subr.mxu0 %v3349
    %3613 = vmatpush1.msra.mxu0 %v3348
    %3614 = vmatprep.subr.mxu0 %v3353
    %3615 = vmatpush1.msra.mxu0 %v3352
    %3616 = vmatprep.subr.mxu0 %v3357
    %3617 = vmatpush1.msra.mxu0 %v3356
    %3618 = vmatprep.subr.mxu0 %v3361
    %3619 = vmatpush1.msra.mxu0 %v3360
    %3620 = vmatprep.subr.mxu0 %v3365
    %3621 = vmatpush1.msra.mxu0 %v3364
    %3622 = vmatprep.subr.mxu0 %v3369
    %3623 = vmatpush1.msra.mxu0 %v3368
    %3624 = vmatprep.subr.mxu0 %v3373
    %3625 = vmatpush1.msra.mxu0 %v3372
    %3626 = vmatprep.subr.mxu0 %v3377
    %3627 = vmatpush1.msra.mxu0 %v3376
    %3628 = vmatprep.subr.mxu0 %v3381
    %3629 = vmatpush1.msra.mxu0 %v3380
    %3630 = vmatprep.subr.mxu0 %v3385
    %3631 = vmatpush1.msra.mxu0 %v3384
    %3632 = vmatprep.subr.mxu0 %v3389
    %3633 = vmatpush1.msra.mxu0 %v3388
    %3634 = vmatprep.subr.mxu0 %v3393
    %3635 = vmatpush1.msra.mxu0 %v3392
    %3636 = vmatprep.subr.mxu0 %v3397
    %3637 = vmatpush1.msra.mxu0 %v3396
    %3638 = vmatprep.subr.mxu0 0.0
    %3639 = vmatpush1.msra.mxu0 0.0
    %3640 = vmatprep.subr.mxu0 0.0
    %3641 = vmatpush1.msra.mxu0 0.0
    %3642 = vmatprep.subr.mxu0 0.0
    %3643 = vmatpush1.msra.mxu0 0.0
    %3644 = vmatprep.subr.mxu0 0.0
    %3645 = vmatpush1.msra.mxu0 0.0
    %3646 = vmatprep.subr.mxu0 0.0
    %3647 = vmatpush1.msra.mxu0 0.0
    %3648 = vmatprep.subr.mxu0 0.0
    %3649 = vmatpush1.msra.mxu0 0.0
    %3650 = vmatprep.subr.mxu0 0.0
    %3651 = vmatpush1.msra.mxu0 0.0
    %3652 = vmatprep.subr.mxu0 0.0
    %3653 = vmatpush1.msra.mxu0 0.0
    %3654 = vmatprep.subr.mxu0 0.0
    %3655 = vmatpush1.msra.mxu0 0.0
    %3656 = vmatprep.subr.mxu0 0.0
    %3657 = vmatpush1.msra.mxu0 0.0
    %3658 = vmatprep.subr.mxu0 0.0
    %3659 = vmatpush1.msra.mxu0 0.0
    %3660 = vmatprep.subr.mxu0 0.0
    %3661 = vmatpush1.msra.mxu0 0.0
    %3662 = vmatprep.subr.mxu0 0.0
    %3663 = vmatpush1.msra.mxu0 0.0
    %3664 = vmatprep.subr.mxu0 0.0
    %3665 = vmatpush1.msra.mxu0 0.0
    %3666 = vmatprep.subr.mxu0 0.0
    %3667 = vmatpush1.msra.mxu0 0.0
    %3668 = vmatprep.subr.mxu0 0.0
    %3669 = vmatpush1.msra.mxu0 0.0
    %3670 = vmatprep.mubr.f32.mxu0 0.0
    %3671 = vmatmul.mubr.f32.gmra.mrb[0].mxu0 %v3335
    %v3672 = vpop.f32.mrb[0].mxu0
    %v3673 = vadd.f32 %v3531, %v3672
    %v3674 = vpop.f32.mrb[0].mxu0
    %v3675 = vadd.f32 %v3533, %v3674
    %3676 = vdwg.mxu0
    %3677 = vmatprep.subr.mxu0 %v3339
    %3678 = vmatpush1.msra.mxu0 %v3338
    %3679 = vmatprep.subr.mxu0 %v3343
    %3680 = vmatpush1.msra.mxu0 %v3342
    %3681 = vmatprep.subr.mxu0 %v3347
    %3682 = vmatpush1.msra.mxu0 %v3346
    %3683 = vmatprep.subr.mxu0 %v3351
    %3684 = vmatpush1.msra.mxu0 %v3350
    %3685 = vmatprep.subr.mxu0 %v3355
    %3686 = vmatpush1.msra.mxu0 %v3354
    %3687 = vmatprep.subr.mxu0 %v3359
    %3688 = vmatpush1.msra.mxu0 %v3358
    %3689 = vmatprep.subr.mxu0 %v3363
    %3690 = vmatpush1.msra.mxu0 %v3362
    %3691 = vmatprep.subr.mxu0 %v3367
    %3692 = vmatpush1.msra.mxu0 %v3366
    %3693 = vmatprep.subr.mxu0 %v3371
    %3694 = vmatpush1.msra.mxu0 %v3370
    %3695 = vmatprep.subr.mxu0 %v3375
    %3696 = vmatpush1.msra.mxu0 %v3374
    %3697 = vmatprep.subr.mxu0 %v3379
    %3698 = vmatpush1.msra.mxu0 %v3378
    %3699 = vmatprep.subr.mxu0 %v3383
    %3700 = vmatpush1.msra.mxu0 %v3382
    %3701 = vmatprep.subr.mxu0 %v3387
    %3702 = vmatpush1.msra.mxu0 %v3386
    %3703 = vmatprep.subr.mxu0 %v3391
    %3704 = vmatpush1.msra.mxu0 %v3390
    %3705 = vmatprep.subr.mxu0 %v3395
    %3706 = vmatpush1.msra.mxu0 %v3394
    %3707 = vmatprep.subr.mxu0 %v3399
    %3708 = vmatpush1.msra.mxu0 %v3398
    %3709 = vmatprep.subr.mxu0 0.0
    %3710 = vmatpush1.msra.mxu0 0.0
    %3711 = vmatprep.subr.mxu0 0.0
    %3712 = vmatpush1.msra.mxu0 0.0
    %3713 = vmatprep.subr.mxu0 0.0
    %3714 = vmatpush1.msra.mxu0 0.0
    %3715 = vmatprep.subr.mxu0 0.0
    %3716 = vmatpush1.msra.mxu0 0.0
    %3717 = vmatprep.subr.mxu0 0.0
    %3718 = vmatpush1.msra.mxu0 0.0
    %3719 = vmatprep.subr.mxu0 0.0
    %3720 = vmatpush1.msra.mxu0 0.0
    %3721 = vmatprep.subr.mxu0 0.0
    %3722 = vmatpush1.msra.mxu0 0.0
    %3723 = vmatprep.subr.mxu0 0.0
    %3724 = vmatpush1.msra.mxu0 0.0
    %3725 = vmatprep.subr.mxu0 0.0
    %3726 = vmatpush1.msra.mxu0 0.0
    %3727 = vmatprep.subr.mxu0 0.0
    %3728 = vmatpush1.msra.mxu0 0.0
    %3729 = vmatprep.subr.mxu0 0.0
    %3730 = vmatpush1.msra.mxu0 0.0
    %3731 = vmatprep.subr.mxu0 0.0
    %3732 = vmatpush1.msra.mxu0 0.0
    %3733 = vmatprep.subr.mxu0 0.0
    %3734 = vmatpush1.msra.mxu0 0.0
    %3735 = vmatprep.subr.mxu0 0.0
    %3736 = vmatpush1.msra.mxu0 0.0
    %3737 = vmatprep.subr.mxu0 0.0
    %3738 = vmatpush1.msra.mxu0 0.0
    %3739 = vmatprep.subr.mxu0 0.0
    %3740 = vmatpush1.msra.mxu0 0.0
    %3741 = vmatprep.mubr.f32.mxu0 0.0
    %3742 = vmatmul.mubr.f32.gmra.mrb[0].mxu0 %v3335
    %v3743 = vpop.f32.mrb[0].mxu0
    %v3744 = vadd.f32 %v3602, %v3743
    %v3745 = vpop.f32.mrb[0].mxu0
    %v3746 = vadd.f32 %v3604, %v3745
    %3747 = vdwg.mxu0
    %v3748 = vadd.f32 %v3673, %v100
    %v3749 = vadd.f32 %v3675, %v104
    %v3750 = vadd.f32 %v3744, %v108
    %v3751 = vadd.f32 %v3746, %v112
    %v3752 = vxor.u32 %v3748, 2147483648
    %v3753 = vxor.u32 %v3749, 2147483648
    %v3754 = vxor.u32 %v3750, 2147483648
    %v3755 = vmul.f32 %v3752, 1.442695
    %v3756 = vpow.pop %v3755
    %v3757 = vmul.f32 %v3753, 1.442695
    %v3758 = vpow.pop %v3757
    %v3759 = vmul.f32 %v3754, 1.442695
    %v3760 = vpow.pop %v3759
    %v3761 = vadd.f32 %v3756, 1.0
    %v3762 = vadd.f32 %v3758, 1.0
    %v3763 = vadd.f32 %v3760, 1.0
    %v3764 = vrcp.pop %v3761
    %v3765 = vmul.f32 1.0, %v3764
    %v3766 = vrcp.pop %v3762
    %v3767 = vmul.f32 1.0, %v3766
    %v3768 = vrcp.pop %v3763
    %v3769 = vmul.f32 1.0, %v3768
    %v3770 = vtanh.pop %v3751
    %v3771 = vmul.f32 %v3767, %v3088
    %v3772 = vmul.f32 %v3765, %v3770
    %v3773 = vadd.f32 %v3771, %v3772
    %v3774 = vtanh.pop %v3773
    %v3775 = vmul.f32 %v3769, %v3774
    %s3776 = scalar_lea.vmem [#allocation3], 16
    %3777 = vst [vmem:[%s3776] sm:$0xf] %v3775
    %s3778 = scalar_lea.vmem [#allocation2], 80
    %v3779 = vld [vmem:[%s3778] sm:$0xff]
    %v3780 = vld [vmem:[%s3778 + $0x8] sm:$0xff]
    %v3781 = vld [vmem:[#allocation5] sm:$0xff]
    %v3782 = vld [vmem:[#allocation5 + $0x8] sm:$0xff]
    %v3783 = vld [vmem:[#allocation5 + $0x10] sm:$0xff]
    %v3784 = vld [vmem:[#allocation5 + $0x18] sm:$0xff]
    %v3785 = vld [vmem:[#allocation5 + $0x20] sm:$0xff]
    %v3786 = vld [vmem:[#allocation5 + $0x28] sm:$0xff]
    %v3787 = vld [vmem:[#allocation5 + $0x30] sm:$0xff]
    %v3788 = vld [vmem:[#allocation5 + $0x38] sm:$0xff]
    %v3789 = vld [vmem:[#allocation5 + $0x40] sm:$0xff]
    %v3790 = vld [vmem:[#allocation5 + $0x48] sm:$0xff]
    %v3791 = vld [vmem:[#allocation5 + $0x50] sm:$0xff]
    %v3792 = vld [vmem:[#allocation5 + $0x58] sm:$0xff]
    %v3793 = vld [vmem:[#allocation5 + $0x60] sm:$0xff]
    %v3794 = vld [vmem:[#allocation5 + $0x68] sm:$0xff]
    %v3795 = vld [vmem:[#allocation5 + $0x70] sm:$0xff]
    %v3796 = vld [vmem:[#allocation5 + $0x78] sm:$0xff]
    %v3797 = vld [vmem:[#allocation5 + $0x80] sm:$0xff]
    %v3798 = vld [vmem:[#allocation5 + $0x88] sm:$0xff]
    %v3799 = vld [vmem:[#allocation5 + $0x90] sm:$0xff]
    %v3800 = vld [vmem:[#allocation5 + $0x98] sm:$0xff]
    %v3801 = vld [vmem:[#allocation5 + $0xa0] sm:$0xff]
    %v3802 = vld [vmem:[#allocation5 + $0xa8] sm:$0xff]
    %v3803 = vld [vmem:[#allocation5 + $0xb0] sm:$0xff]
    %v3804 = vld [vmem:[#allocation5 + $0xb8] sm:$0xff]
    %v3805 = vld [vmem:[#allocation5 + $0xc0] sm:$0xff]
    %v3806 = vld [vmem:[#allocation5 + $0xc8] sm:$0xff]
    %v3807 = vld [vmem:[#allocation5 + $0xd0] sm:$0xff]
    %v3808 = vld [vmem:[#allocation5 + $0xd8] sm:$0xff]
    %v3809 = vld [vmem:[#allocation5 + $0xe0] sm:$0xff]
    %v3810 = vld [vmem:[#allocation5 + $0xe8] sm:$0xff]
    %v3811 = vld [vmem:[#allocation5 + $0xf0] sm:$0xff]
    %v3812 = vld [vmem:[#allocation5 + $0xf8] sm:$0xff]
    %v3813 = vld [vmem:[#allocation5 + $0x100] sm:$0xff]
    %v3814 = vld [vmem:[#allocation5 + $0x108] sm:$0xff]
    %v3815 = vld [vmem:[#allocation5 + $0x110] sm:$0xff]
    %v3816 = vld [vmem:[#allocation5 + $0x118] sm:$0xff]
    %v3817 = vld [vmem:[#allocation5 + $0x120] sm:$0xff]
    %v3818 = vld [vmem:[#allocation5 + $0x128] sm:$0xff]
    %v3819 = vld [vmem:[#allocation5 + $0x130] sm:$0xff]
    %v3820 = vld [vmem:[#allocation5 + $0x138] sm:$0xff]
    %v3821 = vld [vmem:[#allocation5 + $0x140] sm:$0xff]
    %v3822 = vld [vmem:[#allocation5 + $0x148] sm:$0xff]
    %v3823 = vld [vmem:[#allocation5 + $0x150] sm:$0xff]
    %v3824 = vld [vmem:[#allocation5 + $0x158] sm:$0xff]
    %v3825 = vld [vmem:[#allocation5 + $0x160] sm:$0xff]
    %v3826 = vld [vmem:[#allocation5 + $0x168] sm:$0xff]
    %v3827 = vld [vmem:[#allocation5 + $0x170] sm:$0xff]
    %v3828 = vld [vmem:[#allocation5 + $0x178] sm:$0xff]
    %v3829 = vld [vmem:[#allocation5 + $0x180] sm:$0xff]
    %v3830 = vld [vmem:[#allocation5 + $0x188] sm:$0xff]
    %v3831 = vld [vmem:[#allocation5 + $0x190] sm:$0xff]
    %v3832 = vld [vmem:[#allocation5 + $0x198] sm:$0xff]
    %v3833 = vld [vmem:[#allocation5 + $0x1a0] sm:$0xff]
    %v3834 = vld [vmem:[#allocation5 + $0x1a8] sm:$0xff]
    %v3835 = vld [vmem:[#allocation5 + $0x1b0] sm:$0xff]
    %v3836 = vld [vmem:[#allocation5 + $0x1b8] sm:$0xff]
    %v3837 = vld [vmem:[#allocation5 + $0x1c0] sm:$0xff]
    %v3838 = vld [vmem:[#allocation5 + $0x1c8] sm:$0xff]
    %v3839 = vld [vmem:[#allocation5 + $0x1d0] sm:$0xff]
    %v3840 = vld [vmem:[#allocation5 + $0x1d8] sm:$0xff]
    %v3841 = vld [vmem:[#allocation5 + $0x1e0] sm:$0xff]
    %v3842 = vld [vmem:[#allocation5 + $0x1e8] sm:$0xff]
    %v3843 = vld [vmem:[#allocation5 + $0x1f0] sm:$0xff]
    %v3844 = vld [vmem:[#allocation5 + $0x1f8] sm:$0xff]
    %3845 = vmatprep.subr.mxu0 %v3782
    %3846 = vmatpush1.msra.mxu0 %v3781
    %3847 = vmatprep.subr.mxu0 %v3786
    %3848 = vmatpush1.msra.mxu0 %v3785
    %3849 = vmatprep.subr.mxu0 %v3790
    %3850 = vmatpush1.msra.mxu0 %v3789
    %3851 = vmatprep.subr.mxu0 %v3794
    %3852 = vmatpush1.msra.mxu0 %v3793
    %3853 = vmatprep.subr.mxu0 %v3798
    %3854 = vmatpush1.msra.mxu0 %v3797
    %3855 = vmatprep.subr.mxu0 %v3802
    %3856 = vmatpush1.msra.mxu0 %v3801
    %3857 = vmatprep.subr.mxu0 %v3806
    %3858 = vmatpush1.msra.mxu0 %v3805
    %3859 = vmatprep.subr.mxu0 %v3810
    %3860 = vmatpush1.msra.mxu0 %v3809
    %3861 = vmatprep.subr.mxu0 %v3814
    %3862 = vmatpush1.msra.mxu0 %v3813
    %3863 = vmatprep.subr.mxu0 %v3818
    %3864 = vmatpush1.msra.mxu0 %v3817
    %3865 = vmatprep.subr.mxu0 %v3822
    %3866 = vmatpush1.msra.mxu0 %v3821
    %3867 = vmatprep.subr.mxu0 %v3826
    %3868 = vmatpush1.msra.mxu0 %v3825
    %3869 = vmatprep.subr.mxu0 %v3830
    %3870 = vmatpush1.msra.mxu0 %v3829
    %3871 = vmatprep.subr.mxu0 %v3834
    %3872 = vmatpush1.msra.mxu0 %v3833
    %3873 = vmatprep.subr.mxu0 %v3838
    %3874 = vmatpush1.msra.mxu0 %v3837
    %3875 = vmatprep.subr.mxu0 %v3842
    %3876 = vmatpush1.msra.mxu0 %v3841
    %3877 = vmatprep.subr.mxu0 0.0
    %3878 = vmatpush1.msra.mxu0 0.0
    %3879 = vmatprep.subr.mxu0 0.0
    %3880 = vmatpush1.msra.mxu0 0.0
    %3881 = vmatprep.subr.mxu0 0.0
    %3882 = vmatpush1.msra.mxu0 0.0
    %3883 = vmatprep.subr.mxu0 0.0
    %3884 = vmatpush1.msra.mxu0 0.0
    %3885 = vmatprep.subr.mxu0 0.0
    %3886 = vmatpush1.msra.mxu0 0.0
    %3887 = vmatprep.subr.mxu0 0.0
    %3888 = vmatpush1.msra.mxu0 0.0
    %3889 = vmatprep.subr.mxu0 0.0
    %3890 = vmatpush1.msra.mxu0 0.0
    %3891 = vmatprep.subr.mxu0 0.0
    %3892 = vmatpush1.msra.mxu0 0.0
    %3893 = vmatprep.subr.mxu0 0.0
    %3894 = vmatpush1.msra.mxu0 0.0
    %3895 = vmatprep.subr.mxu0 0.0
    %3896 = vmatpush1.msra.mxu0 0.0
    %3897 = vmatprep.subr.mxu0 0.0
    %3898 = vmatpush1.msra.mxu0 0.0
    %3899 = vmatprep.subr.mxu0 0.0
    %3900 = vmatpush1.msra.mxu0 0.0
    %3901 = vmatprep.subr.mxu0 0.0
    %3902 = vmatpush1.msra.mxu0 0.0
    %3903 = vmatprep.subr.mxu0 0.0
    %3904 = vmatpush1.msra.mxu0 0.0
    %3905 = vmatprep.subr.mxu0 0.0
    %3906 = vmatpush1.msra.mxu0 0.0
    %3907 = vmatprep.subr.mxu0 0.0
    %3908 = vmatpush1.msra.mxu0 0.0
    %3909 = vmatprep.mubr.f32.mxu0 0.0
    %3910 = vmatmul.mubr.f32.gmra.mrb[0].mxu0 %v3335
    %v3911 = vpop.f32.mrb[0].mxu0
    %v3912 = vadd.f32 0.0, %v3911
    %v3913 = vpop.f32.mrb[0].mxu0
    %v3914 = vadd.f32 0.0, %v3913
    %3915 = vdwg.mxu0
    %3916 = vmatprep.subr.mxu0 %v3784
    %3917 = vmatpush1.msra.mxu0 %v3783
    %3918 = vmatprep.subr.mxu0 %v3788
    %3919 = vmatpush1.msra.mxu0 %v3787
    %3920 = vmatprep.subr.mxu0 %v3792
    %3921 = vmatpush1.msra.mxu0 %v3791
    %3922 = vmatprep.subr.mxu0 %v3796
    %3923 = vmatpush1.msra.mxu0 %v3795
    %3924 = vmatprep.subr.mxu0 %v3800
    %3925 = vmatpush1.msra.mxu0 %v3799
    %3926 = vmatprep.subr.mxu0 %v3804
    %3927 = vmatpush1.msra.mxu0 %v3803
    %3928 = vmatprep.subr.mxu0 %v3808
    %3929 = vmatpush1.msra.mxu0 %v3807
    %3930 = vmatprep.subr.mxu0 %v3812
    %3931 = vmatpush1.msra.mxu0 %v3811
    %3932 = vmatprep.subr.mxu0 %v3816
    %3933 = vmatpush1.msra.mxu0 %v3815
    %3934 = vmatprep.subr.mxu0 %v3820
    %3935 = vmatpush1.msra.mxu0 %v3819
    %3936 = vmatprep.subr.mxu0 %v3824
    %3937 = vmatpush1.msra.mxu0 %v3823
    %3938 = vmatprep.subr.mxu0 %v3828
    %3939 = vmatpush1.msra.mxu0 %v3827
    %3940 = vmatprep.subr.mxu0 %v3832
    %3941 = vmatpush1.msra.mxu0 %v3831
    %3942 = vmatprep.subr.mxu0 %v3836
    %3943 = vmatpush1.msra.mxu0 %v3835
    %3944 = vmatprep.subr.mxu0 %v3840
    %3945 = vmatpush1.msra.mxu0 %v3839
    %3946 = vmatprep.subr.mxu0 %v3844
    %3947 = vmatpush1.msra.mxu0 %v3843
    %3948 = vmatprep.subr.mxu0 0.0
    %3949 = vmatpush1.msra.mxu0 0.0
    %3950 = vmatprep.subr.mxu0 0.0
    %3951 = vmatpush1.msra.mxu0 0.0
    %3952 = vmatprep.subr.mxu0 0.0
    %3953 = vmatpush1.msra.mxu0 0.0
    %3954 = vmatprep.subr.mxu0 0.0
    %3955 = vmatpush1.msra.mxu0 0.0
    %3956 = vmatprep.subr.mxu0 0.0
    %3957 = vmatpush1.msra.mxu0 0.0
    %3958 = vmatprep.subr.mxu0 0.0
    %3959 = vmatpush1.msra.mxu0 0.0
    %3960 = vmatprep.subr.mxu0 0.0
    %3961 = vmatpush1.msra.mxu0 0.0
    %3962 = vmatprep.subr.mxu0 0.0
    %3963 = vmatpush1.msra.mxu0 0.0
    %3964 = vmatprep.subr.mxu0 0.0
    %3965 = vmatpush1.msra.mxu0 0.0
    %3966 = vmatprep.subr.mxu0 0.0
    %3967 = vmatpush1.msra.mxu0 0.0
    %3968 = vmatprep.subr.mxu0 0.0
    %3969 = vmatpush1.msra.mxu0 0.0
    %3970 = vmatprep.subr.mxu0 0.0
    %3971 = vmatpush1.msra.mxu0 0.0
    %3972 = vmatprep.subr.mxu0 0.0
    %3973 = vmatpush1.msra.mxu0 0.0
    %3974 = vmatprep.subr.mxu0 0.0
    %3975 = vmatpush1.msra.mxu0 0.0
    %3976 = vmatprep.subr.mxu0 0.0
    %3977 = vmatpush1.msra.mxu0 0.0
    %3978 = vmatprep.subr.mxu0 0.0
    %3979 = vmatpush1.msra.mxu0 0.0
    %3980 = vmatprep.mubr.f32.mxu0 0.0
    %3981 = vmatmul.mubr.f32.gmra.mrb[0].mxu0 %v3335
    %v3982 = vpop.f32.mrb[0].mxu0
    %v3983 = vadd.f32 0.0, %v3982
    %v3984 = vpop.f32.mrb[0].mxu0
    %v3985 = vadd.f32 0.0, %v3984
    %3986 = vdwg.mxu0
    %v3991 = vcombine.low %v3912, %v3914
    %v3992 = vcombine.low %v3983, %v3985
    %v3995 = vadd.f32 %v3779, %v3991
    %v3996 = vadd.f32 %v3780, %v3992
    %v3997 = vxor.u32 %v3995, 2147483648
    %v3998 = vxor.u32 %v3996, 2147483648
    %v3999 = vmul.f32 %v3997, 1.442695
    %v4000 = vpow.pop %v3999
    %v4001 = vmul.f32 %v3998, 1.442695
    %v4002 = vpow.pop %v4001
    %v4003 = vadd.f32 %v4000, 1.0
    %v4004 = vadd.f32 %v4002, 1.0
    %v4005 = vrcp.pop %v4003
    %v4006 = vmul.f32 1.0, %v4005
    %v4007 = vrcp.pop %v4004
    %v4008 = vmul.f32 1.0, %v4007
    %v4010 = vrot.slane %v3996, 4
    %v4012 = vtanh.pop %v4010
    %v4014 = vrot.slane %v4006, 4
    %v4016 = vmul.f32 %v4014, %v3333
    %v4017 = vmul.f32 %v4006, %v4012
    %v4018 = vadd.f32 %v4016, %v4017
    %v4019 = vtanh.pop %v4018
    %v4020 = vmul.f32 %v4008, %v4019
    %v4021 = vld [vmem:[#allocation7] sm:$0xff]
    %v4022 = vld [vmem:[#allocation7 + $0x8] sm:$0xff]
    %v4023 = vld [vmem:[#allocation7 + $0x10] sm:$0xff]
    %v4024 = vld [vmem:[#allocation7 + $0x18] sm:$0xff]
    %v4025 = vld [vmem:[#allocation7 + $0x20] sm:$0xff]
    %v4026 = vld [vmem:[#allocation7 + $0x28] sm:$0xff]
    %v4027 = vld [vmem:[#allocation7 + $0x30] sm:$0xff]
    %v4028 = vld [vmem:[#allocation7 + $0x38] sm:$0xff]
    %v4029 = vld [vmem:[#allocation7 + $0x40] sm:$0xff]
    %v4030 = vld [vmem:[#allocation7 + $0x48] sm:$0xff]
    %v4031 = vld [vmem:[#allocation7 + $0x50] sm:$0xff]
    %v4032 = vld [vmem:[#allocation7 + $0x58] sm:$0xff]
    %v4033 = vld [vmem:[#allocation7 + $0x60] sm:$0xff]
    %v4034 = vld [vmem:[#allocation7 + $0x68] sm:$0xff]
    %v4035 = vld [vmem:[#allocation7 + $0x70] sm:$0xff]
    %v4036 = vld [vmem:[#allocation7 + $0x78] sm:$0xff]
    %v4037 = vld [vmem:[#allocation7 + $0x80] sm:$0xff]
    %v4038 = vld [vmem:[#allocation7 + $0x88] sm:$0xff]
    %v4039 = vld [vmem:[#allocation7 + $0x90] sm:$0xff]
    %v4040 = vld [vmem:[#allocation7 + $0x98] sm:$0xff]
    %v4041 = vld [vmem:[#allocation7 + $0xa0] sm:$0xff]
    %v4042 = vld [vmem:[#allocation7 + $0xa8] sm:$0xff]
    %v4043 = vld [vmem:[#allocation7 + $0xb0] sm:$0xff]
    %v4044 = vld [vmem:[#allocation7 + $0xb8] sm:$0xff]
    %v4045 = vld [vmem:[#allocation7 + $0xc0] sm:$0xff]
    %v4046 = vld [vmem:[#allocation7 + $0xc8] sm:$0xff]
    %v4047 = vld [vmem:[#allocation7 + $0xd0] sm:$0xff]
    %v4048 = vld [vmem:[#allocation7 + $0xd8] sm:$0xff]
    %v4049 = vld [vmem:[#allocation7 + $0xe0] sm:$0xff]
    %v4050 = vld [vmem:[#allocation7 + $0xe8] sm:$0xff]
    %v4051 = vld [vmem:[#allocation7 + $0xf0] sm:$0xff]
    %v4052 = vld [vmem:[#allocation7 + $0xf8] sm:$0xff]
    %v4053 = vld [vmem:[#allocation7 + $0x100] sm:$0xff]
    %v4054 = vld [vmem:[#allocation7 + $0x108] sm:$0xff]
    %v4055 = vld [vmem:[#allocation7 + $0x110] sm:$0xff]
    %v4056 = vld [vmem:[#allocation7 + $0x118] sm:$0xff]
    %v4057 = vld [vmem:[#allocation7 + $0x120] sm:$0xff]
    %v4058 = vld [vmem:[#allocation7 + $0x128] sm:$0xff]
    %v4059 = vld [vmem:[#allocation7 + $0x130] sm:$0xff]
    %v4060 = vld [vmem:[#allocation7 + $0x138] sm:$0xff]
    %v4061 = vld [vmem:[#allocation7 + $0x140] sm:$0xff]
    %v4062 = vld [vmem:[#allocation7 + $0x148] sm:$0xff]
    %v4063 = vld [vmem:[#allocation7 + $0x150] sm:$0xff]
    %v4064 = vld [vmem:[#allocation7 + $0x158] sm:$0xff]
    %v4065 = vld [vmem:[#allocation7 + $0x160] sm:$0xff]
    %v4066 = vld [vmem:[#allocation7 + $0x168] sm:$0xff]
    %v4067 = vld [vmem:[#allocation7 + $0x170] sm:$0xff]
    %v4068 = vld [vmem:[#allocation7 + $0x178] sm:$0xff]
    %v4069 = vld [vmem:[#allocation7 + $0x180] sm:$0xff]
    %v4070 = vld [vmem:[#allocation7 + $0x188] sm:$0xff]
    %v4071 = vld [vmem:[#allocation7 + $0x190] sm:$0xff]
    %v4072 = vld [vmem:[#allocation7 + $0x198] sm:$0xff]
    %v4073 = vld [vmem:[#allocation7 + $0x1a0] sm:$0xff]
    %v4074 = vld [vmem:[#allocation7 + $0x1a8] sm:$0xff]
    %v4075 = vld [vmem:[#allocation7 + $0x1b0] sm:$0xff]
    %v4076 = vld [vmem:[#allocation7 + $0x1b8] sm:$0xff]
    %v4077 = vld [vmem:[#allocation7 + $0x1c0] sm:$0xff]
    %v4078 = vld [vmem:[#allocation7 + $0x1c8] sm:$0xff]
    %v4079 = vld [vmem:[#allocation7 + $0x1d0] sm:$0xff]
    %v4080 = vld [vmem:[#allocation7 + $0x1d8] sm:$0xff]
    %v4081 = vld [vmem:[#allocation7 + $0x1e0] sm:$0xff]
    %v4082 = vld [vmem:[#allocation7 + $0x1e8] sm:$0xff]
    %v4083 = vld [vmem:[#allocation7 + $0x1f0] sm:$0xff]
    %v4084 = vld [vmem:[#allocation7 + $0x1f8] sm:$0xff]
    %v4085 = vld [vmem:[#allocation9] sm:$0xff]
    %v4086 = vld [vmem:[#allocation9 + $0x8] sm:$0xff]
    %v4087 = vld [vmem:[#allocation9 + $0x10] sm:$0xff]
    %v4088 = vld [vmem:[#allocation9 + $0x18] sm:$0xff]
    %v4089 = vld [vmem:[#allocation9 + $0x20] sm:$0xff]
    %v4090 = vld [vmem:[#allocation9 + $0x28] sm:$0xff]
    %v4091 = vld [vmem:[#allocation9 + $0x30] sm:$0xff]
    %v4092 = vld [vmem:[#allocation9 + $0x38] sm:$0xff]
    %v4093 = vld [vmem:[#allocation9 + $0x40] sm:$0xff]
    %v4094 = vld [vmem:[#allocation9 + $0x48] sm:$0xff]
    %v4095 = vld [vmem:[#allocation9 + $0x50] sm:$0xff]
    %v4096 = vld [vmem:[#allocation9 + $0x58] sm:$0xff]
    %v4097 = vld [vmem:[#allocation9 + $0x60] sm:$0xff]
    %v4098 = vld [vmem:[#allocation9 + $0x68] sm:$0xff]
    %v4099 = vld [vmem:[#allocation9 + $0x70] sm:$0xff]
    %v4100 = vld [vmem:[#allocation9 + $0x78] sm:$0xff]
    %v4101 = vld [vmem:[#allocation9 + $0x80] sm:$0xff]
    %v4102 = vld [vmem:[#allocation9 + $0x88] sm:$0xff]
    %v4103 = vld [vmem:[#allocation9 + $0x90] sm:$0xff]
    %v4104 = vld [vmem:[#allocation9 + $0x98] sm:$0xff]
    %v4105 = vld [vmem:[#allocation9 + $0xa0] sm:$0xff]
    %v4106 = vld [vmem:[#allocation9 + $0xa8] sm:$0xff]
    %v4107 = vld [vmem:[#allocation9 + $0xb0] sm:$0xff]
    %v4108 = vld [vmem:[#allocation9 + $0xb8] sm:$0xff]
    %v4109 = vld [vmem:[#allocation9 + $0xc0] sm:$0xff]
    %v4110 = vld [vmem:[#allocation9 + $0xc8] sm:$0xff]
    %v4111 = vld [vmem:[#allocation9 + $0xd0] sm:$0xff]
    %v4112 = vld [vmem:[#allocation9 + $0xd8] sm:$0xff]
    %v4113 = vld [vmem:[#allocation9 + $0xe0] sm:$0xff]
    %v4114 = vld [vmem:[#allocation9 + $0xe8] sm:$0xff]
    %v4115 = vld [vmem:[#allocation9 + $0xf0] sm:$0xff]
    %v4116 = vld [vmem:[#allocation9 + $0xf8] sm:$0xff]
    %v4117 = vld [vmem:[#allocation9 + $0x100] sm:$0xff]
    %v4118 = vld [vmem:[#allocation9 + $0x108] sm:$0xff]
    %v4119 = vld [vmem:[#allocation9 + $0x110] sm:$0xff]
    %v4120 = vld [vmem:[#allocation9 + $0x118] sm:$0xff]
    %v4121 = vld [vmem:[#allocation9 + $0x120] sm:$0xff]
    %v4122 = vld [vmem:[#allocation9 + $0x128] sm:$0xff]
    %v4123 = vld [vmem:[#allocation9 + $0x130] sm:$0xff]
    %v4124 = vld [vmem:[#allocation9 + $0x138] sm:$0xff]
    %v4125 = vld [vmem:[#allocation9 + $0x140] sm:$0xff]
    %v4126 = vld [vmem:[#allocation9 + $0x148] sm:$0xff]
    %v4127 = vld [vmem:[#allocation9 + $0x150] sm:$0xff]
    %v4128 = vld [vmem:[#allocation9 + $0x158] sm:$0xff]
    %v4129 = vld [vmem:[#allocation9 + $0x160] sm:$0xff]
    %v4130 = vld [vmem:[#allocation9 + $0x168] sm:$0xff]
    %v4131 = vld [vmem:[#allocation9 + $0x170] sm:$0xff]
    %v4132 = vld [vmem:[#allocation9 + $0x178] sm:$0xff]
    %v4133 = vld [vmem:[#allocation9 + $0x180] sm:$0xff]
    %v4134 = vld [vmem:[#allocation9 + $0x188] sm:$0xff]
    %v4135 = vld [vmem:[#allocation9 + $0x190] sm:$0xff]
    %v4136 = vld [vmem:[#allocation9 + $0x198] sm:$0xff]
    %v4137 = vld [vmem:[#allocation9 + $0x1a0] sm:$0xff]
    %v4138 = vld [vmem:[#allocation9 + $0x1a8] sm:$0xff]
    %v4139 = vld [vmem:[#allocation9 + $0x1b0] sm:$0xff]
    %v4140 = vld [vmem:[#allocation9 + $0x1b8] sm:$0xff]
    %v4141 = vld [vmem:[#allocation9 + $0x1c0] sm:$0xff]
    %v4142 = vld [vmem:[#allocation9 + $0x1c8] sm:$0xff]
    %v4143 = vld [vmem:[#allocation9 + $0x1d0] sm:$0xff]
    %v4144 = vld [vmem:[#allocation9 + $0x1d8] sm:$0xff]
    %v4145 = vld [vmem:[#allocation9 + $0x1e0] sm:$0xff]
    %v4146 = vld [vmem:[#allocation9 + $0x1e8] sm:$0xff]
    %v4147 = vld [vmem:[#allocation9 + $0x1f0] sm:$0xff]
    %v4148 = vld [vmem:[#allocation9 + $0x1f8] sm:$0xff]
    %4149 = vmatprep.subr.mxu0 %v4086
    %4150 = vmatpush1.msra.mxu0 %v4085
    %4151 = vmatprep.subr.mxu0 %v4090
    %4152 = vmatpush1.msra.mxu0 %v4089
    %4153 = vmatprep.subr.mxu0 %v4094
    %4154 = vmatpush1.msra.mxu0 %v4093
    %4155 = vmatprep.subr.mxu0 %v4098
    %4156 = vmatpush1.msra.mxu0 %v4097
    %4157 = vmatprep.subr.mxu0 %v4102
    %4158 = vmatpush1.msra.mxu0 %v4101
    %4159 = vmatprep.subr.mxu0 %v4106
    %4160 = vmatpush1.msra.mxu0 %v4105
    %4161 = vmatprep.subr.mxu0 %v4110
    %4162 = vmatpush1.msra.mxu0 %v4109
    %4163 = vmatprep.subr.mxu0 %v4114
    %4164 = vmatpush1.msra.mxu0 %v4113
    %4165 = vmatprep.subr.mxu0 %v4118
    %4166 = vmatpush1.msra.mxu0 %v4117
    %4167 = vmatprep.subr.mxu0 %v4122
    %4168 = vmatpush1.msra.mxu0 %v4121
    %4169 = vmatprep.subr.mxu0 %v4126
    %4170 = vmatpush1.msra.mxu0 %v4125
    %4171 = vmatprep.subr.mxu0 %v4130
    %4172 = vmatpush1.msra.mxu0 %v4129
    %4173 = vmatprep.subr.mxu0 %v4134
    %4174 = vmatpush1.msra.mxu0 %v4133
    %4175 = vmatprep.subr.mxu0 %v4138
    %4176 = vmatpush1.msra.mxu0 %v4137
    %4177 = vmatprep.subr.mxu0 %v4142
    %4178 = vmatpush1.msra.mxu0 %v4141
    %4179 = vmatprep.subr.mxu0 %v4146
    %4180 = vmatpush1.msra.mxu0 %v4145
    %4181 = vmatprep.subr.mxu0 0.0
    %4182 = vmatpush1.msra.mxu0 0.0
    %4183 = vmatprep.subr.mxu0 0.0
    %4184 = vmatpush1.msra.mxu0 0.0
    %4185 = vmatprep.subr.mxu0 0.0
    %4186 = vmatpush1.msra.mxu0 0.0
    %4187 = vmatprep.subr.mxu0 0.0
    %4188 = vmatpush1.msra.mxu0 0.0
    %4189 = vmatprep.subr.mxu0 0.0
    %4190 = vmatpush1.msra.mxu0 0.0
    %4191 = vmatprep.subr.mxu0 0.0
    %4192 = vmatpush1.msra.mxu0 0.0
    %4193 = vmatprep.subr.mxu0 0.0
    %4194 = vmatpush1.msra.mxu0 0.0
    %4195 = vmatprep.subr.mxu0 0.0
    %4196 = vmatpush1.msra.mxu0 0.0
    %4197 = vmatprep.subr.mxu0 0.0
    %4198 = vmatpush1.msra.mxu0 0.0
    %4199 = vmatprep.subr.mxu0 0.0
    %4200 = vmatpush1.msra.mxu0 0.0
    %4201 = vmatprep.subr.mxu0 0.0
    %4202 = vmatpush1.msra.mxu0 0.0
    %4203 = vmatprep.subr.mxu0 0.0
    %4204 = vmatpush1.msra.mxu0 0.0
    %4205 = vmatprep.subr.mxu0 0.0
    %4206 = vmatpush1.msra.mxu0 0.0
    %4207 = vmatprep.subr.mxu0 0.0
    %4208 = vmatpush1.msra.mxu0 0.0
    %4209 = vmatprep.subr.mxu0 0.0
    %4210 = vmatpush1.msra.mxu0 0.0
    %4211 = vmatprep.subr.mxu0 0.0
    %4212 = vmatpush1.msra.mxu0 0.0
    %4213 = vmatprep.mubr.f32.mxu0 0.0
    %4214 = vmatmul.mubr.f32.gmra.mrb[0].mxu0 %v3775
    %v4215 = vpop.f32.mrb[0].mxu0
    %v4216 = vadd.f32 0.0, %v4215
    %v4217 = vpop.f32.mrb[0].mxu0
    %v4218 = vadd.f32 0.0, %v4217
    %4219 = vdwg.mxu0
    %4220 = vmatprep.subr.mxu0 %v4088
    %4221 = vmatpush1.msra.mxu0 %v4087
    %4222 = vmatprep.subr.mxu0 %v4092
    %4223 = vmatpush1.msra.mxu0 %v4091
    %4224 = vmatprep.subr.mxu0 %v4096
    %4225 = vmatpush1.msra.mxu0 %v4095
    %4226 = vmatprep.subr.mxu0 %v4100
    %4227 = vmatpush1.msra.mxu0 %v4099
    %4228 = vmatprep.subr.mxu0 %v4104
    %4229 = vmatpush1.msra.mxu0 %v4103
    %4230 = vmatprep.subr.mxu0 %v4108
    %4231 = vmatpush1.msra.mxu0 %v4107
    %4232 = vmatprep.subr.mxu0 %v4112
    %4233 = vmatpush1.msra.mxu0 %v4111
    %4234 = vmatprep.subr.mxu0 %v4116
    %4235 = vmatpush1.msra.mxu0 %v4115
    %4236 = vmatprep.subr.mxu0 %v4120
    %4237 = vmatpush1.msra.mxu0 %v4119
    %4238 = vmatprep.subr.mxu0 %v4124
    %4239 = vmatpush1.msra.mxu0 %v4123
    %4240 = vmatprep.subr.mxu0 %v4128
    %4241 = vmatpush1.msra.mxu0 %v4127
    %4242 = vmatprep.subr.mxu0 %v4132
    %4243 = vmatpush1.msra.mxu0 %v4131
    %4244 = vmatprep.subr.mxu0 %v4136
    %4245 = vmatpush1.msra.mxu0 %v4135
    %4246 = vmatprep.subr.mxu0 %v4140
    %4247 = vmatpush1.msra.mxu0 %v4139
    %4248 = vmatprep.subr.mxu0 %v4144
    %4249 = vmatpush1.msra.mxu0 %v4143
    %4250 = vmatprep.subr.mxu0 %v4148
    %4251 = vmatpush1.msra.mxu0 %v4147
    %4252 = vmatprep.subr.mxu0 0.0
    %4253 = vmatpush1.msra.mxu0 0.0
    %4254 = vmatprep.subr.mxu0 0.0
    %4255 = vmatpush1.msra.mxu0 0.0
    %4256 = vmatprep.subr.mxu0 0.0
    %4257 = vmatpush1.msra.mxu0 0.0
    %4258 = vmatprep.subr.mxu0 0.0
    %4259 = vmatpush1.msra.mxu0 0.0
    %4260 = vmatprep.subr.mxu0 0.0
    %4261 = vmatpush1.msra.mxu0 0.0
    %4262 = vmatprep.subr.mxu0 0.0
    %4263 = vmatpush1.msra.mxu0 0.0
    %4264 = vmatprep.subr.mxu0 0.0
    %4265 = vmatpush1.msra.mxu0 0.0
    %4266 = vmatprep.subr.mxu0 0.0
    %4267 = vmatpush1.msra.mxu0 0.0
    %4268 = vmatprep.subr.mxu0 0.0
    %4269 = vmatpush1.msra.mxu0 0.0
    %4270 = vmatprep.subr.mxu0 0.0
    %4271 = vmatpush1.msra.mxu0 0.0
    %4272 = vmatprep.subr.mxu0 0.0
    %4273 = vmatpush1.msra.mxu0 0.0
    %4274 = vmatprep.subr.mxu0 0.0
    %4275 = vmatpush1.msra.mxu0 0.0
    %4276 = vmatprep.subr.mxu0 0.0
    %4277 = vmatpush1.msra.mxu0 0.0
    %4278 = vmatprep.subr.mxu0 0.0
    %4279 = vmatpush1.msra.mxu0 0.0
    %4280 = vmatprep.subr.mxu0 0.0
    %4281 = vmatpush1.msra.mxu0 0.0
    %4282 = vmatprep.subr.mxu0 0.0
    %4283 = vmatpush1.msra.mxu0 0.0
    %4284 = vmatprep.mubr.f32.mxu0 0.0
    %4285 = vmatmul.mubr.f32.gmra.mrb[0].mxu0 %v3775
    %v4286 = vpop.f32.mrb[0].mxu0
    %v4287 = vadd.f32 0.0, %v4286
    %v4288 = vpop.f32.mrb[0].mxu0
    %v4289 = vadd.f32 0.0, %v4288
    %4290 = vdwg.mxu0
    %4291 = vmatprep.subr.mxu0 %v4022
    %4292 = vmatpush1.msra.mxu0 %v4021
    %4293 = vmatprep.subr.mxu0 %v4026
    %4294 = vmatpush1.msra.mxu0 %v4025
    %4295 = vmatprep.subr.mxu0 %v4030
    %4296 = vmatpush1.msra.mxu0 %v4029
    %4297 = vmatprep.subr.mxu0 %v4034
    %4298 = vmatpush1.msra.mxu0 %v4033
    %4299 = vmatprep.subr.mxu0 %v4038
    %4300 = vmatpush1.msra.mxu0 %v4037
    %4301 = vmatprep.subr.mxu0 %v4042
    %4302 = vmatpush1.msra.mxu0 %v4041
    %4303 = vmatprep.subr.mxu0 %v4046
    %4304 = vmatpush1.msra.mxu0 %v4045
    %4305 = vmatprep.subr.mxu0 %v4050
    %4306 = vmatpush1.msra.mxu0 %v4049
    %4307 = vmatprep.subr.mxu0 %v4054
    %4308 = vmatpush1.msra.mxu0 %v4053
    %4309 = vmatprep.subr.mxu0 %v4058
    %4310 = vmatpush1.msra.mxu0 %v4057
    %4311 = vmatprep.subr.mxu0 %v4062
    %4312 = vmatpush1.msra.mxu0 %v4061
    %4313 = vmatprep.subr.mxu0 %v4066
    %4314 = vmatpush1.msra.mxu0 %v4065
    %4315 = vmatprep.subr.mxu0 %v4070
    %4316 = vmatpush1.msra.mxu0 %v4069
    %4317 = vmatprep.subr.mxu0 %v4074
    %4318 = vmatpush1.msra.mxu0 %v4073
    %4319 = vmatprep.subr.mxu0 %v4078
    %4320 = vmatpush1.msra.mxu0 %v4077
    %4321 = vmatprep.subr.mxu0 %v4082
    %4322 = vmatpush1.msra.mxu0 %v4081
    %4323 = vmatprep.subr.mxu0 0.0
    %4324 = vmatpush1.msra.mxu0 0.0
    %4325 = vmatprep.subr.mxu0 0.0
    %4326 = vmatpush1.msra.mxu0 0.0
    %4327 = vmatprep.subr.mxu0 0.0
    %4328 = vmatpush1.msra.mxu0 0.0
    %4329 = vmatprep.subr.mxu0 0.0
    %4330 = vmatpush1.msra.mxu0 0.0
    %4331 = vmatprep.subr.mxu0 0.0
    %4332 = vmatpush1.msra.mxu0 0.0
    %4333 = vmatprep.subr.mxu0 0.0
    %4334 = vmatpush1.msra.mxu0 0.0
    %4335 = vmatprep.subr.mxu0 0.0
    %4336 = vmatpush1.msra.mxu0 0.0
    %4337 = vmatprep.subr.mxu0 0.0
    %4338 = vmatpush1.msra.mxu0 0.0
    %4339 = vmatprep.subr.mxu0 0.0
    %4340 = vmatpush1.msra.mxu0 0.0
    %4341 = vmatprep.subr.mxu0 0.0
    %4342 = vmatpush1.msra.mxu0 0.0
    %4343 = vmatprep.subr.mxu0 0.0
    %4344 = vmatpush1.msra.mxu0 0.0
    %4345 = vmatprep.subr.mxu0 0.0
    %4346 = vmatpush1.msra.mxu0 0.0
    %4347 = vmatprep.subr.mxu0 0.0
    %4348 = vmatpush1.msra.mxu0 0.0
    %4349 = vmatprep.subr.mxu0 0.0
    %4350 = vmatpush1.msra.mxu0 0.0
    %4351 = vmatprep.subr.mxu0 0.0
    %4352 = vmatpush1.msra.mxu0 0.0
    %4353 = vmatprep.subr.mxu0 0.0
    %4354 = vmatpush1.msra.mxu0 0.0
    %4355 = vmatprep.mubr.f32.mxu0 0.0
    %4356 = vmatmul.mubr.f32.gmra.mrb[0].mxu0 %v4020
    %v4357 = vpop.f32.mrb[0].mxu0
    %v4358 = vadd.f32 %v4216, %v4357
    %v4359 = vpop.f32.mrb[0].mxu0
    %v4360 = vadd.f32 %v4218, %v4359
    %4361 = vdwg.mxu0
    %4362 = vmatprep.subr.mxu0 %v4024
    %4363 = vmatpush1.msra.mxu0 %v4023
    %4364 = vmatprep.subr.mxu0 %v4028
    %4365 = vmatpush1.msra.mxu0 %v4027
    %4366 = vmatprep.subr.mxu0 %v4032
    %4367 = vmatpush1.msra.mxu0 %v4031
    %4368 = vmatprep.subr.mxu0 %v4036
    %4369 = vmatpush1.msra.mxu0 %v4035
    %4370 = vmatprep.subr.mxu0 %v4040
    %4371 = vmatpush1.msra.mxu0 %v4039
    %4372 = vmatprep.subr.mxu0 %v4044
    %4373 = vmatpush1.msra.mxu0 %v4043
    %4374 = vmatprep.subr.mxu0 %v4048
    %4375 = vmatpush1.msra.mxu0 %v4047
    %4376 = vmatprep.subr.mxu0 %v4052
    %4377 = vmatpush1.msra.mxu0 %v4051
    %4378 = vmatprep.subr.mxu0 %v4056
    %4379 = vmatpush1.msra.mxu0 %v4055
    %4380 = vmatprep.subr.mxu0 %v4060
    %4381 = vmatpush1.msra.mxu0 %v4059
    %4382 = vmatprep.subr.mxu0 %v4064
    %4383 = vmatpush1.msra.mxu0 %v4063
    %4384 = vmatprep.subr.mxu0 %v4068
    %4385 = vmatpush1.msra.mxu0 %v4067
    %4386 = vmatprep.subr.mxu0 %v4072
    %4387 = vmatpush1.msra.mxu0 %v4071
    %4388 = vmatprep.subr.mxu0 %v4076
    %4389 = vmatpush1.msra.mxu0 %v4075
    %4390 = vmatprep.subr.mxu0 %v4080
    %4391 = vmatpush1.msra.mxu0 %v4079
    %4392 = vmatprep.subr.mxu0 %v4084
    %4393 = vmatpush1.msra.mxu0 %v4083
    %4394 = vmatprep.subr.mxu0 0.0
    %4395 = vmatpush1.msra.mxu0 0.0
    %4396 = vmatprep.subr.mxu0 0.0
    %4397 = vmatpush1.msra.mxu0 0.0
    %4398 = vmatprep.subr.mxu0 0.0
    %4399 = vmatpush1.msra.mxu0 0.0
    %4400 = vmatprep.subr.mxu0 0.0
    %4401 = vmatpush1.msra.mxu0 0.0
    %4402 = vmatprep.subr.mxu0 0.0
    %4403 = vmatpush1.msra.mxu0 0.0
    %4404 = vmatprep.subr.mxu0 0.0
    %4405 = vmatpush1.msra.mxu0 0.0
    %4406 = vmatprep.subr.mxu0 0.0
    %4407 = vmatpush1.msra.mxu0 0.0
    %4408 = vmatprep.subr.mxu0 0.0
    %4409 = vmatpush1.msra.mxu0 0.0
    %4410 = vmatprep.subr.mxu0 0.0
    %4411 = vmatpush1.msra.mxu0 0.0
    %4412 = vmatprep.subr.mxu0 0.0
    %4413 = vmatpush1.msra.mxu0 0.0
    %4414 = vmatprep.subr.mxu0 0.0
    %4415 = vmatpush1.msra.mxu0 0.0
    %4416 = vmatprep.subr.mxu0 0.0
    %4417 = vmatpush1.msra.mxu0 0.0
    %4418 = vmatprep.subr.mxu0 0.0
    %4419 = vmatpush1.msra.mxu0 0.0
    %4420 = vmatprep.subr.mxu0 0.0
    %4421 = vmatpush1.msra.mxu0 0.0
    %4422 = vmatprep.subr.mxu0 0.0
    %4423 = vmatpush1.msra.mxu0 0.0
    %4424 = vmatprep.subr.mxu0 0.0
    %4425 = vmatpush1.msra.mxu0 0.0
    %4426 = vmatprep.mubr.f32.mxu0 0.0
    %4427 = vmatmul.mubr.f32.gmra.mrb[0].mxu0 %v4020
    %v4428 = vpop.f32.mrb[0].mxu0
    %v4429 = vadd.f32 %v4287, %v4428
    %v4430 = vpop.f32.mrb[0].mxu0
    %v4431 = vadd.f32 %v4289, %v4430
    %4432 = vdwg.mxu0
    %v4433 = vadd.f32 %v4358, %v100
    %v4434 = vadd.f32 %v4360, %v104
    %v4435 = vadd.f32 %v4429, %v108
    %v4436 = vadd.f32 %v4431, %v112
    %v4437 = vxor.u32 %v4433, 2147483648
    %v4438 = vxor.u32 %v4434, 2147483648
    %v4439 = vxor.u32 %v4435, 2147483648
    %v4440 = vmul.f32 %v4437, 1.442695
    %v4441 = vpow.pop %v4440
    %v4442 = vmul.f32 %v4438, 1.442695
    %v4443 = vpow.pop %v4442
    %v4444 = vmul.f32 %v4439, 1.442695
    %v4445 = vpow.pop %v4444
    %v4446 = vadd.f32 %v4441, 1.0
    %v4447 = vadd.f32 %v4443, 1.0
    %v4448 = vadd.f32 %v4445, 1.0
    %v4449 = vrcp.pop %v4446
    %v4450 = vmul.f32 1.0, %v4449
    %v4451 = vrcp.pop %v4447
    %v4452 = vmul.f32 1.0, %v4451
    %v4453 = vrcp.pop %v4448
    %v4454 = vmul.f32 1.0, %v4453
    %v4455 = vtanh.pop %v4436
    %v4456 = vmul.f32 %v4452, %v3773
    %v4457 = vmul.f32 %v4450, %v4455
    %v4458 = vadd.f32 %v4456, %v4457
    %v4459 = vtanh.pop %v4458
    %v4460 = vmul.f32 %v4454, %v4459
    %s4461 = scalar_lea.vmem [#allocation3], 20
    %4462 = vst [vmem:[%s4461] sm:$0xf] %v4460
    %s4463 = scalar_lea.vmem [#allocation2], 96
    %v4464 = vld [vmem:[%s4463] sm:$0xff]
    %v4465 = vld [vmem:[%s4463 + $0x8] sm:$0xff]
    %v4466 = vld [vmem:[#allocation5] sm:$0xff]
    %v4467 = vld [vmem:[#allocation5 + $0x8] sm:$0xff]
    %v4468 = vld [vmem:[#allocation5 + $0x10] sm:$0xff]
    %v4469 = vld [vmem:[#allocation5 + $0x18] sm:$0xff]
    %v4470 = vld [vmem:[#allocation5 + $0x20] sm:$0xff]
    %v4471 = vld [vmem:[#allocation5 + $0x28] sm:$0xff]
    %v4472 = vld [vmem:[#allocation5 + $0x30] sm:$0xff]
    %v4473 = vld [vmem:[#allocation5 + $0x38] sm:$0xff]
    %v4474 = vld [vmem:[#allocation5 + $0x40] sm:$0xff]
    %v4475 = vld [vmem:[#allocation5 + $0x48] sm:$0xff]
    %v4476 = vld [vmem:[#allocation5 + $0x50] sm:$0xff]
    %v4477 = vld [vmem:[#allocation5 + $0x58] sm:$0xff]
    %v4478 = vld [vmem:[#allocation5 + $0x60] sm:$0xff]
    %v4479 = vld [vmem:[#allocation5 + $0x68] sm:$0xff]
    %v4480 = vld [vmem:[#allocation5 + $0x70] sm:$0xff]
    %v4481 = vld [vmem:[#allocation5 + $0x78] sm:$0xff]
    %v4482 = vld [vmem:[#allocation5 + $0x80] sm:$0xff]
    %v4483 = vld [vmem:[#allocation5 + $0x88] sm:$0xff]
    %v4484 = vld [vmem:[#allocation5 + $0x90] sm:$0xff]
    %v4485 = vld [vmem:[#allocation5 + $0x98] sm:$0xff]
    %v4486 = vld [vmem:[#allocation5 + $0xa0] sm:$0xff]
    %v4487 = vld [vmem:[#allocation5 + $0xa8] sm:$0xff]
    %v4488 = vld [vmem:[#allocation5 + $0xb0] sm:$0xff]
    %v4489 = vld [vmem:[#allocation5 + $0xb8] sm:$0xff]
    %v4490 = vld [vmem:[#allocation5 + $0xc0] sm:$0xff]
    %v4491 = vld [vmem:[#allocation5 + $0xc8] sm:$0xff]
    %v4492 = vld [vmem:[#allocation5 + $0xd0] sm:$0xff]
    %v4493 = vld [vmem:[#allocation5 + $0xd8] sm:$0xff]
    %v4494 = vld [vmem:[#allocation5 + $0xe0] sm:$0xff]
    %v4495 = vld [vmem:[#allocation5 + $0xe8] sm:$0xff]
    %v4496 = vld [vmem:[#allocation5 + $0xf0] sm:$0xff]
    %v4497 = vld [vmem:[#allocation5 + $0xf8] sm:$0xff]
    %v4498 = vld [vmem:[#allocation5 + $0x100] sm:$0xff]
    %v4499 = vld [vmem:[#allocation5 + $0x108] sm:$0xff]
    %v4500 = vld [vmem:[#allocation5 + $0x110] sm:$0xff]
    %v4501 = vld [vmem:[#allocation5 + $0x118] sm:$0xff]
    %v4502 = vld [vmem:[#allocation5 + $0x120] sm:$0xff]
    %v4503 = vld [vmem:[#allocation5 + $0x128] sm:$0xff]
    %v4504 = vld [vmem:[#allocation5 + $0x130] sm:$0xff]
    %v4505 = vld [vmem:[#allocation5 + $0x138] sm:$0xff]
    %v4506 = vld [vmem:[#allocation5 + $0x140] sm:$0xff]
    %v4507 = vld [vmem:[#allocation5 + $0x148] sm:$0xff]
    %v4508 = vld [vmem:[#allocation5 + $0x150] sm:$0xff]
    %v4509 = vld [vmem:[#allocation5 + $0x158] sm:$0xff]
    %v4510 = vld [vmem:[#allocation5 + $0x160] sm:$0xff]
    %v4511 = vld [vmem:[#allocation5 + $0x168] sm:$0xff]
    %v4512 = vld [vmem:[#allocation5 + $0x170] sm:$0xff]
    %v4513 = vld [vmem:[#allocation5 + $0x178] sm:$0xff]
    %v4514 = vld [vmem:[#allocation5 + $0x180] sm:$0xff]
    %v4515 = vld [vmem:[#allocation5 + $0x188] sm:$0xff]
    %v4516 = vld [vmem:[#allocation5 + $0x190] sm:$0xff]
    %v4517 = vld [vmem:[#allocation5 + $0x198] sm:$0xff]
    %v4518 = vld [vmem:[#allocation5 + $0x1a0] sm:$0xff]
    %v4519 = vld [vmem:[#allocation5 + $0x1a8] sm:$0xff]
    %v4520 = vld [vmem:[#allocation5 + $0x1b0] sm:$0xff]
    %v4521 = vld [vmem:[#allocation5 + $0x1b8] sm:$0xff]
    %v4522 = vld [vmem:[#allocation5 + $0x1c0] sm:$0xff]
    %v4523 = vld [vmem:[#allocation5 + $0x1c8] sm:$0xff]
    %v4524 = vld [vmem:[#allocation5 + $0x1d0] sm:$0xff]
    %v4525 = vld [vmem:[#allocation5 + $0x1d8] sm:$0xff]
    %v4526 = vld [vmem:[#allocation5 + $0x1e0] sm:$0xff]
    %v4527 = vld [vmem:[#allocation5 + $0x1e8] sm:$0xff]
    %v4528 = vld [vmem:[#allocation5 + $0x1f0] sm:$0xff]
    %v4529 = vld [vmem:[#allocation5 + $0x1f8] sm:$0xff]
    %4530 = vmatprep.subr.mxu0 %v4467
    %4531 = vmatpush1.msra.mxu0 %v4466
    %4532 = vmatprep.subr.mxu0 %v4471
    %4533 = vmatpush1.msra.mxu0 %v4470
    %4534 = vmatprep.subr.mxu0 %v4475
    %4535 = vmatpush1.msra.mxu0 %v4474
    %4536 = vmatprep.subr.mxu0 %v4479
    %4537 = vmatpush1.msra.mxu0 %v4478
    %4538 = vmatprep.subr.mxu0 %v4483
    %4539 = vmatpush1.msra.mxu0 %v4482
    %4540 = vmatprep.subr.mxu0 %v4487
    %4541 = vmatpush1.msra.mxu0 %v4486
    %4542 = vmatprep.subr.mxu0 %v4491
    %4543 = vmatpush1.msra.mxu0 %v4490
    %4544 = vmatprep.subr.mxu0 %v4495
    %4545 = vmatpush1.msra.mxu0 %v4494
    %4546 = vmatprep.subr.mxu0 %v4499
    %4547 = vmatpush1.msra.mxu0 %v4498
    %4548 = vmatprep.subr.mxu0 %v4503
    %4549 = vmatpush1.msra.mxu0 %v4502
    %4550 = vmatprep.subr.mxu0 %v4507
    %4551 = vmatpush1.msra.mxu0 %v4506
    %4552 = vmatprep.subr.mxu0 %v4511
    %4553 = vmatpush1.msra.mxu0 %v4510
    %4554 = vmatprep.subr.mxu0 %v4515
    %4555 = vmatpush1.msra.mxu0 %v4514
    %4556 = vmatprep.subr.mxu0 %v4519
    %4557 = vmatpush1.msra.mxu0 %v4518
    %4558 = vmatprep.subr.mxu0 %v4523
    %4559 = vmatpush1.msra.mxu0 %v4522
    %4560 = vmatprep.subr.mxu0 %v4527
    %4561 = vmatpush1.msra.mxu0 %v4526
    %4562 = vmatprep.subr.mxu0 0.0
    %4563 = vmatpush1.msra.mxu0 0.0
    %4564 = vmatprep.subr.mxu0 0.0
    %4565 = vmatpush1.msra.mxu0 0.0
    %4566 = vmatprep.subr.mxu0 0.0
    %4567 = vmatpush1.msra.mxu0 0.0
    %4568 = vmatprep.subr.mxu0 0.0
    %4569 = vmatpush1.msra.mxu0 0.0
    %4570 = vmatprep.subr.mxu0 0.0
    %4571 = vmatpush1.msra.mxu0 0.0
    %4572 = vmatprep.subr.mxu0 0.0
    %4573 = vmatpush1.msra.mxu0 0.0
    %4574 = vmatprep.subr.mxu0 0.0
    %4575 = vmatpush1.msra.mxu0 0.0
    %4576 = vmatprep.subr.mxu0 0.0
    %4577 = vmatpush1.msra.mxu0 0.0
    %4578 = vmatprep.subr.mxu0 0.0
    %4579 = vmatpush1.msra.mxu0 0.0
    %4580 = vmatprep.subr.mxu0 0.0
    %4581 = vmatpush1.msra.mxu0 0.0
    %4582 = vmatprep.subr.mxu0 0.0
    %4583 = vmatpush1.msra.mxu0 0.0
    %4584 = vmatprep.subr.mxu0 0.0
    %4585 = vmatpush1.msra.mxu0 0.0
    %4586 = vmatprep.subr.mxu0 0.0
    %4587 = vmatpush1.msra.mxu0 0.0
    %4588 = vmatprep.subr.mxu0 0.0
    %4589 = vmatpush1.msra.mxu0 0.0
    %4590 = vmatprep.subr.mxu0 0.0
    %4591 = vmatpush1.msra.mxu0 0.0
    %4592 = vmatprep.subr.mxu0 0.0
    %4593 = vmatpush1.msra.mxu0 0.0
    %4594 = vmatprep.mubr.f32.mxu0 0.0
    %4595 = vmatmul.mubr.f32.gmra.mrb[0].mxu0 %v4020
    %v4596 = vpop.f32.mrb[0].mxu0
    %v4597 = vadd.f32 0.0, %v4596
    %v4598 = vpop.f32.mrb[0].mxu0
    %v4599 = vadd.f32 0.0, %v4598
    %4600 = vdwg.mxu0
    %4601 = vmatprep.subr.mxu0 %v4469
    %4602 = vmatpush1.msra.mxu0 %v4468
    %4603 = vmatprep.subr.mxu0 %v4473
    %4604 = vmatpush1.msra.mxu0 %v4472
    %4605 = vmatprep.subr.mxu0 %v4477
    %4606 = vmatpush1.msra.mxu0 %v4476
    %4607 = vmatprep.subr.mxu0 %v4481
    %4608 = vmatpush1.msra.mxu0 %v4480
    %4609 = vmatprep.subr.mxu0 %v4485
    %4610 = vmatpush1.msra.mxu0 %v4484
    %4611 = vmatprep.subr.mxu0 %v4489
    %4612 = vmatpush1.msra.mxu0 %v4488
    %4613 = vmatprep.subr.mxu0 %v4493
    %4614 = vmatpush1.msra.mxu0 %v4492
    %4615 = vmatprep.subr.mxu0 %v4497
    %4616 = vmatpush1.msra.mxu0 %v4496
    %4617 = vmatprep.subr.mxu0 %v4501
    %4618 = vmatpush1.msra.mxu0 %v4500
    %4619 = vmatprep.subr.mxu0 %v4505
    %4620 = vmatpush1.msra.mxu0 %v4504
    %4621 = vmatprep.subr.mxu0 %v4509
    %4622 = vmatpush1.msra.mxu0 %v4508
    %4623 = vmatprep.subr.mxu0 %v4513
    %4624 = vmatpush1.msra.mxu0 %v4512
    %4625 = vmatprep.subr.mxu0 %v4517
    %4626 = vmatpush1.msra.mxu0 %v4516
    %4627 = vmatprep.subr.mxu0 %v4521
    %4628 = vmatpush1.msra.mxu0 %v4520
    %4629 = vmatprep.subr.mxu0 %v4525
    %4630 = vmatpush1.msra.mxu0 %v4524
    %4631 = vmatprep.subr.mxu0 %v4529
    %4632 = vmatpush1.msra.mxu0 %v4528
    %4633 = vmatprep.subr.mxu0 0.0
    %4634 = vmatpush1.msra.mxu0 0.0
    %4635 = vmatprep.subr.mxu0 0.0
    %4636 = vmatpush1.msra.mxu0 0.0
    %4637 = vmatprep.subr.mxu0 0.0
    %4638 = vmatpush1.msra.mxu0 0.0
    %4639 = vmatprep.subr.mxu0 0.0
    %4640 = vmatpush1.msra.mxu0 0.0
    %4641 = vmatprep.subr.mxu0 0.0
    %4642 = vmatpush1.msra.mxu0 0.0
    %4643 = vmatprep.subr.mxu0 0.0
    %4644 = vmatpush1.msra.mxu0 0.0
    %4645 = vmatprep.subr.mxu0 0.0
    %4646 = vmatpush1.msra.mxu0 0.0
    %4647 = vmatprep.subr.mxu0 0.0
    %4648 = vmatpush1.msra.mxu0 0.0
    %4649 = vmatprep.subr.mxu0 0.0
    %4650 = vmatpush1.msra.mxu0 0.0
    %4651 = vmatprep.subr.mxu0 0.0
    %4652 = vmatpush1.msra.mxu0 0.0
    %4653 = vmatprep.subr.mxu0 0.0
    %4654 = vmatpush1.msra.mxu0 0.0
    %4655 = vmatprep.subr.mxu0 0.0
    %4656 = vmatpush1.msra.mxu0 0.0
    %4657 = vmatprep.subr.mxu0 0.0
    %4658 = vmatpush1.msra.mxu0 0.0
    %4659 = vmatprep.subr.mxu0 0.0
    %4660 = vmatpush1.msra.mxu0 0.0
    %4661 = vmatprep.subr.mxu0 0.0
    %4662 = vmatpush1.msra.mxu0 0.0
    %4663 = vmatprep.subr.mxu0 0.0
    %4664 = vmatpush1.msra.mxu0 0.0
    %4665 = vmatprep.mubr.f32.mxu0 0.0
    %4666 = vmatmul.mubr.f32.gmra.mrb[0].mxu0 %v4020
    %v4667 = vpop.f32.mrb[0].mxu0
    %v4668 = vadd.f32 0.0, %v4667
    %v4669 = vpop.f32.mrb[0].mxu0
    %v4670 = vadd.f32 0.0, %v4669
    %4671 = vdwg.mxu0
    %v4676 = vcombine.low %v4597, %v4599
    %v4677 = vcombine.low %v4668, %v4670
    %v4680 = vadd.f32 %v4464, %v4676
    %v4681 = vadd.f32 %v4465, %v4677
    %v4682 = vxor.u32 %v4680, 2147483648
    %v4683 = vxor.u32 %v4681, 2147483648
    %v4684 = vmul.f32 %v4682, 1.442695
    %v4685 = vpow.pop %v4684
    %v4686 = vmul.f32 %v4683, 1.442695
    %v4687 = vpow.pop %v4686
    %v4688 = vadd.f32 %v4685, 1.0
    %v4689 = vadd.f32 %v4687, 1.0
    %v4690 = vrcp.pop %v4688
    %v4691 = vmul.f32 1.0, %v4690
    %v4692 = vrcp.pop %v4689
    %v4693 = vmul.f32 1.0, %v4692
    %v4695 = vrot.slane %v4681, 4
    %v4697 = vtanh.pop %v4695
    %v4699 = vrot.slane %v4691, 4
    %v4701 = vmul.f32 %v4699, %v4018
    %v4702 = vmul.f32 %v4691, %v4697
    %v4703 = vadd.f32 %v4701, %v4702
    %v4704 = vtanh.pop %v4703
    %v4705 = vmul.f32 %v4693, %v4704
    %v4706 = vld [vmem:[#allocation7] sm:$0xff]
    %v4707 = vld [vmem:[#allocation7 + $0x8] sm:$0xff]
    %v4708 = vld [vmem:[#allocation7 + $0x10] sm:$0xff]
    %v4709 = vld [vmem:[#allocation7 + $0x18] sm:$0xff]
    %v4710 = vld [vmem:[#allocation7 + $0x20] sm:$0xff]
    %v4711 = vld [vmem:[#allocation7 + $0x28] sm:$0xff]
    %v4712 = vld [vmem:[#allocation7 + $0x30] sm:$0xff]
    %v4713 = vld [vmem:[#allocation7 + $0x38] sm:$0xff]
    %v4714 = vld [vmem:[#allocation7 + $0x40] sm:$0xff]
    %v4715 = vld [vmem:[#allocation7 + $0x48] sm:$0xff]
    %v4716 = vld [vmem:[#allocation7 + $0x50] sm:$0xff]
    %v4717 = vld [vmem:[#allocation7 + $0x58] sm:$0xff]
    %v4718 = vld [vmem:[#allocation7 + $0x60] sm:$0xff]
    %v4719 = vld [vmem:[#allocation7 + $0x68] sm:$0xff]
    %v4720 = vld [vmem:[#allocation7 + $0x70] sm:$0xff]
    %v4721 = vld [vmem:[#allocation7 + $0x78] sm:$0xff]
    %v4722 = vld [vmem:[#allocation7 + $0x80] sm:$0xff]
    %v4723 = vld [vmem:[#allocation7 + $0x88] sm:$0xff]
    %v4724 = vld [vmem:[#allocation7 + $0x90] sm:$0xff]
    %v4725 = vld [vmem:[#allocation7 + $0x98] sm:$0xff]
    %v4726 = vld [vmem:[#allocation7 + $0xa0] sm:$0xff]
    %v4727 = vld [vmem:[#allocation7 + $0xa8] sm:$0xff]
    %v4728 = vld [vmem:[#allocation7 + $0xb0] sm:$0xff]
    %v4729 = vld [vmem:[#allocation7 + $0xb8] sm:$0xff]
    %v4730 = vld [vmem:[#allocation7 + $0xc0] sm:$0xff]
    %v4731 = vld [vmem:[#allocation7 + $0xc8] sm:$0xff]
    %v4732 = vld [vmem:[#allocation7 + $0xd0] sm:$0xff]
    %v4733 = vld [vmem:[#allocation7 + $0xd8] sm:$0xff]
    %v4734 = vld [vmem:[#allocation7 + $0xe0] sm:$0xff]
    %v4735 = vld [vmem:[#allocation7 + $0xe8] sm:$0xff]
    %v4736 = vld [vmem:[#allocation7 + $0xf0] sm:$0xff]
    %v4737 = vld [vmem:[#allocation7 + $0xf8] sm:$0xff]
    %v4738 = vld [vmem:[#allocation7 + $0x100] sm:$0xff]
    %v4739 = vld [vmem:[#allocation7 + $0x108] sm:$0xff]
    %v4740 = vld [vmem:[#allocation7 + $0x110] sm:$0xff]
    %v4741 = vld [vmem:[#allocation7 + $0x118] sm:$0xff]
    %v4742 = vld [vmem:[#allocation7 + $0x120] sm:$0xff]
    %v4743 = vld [vmem:[#allocation7 + $0x128] sm:$0xff]
    %v4744 = vld [vmem:[#allocation7 + $0x130] sm:$0xff]
    %v4745 = vld [vmem:[#allocation7 + $0x138] sm:$0xff]
    %v4746 = vld [vmem:[#allocation7 + $0x140] sm:$0xff]
    %v4747 = vld [vmem:[#allocation7 + $0x148] sm:$0xff]
    %v4748 = vld [vmem:[#allocation7 + $0x150] sm:$0xff]
    %v4749 = vld [vmem:[#allocation7 + $0x158] sm:$0xff]
    %v4750 = vld [vmem:[#allocation7 + $0x160] sm:$0xff]
    %v4751 = vld [vmem:[#allocation7 + $0x168] sm:$0xff]
    %v4752 = vld [vmem:[#allocation7 + $0x170] sm:$0xff]
    %v4753 = vld [vmem:[#allocation7 + $0x178] sm:$0xff]
    %v4754 = vld [vmem:[#allocation7 + $0x180] sm:$0xff]
    %v4755 = vld [vmem:[#allocation7 + $0x188] sm:$0xff]
    %v4756 = vld [vmem:[#allocation7 + $0x190] sm:$0xff]
    %v4757 = vld [vmem:[#allocation7 + $0x198] sm:$0xff]
    %v4758 = vld [vmem:[#allocation7 + $0x1a0] sm:$0xff]
    %v4759 = vld [vmem:[#allocation7 + $0x1a8] sm:$0xff]
    %v4760 = vld [vmem:[#allocation7 + $0x1b0] sm:$0xff]
    %v4761 = vld [vmem:[#allocation7 + $0x1b8] sm:$0xff]
    %v4762 = vld [vmem:[#allocation7 + $0x1c0] sm:$0xff]
    %v4763 = vld [vmem:[#allocation7 + $0x1c8] sm:$0xff]
    %v4764 = vld [vmem:[#allocation7 + $0x1d0] sm:$0xff]
    %v4765 = vld [vmem:[#allocation7 + $0x1d8] sm:$0xff]
    %v4766 = vld [vmem:[#allocation7 + $0x1e0] sm:$0xff]
    %v4767 = vld [vmem:[#allocation7 + $0x1e8] sm:$0xff]
    %v4768 = vld [vmem:[#allocation7 + $0x1f0] sm:$0xff]
    %v4769 = vld [vmem:[#allocation7 + $0x1f8] sm:$0xff]
    %v4770 = vld [vmem:[#allocation9] sm:$0xff]
    %v4771 = vld [vmem:[#allocation9 + $0x8] sm:$0xff]
    %v4772 = vld [vmem:[#allocation9 + $0x10] sm:$0xff]
    %v4773 = vld [vmem:[#allocation9 + $0x18] sm:$0xff]
    %v4774 = vld [vmem:[#allocation9 + $0x20] sm:$0xff]
    %v4775 = vld [vmem:[#allocation9 + $0x28] sm:$0xff]
    %v4776 = vld [vmem:[#allocation9 + $0x30] sm:$0xff]
    %v4777 = vld [vmem:[#allocation9 + $0x38] sm:$0xff]
    %v4778 = vld [vmem:[#allocation9 + $0x40] sm:$0xff]
    %v4779 = vld [vmem:[#allocation9 + $0x48] sm:$0xff]
    %v4780 = vld [vmem:[#allocation9 + $0x50] sm:$0xff]
    %v4781 = vld [vmem:[#allocation9 + $0x58] sm:$0xff]
    %v4782 = vld [vmem:[#allocation9 + $0x60] sm:$0xff]
    %v4783 = vld [vmem:[#allocation9 + $0x68] sm:$0xff]
    %v4784 = vld [vmem:[#allocation9 + $0x70] sm:$0xff]
    %v4785 = vld [vmem:[#allocation9 + $0x78] sm:$0xff]
    %v4786 = vld [vmem:[#allocation9 + $0x80] sm:$0xff]
    %v4787 = vld [vmem:[#allocation9 + $0x88] sm:$0xff]
    %v4788 = vld [vmem:[#allocation9 + $0x90] sm:$0xff]
    %v4789 = vld [vmem:[#allocation9 + $0x98] sm:$0xff]
    %v4790 = vld [vmem:[#allocation9 + $0xa0] sm:$0xff]
    %v4791 = vld [vmem:[#allocation9 + $0xa8] sm:$0xff]
    %v4792 = vld [vmem:[#allocation9 + $0xb0] sm:$0xff]
    %v4793 = vld [vmem:[#allocation9 + $0xb8] sm:$0xff]
    %v4794 = vld [vmem:[#allocation9 + $0xc0] sm:$0xff]
    %v4795 = vld [vmem:[#allocation9 + $0xc8] sm:$0xff]
    %v4796 = vld [vmem:[#allocation9 + $0xd0] sm:$0xff]
    %v4797 = vld [vmem:[#allocation9 + $0xd8] sm:$0xff]
    %v4798 = vld [vmem:[#allocation9 + $0xe0] sm:$0xff]
    %v4799 = vld [vmem:[#allocation9 + $0xe8] sm:$0xff]
    %v4800 = vld [vmem:[#allocation9 + $0xf0] sm:$0xff]
    %v4801 = vld [vmem:[#allocation9 + $0xf8] sm:$0xff]
    %v4802 = vld [vmem:[#allocation9 + $0x100] sm:$0xff]
    %v4803 = vld [vmem:[#allocation9 + $0x108] sm:$0xff]
    %v4804 = vld [vmem:[#allocation9 + $0x110] sm:$0xff]
    %v4805 = vld [vmem:[#allocation9 + $0x118] sm:$0xff]
    %v4806 = vld [vmem:[#allocation9 + $0x120] sm:$0xff]
    %v4807 = vld [vmem:[#allocation9 + $0x128] sm:$0xff]
    %v4808 = vld [vmem:[#allocation9 + $0x130] sm:$0xff]
    %v4809 = vld [vmem:[#allocation9 + $0x138] sm:$0xff]
    %v4810 = vld [vmem:[#allocation9 + $0x140] sm:$0xff]
    %v4811 = vld [vmem:[#allocation9 + $0x148] sm:$0xff]
    %v4812 = vld [vmem:[#allocation9 + $0x150] sm:$0xff]
    %v4813 = vld [vmem:[#allocation9 + $0x158] sm:$0xff]
    %v4814 = vld [vmem:[#allocation9 + $0x160] sm:$0xff]
    %v4815 = vld [vmem:[#allocation9 + $0x168] sm:$0xff]
    %v4816 = vld [vmem:[#allocation9 + $0x170] sm:$0xff]
    %v4817 = vld [vmem:[#allocation9 + $0x178] sm:$0xff]
    %v4818 = vld [vmem:[#allocation9 + $0x180] sm:$0xff]
    %v4819 = vld [vmem:[#allocation9 + $0x188] sm:$0xff]
    %v4820 = vld [vmem:[#allocation9 + $0x190] sm:$0xff]
    %v4821 = vld [vmem:[#allocation9 + $0x198] sm:$0xff]
    %v4822 = vld [vmem:[#allocation9 + $0x1a0] sm:$0xff]
    %v4823 = vld [vmem:[#allocation9 + $0x1a8] sm:$0xff]
    %v4824 = vld [vmem:[#allocation9 + $0x1b0] sm:$0xff]
    %v4825 = vld [vmem:[#allocation9 + $0x1b8] sm:$0xff]
    %v4826 = vld [vmem:[#allocation9 + $0x1c0] sm:$0xff]
    %v4827 = vld [vmem:[#allocation9 + $0x1c8] sm:$0xff]
    %v4828 = vld [vmem:[#allocation9 + $0x1d0] sm:$0xff]
    %v4829 = vld [vmem:[#allocation9 + $0x1d8] sm:$0xff]
    %v4830 = vld [vmem:[#allocation9 + $0x1e0] sm:$0xff]
    %v4831 = vld [vmem:[#allocation9 + $0x1e8] sm:$0xff]
    %v4832 = vld [vmem:[#allocation9 + $0x1f0] sm:$0xff]
    %v4833 = vld [vmem:[#allocation9 + $0x1f8] sm:$0xff]
    %4834 = vmatprep.subr.mxu0 %v4771
    %4835 = vmatpush1.msra.mxu0 %v4770
    %4836 = vmatprep.subr.mxu0 %v4775
    %4837 = vmatpush1.msra.mxu0 %v4774
    %4838 = vmatprep.subr.mxu0 %v4779
    %4839 = vmatpush1.msra.mxu0 %v4778
    %4840 = vmatprep.subr.mxu0 %v4783
    %4841 = vmatpush1.msra.mxu0 %v4782
    %4842 = vmatprep.subr.mxu0 %v4787
    %4843 = vmatpush1.msra.mxu0 %v4786
    %4844 = vmatprep.subr.mxu0 %v4791
    %4845 = vmatpush1.msra.mxu0 %v4790
    %4846 = vmatprep.subr.mxu0 %v4795
    %4847 = vmatpush1.msra.mxu0 %v4794
    %4848 = vmatprep.subr.mxu0 %v4799
    %4849 = vmatpush1.msra.mxu0 %v4798
    %4850 = vmatprep.subr.mxu0 %v4803
    %4851 = vmatpush1.msra.mxu0 %v4802
    %4852 = vmatprep.subr.mxu0 %v4807
    %4853 = vmatpush1.msra.mxu0 %v4806
    %4854 = vmatprep.subr.mxu0 %v4811
    %4855 = vmatpush1.msra.mxu0 %v4810
    %4856 = vmatprep.subr.mxu0 %v4815
    %4857 = vmatpush1.msra.mxu0 %v4814
    %4858 = vmatprep.subr.mxu0 %v4819
    %4859 = vmatpush1.msra.mxu0 %v4818
    %4860 = vmatprep.subr.mxu0 %v4823
    %4861 = vmatpush1.msra.mxu0 %v4822
    %4862 = vmatprep.subr.mxu0 %v4827
    %4863 = vmatpush1.msra.mxu0 %v4826
    %4864 = vmatprep.subr.mxu0 %v4831
    %4865 = vmatpush1.msra.mxu0 %v4830
    %4866 = vmatprep.subr.mxu0 0.0
    %4867 = vmatpush1.msra.mxu0 0.0
    %4868 = vmatprep.subr.mxu0 0.0
    %4869 = vmatpush1.msra.mxu0 0.0
    %4870 = vmatprep.subr.mxu0 0.0
    %4871 = vmatpush1.msra.mxu0 0.0
    %4872 = vmatprep.subr.mxu0 0.0
    %4873 = vmatpush1.msra.mxu0 0.0
    %4874 = vmatprep.subr.mxu0 0.0
    %4875 = vmatpush1.msra.mxu0 0.0
    %4876 = vmatprep.subr.mxu0 0.0
    %4877 = vmatpush1.msra.mxu0 0.0
    %4878 = vmatprep.subr.mxu0 0.0
    %4879 = vmatpush1.msra.mxu0 0.0
    %4880 = vmatprep.subr.mxu0 0.0
    %4881 = vmatpush1.msra.mxu0 0.0
    %4882 = vmatprep.subr.mxu0 0.0
    %4883 = vmatpush1.msra.mxu0 0.0
    %4884 = vmatprep.subr.mxu0 0.0
    %4885 = vmatpush1.msra.mxu0 0.0
    %4886 = vmatprep.subr.mxu0 0.0
    %4887 = vmatpush1.msra.mxu0 0.0
    %4888 = vmatprep.subr.mxu0 0.0
    %4889 = vmatpush1.msra.mxu0 0.0
    %4890 = vmatprep.subr.mxu0 0.0
    %4891 = vmatpush1.msra.mxu0 0.0
    %4892 = vmatprep.subr.mxu0 0.0
    %4893 = vmatpush1.msra.mxu0 0.0
    %4894 = vmatprep.subr.mxu0 0.0
    %4895 = vmatpush1.msra.mxu0 0.0
    %4896 = vmatprep.subr.mxu0 0.0
    %4897 = vmatpush1.msra.mxu0 0.0
    %4898 = vmatprep.mubr.f32.mxu0 0.0
    %4899 = vmatmul.mubr.f32.gmra.mrb[0].mxu0 %v4460
    %v4900 = vpop.f32.mrb[0].mxu0
    %v4901 = vadd.f32 0.0, %v4900
    %v4902 = vpop.f32.mrb[0].mxu0
    %v4903 = vadd.f32 0.0, %v4902
    %4904 = vdwg.mxu0
    %4905 = vmatprep.subr.mxu0 %v4773
    %4906 = vmatpush1.msra.mxu0 %v4772
    %4907 = vmatprep.subr.mxu0 %v4777
    %4908 = vmatpush1.msra.mxu0 %v4776
    %4909 = vmatprep.subr.mxu0 %v4781
    %4910 = vmatpush1.msra.mxu0 %v4780
    %4911 = vmatprep.subr.mxu0 %v4785
    %4912 = vmatpush1.msra.mxu0 %v4784
    %4913 = vmatprep.subr.mxu0 %v4789
    %4914 = vmatpush1.msra.mxu0 %v4788
    %4915 = vmatprep.subr.mxu0 %v4793
    %4916 = vmatpush1.msra.mxu0 %v4792
    %4917 = vmatprep.subr.mxu0 %v4797
    %4918 = vmatpush1.msra.mxu0 %v4796
    %4919 = vmatprep.subr.mxu0 %v4801
    %4920 = vmatpush1.msra.mxu0 %v4800
    %4921 = vmatprep.subr.mxu0 %v4805
    %4922 = vmatpush1.msra.mxu0 %v4804
    %4923 = vmatprep.subr.mxu0 %v4809
    %4924 = vmatpush1.msra.mxu0 %v4808
    %4925 = vmatprep.subr.mxu0 %v4813
    %4926 = vmatpush1.msra.mxu0 %v4812
    %4927 = vmatprep.subr.mxu0 %v4817
    %4928 = vmatpush1.msra.mxu0 %v4816
    %4929 = vmatprep.subr.mxu0 %v4821
    %4930 = vmatpush1.msra.mxu0 %v4820
    %4931 = vmatprep.subr.mxu0 %v4825
    %4932 = vmatpush1.msra.mxu0 %v4824
    %4933 = vmatprep.subr.mxu0 %v4829
    %4934 = vmatpush1.msra.mxu0 %v4828
    %4935 = vmatprep.subr.mxu0 %v4833
    %4936 = vmatpush1.msra.mxu0 %v4832
    %4937 = vmatprep.subr.mxu0 0.0
    %4938 = vmatpush1.msra.mxu0 0.0
    %4939 = vmatprep.subr.mxu0 0.0
    %4940 = vmatpush1.msra.mxu0 0.0
    %4941 = vmatprep.subr.mxu0 0.0
    %4942 = vmatpush1.msra.mxu0 0.0
    %4943 = vmatprep.subr.mxu0 0.0
    %4944 = vmatpush1.msra.mxu0 0.0
    %4945 = vmatprep.subr.mxu0 0.0
    %4946 = vmatpush1.msra.mxu0 0.0
    %4947 = vmatprep.subr.mxu0 0.0
    %4948 = vmatpush1.msra.mxu0 0.0
    %4949 = vmatprep.subr.mxu0 0.0
    %4950 = vmatpush1.msra.mxu0 0.0
    %4951 = vmatprep.subr.mxu0 0.0
    %4952 = vmatpush1.msra.mxu0 0.0
    %4953 = vmatprep.subr.mxu0 0.0
    %4954 = vmatpush1.msra.mxu0 0.0
    %4955 = vmatprep.subr.mxu0 0.0
    %4956 = vmatpush1.msra.mxu0 0.0
    %4957 = vmatprep.subr.mxu0 0.0
    %4958 = vmatpush1.msra.mxu0 0.0
    %4959 = vmatprep.subr.mxu0 0.0
    %4960 = vmatpush1.msra.mxu0 0.0
    %4961 = vmatprep.subr.mxu0 0.0
    %4962 = vmatpush1.msra.mxu0 0.0
    %4963 = vmatprep.subr.mxu0 0.0
    %4964 = vmatpush1.msra.mxu0 0.0
    %4965 = vmatprep.subr.mxu0 0.0
    %4966 = vmatpush1.msra.mxu0 0.0
    %4967 = vmatprep.subr.mxu0 0.0
    %4968 = vmatpush1.msra.mxu0 0.0
    %4969 = vmatprep.mubr.f32.mxu0 0.0
    %4970 = vmatmul.mubr.f32.gmra.mrb[0].mxu0 %v4460
    %v4971 = vpop.f32.mrb[0].mxu0
    %v4972 = vadd.f32 0.0, %v4971
    %v4973 = vpop.f32.mrb[0].mxu0
    %v4974 = vadd.f32 0.0, %v4973
    %4975 = vdwg.mxu0
    %4976 = vmatprep.subr.mxu0 %v4707
    %4977 = vmatpush1.msra.mxu0 %v4706
    %4978 = vmatprep.subr.mxu0 %v4711
    %4979 = vmatpush1.msra.mxu0 %v4710
    %4980 = vmatprep.subr.mxu0 %v4715
    %4981 = vmatpush1.msra.mxu0 %v4714
    %4982 = vmatprep.subr.mxu0 %v4719
    %4983 = vmatpush1.msra.mxu0 %v4718
    %4984 = vmatprep.subr.mxu0 %v4723
    %4985 = vmatpush1.msra.mxu0 %v4722
    %4986 = vmatprep.subr.mxu0 %v4727
    %4987 = vmatpush1.msra.mxu0 %v4726
    %4988 = vmatprep.subr.mxu0 %v4731
    %4989 = vmatpush1.msra.mxu0 %v4730
    %4990 = vmatprep.subr.mxu0 %v4735
    %4991 = vmatpush1.msra.mxu0 %v4734
    %4992 = vmatprep.subr.mxu0 %v4739
    %4993 = vmatpush1.msra.mxu0 %v4738
    %4994 = vmatprep.subr.mxu0 %v4743
    %4995 = vmatpush1.msra.mxu0 %v4742
    %4996 = vmatprep.subr.mxu0 %v4747
    %4997 = vmatpush1.msra.mxu0 %v4746
    %4998 = vmatprep.subr.mxu0 %v4751
    %4999 = vmatpush1.msra.mxu0 %v4750
    %5000 = vmatprep.subr.mxu0 %v4755
    %5001 = vmatpush1.msra.mxu0 %v4754
    %5002 = vmatprep.subr.mxu0 %v4759
    %5003 = vmatpush1.msra.mxu0 %v4758
    %5004 = vmatprep.subr.mxu0 %v4763
    %5005 = vmatpush1.msra.mxu0 %v4762
    %5006 = vmatprep.subr.mxu0 %v4767
    %5007 = vmatpush1.msra.mxu0 %v4766
    %5008 = vmatprep.subr.mxu0 0.0
    %5009 = vmatpush1.msra.mxu0 0.0
    %5010 = vmatprep.subr.mxu0 0.0
    %5011 = vmatpush1.msra.mxu0 0.0
    %5012 = vmatprep.subr.mxu0 0.0
    %5013 = vmatpush1.msra.mxu0 0.0
    %5014 = vmatprep.subr.mxu0 0.0
    %5015 = vmatpush1.msra.mxu0 0.0
    %5016 = vmatprep.subr.mxu0 0.0
    %5017 = vmatpush1.msra.mxu0 0.0
    %5018 = vmatprep.subr.mxu0 0.0
    %5019 = vmatpush1.msra.mxu0 0.0
    %5020 = vmatprep.subr.mxu0 0.0
    %5021 = vmatpush1.msra.mxu0 0.0
    %5022 = vmatprep.subr.mxu0 0.0
    %5023 = vmatpush1.msra.mxu0 0.0
    %5024 = vmatprep.subr.mxu0 0.0
    %5025 = vmatpush1.msra.mxu0 0.0
    %5026 = vmatprep.subr.mxu0 0.0
    %5027 = vmatpush1.msra.mxu0 0.0
    %5028 = vmatprep.subr.mxu0 0.0
    %5029 = vmatpush1.msra.mxu0 0.0
    %5030 = vmatprep.subr.mxu0 0.0
    %5031 = vmatpush1.msra.mxu0 0.0
    %5032 = vmatprep.subr.mxu0 0.0
    %5033 = vmatpush1.msra.mxu0 0.0
    %5034 = vmatprep.subr.mxu0 0.0
    %5035 = vmatpush1.msra.mxu0 0.0
    %5036 = vmatprep.subr.mxu0 0.0
    %5037 = vmatpush1.msra.mxu0 0.0
    %5038 = vmatprep.subr.mxu0 0.0
    %5039 = vmatpush1.msra.mxu0 0.0
    %5040 = vmatprep.mubr.f32.mxu0 0.0
    %5041 = vmatmul.mubr.f32.gmra.mrb[0].mxu0 %v4705
    %v5042 = vpop.f32.mrb[0].mxu0
    %v5043 = vadd.f32 %v4901, %v5042
    %v5044 = vpop.f32.mrb[0].mxu0
    %v5045 = vadd.f32 %v4903, %v5044
    %5046 = vdwg.mxu0
    %5047 = vmatprep.subr.mxu0 %v4709
    %5048 = vmatpush1.msra.mxu0 %v4708
    %5049 = vmatprep.subr.mxu0 %v4713
    %5050 = vmatpush1.msra.mxu0 %v4712
    %5051 = vmatprep.subr.mxu0 %v4717
    %5052 = vmatpush1.msra.mxu0 %v4716
    %5053 = vmatprep.subr.mxu0 %v4721
    %5054 = vmatpush1.msra.mxu0 %v4720
    %5055 = vmatprep.subr.mxu0 %v4725
    %5056 = vmatpush1.msra.mxu0 %v4724
    %5057 = vmatprep.subr.mxu0 %v4729
    %5058 = vmatpush1.msra.mxu0 %v4728
    %5059 = vmatprep.subr.mxu0 %v4733
    %5060 = vmatpush1.msra.mxu0 %v4732
    %5061 = vmatprep.subr.mxu0 %v4737
    %5062 = vmatpush1.msra.mxu0 %v4736
    %5063 = vmatprep.subr.mxu0 %v4741
    %5064 = vmatpush1.msra.mxu0 %v4740
    %5065 = vmatprep.subr.mxu0 %v4745
    %5066 = vmatpush1.msra.mxu0 %v4744
    %5067 = vmatprep.subr.mxu0 %v4749
    %5068 = vmatpush1.msra.mxu0 %v4748
    %5069 = vmatprep.subr.mxu0 %v4753
    %5070 = vmatpush1.msra.mxu0 %v4752
    %5071 = vmatprep.subr.mxu0 %v4757
    %5072 = vmatpush1.msra.mxu0 %v4756
    %5073 = vmatprep.subr.mxu0 %v4761
    %5074 = vmatpush1.msra.mxu0 %v4760
    %5075 = vmatprep.subr.mxu0 %v4765
    %5076 = vmatpush1.msra.mxu0 %v4764
    %5077 = vmatprep.subr.mxu0 %v4769
    %5078 = vmatpush1.msra.mxu0 %v4768
    %5079 = vmatprep.subr.mxu0 0.0
    %5080 = vmatpush1.msra.mxu0 0.0
    %5081 = vmatprep.subr.mxu0 0.0
    %5082 = vmatpush1.msra.mxu0 0.0
    %5083 = vmatprep.subr.mxu0 0.0
    %5084 = vmatpush1.msra.mxu0 0.0
    %5085 = vmatprep.subr.mxu0 0.0
    %5086 = vmatpush1.msra.mxu0 0.0
    %5087 = vmatprep.subr.mxu0 0.0
    %5088 = vmatpush1.msra.mxu0 0.0
    %5089 = vmatprep.subr.mxu0 0.0
    %5090 = vmatpush1.msra.mxu0 0.0
    %5091 = vmatprep.subr.mxu0 0.0
    %5092 = vmatpush1.msra.mxu0 0.0
    %5093 = vmatprep.subr.mxu0 0.0
    %5094 = vmatpush1.msra.mxu0 0.0
    %5095 = vmatprep.subr.mxu0 0.0
    %5096 = vmatpush1.msra.mxu0 0.0
    %5097 = vmatprep.subr.mxu0 0.0
    %5098 = vmatpush1.msra.mxu0 0.0
    %5099 = vmatprep.subr.mxu0 0.0
    %5100 = vmatpush1.msra.mxu0 0.0
    %5101 = vmatprep.subr.mxu0 0.0
    %5102 = vmatpush1.msra.mxu0 0.0
    %5103 = vmatprep.subr.mxu0 0.0
    %5104 = vmatpush1.msra.mxu0 0.0
    %5105 = vmatprep.subr.mxu0 0.0
    %5106 = vmatpush1.msra.mxu0 0.0
    %5107 = vmatprep.subr.mxu0 0.0
    %5108 = vmatpush1.msra.mxu0 0.0
    %5109 = vmatprep.subr.mxu0 0.0
    %5110 = vmatpush1.msra.mxu0 0.0
    %5111 = vmatprep.mubr.f32.mxu0 0.0
    %5112 = vmatmul.mubr.f32.gmra.mrb[0].mxu0 %v4705
    %v5113 = vpop.f32.mrb[0].mxu0
    %v5114 = vadd.f32 %v4972, %v5113
    %v5115 = vpop.f32.mrb[0].mxu0
    %v5116 = vadd.f32 %v4974, %v5115
    %5117 = vdwg.mxu0
    %v5118 = vadd.f32 %v5043, %v100
    %v5119 = vadd.f32 %v5045, %v104
    %v5120 = vadd.f32 %v5114, %v108
    %v5121 = vadd.f32 %v5116, %v112
    %v5122 = vxor.u32 %v5118, 2147483648
    %v5123 = vxor.u32 %v5119, 2147483648
    %v5124 = vxor.u32 %v5120, 2147483648
    %v5125 = vmul.f32 %v5122, 1.442695
    %v5126 = vpow.pop %v5125
    %v5127 = vmul.f32 %v5123, 1.442695
    %v5128 = vpow.pop %v5127
    %v5129 = vmul.f32 %v5124, 1.442695
    %v5130 = vpow.pop %v5129
    %v5131 = vadd.f32 %v5126, 1.0
    %v5132 = vadd.f32 %v5128, 1.0
    %v5133 = vadd.f32 %v5130, 1.0
    %v5134 = vrcp.pop %v5131
    %v5135 = vmul.f32 1.0, %v5134
    %v5136 = vrcp.pop %v5132
    %v5137 = vmul.f32 1.0, %v5136
    %v5138 = vrcp.pop %v5133
    %v5139 = vmul.f32 1.0, %v5138
    %v5140 = vtanh.pop %v5121
    %v5141 = vmul.f32 %v5137, %v4458
    %v5142 = vmul.f32 %v5135, %v5140
    %v5143 = vadd.f32 %v5141, %v5142
    %v5144 = vtanh.pop %v5143
    %v5145 = vmul.f32 %v5139, %v5144
    %s5146 = scalar_lea.vmem [#allocation3], 24
    %5147 = vst [vmem:[%s5146] sm:$0xf] %v5145
    %s5148 = scalar_lea.vmem [#allocation2], 112
    %v5149 = vld [vmem:[%s5148] sm:$0xff]
    %v5150 = vld [vmem:[%s5148 + $0x8] sm:$0xff]
    %v5151 = vld [vmem:[#allocation5] sm:$0xff]
    %v5152 = vld [vmem:[#allocation5 + $0x8] sm:$0xff]
    %v5153 = vld [vmem:[#allocation5 + $0x10] sm:$0xff]
    %v5154 = vld [vmem:[#allocation5 + $0x18] sm:$0xff]
    %v5155 = vld [vmem:[#allocation5 + $0x20] sm:$0xff]
    %v5156 = vld [vmem:[#allocation5 + $0x28] sm:$0xff]
    %v5157 = vld [vmem:[#allocation5 + $0x30] sm:$0xff]
    %v5158 = vld [vmem:[#allocation5 + $0x38] sm:$0xff]
    %v5159 = vld [vmem:[#allocation5 + $0x40] sm:$0xff]
    %v5160 = vld [vmem:[#allocation5 + $0x48] sm:$0xff]
    %v5161 = vld [vmem:[#allocation5 + $0x50] sm:$0xff]
    %v5162 = vld [vmem:[#allocation5 + $0x58] sm:$0xff]
    %v5163 = vld [vmem:[#allocation5 + $0x60] sm:$0xff]
    %v5164 = vld [vmem:[#allocation5 + $0x68] sm:$0xff]
    %v5165 = vld [vmem:[#allocation5 + $0x70] sm:$0xff]
    %v5166 = vld [vmem:[#allocation5 + $0x78] sm:$0xff]
    %v5167 = vld [vmem:[#allocation5 + $0x80] sm:$0xff]
    %v5168 = vld [vmem:[#allocation5 + $0x88] sm:$0xff]
    %v5169 = vld [vmem:[#allocation5 + $0x90] sm:$0xff]
    %v5170 = vld [vmem:[#allocation5 + $0x98] sm:$0xff]
    %v5171 = vld [vmem:[#allocation5 + $0xa0] sm:$0xff]
    %v5172 = vld [vmem:[#allocation5 + $0xa8] sm:$0xff]
    %v5173 = vld [vmem:[#allocation5 + $0xb0] sm:$0xff]
    %v5174 = vld [vmem:[#allocation5 + $0xb8] sm:$0xff]
    %v5175 = vld [vmem:[#allocation5 + $0xc0] sm:$0xff]
    %v5176 = vld [vmem:[#allocation5 + $0xc8] sm:$0xff]
    %v5177 = vld [vmem:[#allocation5 + $0xd0] sm:$0xff]
    %v5178 = vld [vmem:[#allocation5 + $0xd8] sm:$0xff]
    %v5179 = vld [vmem:[#allocation5 + $0xe0] sm:$0xff]
    %v5180 = vld [vmem:[#allocation5 + $0xe8] sm:$0xff]
    %v5181 = vld [vmem:[#allocation5 + $0xf0] sm:$0xff]
    %v5182 = vld [vmem:[#allocation5 + $0xf8] sm:$0xff]
    %v5183 = vld [vmem:[#allocation5 + $0x100] sm:$0xff]
    %v5184 = vld [vmem:[#allocation5 + $0x108] sm:$0xff]
    %v5185 = vld [vmem:[#allocation5 + $0x110] sm:$0xff]
    %v5186 = vld [vmem:[#allocation5 + $0x118] sm:$0xff]
    %v5187 = vld [vmem:[#allocation5 + $0x120] sm:$0xff]
    %v5188 = vld [vmem:[#allocation5 + $0x128] sm:$0xff]
    %v5189 = vld [vmem:[#allocation5 + $0x130] sm:$0xff]
    %v5190 = vld [vmem:[#allocation5 + $0x138] sm:$0xff]
    %v5191 = vld [vmem:[#allocation5 + $0x140] sm:$0xff]
    %v5192 = vld [vmem:[#allocation5 + $0x148] sm:$0xff]
    %v5193 = vld [vmem:[#allocation5 + $0x150] sm:$0xff]
    %v5194 = vld [vmem:[#allocation5 + $0x158] sm:$0xff]
    %v5195 = vld [vmem:[#allocation5 + $0x160] sm:$0xff]
    %v5196 = vld [vmem:[#allocation5 + $0x168] sm:$0xff]
    %v5197 = vld [vmem:[#allocation5 + $0x170] sm:$0xff]
    %v5198 = vld [vmem:[#allocation5 + $0x178] sm:$0xff]
    %v5199 = vld [vmem:[#allocation5 + $0x180] sm:$0xff]
    %v5200 = vld [vmem:[#allocation5 + $0x188] sm:$0xff]
    %v5201 = vld [vmem:[#allocation5 + $0x190] sm:$0xff]
    %v5202 = vld [vmem:[#allocation5 + $0x198] sm:$0xff]
    %v5203 = vld [vmem:[#allocation5 + $0x1a0] sm:$0xff]
    %v5204 = vld [vmem:[#allocation5 + $0x1a8] sm:$0xff]
    %v5205 = vld [vmem:[#allocation5 + $0x1b0] sm:$0xff]
    %v5206 = vld [vmem:[#allocation5 + $0x1b8] sm:$0xff]
    %v5207 = vld [vmem:[#allocation5 + $0x1c0] sm:$0xff]
    %v5208 = vld [vmem:[#allocation5 + $0x1c8] sm:$0xff]
    %v5209 = vld [vmem:[#allocation5 + $0x1d0] sm:$0xff]
    %v5210 = vld [vmem:[#allocation5 + $0x1d8] sm:$0xff]
    %v5211 = vld [vmem:[#allocation5 + $0x1e0] sm:$0xff]
    %v5212 = vld [vmem:[#allocation5 + $0x1e8] sm:$0xff]
    %v5213 = vld [vmem:[#allocation5 + $0x1f0] sm:$0xff]
    %v5214 = vld [vmem:[#allocation5 + $0x1f8] sm:$0xff]
    %5215 = vmatprep.subr.mxu0 %v5152
    %5216 = vmatpush1.msra.mxu0 %v5151
    %5217 = vmatprep.subr.mxu0 %v5156
    %5218 = vmatpush1.msra.mxu0 %v5155
    %5219 = vmatprep.subr.mxu0 %v5160
    %5220 = vmatpush1.msra.mxu0 %v5159
    %5221 = vmatprep.subr.mxu0 %v5164
    %5222 = vmatpush1.msra.mxu0 %v5163
    %5223 = vmatprep.subr.mxu0 %v5168
    %5224 = vmatpush1.msra.mxu0 %v5167
    %5225 = vmatprep.subr.mxu0 %v5172
    %5226 = vmatpush1.msra.mxu0 %v5171
    %5227 = vmatprep.subr.mxu0 %v5176
    %5228 = vmatpush1.msra.mxu0 %v5175
    %5229 = vmatprep.subr.mxu0 %v5180
    %5230 = vmatpush1.msra.mxu0 %v5179
    %5231 = vmatprep.subr.mxu0 %v5184
    %5232 = vmatpush1.msra.mxu0 %v5183
    %5233 = vmatprep.subr.mxu0 %v5188
    %5234 = vmatpush1.msra.mxu0 %v5187
    %5235 = vmatprep.subr.mxu0 %v5192
    %5236 = vmatpush1.msra.mxu0 %v5191
    %5237 = vmatprep.subr.mxu0 %v5196
    %5238 = vmatpush1.msra.mxu0 %v5195
    %5239 = vmatprep.subr.mxu0 %v5200
    %5240 = vmatpush1.msra.mxu0 %v5199
    %5241 = vmatprep.subr.mxu0 %v5204
    %5242 = vmatpush1.msra.mxu0 %v5203
    %5243 = vmatprep.subr.mxu0 %v5208
    %5244 = vmatpush1.msra.mxu0 %v5207
    %5245 = vmatprep.subr.mxu0 %v5212
    %5246 = vmatpush1.msra.mxu0 %v5211
    %5247 = vmatprep.subr.mxu0 0.0
    %5248 = vmatpush1.msra.mxu0 0.0
    %5249 = vmatprep.subr.mxu0 0.0
    %5250 = vmatpush1.msra.mxu0 0.0
    %5251 = vmatprep.subr.mxu0 0.0
    %5252 = vmatpush1.msra.mxu0 0.0
    %5253 = vmatprep.subr.mxu0 0.0
    %5254 = vmatpush1.msra.mxu0 0.0
    %5255 = vmatprep.subr.mxu0 0.0
    %5256 = vmatpush1.msra.mxu0 0.0
    %5257 = vmatprep.subr.mxu0 0.0
    %5258 = vmatpush1.msra.mxu0 0.0
    %5259 = vmatprep.subr.mxu0 0.0
    %5260 = vmatpush1.msra.mxu0 0.0
    %5261 = vmatprep.subr.mxu0 0.0
    %5262 = vmatpush1.msra.mxu0 0.0
    %5263 = vmatprep.subr.mxu0 0.0
    %5264 = vmatpush1.msra.mxu0 0.0
    %5265 = vmatprep.subr.mxu0 0.0
    %5266 = vmatpush1.msra.mxu0 0.0
    %5267 = vmatprep.subr.mxu0 0.0
    %5268 = vmatpush1.msra.mxu0 0.0
    %5269 = vmatprep.subr.mxu0 0.0
    %5270 = vmatpush1.msra.mxu0 0.0
    %5271 = vmatprep.subr.mxu0 0.0
    %5272 = vmatpush1.msra.mxu0 0.0
    %5273 = vmatprep.subr.mxu0 0.0
    %5274 = vmatpush1.msra.mxu0 0.0
    %5275 = vmatprep.subr.mxu0 0.0
    %5276 = vmatpush1.msra.mxu0 0.0
    %5277 = vmatprep.subr.mxu0 0.0
    %5278 = vmatpush1.msra.mxu0 0.0
    %5279 = vmatprep.mubr.f32.mxu0 0.0
    %5280 = vmatmul.mubr.f32.gmra.mrb[0].mxu0 %v4705
    %v5281 = vpop.f32.mrb[0].mxu0
    %v5282 = vadd.f32 0.0, %v5281
    %v5283 = vpop.f32.mrb[0].mxu0
    %v5284 = vadd.f32 0.0, %v5283
    %5285 = vdwg.mxu0
    %5286 = vmatprep.subr.mxu0 %v5154
    %5287 = vmatpush1.msra.mxu0 %v5153
    %5288 = vmatprep.subr.mxu0 %v5158
    %5289 = vmatpush1.msra.mxu0 %v5157
    %5290 = vmatprep.subr.mxu0 %v5162
    %5291 = vmatpush1.msra.mxu0 %v5161
    %5292 = vmatprep.subr.mxu0 %v5166
    %5293 = vmatpush1.msra.mxu0 %v5165
    %5294 = vmatprep.subr.mxu0 %v5170
    %5295 = vmatpush1.msra.mxu0 %v5169
    %5296 = vmatprep.subr.mxu0 %v5174
    %5297 = vmatpush1.msra.mxu0 %v5173
    %5298 = vmatprep.subr.mxu0 %v5178
    %5299 = vmatpush1.msra.mxu0 %v5177
    %5300 = vmatprep.subr.mxu0 %v5182
    %5301 = vmatpush1.msra.mxu0 %v5181
    %5302 = vmatprep.subr.mxu0 %v5186
    %5303 = vmatpush1.msra.mxu0 %v5185
    %5304 = vmatprep.subr.mxu0 %v5190
    %5305 = vmatpush1.msra.mxu0 %v5189
    %5306 = vmatprep.subr.mxu0 %v5194
    %5307 = vmatpush1.msra.mxu0 %v5193
    %5308 = vmatprep.subr.mxu0 %v5198
    %5309 = vmatpush1.msra.mxu0 %v5197
    %5310 = vmatprep.subr.mxu0 %v5202
    %5311 = vmatpush1.msra.mxu0 %v5201
    %5312 = vmatprep.subr.mxu0 %v5206
    %5313 = vmatpush1.msra.mxu0 %v5205
    %5314 = vmatprep.subr.mxu0 %v5210
    %5315 = vmatpush1.msra.mxu0 %v5209
    %5316 = vmatprep.subr.mxu0 %v5214
    %5317 = vmatpush1.msra.mxu0 %v5213
    %5318 = vmatprep.subr.mxu0 0.0
    %5319 = vmatpush1.msra.mxu0 0.0
    %5320 = vmatprep.subr.mxu0 0.0
    %5321 = vmatpush1.msra.mxu0 0.0
    %5322 = vmatprep.subr.mxu0 0.0
    %5323 = vmatpush1.msra.mxu0 0.0
    %5324 = vmatprep.subr.mxu0 0.0
    %5325 = vmatpush1.msra.mxu0 0.0
    %5326 = vmatprep.subr.mxu0 0.0
    %5327 = vmatpush1.msra.mxu0 0.0
    %5328 = vmatprep.subr.mxu0 0.0
    %5329 = vmatpush1.msra.mxu0 0.0
    %5330 = vmatprep.subr.mxu0 0.0
    %5331 = vmatpush1.msra.mxu0 0.0
    %5332 = vmatprep.subr.mxu0 0.0
    %5333 = vmatpush1.msra.mxu0 0.0
    %5334 = vmatprep.subr.mxu0 0.0
    %5335 = vmatpush1.msra.mxu0 0.0
    %5336 = vmatprep.subr.mxu0 0.0
    %5337 = vmatpush1.msra.mxu0 0.0
    %5338 = vmatprep.subr.mxu0 0.0
    %5339 = vmatpush1.msra.mxu0 0.0
    %5340 = vmatprep.subr.mxu0 0.0
    %5341 = vmatpush1.msra.mxu0 0.0
    %5342 = vmatprep.subr.mxu0 0.0
    %5343 = vmatpush1.msra.mxu0 0.0
    %5344 = vmatprep.subr.mxu0 0.0
    %5345 = vmatpush1.msra.mxu0 0.0
    %5346 = vmatprep.subr.mxu0 0.0
    %5347 = vmatpush1.msra.mxu0 0.0
    %5348 = vmatprep.subr.mxu0 0.0
    %5349 = vmatpush1.msra.mxu0 0.0
    %5350 = vmatprep.mubr.f32.mxu0 0.0
    %5351 = vmatmul.mubr.f32.gmra.mrb[0].mxu0 %v4705
    %v5352 = vpop.f32.mrb[0].mxu0
    %v5353 = vadd.f32 0.0, %v5352
    %v5354 = vpop.f32.mrb[0].mxu0
    %v5355 = vadd.f32 0.0, %v5354
    %5356 = vdwg.mxu0
    %v5361 = vcombine.low %v5282, %v5284
    %v5362 = vcombine.low %v5353, %v5355
    %v5365 = vadd.f32 %v5149, %v5361
    %v5366 = vadd.f32 %v5150, %v5362
    %v5367 = vxor.u32 %v5365, 2147483648
    %v5368 = vxor.u32 %v5366, 2147483648
    %v5369 = vmul.f32 %v5367, 1.442695
    %v5370 = vpow.pop %v5369
    %v5371 = vmul.f32 %v5368, 1.442695
    %v5372 = vpow.pop %v5371
    %v5373 = vadd.f32 %v5370, 1.0
    %v5374 = vadd.f32 %v5372, 1.0
    %v5375 = vrcp.pop %v5373
    %v5376 = vmul.f32 1.0, %v5375
    %v5377 = vrcp.pop %v5374
    %v5378 = vmul.f32 1.0, %v5377
    %v5380 = vrot.slane %v5366, 4
    %v5382 = vtanh.pop %v5380
    %v5384 = vrot.slane %v5376, 4
    %v5386 = vmul.f32 %v5384, %v4703
    %v5387 = vmul.f32 %v5376, %v5382
    %v5388 = vadd.f32 %v5386, %v5387
    %v5389 = vtanh.pop %v5388
    %v5390 = vmul.f32 %v5378, %v5389
    %v5391 = vld [vmem:[#allocation7] sm:$0xff]
    %v5392 = vld [vmem:[#allocation7 + $0x8] sm:$0xff]
    %v5393 = vld [vmem:[#allocation7 + $0x10] sm:$0xff]
    %v5394 = vld [vmem:[#allocation7 + $0x18] sm:$0xff]
    %v5395 = vld [vmem:[#allocation7 + $0x20] sm:$0xff]
    %v5396 = vld [vmem:[#allocation7 + $0x28] sm:$0xff]
    %v5397 = vld [vmem:[#allocation7 + $0x30] sm:$0xff]
    %v5398 = vld [vmem:[#allocation7 + $0x38] sm:$0xff]
    %v5399 = vld [vmem:[#allocation7 + $0x40] sm:$0xff]
    %v5400 = vld [vmem:[#allocation7 + $0x48] sm:$0xff]
    %v5401 = vld [vmem:[#allocation7 + $0x50] sm:$0xff]
    %v5402 = vld [vmem:[#allocation7 + $0x58] sm:$0xff]
    %v5403 = vld [vmem:[#allocation7 + $0x60] sm:$0xff]
    %v5404 = vld [vmem:[#allocation7 + $0x68] sm:$0xff]
    %v5405 = vld [vmem:[#allocation7 + $0x70] sm:$0xff]
    %v5406 = vld [vmem:[#allocation7 + $0x78] sm:$0xff]
    %v5407 = vld [vmem:[#allocation7 + $0x80] sm:$0xff]
    %v5408 = vld [vmem:[#allocation7 + $0x88] sm:$0xff]
    %v5409 = vld [vmem:[#allocation7 + $0x90] sm:$0xff]
    %v5410 = vld [vmem:[#allocation7 + $0x98] sm:$0xff]
    %v5411 = vld [vmem:[#allocation7 + $0xa0] sm:$0xff]
    %v5412 = vld [vmem:[#allocation7 + $0xa8] sm:$0xff]
    %v5413 = vld [vmem:[#allocation7 + $0xb0] sm:$0xff]
    %v5414 = vld [vmem:[#allocation7 + $0xb8] sm:$0xff]
    %v5415 = vld [vmem:[#allocation7 + $0xc0] sm:$0xff]
    %v5416 = vld [vmem:[#allocation7 + $0xc8] sm:$0xff]
    %v5417 = vld [vmem:[#allocation7 + $0xd0] sm:$0xff]
    %v5418 = vld [vmem:[#allocation7 + $0xd8] sm:$0xff]
    %v5419 = vld [vmem:[#allocation7 + $0xe0] sm:$0xff]
    %v5420 = vld [vmem:[#allocation7 + $0xe8] sm:$0xff]
    %v5421 = vld [vmem:[#allocation7 + $0xf0] sm:$0xff]
    %v5422 = vld [vmem:[#allocation7 + $0xf8] sm:$0xff]
    %v5423 = vld [vmem:[#allocation7 + $0x100] sm:$0xff]
    %v5424 = vld [vmem:[#allocation7 + $0x108] sm:$0xff]
    %v5425 = vld [vmem:[#allocation7 + $0x110] sm:$0xff]
    %v5426 = vld [vmem:[#allocation7 + $0x118] sm:$0xff]
    %v5427 = vld [vmem:[#allocation7 + $0x120] sm:$0xff]
    %v5428 = vld [vmem:[#allocation7 + $0x128] sm:$0xff]
    %v5429 = vld [vmem:[#allocation7 + $0x130] sm:$0xff]
    %v5430 = vld [vmem:[#allocation7 + $0x138] sm:$0xff]
    %v5431 = vld [vmem:[#allocation7 + $0x140] sm:$0xff]
    %v5432 = vld [vmem:[#allocation7 + $0x148] sm:$0xff]
    %v5433 = vld [vmem:[#allocation7 + $0x150] sm:$0xff]
    %v5434 = vld [vmem:[#allocation7 + $0x158] sm:$0xff]
    %v5435 = vld [vmem:[#allocation7 + $0x160] sm:$0xff]
    %v5436 = vld [vmem:[#allocation7 + $0x168] sm:$0xff]
    %v5437 = vld [vmem:[#allocation7 + $0x170] sm:$0xff]
    %v5438 = vld [vmem:[#allocation7 + $0x178] sm:$0xff]
    %v5439 = vld [vmem:[#allocation7 + $0x180] sm:$0xff]
    %v5440 = vld [vmem:[#allocation7 + $0x188] sm:$0xff]
    %v5441 = vld [vmem:[#allocation7 + $0x190] sm:$0xff]
    %v5442 = vld [vmem:[#allocation7 + $0x198] sm:$0xff]
    %v5443 = vld [vmem:[#allocation7 + $0x1a0] sm:$0xff]
    %v5444 = vld [vmem:[#allocation7 + $0x1a8] sm:$0xff]
    %v5445 = vld [vmem:[#allocation7 + $0x1b0] sm:$0xff]
    %v5446 = vld [vmem:[#allocation7 + $0x1b8] sm:$0xff]
    %v5447 = vld [vmem:[#allocation7 + $0x1c0] sm:$0xff]
    %v5448 = vld [vmem:[#allocation7 + $0x1c8] sm:$0xff]
    %v5449 = vld [vmem:[#allocation7 + $0x1d0] sm:$0xff]
    %v5450 = vld [vmem:[#allocation7 + $0x1d8] sm:$0xff]
    %v5451 = vld [vmem:[#allocation7 + $0x1e0] sm:$0xff]
    %v5452 = vld [vmem:[#allocation7 + $0x1e8] sm:$0xff]
    %v5453 = vld [vmem:[#allocation7 + $0x1f0] sm:$0xff]
    %v5454 = vld [vmem:[#allocation7 + $0x1f8] sm:$0xff]
    %v5455 = vld [vmem:[#allocation9] sm:$0xff]
    %v5456 = vld [vmem:[#allocation9 + $0x8] sm:$0xff]
    %v5457 = vld [vmem:[#allocation9 + $0x10] sm:$0xff]
    %v5458 = vld [vmem:[#allocation9 + $0x18] sm:$0xff]
    %v5459 = vld [vmem:[#allocation9 + $0x20] sm:$0xff]
    %v5460 = vld [vmem:[#allocation9 + $0x28] sm:$0xff]
    %v5461 = vld [vmem:[#allocation9 + $0x30] sm:$0xff]
    %v5462 = vld [vmem:[#allocation9 + $0x38] sm:$0xff]
    %v5463 = vld [vmem:[#allocation9 + $0x40] sm:$0xff]
    %v5464 = vld [vmem:[#allocation9 + $0x48] sm:$0xff]
    %v5465 = vld [vmem:[#allocation9 + $0x50] sm:$0xff]
    %v5466 = vld [vmem:[#allocation9 + $0x58] sm:$0xff]
    %v5467 = vld [vmem:[#allocation9 + $0x60] sm:$0xff]
    %v5468 = vld [vmem:[#allocation9 + $0x68] sm:$0xff]
    %v5469 = vld [vmem:[#allocation9 + $0x70] sm:$0xff]
    %v5470 = vld [vmem:[#allocation9 + $0x78] sm:$0xff]
    %v5471 = vld [vmem:[#allocation9 + $0x80] sm:$0xff]
    %v5472 = vld [vmem:[#allocation9 + $0x88] sm:$0xff]
    %v5473 = vld [vmem:[#allocation9 + $0x90] sm:$0xff]
    %v5474 = vld [vmem:[#allocation9 + $0x98] sm:$0xff]
    %v5475 = vld [vmem:[#allocation9 + $0xa0] sm:$0xff]
    %v5476 = vld [vmem:[#allocation9 + $0xa8] sm:$0xff]
    %v5477 = vld [vmem:[#allocation9 + $0xb0] sm:$0xff]
    %v5478 = vld [vmem:[#allocation9 + $0xb8] sm:$0xff]
    %v5479 = vld [vmem:[#allocation9 + $0xc0] sm:$0xff]
    %v5480 = vld [vmem:[#allocation9 + $0xc8] sm:$0xff]
    %v5481 = vld [vmem:[#allocation9 + $0xd0] sm:$0xff]
    %v5482 = vld [vmem:[#allocation9 + $0xd8] sm:$0xff]
    %v5483 = vld [vmem:[#allocation9 + $0xe0] sm:$0xff]
    %v5484 = vld [vmem:[#allocation9 + $0xe8] sm:$0xff]
    %v5485 = vld [vmem:[#allocation9 + $0xf0] sm:$0xff]
    %v5486 = vld [vmem:[#allocation9 + $0xf8] sm:$0xff]
    %v5487 = vld [vmem:[#allocation9 + $0x100] sm:$0xff]
    %v5488 = vld [vmem:[#allocation9 + $0x108] sm:$0xff]
    %v5489 = vld [vmem:[#allocation9 + $0x110] sm:$0xff]
    %v5490 = vld [vmem:[#allocation9 + $0x118] sm:$0xff]
    %v5491 = vld [vmem:[#allocation9 + $0x120] sm:$0xff]
    %v5492 = vld [vmem:[#allocation9 + $0x128] sm:$0xff]
    %v5493 = vld [vmem:[#allocation9 + $0x130] sm:$0xff]
    %v5494 = vld [vmem:[#allocation9 + $0x138] sm:$0xff]
    %v5495 = vld [vmem:[#allocation9 + $0x140] sm:$0xff]
    %v5496 = vld [vmem:[#allocation9 + $0x148] sm:$0xff]
    %v5497 = vld [vmem:[#allocation9 + $0x150] sm:$0xff]
    %v5498 = vld [vmem:[#allocation9 + $0x158] sm:$0xff]
    %v5499 = vld [vmem:[#allocation9 + $0x160] sm:$0xff]
    %v5500 = vld [vmem:[#allocation9 + $0x168] sm:$0xff]
    %v5501 = vld [vmem:[#allocation9 + $0x170] sm:$0xff]
    %v5502 = vld [vmem:[#allocation9 + $0x178] sm:$0xff]
    %v5503 = vld [vmem:[#allocation9 + $0x180] sm:$0xff]
    %v5504 = vld [vmem:[#allocation9 + $0x188] sm:$0xff]
    %v5505 = vld [vmem:[#allocation9 + $0x190] sm:$0xff]
    %v5506 = vld [vmem:[#allocation9 + $0x198] sm:$0xff]
    %v5507 = vld [vmem:[#allocation9 + $0x1a0] sm:$0xff]
    %v5508 = vld [vmem:[#allocation9 + $0x1a8] sm:$0xff]
    %v5509 = vld [vmem:[#allocation9 + $0x1b0] sm:$0xff]
    %v5510 = vld [vmem:[#allocation9 + $0x1b8] sm:$0xff]
    %v5511 = vld [vmem:[#allocation9 + $0x1c0] sm:$0xff]
    %v5512 = vld [vmem:[#allocation9 + $0x1c8] sm:$0xff]
    %v5513 = vld [vmem:[#allocation9 + $0x1d0] sm:$0xff]
    %v5514 = vld [vmem:[#allocation9 + $0x1d8] sm:$0xff]
    %v5515 = vld [vmem:[#allocation9 + $0x1e0] sm:$0xff]
    %v5516 = vld [vmem:[#allocation9 + $0x1e8] sm:$0xff]
    %v5517 = vld [vmem:[#allocation9 + $0x1f0] sm:$0xff]
    %v5518 = vld [vmem:[#allocation9 + $0x1f8] sm:$0xff]
    %5519 = vmatprep.subr.mxu0 %v5456
    %5520 = vmatpush1.msra.mxu0 %v5455
    %5521 = vmatprep.subr.mxu0 %v5460
    %5522 = vmatpush1.msra.mxu0 %v5459
    %5523 = vmatprep.subr.mxu0 %v5464
    %5524 = vmatpush1.msra.mxu0 %v5463
    %5525 = vmatprep.subr.mxu0 %v5468
    %5526 = vmatpush1.msra.mxu0 %v5467
    %5527 = vmatprep.subr.mxu0 %v5472
    %5528 = vmatpush1.msra.mxu0 %v5471
    %5529 = vmatprep.subr.mxu0 %v5476
    %5530 = vmatpush1.msra.mxu0 %v5475
    %5531 = vmatprep.subr.mxu0 %v5480
    %5532 = vmatpush1.msra.mxu0 %v5479
    %5533 = vmatprep.subr.mxu0 %v5484
    %5534 = vmatpush1.msra.mxu0 %v5483
    %5535 = vmatprep.subr.mxu0 %v5488
    %5536 = vmatpush1.msra.mxu0 %v5487
    %5537 = vmatprep.subr.mxu0 %v5492
    %5538 = vmatpush1.msra.mxu0 %v5491
    %5539 = vmatprep.subr.mxu0 %v5496
    %5540 = vmatpush1.msra.mxu0 %v5495
    %5541 = vmatprep.subr.mxu0 %v5500
    %5542 = vmatpush1.msra.mxu0 %v5499
    %5543 = vmatprep.subr.mxu0 %v5504
    %5544 = vmatpush1.msra.mxu0 %v5503
    %5545 = vmatprep.subr.mxu0 %v5508
    %5546 = vmatpush1.msra.mxu0 %v5507
    %5547 = vmatprep.subr.mxu0 %v5512
    %5548 = vmatpush1.msra.mxu0 %v5511
    %5549 = vmatprep.subr.mxu0 %v5516
    %5550 = vmatpush1.msra.mxu0 %v5515
    %5551 = vmatprep.subr.mxu0 0.0
    %5552 = vmatpush1.msra.mxu0 0.0
    %5553 = vmatprep.subr.mxu0 0.0
    %5554 = vmatpush1.msra.mxu0 0.0
    %5555 = vmatprep.subr.mxu0 0.0
    %5556 = vmatpush1.msra.mxu0 0.0
    %5557 = vmatprep.subr.mxu0 0.0
    %5558 = vmatpush1.msra.mxu0 0.0
    %5559 = vmatprep.subr.mxu0 0.0
    %5560 = vmatpush1.msra.mxu0 0.0
    %5561 = vmatprep.subr.mxu0 0.0
    %5562 = vmatpush1.msra.mxu0 0.0
    %5563 = vmatprep.subr.mxu0 0.0
    %5564 = vmatpush1.msra.mxu0 0.0
    %5565 = vmatprep.subr.mxu0 0.0
    %5566 = vmatpush1.msra.mxu0 0.0
    %5567 = vmatprep.subr.mxu0 0.0
    %5568 = vmatpush1.msra.mxu0 0.0
    %5569 = vmatprep.subr.mxu0 0.0
    %5570 = vmatpush1.msra.mxu0 0.0
    %5571 = vmatprep.subr.mxu0 0.0
    %5572 = vmatpush1.msra.mxu0 0.0
    %5573 = vmatprep.subr.mxu0 0.0
    %5574 = vmatpush1.msra.mxu0 0.0
    %5575 = vmatprep.subr.mxu0 0.0
    %5576 = vmatpush1.msra.mxu0 0.0
    %5577 = vmatprep.subr.mxu0 0.0
    %5578 = vmatpush1.msra.mxu0 0.0
    %5579 = vmatprep.subr.mxu0 0.0
    %5580 = vmatpush1.msra.mxu0 0.0
    %5581 = vmatprep.subr.mxu0 0.0
    %5582 = vmatpush1.msra.mxu0 0.0
    %5583 = vmatprep.mubr.f32.mxu0 0.0
    %5584 = vmatmul.mubr.f32.gmra.mrb[0].mxu0 %v5145
    %v5585 = vpop.f32.mrb[0].mxu0
    %v5586 = vadd.f32 0.0, %v5585
    %v5587 = vpop.f32.mrb[0].mxu0
    %v5588 = vadd.f32 0.0, %v5587
    %5589 = vdwg.mxu0
    %5590 = vmatprep.subr.mxu0 %v5458
    %5591 = vmatpush1.msra.mxu0 %v5457
    %5592 = vmatprep.subr.mxu0 %v5462
    %5593 = vmatpush1.msra.mxu0 %v5461
    %5594 = vmatprep.subr.mxu0 %v5466
    %5595 = vmatpush1.msra.mxu0 %v5465
    %5596 = vmatprep.subr.mxu0 %v5470
    %5597 = vmatpush1.msra.mxu0 %v5469
    %5598 = vmatprep.subr.mxu0 %v5474
    %5599 = vmatpush1.msra.mxu0 %v5473
    %5600 = vmatprep.subr.mxu0 %v5478
    %5601 = vmatpush1.msra.mxu0 %v5477
    %5602 = vmatprep.subr.mxu0 %v5482
    %5603 = vmatpush1.msra.mxu0 %v5481
    %5604 = vmatprep.subr.mxu0 %v5486
    %5605 = vmatpush1.msra.mxu0 %v5485
    %5606 = vmatprep.subr.mxu0 %v5490
    %5607 = vmatpush1.msra.mxu0 %v5489
    %5608 = vmatprep.subr.mxu0 %v5494
    %5609 = vmatpush1.msra.mxu0 %v5493
    %5610 = vmatprep.subr.mxu0 %v5498
    %5611 = vmatpush1.msra.mxu0 %v5497
    %5612 = vmatprep.subr.mxu0 %v5502
    %5613 = vmatpush1.msra.mxu0 %v5501
    %5614 = vmatprep.subr.mxu0 %v5506
    %5615 = vmatpush1.msra.mxu0 %v5505
    %5616 = vmatprep.subr.mxu0 %v5510
    %5617 = vmatpush1.msra.mxu0 %v5509
    %5618 = vmatprep.subr.mxu0 %v5514
    %5619 = vmatpush1.msra.mxu0 %v5513
    %5620 = vmatprep.subr.mxu0 %v5518
    %5621 = vmatpush1.msra.mxu0 %v5517
    %5622 = vmatprep.subr.mxu0 0.0
    %5623 = vmatpush1.msra.mxu0 0.0
    %5624 = vmatprep.subr.mxu0 0.0
    %5625 = vmatpush1.msra.mxu0 0.0
    %5626 = vmatprep.subr.mxu0 0.0
    %5627 = vmatpush1.msra.mxu0 0.0
    %5628 = vmatprep.subr.mxu0 0.0
    %5629 = vmatpush1.msra.mxu0 0.0
    %5630 = vmatprep.subr.mxu0 0.0
    %5631 = vmatpush1.msra.mxu0 0.0
    %5632 = vmatprep.subr.mxu0 0.0
    %5633 = vmatpush1.msra.mxu0 0.0
    %5634 = vmatprep.subr.mxu0 0.0
    %5635 = vmatpush1.msra.mxu0 0.0
    %5636 = vmatprep.subr.mxu0 0.0
    %5637 = vmatpush1.msra.mxu0 0.0
    %5638 = vmatprep.subr.mxu0 0.0
    %5639 = vmatpush1.msra.mxu0 0.0
    %5640 = vmatprep.subr.mxu0 0.0
    %5641 = vmatpush1.msra.mxu0 0.0
    %5642 = vmatprep.subr.mxu0 0.0
    %5643 = vmatpush1.msra.mxu0 0.0
    %5644 = vmatprep.subr.mxu0 0.0
    %5645 = vmatpush1.msra.mxu0 0.0
    %5646 = vmatprep.subr.mxu0 0.0
    %5647 = vmatpush1.msra.mxu0 0.0
    %5648 = vmatprep.subr.mxu0 0.0
    %5649 = vmatpush1.msra.mxu0 0.0
    %5650 = vmatprep.subr.mxu0 0.0
    %5651 = vmatpush1.msra.mxu0 0.0
    %5652 = vmatprep.subr.mxu0 0.0
    %5653 = vmatpush1.msra.mxu0 0.0
    %5654 = vmatprep.mubr.f32.mxu0 0.0
    %5655 = vmatmul.mubr.f32.gmra.mrb[0].mxu0 %v5145
    %v5656 = vpop.f32.mrb[0].mxu0
    %v5657 = vadd.f32 0.0, %v5656
    %v5658 = vpop.f32.mrb[0].mxu0
    %v5659 = vadd.f32 0.0, %v5658
    %5660 = vdwg.mxu0
    %5661 = vmatprep.subr.mxu0 %v5392
    %5662 = vmatpush1.msra.mxu0 %v5391
    %5663 = vmatprep.subr.mxu0 %v5396
    %5664 = vmatpush1.msra.mxu0 %v5395
    %5665 = vmatprep.subr.mxu0 %v5400
    %5666 = vmatpush1.msra.mxu0 %v5399
    %5667 = vmatprep.subr.mxu0 %v5404
    %5668 = vmatpush1.msra.mxu0 %v5403
    %5669 = vmatprep.subr.mxu0 %v5408
    %5670 = vmatpush1.msra.mxu0 %v5407
    %5671 = vmatprep.subr.mxu0 %v5412
    %5672 = vmatpush1.msra.mxu0 %v5411
    %5673 = vmatprep.subr.mxu0 %v5416
    %5674 = vmatpush1.msra.mxu0 %v5415
    %5675 = vmatprep.subr.mxu0 %v5420
    %5676 = vmatpush1.msra.mxu0 %v5419
    %5677 = vmatprep.subr.mxu0 %v5424
    %5678 = vmatpush1.msra.mxu0 %v5423
    %5679 = vmatprep.subr.mxu0 %v5428
    %5680 = vmatpush1.msra.mxu0 %v5427
    %5681 = vmatprep.subr.mxu0 %v5432
    %5682 = vmatpush1.msra.mxu0 %v5431
    %5683 = vmatprep.subr.mxu0 %v5436
    %5684 = vmatpush1.msra.mxu0 %v5435
    %5685 = vmatprep.subr.mxu0 %v5440
    %5686 = vmatpush1.msra.mxu0 %v5439
    %5687 = vmatprep.subr.mxu0 %v5444
    %5688 = vmatpush1.msra.mxu0 %v5443
    %5689 = vmatprep.subr.mxu0 %v5448
    %5690 = vmatpush1.msra.mxu0 %v5447
    %5691 = vmatprep.subr.mxu0 %v5452
    %5692 = vmatpush1.msra.mxu0 %v5451
    %5693 = vmatprep.subr.mxu0 0.0
    %5694 = vmatpush1.msra.mxu0 0.0
    %5695 = vmatprep.subr.mxu0 0.0
    %5696 = vmatpush1.msra.mxu0 0.0
    %5697 = vmatprep.subr.mxu0 0.0
    %5698 = vmatpush1.msra.mxu0 0.0
    %5699 = vmatprep.subr.mxu0 0.0
    %5700 = vmatpush1.msra.mxu0 0.0
    %5701 = vmatprep.subr.mxu0 0.0
    %5702 = vmatpush1.msra.mxu0 0.0
    %5703 = vmatprep.subr.mxu0 0.0
    %5704 = vmatpush1.msra.mxu0 0.0
    %5705 = vmatprep.subr.mxu0 0.0
    %5706 = vmatpush1.msra.mxu0 0.0
    %5707 = vmatprep.subr.mxu0 0.0
    %5708 = vmatpush1.msra.mxu0 0.0
    %5709 = vmatprep.subr.mxu0 0.0
    %5710 = vmatpush1.msra.mxu0 0.0
    %5711 = vmatprep.subr.mxu0 0.0
    %5712 = vmatpush1.msra.mxu0 0.0
    %5713 = vmatprep.subr.mxu0 0.0
    %5714 = vmatpush1.msra.mxu0 0.0
    %5715 = vmatprep.subr.mxu0 0.0
    %5716 = vmatpush1.msra.mxu0 0.0
    %5717 = vmatprep.subr.mxu0 0.0
    %5718 = vmatpush1.msra.mxu0 0.0
    %5719 = vmatprep.subr.mxu0 0.0
    %5720 = vmatpush1.msra.mxu0 0.0
    %5721 = vmatprep.subr.mxu0 0.0
    %5722 = vmatpush1.msra.mxu0 0.0
    %5723 = vmatprep.subr.mxu0 0.0
    %5724 = vmatpush1.msra.mxu0 0.0
    %5725 = vmatprep.mubr.f32.mxu0 0.0
    %5726 = vmatmul.mubr.f32.gmra.mrb[0].mxu0 %v5390
    %v5727 = vpop.f32.mrb[0].mxu0
    %v5728 = vadd.f32 %v5586, %v5727
    %v5729 = vpop.f32.mrb[0].mxu0
    %v5730 = vadd.f32 %v5588, %v5729
    %5731 = vdwg.mxu0
    %5732 = vmatprep.subr.mxu0 %v5394
    %5733 = vmatpush1.msra.mxu0 %v5393
    %5734 = vmatprep.subr.mxu0 %v5398
    %5735 = vmatpush1.msra.mxu0 %v5397
    %5736 = vmatprep.subr.mxu0 %v5402
    %5737 = vmatpush1.msra.mxu0 %v5401
    %5738 = vmatprep.subr.mxu0 %v5406
    %5739 = vmatpush1.msra.mxu0 %v5405
    %5740 = vmatprep.subr.mxu0 %v5410
    %5741 = vmatpush1.msra.mxu0 %v5409
    %5742 = vmatprep.subr.mxu0 %v5414
    %5743 = vmatpush1.msra.mxu0 %v5413
    %5744 = vmatprep.subr.mxu0 %v5418
    %5745 = vmatpush1.msra.mxu0 %v5417
    %5746 = vmatprep.subr.mxu0 %v5422
    %5747 = vmatpush1.msra.mxu0 %v5421
    %5748 = vmatprep.subr.mxu0 %v5426
    %5749 = vmatpush1.msra.mxu0 %v5425
    %5750 = vmatprep.subr.mxu0 %v5430
    %5751 = vmatpush1.msra.mxu0 %v5429
    %5752 = vmatprep.subr.mxu0 %v5434
    %5753 = vmatpush1.msra.mxu0 %v5433
    %5754 = vmatprep.subr.mxu0 %v5438
    %5755 = vmatpush1.msra.mxu0 %v5437
    %5756 = vmatprep.subr.mxu0 %v5442
    %5757 = vmatpush1.msra.mxu0 %v5441
    %5758 = vmatprep.subr.mxu0 %v5446
    %5759 = vmatpush1.msra.mxu0 %v5445
    %5760 = vmatprep.subr.mxu0 %v5450
    %5761 = vmatpush1.msra.mxu0 %v5449
    %5762 = vmatprep.subr.mxu0 %v5454
    %5763 = vmatpush1.msra.mxu0 %v5453
    %5764 = vmatprep.subr.mxu0 0.0
    %5765 = vmatpush1.msra.mxu0 0.0
    %5766 = vmatprep.subr.mxu0 0.0
    %5767 = vmatpush1.msra.mxu0 0.0
    %5768 = vmatprep.subr.mxu0 0.0
    %5769 = vmatpush1.msra.mxu0 0.0
    %5770 = vmatprep.subr.mxu0 0.0
    %5771 = vmatpush1.msra.mxu0 0.0
    %5772 = vmatprep.subr.mxu0 0.0
    %5773 = vmatpush1.msra.mxu0 0.0
    %5774 = vmatprep.subr.mxu0 0.0
    %5775 = vmatpush1.msra.mxu0 0.0
    %5776 = vmatprep.subr.mxu0 0.0
    %5777 = vmatpush1.msra.mxu0 0.0
    %5778 = vmatprep.subr.mxu0 0.0
    %5779 = vmatpush1.msra.mxu0 0.0
    %5780 = vmatprep.subr.mxu0 0.0
    %5781 = vmatpush1.msra.mxu0 0.0
    %5782 = vmatprep.subr.mxu0 0.0
    %5783 = vmatpush1.msra.mxu0 0.0
    %5784 = vmatprep.subr.mxu0 0.0
    %5785 = vmatpush1.msra.mxu0 0.0
    %5786 = vmatprep.subr.mxu0 0.0
    %5787 = vmatpush1.msra.mxu0 0.0
    %5788 = vmatprep.subr.mxu0 0.0
    %5789 = vmatpush1.msra.mxu0 0.0
    %5790 = vmatprep.subr.mxu0 0.0
    %5791 = vmatpush1.msra.mxu0 0.0
    %5792 = vmatprep.subr.mxu0 0.0
    %5793 = vmatpush1.msra.mxu0 0.0
    %5794 = vmatprep.subr.mxu0 0.0
    %5795 = vmatpush1.msra.mxu0 0.0
    %5796 = vmatprep.mubr.f32.mxu0 0.0
    %5797 = vmatmul.mubr.f32.gmra.mrb[0].mxu0 %v5390
    %v5798 = vpop.f32.mrb[0].mxu0
    %v5799 = vadd.f32 %v5657, %v5798
    %v5800 = vpop.f32.mrb[0].mxu0
    %v5801 = vadd.f32 %v5659, %v5800
    %5802 = vdwg.mxu0
    %v5803 = vadd.f32 %v5728, %v100
    %v5804 = vadd.f32 %v5730, %v104
    %v5805 = vadd.f32 %v5799, %v108
    %v5806 = vadd.f32 %v5801, %v112
    %v5807 = vxor.u32 %v5803, 2147483648
    %v5808 = vxor.u32 %v5804, 2147483648
    %v5809 = vxor.u32 %v5805, 2147483648
    %v5810 = vmul.f32 %v5807, 1.442695
    %v5811 = vpow.pop %v5810
    %v5812 = vmul.f32 %v5808, 1.442695
    %v5813 = vpow.pop %v5812
    %v5814 = vmul.f32 %v5809, 1.442695
    %v5815 = vpow.pop %v5814
    %v5816 = vadd.f32 %v5811, 1.0
    %v5817 = vadd.f32 %v5813, 1.0
    %v5818 = vadd.f32 %v5815, 1.0
    %v5819 = vrcp.pop %v5816
    %v5820 = vmul.f32 1.0, %v5819
    %v5821 = vrcp.pop %v5817
    %v5822 = vmul.f32 1.0, %v5821
    %v5823 = vrcp.pop %v5818
    %v5824 = vmul.f32 1.0, %v5823
    %v5825 = vtanh.pop %v5806
    %v5826 = vmul.f32 %v5822, %v5143
    %v5827 = vmul.f32 %v5820, %v5825
    %v5828 = vadd.f32 %v5826, %v5827
    %v5829 = vtanh.pop %v5828
    %v5830 = vmul.f32 %v5824, %v5829
    %s5831 = scalar_lea.vmem [#allocation3], 28
    %5832 = vst [vmem:[%s5831] sm:$0xf] %v5830
    %v5833 = vld [vmem:[%s8] sm:$0xf]
    %v5835 = vlaneseq
    %v5836 = vshrl.u32 %v5835, 7
    %v5837 = vsub.s32 0, %v5836
    %v5838 = vrot.slane %v5833, %v5837
    %v5839 = vlaneseq
    %v5840 = vshrl.u32 %v5839, 7
    %v5841 = vsub.s32 1, %v5840
    %v5842 = vrot.slane %v5833, %v5841
    %v5843 = vlaneseq
    %v5844 = vshrl.u32 %v5843, 7
    %v5845 = vsub.s32 2, %v5844
    %v5846 = vrot.slane %v5833, %v5845
    %v5847 = vlaneseq
    %v5848 = vshrl.u32 %v5847, 7
    %v5849 = vsub.s32 3, %v5848
    %v5850 = vrot.slane %v5833, %v5849
    %v5855 = vld [vmem:[#allocation10] sm:$0xff]
    %v5856 = vld [vmem:[#allocation10 + $0x8] sm:$0xff]
    %v5857 = vld [vmem:[#allocation10 + $0x10] sm:$0xff]
    %v5858 = vld [vmem:[#allocation10 + $0x18] sm:$0xff]
    %v5859 = vld [vmem:[#allocation10 + $0x20] sm:$0xff]
    %v5860 = vld [vmem:[#allocation10 + $0x28] sm:$0xff]
    %v5861 = vld [vmem:[#allocation10 + $0x30] sm:$0xff]
    %v5862 = vld [vmem:[#allocation10 + $0x38] sm:$0xff]
    %v5863 = vld [vmem:[#allocation10 + $0x40] sm:$0xff]
    %v5864 = vld [vmem:[#allocation10 + $0x48] sm:$0xff]
    %v5865 = vld [vmem:[#allocation10 + $0x50] sm:$0xff]
    %v5866 = vld [vmem:[#allocation10 + $0x58] sm:$0xff]
    %v5867 = vld [vmem:[#allocation10 + $0x60] sm:$0xff]
    %v5868 = vld [vmem:[#allocation10 + $0x68] sm:$0xff]
    %v5869 = vld [vmem:[#allocation10 + $0x70] sm:$0xff]
    %v5870 = vld [vmem:[#allocation10 + $0x78] sm:$0xff]
    %v5871 = vld [vmem:[#allocation10 + $0x80] sm:$0xff]
    %v5872 = vld [vmem:[#allocation10 + $0x88] sm:$0xff]
    %v5873 = vld [vmem:[#allocation10 + $0x90] sm:$0xff]
    %v5874 = vld [vmem:[#allocation10 + $0x98] sm:$0xff]
    %v5875 = vld [vmem:[#allocation10 + $0xa0] sm:$0xff]
    %v5876 = vld [vmem:[#allocation10 + $0xa8] sm:$0xff]
    %v5877 = vld [vmem:[#allocation10 + $0xb0] sm:$0xff]
    %v5878 = vld [vmem:[#allocation10 + $0xb8] sm:$0xff]
    %v5879 = vld [vmem:[#allocation10 + $0xc0] sm:$0xff]
    %v5880 = vld [vmem:[#allocation10 + $0xc8] sm:$0xff]
    %v5881 = vld [vmem:[#allocation10 + $0xd0] sm:$0xff]
    %v5882 = vld [vmem:[#allocation10 + $0xd8] sm:$0xff]
    %v5883 = vld [vmem:[#allocation10 + $0xe0] sm:$0xff]
    %v5884 = vld [vmem:[#allocation10 + $0xe8] sm:$0xff]
    %v5885 = vld [vmem:[#allocation10 + $0xf0] sm:$0xff]
    %v5886 = vld [vmem:[#allocation10 + $0xf8] sm:$0xff]
    %v5887 = vld [vmem:[#allocation10 + $0x100] sm:$0xff]
    %v5888 = vld [vmem:[#allocation10 + $0x108] sm:$0xff]
    %v5889 = vld [vmem:[#allocation10 + $0x110] sm:$0xff]
    %v5890 = vld [vmem:[#allocation10 + $0x118] sm:$0xff]
    %v5891 = vld [vmem:[#allocation10 + $0x120] sm:$0xff]
    %v5892 = vld [vmem:[#allocation10 + $0x128] sm:$0xff]
    %v5893 = vld [vmem:[#allocation10 + $0x130] sm:$0xff]
    %v5894 = vld [vmem:[#allocation10 + $0x138] sm:$0xff]
    %v5895 = vld [vmem:[#allocation10 + $0x140] sm:$0xff]
    %v5896 = vld [vmem:[#allocation10 + $0x148] sm:$0xff]
    %v5897 = vld [vmem:[#allocation10 + $0x150] sm:$0xff]
    %v5898 = vld [vmem:[#allocation10 + $0x158] sm:$0xff]
    %v5899 = vld [vmem:[#allocation10 + $0x160] sm:$0xff]
    %v5900 = vld [vmem:[#allocation10 + $0x168] sm:$0xff]
    %v5901 = vld [vmem:[#allocation10 + $0x170] sm:$0xff]
    %v5902 = vld [vmem:[#allocation10 + $0x178] sm:$0xff]
    %v5903 = vld [vmem:[#allocation10 + $0x180] sm:$0xff]
    %v5904 = vld [vmem:[#allocation10 + $0x188] sm:$0xff]
    %v5905 = vld [vmem:[#allocation10 + $0x190] sm:$0xff]
    %v5906 = vld [vmem:[#allocation10 + $0x198] sm:$0xff]
    %v5907 = vld [vmem:[#allocation10 + $0x1a0] sm:$0xff]
    %v5908 = vld [vmem:[#allocation10 + $0x1a8] sm:$0xff]
    %v5909 = vld [vmem:[#allocation10 + $0x1b0] sm:$0xff]
    %v5910 = vld [vmem:[#allocation10 + $0x1b8] sm:$0xff]
    %v5911 = vld [vmem:[#allocation10 + $0x1c0] sm:$0xff]
    %v5912 = vld [vmem:[#allocation10 + $0x1c8] sm:$0xff]
    %v5913 = vld [vmem:[#allocation10 + $0x1d0] sm:$0xff]
    %v5914 = vld [vmem:[#allocation10 + $0x1d8] sm:$0xff]
    %v5915 = vld [vmem:[#allocation10 + $0x1e0] sm:$0xff]
    %v5916 = vld [vmem:[#allocation10 + $0x1e8] sm:$0xff]
    %v5917 = vld [vmem:[#allocation10 + $0x1f0] sm:$0xff]
    %v5918 = vld [vmem:[#allocation10 + $0x1f8] sm:$0xff]
    %5919 = vmatprep.subr.mxu0 %v5856
    %5920 = vmatpush1.msra.mxu0 %v5855
    %5921 = vmatprep.subr.mxu0 %v5860
    %5922 = vmatpush1.msra.mxu0 %v5859
    %5923 = vmatprep.subr.mxu0 %v5864
    %5924 = vmatpush1.msra.mxu0 %v5863
    %5925 = vmatprep.subr.mxu0 %v5868
    %5926 = vmatpush1.msra.mxu0 %v5867
    %5927 = vmatprep.subr.mxu0 %v5872
    %5928 = vmatpush1.msra.mxu0 %v5871
    %5929 = vmatprep.subr.mxu0 %v5876
    %5930 = vmatpush1.msra.mxu0 %v5875
    %5931 = vmatprep.subr.mxu0 %v5880
    %5932 = vmatpush1.msra.mxu0 %v5879
    %5933 = vmatprep.subr.mxu0 %v5884
    %5934 = vmatpush1.msra.mxu0 %v5883
    %5935 = vmatprep.subr.mxu0 %v5888
    %5936 = vmatpush1.msra.mxu0 %v5887
    %5937 = vmatprep.subr.mxu0 %v5892
    %5938 = vmatpush1.msra.mxu0 %v5891
    %5939 = vmatprep.subr.mxu0 %v5896
    %5940 = vmatpush1.msra.mxu0 %v5895
    %5941 = vmatprep.subr.mxu0 %v5900
    %5942 = vmatpush1.msra.mxu0 %v5899
    %5943 = vmatprep.subr.mxu0 %v5904
    %5944 = vmatpush1.msra.mxu0 %v5903
    %5945 = vmatprep.subr.mxu0 %v5908
    %5946 = vmatpush1.msra.mxu0 %v5907
    %5947 = vmatprep.subr.mxu0 %v5912
    %5948 = vmatpush1.msra.mxu0 %v5911
    %5949 = vmatprep.subr.mxu0 %v5916
    %5950 = vmatpush1.msra.mxu0 %v5915
    %5951 = vmatprep.subr.mxu0 0.0
    %5952 = vmatpush1.msra.mxu0 0.0
    %5953 = vmatprep.subr.mxu0 0.0
    %5954 = vmatpush1.msra.mxu0 0.0
    %5955 = vmatprep.subr.mxu0 0.0
    %5956 = vmatpush1.msra.mxu0 0.0
    %5957 = vmatprep.subr.mxu0 0.0
    %5958 = vmatpush1.msra.mxu0 0.0
    %5959 = vmatprep.subr.mxu0 0.0
    %5960 = vmatpush1.msra.mxu0 0.0
    %5961 = vmatprep.subr.mxu0 0.0
    %5962 = vmatpush1.msra.mxu0 0.0
    %5963 = vmatprep.subr.mxu0 0.0
    %5964 = vmatpush1.msra.mxu0 0.0
    %5965 = vmatprep.subr.mxu0 0.0
    %5966 = vmatpush1.msra.mxu0 0.0
    %5967 = vmatprep.subr.mxu0 0.0
    %5968 = vmatpush1.msra.mxu0 0.0
    %5969 = vmatprep.subr.mxu0 0.0
    %5970 = vmatpush1.msra.mxu0 0.0
    %5971 = vmatprep.subr.mxu0 0.0
    %5972 = vmatpush1.msra.mxu0 0.0
    %5973 = vmatprep.subr.mxu0 0.0
    %5974 = vmatpush1.msra.mxu0 0.0
    %5975 = vmatprep.subr.mxu0 0.0
    %5976 = vmatpush1.msra.mxu0 0.0
    %5977 = vmatprep.subr.mxu0 0.0
    %5978 = vmatpush1.msra.mxu0 0.0
    %5979 = vmatprep.subr.mxu0 0.0
    %5980 = vmatpush1.msra.mxu0 0.0
    %5981 = vmatprep.subr.mxu0 0.0
    %5982 = vmatpush1.msra.mxu0 0.0
    %5983 = vmatprep.mubr.f32.mxu0 0.0
    %5984 = vmatmul.mubr.f32.gmra.mrb[0].mxu0 %v5830
    %v5985 = vpop.f32.mrb[0].mxu0
    %v5986 = vadd.f32 0.0, %v5985
    %v5987 = vpop.f32.mrb[0].mxu0
    %v5988 = vadd.f32 0.0, %v5987
    %5989 = vdwg.mxu0
    %5990 = vmatprep.subr.mxu0 %v5858
    %5991 = vmatpush1.msra.mxu0 %v5857
    %5992 = vmatprep.subr.mxu0 %v5862
    %5993 = vmatpush1.msra.mxu0 %v5861
    %5994 = vmatprep.subr.mxu0 %v5866
    %5995 = vmatpush1.msra.mxu0 %v5865
    %5996 = vmatprep.subr.mxu0 %v5870
    %5997 = vmatpush1.msra.mxu0 %v5869
    %5998 = vmatprep.subr.mxu0 %v5874
    %5999 = vmatpush1.msra.mxu0 %v5873
    %6000 = vmatprep.subr.mxu0 %v5878
    %6001 = vmatpush1.msra.mxu0 %v5877
    %6002 = vmatprep.subr.mxu0 %v5882
    %6003 = vmatpush1.msra.mxu0 %v5881
    %6004 = vmatprep.subr.mxu0 %v5886
    %6005 = vmatpush1.msra.mxu0 %v5885
    %6006 = vmatprep.subr.mxu0 %v5890
    %6007 = vmatpush1.msra.mxu0 %v5889
    %6008 = vmatprep.subr.mxu0 %v5894
    %6009 = vmatpush1.msra.mxu0 %v5893
    %6010 = vmatprep.subr.mxu0 %v5898
    %6011 = vmatpush1.msra.mxu0 %v5897
    %6012 = vmatprep.subr.mxu0 %v5902
    %6013 = vmatpush1.msra.mxu0 %v5901
    %6014 = vmatprep.subr.mxu0 %v5906
    %6015 = vmatpush1.msra.mxu0 %v5905
    %6016 = vmatprep.subr.mxu0 %v5910
    %6017 = vmatpush1.msra.mxu0 %v5909
    %6018 = vmatprep.subr.mxu0 %v5914
    %6019 = vmatpush1.msra.mxu0 %v5913
    %6020 = vmatprep.subr.mxu0 %v5918
    %6021 = vmatpush1.msra.mxu0 %v5917
    %6022 = vmatprep.subr.mxu0 0.0
    %6023 = vmatpush1.msra.mxu0 0.0
    %6024 = vmatprep.subr.mxu0 0.0
    %6025 = vmatpush1.msra.mxu0 0.0
    %6026 = vmatprep.subr.mxu0 0.0
    %6027 = vmatpush1.msra.mxu0 0.0
    %6028 = vmatprep.subr.mxu0 0.0
    %6029 = vmatpush1.msra.mxu0 0.0
    %6030 = vmatprep.subr.mxu0 0.0
    %6031 = vmatpush1.msra.mxu0 0.0
    %6032 = vmatprep.subr.mxu0 0.0
    %6033 = vmatpush1.msra.mxu0 0.0
    %6034 = vmatprep.subr.mxu0 0.0
    %6035 = vmatpush1.msra.mxu0 0.0
    %6036 = vmatprep.subr.mxu0 0.0
    %6037 = vmatpush1.msra.mxu0 0.0
    %6038 = vmatprep.subr.mxu0 0.0
    %6039 = vmatpush1.msra.mxu0 0.0
    %6040 = vmatprep.subr.mxu0 0.0
    %6041 = vmatpush1.msra.mxu0 0.0
    %6042 = vmatprep.subr.mxu0 0.0
    %6043 = vmatpush1.msra.mxu0 0.0
    %6044 = vmatprep.subr.mxu0 0.0
    %6045 = vmatpush1.msra.mxu0 0.0
    %6046 = vmatprep.subr.mxu0 0.0
    %6047 = vmatpush1.msra.mxu0 0.0
    %6048 = vmatprep.subr.mxu0 0.0
    %6049 = vmatpush1.msra.mxu0 0.0
    %6050 = vmatprep.subr.mxu0 0.0
    %6051 = vmatpush1.msra.mxu0 0.0
    %6052 = vmatprep.subr.mxu0 0.0
    %6053 = vmatpush1.msra.mxu0 0.0
    %6054 = vmatprep.mubr.f32.mxu0 0.0
    %6055 = vmatmul.mubr.f32.gmra.mrb[0].mxu0 %v5830
    %v6056 = vpop.f32.mrb[0].mxu0
    %v6057 = vadd.f32 0.0, %v6056
    %v6058 = vpop.f32.mrb[0].mxu0
    %v6059 = vadd.f32 0.0, %v6058
    %6060 = vdwg.mxu0
    %v6061 = vadd.f32 %v5838, %v5986
    %v6062 = vadd.f32 %v5842, %v5988
    %v6063 = vadd.f32 %v5846, %v6057
    %v6064 = vadd.f32 %v5850, %v6059
    %v6065 = vld [vmem:[#allocation5] sm:$0xff]
    %v6066 = vld [vmem:[#allocation5 + $0x8] sm:$0xff]
    %v6067 = vld [vmem:[#allocation5 + $0x10] sm:$0xff]
    %v6068 = vld [vmem:[#allocation5 + $0x18] sm:$0xff]
    %v6069 = vld [vmem:[#allocation5 + $0x20] sm:$0xff]
    %v6070 = vld [vmem:[#allocation5 + $0x28] sm:$0xff]
    %v6071 = vld [vmem:[#allocation5 + $0x30] sm:$0xff]
    %v6072 = vld [vmem:[#allocation5 + $0x38] sm:$0xff]
    %v6073 = vld [vmem:[#allocation5 + $0x40] sm:$0xff]
    %v6074 = vld [vmem:[#allocation5 + $0x48] sm:$0xff]
    %v6075 = vld [vmem:[#allocation5 + $0x50] sm:$0xff]
    %v6076 = vld [vmem:[#allocation5 + $0x58] sm:$0xff]
    %v6077 = vld [vmem:[#allocation5 + $0x60] sm:$0xff]
    %v6078 = vld [vmem:[#allocation5 + $0x68] sm:$0xff]
    %v6079 = vld [vmem:[#allocation5 + $0x70] sm:$0xff]
    %v6080 = vld [vmem:[#allocation5 + $0x78] sm:$0xff]
    %v6081 = vld [vmem:[#allocation5 + $0x80] sm:$0xff]
    %v6082 = vld [vmem:[#allocation5 + $0x88] sm:$0xff]
    %v6083 = vld [vmem:[#allocation5 + $0x90] sm:$0xff]
    %v6084 = vld [vmem:[#allocation5 + $0x98] sm:$0xff]
    %v6085 = vld [vmem:[#allocation5 + $0xa0] sm:$0xff]
    %v6086 = vld [vmem:[#allocation5 + $0xa8] sm:$0xff]
    %v6087 = vld [vmem:[#allocation5 + $0xb0] sm:$0xff]
    %v6088 = vld [vmem:[#allocation5 + $0xb8] sm:$0xff]
    %v6089 = vld [vmem:[#allocation5 + $0xc0] sm:$0xff]
    %v6090 = vld [vmem:[#allocation5 + $0xc8] sm:$0xff]
    %v6091 = vld [vmem:[#allocation5 + $0xd0] sm:$0xff]
    %v6092 = vld [vmem:[#allocation5 + $0xd8] sm:$0xff]
    %v6093 = vld [vmem:[#allocation5 + $0xe0] sm:$0xff]
    %v6094 = vld [vmem:[#allocation5 + $0xe8] sm:$0xff]
    %v6095 = vld [vmem:[#allocation5 + $0xf0] sm:$0xff]
    %v6096 = vld [vmem:[#allocation5 + $0xf8] sm:$0xff]
    %v6097 = vld [vmem:[#allocation5 + $0x100] sm:$0xff]
    %v6098 = vld [vmem:[#allocation5 + $0x108] sm:$0xff]
    %v6099 = vld [vmem:[#allocation5 + $0x110] sm:$0xff]
    %v6100 = vld [vmem:[#allocation5 + $0x118] sm:$0xff]
    %v6101 = vld [vmem:[#allocation5 + $0x120] sm:$0xff]
    %v6102 = vld [vmem:[#allocation5 + $0x128] sm:$0xff]
    %v6103 = vld [vmem:[#allocation5 + $0x130] sm:$0xff]
    %v6104 = vld [vmem:[#allocation5 + $0x138] sm:$0xff]
    %v6105 = vld [vmem:[#allocation5 + $0x140] sm:$0xff]
    %v6106 = vld [vmem:[#allocation5 + $0x148] sm:$0xff]
    %v6107 = vld [vmem:[#allocation5 + $0x150] sm:$0xff]
    %v6108 = vld [vmem:[#allocation5 + $0x158] sm:$0xff]
    %v6109 = vld [vmem:[#allocation5 + $0x160] sm:$0xff]
    %v6110 = vld [vmem:[#allocation5 + $0x168] sm:$0xff]
    %v6111 = vld [vmem:[#allocation5 + $0x170] sm:$0xff]
    %v6112 = vld [vmem:[#allocation5 + $0x178] sm:$0xff]
    %v6113 = vld [vmem:[#allocation5 + $0x180] sm:$0xff]
    %v6114 = vld [vmem:[#allocation5 + $0x188] sm:$0xff]
    %v6115 = vld [vmem:[#allocation5 + $0x190] sm:$0xff]
    %v6116 = vld [vmem:[#allocation5 + $0x198] sm:$0xff]
    %v6117 = vld [vmem:[#allocation5 + $0x1a0] sm:$0xff]
    %v6118 = vld [vmem:[#allocation5 + $0x1a8] sm:$0xff]
    %v6119 = vld [vmem:[#allocation5 + $0x1b0] sm:$0xff]
    %v6120 = vld [vmem:[#allocation5 + $0x1b8] sm:$0xff]
    %v6121 = vld [vmem:[#allocation5 + $0x1c0] sm:$0xff]
    %v6122 = vld [vmem:[#allocation5 + $0x1c8] sm:$0xff]
    %v6123 = vld [vmem:[#allocation5 + $0x1d0] sm:$0xff]
    %v6124 = vld [vmem:[#allocation5 + $0x1d8] sm:$0xff]
    %v6125 = vld [vmem:[#allocation5 + $0x1e0] sm:$0xff]
    %v6126 = vld [vmem:[#allocation5 + $0x1e8] sm:$0xff]
    %v6127 = vld [vmem:[#allocation5 + $0x1f0] sm:$0xff]
    %v6128 = vld [vmem:[#allocation5 + $0x1f8] sm:$0xff]
    %6129 = vmatprep.subr.mxu0 %v6066
    %6130 = vmatpush1.msra.mxu0 %v6065
    %6131 = vmatprep.subr.mxu0 %v6070
    %6132 = vmatpush1.msra.mxu0 %v6069
    %6133 = vmatprep.subr.mxu0 %v6074
    %6134 = vmatpush1.msra.mxu0 %v6073
    %6135 = vmatprep.subr.mxu0 %v6078
    %6136 = vmatpush1.msra.mxu0 %v6077
    %6137 = vmatprep.subr.mxu0 %v6082
    %6138 = vmatpush1.msra.mxu0 %v6081
    %6139 = vmatprep.subr.mxu0 %v6086
    %6140 = vmatpush1.msra.mxu0 %v6085
    %6141 = vmatprep.subr.mxu0 %v6090
    %6142 = vmatpush1.msra.mxu0 %v6089
    %6143 = vmatprep.subr.mxu0 %v6094
    %6144 = vmatpush1.msra.mxu0 %v6093
    %6145 = vmatprep.subr.mxu0 %v6098
    %6146 = vmatpush1.msra.mxu0 %v6097
    %6147 = vmatprep.subr.mxu0 %v6102
    %6148 = vmatpush1.msra.mxu0 %v6101
    %6149 = vmatprep.subr.mxu0 %v6106
    %6150 = vmatpush1.msra.mxu0 %v6105
    %6151 = vmatprep.subr.mxu0 %v6110
    %6152 = vmatpush1.msra.mxu0 %v6109
    %6153 = vmatprep.subr.mxu0 %v6114
    %6154 = vmatpush1.msra.mxu0 %v6113
    %6155 = vmatprep.subr.mxu0 %v6118
    %6156 = vmatpush1.msra.mxu0 %v6117
    %6157 = vmatprep.subr.mxu0 %v6122
    %6158 = vmatpush1.msra.mxu0 %v6121
    %6159 = vmatprep.subr.mxu0 %v6126
    %6160 = vmatpush1.msra.mxu0 %v6125
    %6161 = vmatprep.subr.mxu0 0.0
    %6162 = vmatpush1.msra.mxu0 0.0
    %6163 = vmatprep.subr.mxu0 0.0
    %6164 = vmatpush1.msra.mxu0 0.0
    %6165 = vmatprep.subr.mxu0 0.0
    %6166 = vmatpush1.msra.mxu0 0.0
    %6167 = vmatprep.subr.mxu0 0.0
    %6168 = vmatpush1.msra.mxu0 0.0
    %6169 = vmatprep.subr.mxu0 0.0
    %6170 = vmatpush1.msra.mxu0 0.0
    %6171 = vmatprep.subr.mxu0 0.0
    %6172 = vmatpush1.msra.mxu0 0.0
    %6173 = vmatprep.subr.mxu0 0.0
    %6174 = vmatpush1.msra.mxu0 0.0
    %6175 = vmatprep.subr.mxu0 0.0
    %6176 = vmatpush1.msra.mxu0 0.0
    %6177 = vmatprep.subr.mxu0 0.0
    %6178 = vmatpush1.msra.mxu0 0.0
    %6179 = vmatprep.subr.mxu0 0.0
    %6180 = vmatpush1.msra.mxu0 0.0
    %6181 = vmatprep.subr.mxu0 0.0
    %6182 = vmatpush1.msra.mxu0 0.0
    %6183 = vmatprep.subr.mxu0 0.0
    %6184 = vmatpush1.msra.mxu0 0.0
    %6185 = vmatprep.subr.mxu0 0.0
    %6186 = vmatpush1.msra.mxu0 0.0
    %6187 = vmatprep.subr.mxu0 0.0
    %6188 = vmatpush1.msra.mxu0 0.0
    %6189 = vmatprep.subr.mxu0 0.0
    %6190 = vmatpush1.msra.mxu0 0.0
    %6191 = vmatprep.subr.mxu0 0.0
    %6192 = vmatpush1.msra.mxu0 0.0
    %6193 = vmatprep.mubr.f32.mxu0 0.0
    %6194 = vmatmul.mubr.f32.gmra.mrb[0].mxu0 %v5390
    %v6195 = vpop.f32.mrb[0].mxu0
    %v6196 = vadd.f32 0.0, %v6195
    %v6197 = vpop.f32.mrb[0].mxu0
    %v6198 = vadd.f32 0.0, %v6197
    %6199 = vdwg.mxu0
    %6200 = vmatprep.subr.mxu0 %v6068
    %6201 = vmatpush1.msra.mxu0 %v6067
    %6202 = vmatprep.subr.mxu0 %v6072
    %6203 = vmatpush1.msra.mxu0 %v6071
    %6204 = vmatprep.subr.mxu0 %v6076
    %6205 = vmatpush1.msra.mxu0 %v6075
    %6206 = vmatprep.subr.mxu0 %v6080
    %6207 = vmatpush1.msra.mxu0 %v6079
    %6208 = vmatprep.subr.mxu0 %v6084
    %6209 = vmatpush1.msra.mxu0 %v6083
    %6210 = vmatprep.subr.mxu0 %v6088
    %6211 = vmatpush1.msra.mxu0 %v6087
    %6212 = vmatprep.subr.mxu0 %v6092
    %6213 = vmatpush1.msra.mxu0 %v6091
    %6214 = vmatprep.subr.mxu0 %v6096
    %6215 = vmatpush1.msra.mxu0 %v6095
    %6216 = vmatprep.subr.mxu0 %v6100
    %6217 = vmatpush1.msra.mxu0 %v6099
    %6218 = vmatprep.subr.mxu0 %v6104
    %6219 = vmatpush1.msra.mxu0 %v6103
    %6220 = vmatprep.subr.mxu0 %v6108
    %6221 = vmatpush1.msra.mxu0 %v6107
    %6222 = vmatprep.subr.mxu0 %v6112
    %6223 = vmatpush1.msra.mxu0 %v6111
    %6224 = vmatprep.subr.mxu0 %v6116
    %6225 = vmatpush1.msra.mxu0 %v6115
    %6226 = vmatprep.subr.mxu0 %v6120
    %6227 = vmatpush1.msra.mxu0 %v6119
    %6228 = vmatprep.subr.mxu0 %v6124
    %6229 = vmatpush1.msra.mxu0 %v6123
    %6230 = vmatprep.subr.mxu0 %v6128
    %6231 = vmatpush1.msra.mxu0 %v6127
    %6232 = vmatprep.subr.mxu0 0.0
    %6233 = vmatpush1.msra.mxu0 0.0
    %6234 = vmatprep.subr.mxu0 0.0
    %6235 = vmatpush1.msra.mxu0 0.0
    %6236 = vmatprep.subr.mxu0 0.0
    %6237 = vmatpush1.msra.mxu0 0.0
    %6238 = vmatprep.subr.mxu0 0.0
    %6239 = vmatpush1.msra.mxu0 0.0
    %6240 = vmatprep.subr.mxu0 0.0
    %6241 = vmatpush1.msra.mxu0 0.0
    %6242 = vmatprep.subr.mxu0 0.0
    %6243 = vmatpush1.msra.mxu0 0.0
    %6244 = vmatprep.subr.mxu0 0.0
    %6245 = vmatpush1.msra.mxu0 0.0
    %6246 = vmatprep.subr.mxu0 0.0
    %6247 = vmatpush1.msra.mxu0 0.0
    %6248 = vmatprep.subr.mxu0 0.0
    %6249 = vmatpush1.msra.mxu0 0.0
    %6250 = vmatprep.subr.mxu0 0.0
    %6251 = vmatpush1.msra.mxu0 0.0
    %6252 = vmatprep.subr.mxu0 0.0
    %6253 = vmatpush1.msra.mxu0 0.0
    %6254 = vmatprep.subr.mxu0 0.0
    %6255 = vmatpush1.msra.mxu0 0.0
    %6256 = vmatprep.subr.mxu0 0.0
    %6257 = vmatpush1.msra.mxu0 0.0
    %6258 = vmatprep.subr.mxu0 0.0
    %6259 = vmatpush1.msra.mxu0 0.0
    %6260 = vmatprep.subr.mxu0 0.0
    %6261 = vmatpush1.msra.mxu0 0.0
    %6262 = vmatprep.subr.mxu0 0.0
    %6263 = vmatpush1.msra.mxu0 0.0
    %6264 = vmatprep.mubr.f32.mxu0 0.0
    %6265 = vmatmul.mubr.f32.gmra.mrb[0].mxu0 %v5390
    %v6266 = vpop.f32.mrb[0].mxu0
    %v6267 = vadd.f32 0.0, %v6266
    %v6268 = vpop.f32.mrb[0].mxu0
    %v6269 = vadd.f32 0.0, %v6268
    %6270 = vdwg.mxu0
    %v6271 = vadd.f32 %v6061, %v6196
    %v6272 = vadd.f32 %v6062, %v6198
    %v6273 = vadd.f32 %v6063, %v6267
    %v6274 = vadd.f32 %v6064, %v6269
    %v6275 = vxor.u32 %v6271, 2147483648
    %v6276 = vxor.u32 %v6272, 2147483648
    %v6277 = vxor.u32 %v6273, 2147483648
    %v6278 = vmul.f32 %v6275, 1.442695
    %v6279 = vpow.pop %v6278
    %v6280 = vmul.f32 %v6276, 1.442695
    %v6281 = vpow.pop %v6280
    %v6282 = vmul.f32 %v6277, 1.442695
    %v6283 = vpow.pop %v6282
    %v6284 = vadd.f32 %v6279, 1.0
    %v6285 = vadd.f32 %v6281, 1.0
    %v6286 = vadd.f32 %v6283, 1.0
    %v6287 = vrcp.pop %v6284
    %v6288 = vmul.f32 1.0, %v6287
    %v6289 = vrcp.pop %v6285
    %v6290 = vmul.f32 1.0, %v6289
    %v6291 = vrcp.pop %v6286
    %v6292 = vmul.f32 1.0, %v6291
    %v6293 = vtanh.pop %v6274
    %v6294 = vmul.f32 %v6290, %v5388
    %v6295 = vmul.f32 %v6288, %v6293
    %v6296 = vadd.f32 %v6294, %v6295
    %v6297 = vtanh.pop %v6296
    %v6298 = vmul.f32 %v6292, %v6297
    %v6299 = vld [vmem:[#allocation7] sm:$0xff]
    %v6300 = vld [vmem:[#allocation7 + $0x8] sm:$0xff]
    %v6301 = vld [vmem:[#allocation7 + $0x10] sm:$0xff]
    %v6302 = vld [vmem:[#allocation7 + $0x18] sm:$0xff]
    %v6303 = vld [vmem:[#allocation7 + $0x20] sm:$0xff]
    %v6304 = vld [vmem:[#allocation7 + $0x28] sm:$0xff]
    %v6305 = vld [vmem:[#allocation7 + $0x30] sm:$0xff]
    %v6306 = vld [vmem:[#allocation7 + $0x38] sm:$0xff]
    %v6307 = vld [vmem:[#allocation7 + $0x40] sm:$0xff]
    %v6308 = vld [vmem:[#allocation7 + $0x48] sm:$0xff]
    %v6309 = vld [vmem:[#allocation7 + $0x50] sm:$0xff]
    %v6310 = vld [vmem:[#allocation7 + $0x58] sm:$0xff]
    %v6311 = vld [vmem:[#allocation7 + $0x60] sm:$0xff]
    %v6312 = vld [vmem:[#allocation7 + $0x68] sm:$0xff]
    %v6313 = vld [vmem:[#allocation7 + $0x70] sm:$0xff]
    %v6314 = vld [vmem:[#allocation7 + $0x78] sm:$0xff]
    %v6315 = vld [vmem:[#allocation7 + $0x80] sm:$0xff]
    %v6316 = vld [vmem:[#allocation7 + $0x88] sm:$0xff]
    %v6317 = vld [vmem:[#allocation7 + $0x90] sm:$0xff]
    %v6318 = vld [vmem:[#allocation7 + $0x98] sm:$0xff]
    %v6319 = vld [vmem:[#allocation7 + $0xa0] sm:$0xff]
    %v6320 = vld [vmem:[#allocation7 + $0xa8] sm:$0xff]
    %v6321 = vld [vmem:[#allocation7 + $0xb0] sm:$0xff]
    %v6322 = vld [vmem:[#allocation7 + $0xb8] sm:$0xff]
    %v6323 = vld [vmem:[#allocation7 + $0xc0] sm:$0xff]
    %v6324 = vld [vmem:[#allocation7 + $0xc8] sm:$0xff]
    %v6325 = vld [vmem:[#allocation7 + $0xd0] sm:$0xff]
    %v6326 = vld [vmem:[#allocation7 + $0xd8] sm:$0xff]
    %v6327 = vld [vmem:[#allocation7 + $0xe0] sm:$0xff]
    %v6328 = vld [vmem:[#allocation7 + $0xe8] sm:$0xff]
    %v6329 = vld [vmem:[#allocation7 + $0xf0] sm:$0xff]
    %v6330 = vld [vmem:[#allocation7 + $0xf8] sm:$0xff]
    %v6331 = vld [vmem:[#allocation7 + $0x100] sm:$0xff]
    %v6332 = vld [vmem:[#allocation7 + $0x108] sm:$0xff]
    %v6333 = vld [vmem:[#allocation7 + $0x110] sm:$0xff]
    %v6334 = vld [vmem:[#allocation7 + $0x118] sm:$0xff]
    %v6335 = vld [vmem:[#allocation7 + $0x120] sm:$0xff]
    %v6336 = vld [vmem:[#allocation7 + $0x128] sm:$0xff]
    %v6337 = vld [vmem:[#allocation7 + $0x130] sm:$0xff]
    %v6338 = vld [vmem:[#allocation7 + $0x138] sm:$0xff]
    %v6339 = vld [vmem:[#allocation7 + $0x140] sm:$0xff]
    %v6340 = vld [vmem:[#allocation7 + $0x148] sm:$0xff]
    %v6341 = vld [vmem:[#allocation7 + $0x150] sm:$0xff]
    %v6342 = vld [vmem:[#allocation7 + $0x158] sm:$0xff]
    %v6343 = vld [vmem:[#allocation7 + $0x160] sm:$0xff]
    %v6344 = vld [vmem:[#allocation7 + $0x168] sm:$0xff]
    %v6345 = vld [vmem:[#allocation7 + $0x170] sm:$0xff]
    %v6346 = vld [vmem:[#allocation7 + $0x178] sm:$0xff]
    %v6347 = vld [vmem:[#allocation7 + $0x180] sm:$0xff]
    %v6348 = vld [vmem:[#allocation7 + $0x188] sm:$0xff]
    %v6349 = vld [vmem:[#allocation7 + $0x190] sm:$0xff]
    %v6350 = vld [vmem:[#allocation7 + $0x198] sm:$0xff]
    %v6351 = vld [vmem:[#allocation7 + $0x1a0] sm:$0xff]
    %v6352 = vld [vmem:[#allocation7 + $0x1a8] sm:$0xff]
    %v6353 = vld [vmem:[#allocation7 + $0x1b0] sm:$0xff]
    %v6354 = vld [vmem:[#allocation7 + $0x1b8] sm:$0xff]
    %v6355 = vld [vmem:[#allocation7 + $0x1c0] sm:$0xff]
    %v6356 = vld [vmem:[#allocation7 + $0x1c8] sm:$0xff]
    %v6357 = vld [vmem:[#allocation7 + $0x1d0] sm:$0xff]
    %v6358 = vld [vmem:[#allocation7 + $0x1d8] sm:$0xff]
    %v6359 = vld [vmem:[#allocation7 + $0x1e0] sm:$0xff]
    %v6360 = vld [vmem:[#allocation7 + $0x1e8] sm:$0xff]
    %v6361 = vld [vmem:[#allocation7 + $0x1f0] sm:$0xff]
    %v6362 = vld [vmem:[#allocation7 + $0x1f8] sm:$0xff]
    %v6363 = vld [vmem:[#allocation9] sm:$0xff]
    %v6364 = vld [vmem:[#allocation9 + $0x8] sm:$0xff]
    %v6365 = vld [vmem:[#allocation9 + $0x10] sm:$0xff]
    %v6366 = vld [vmem:[#allocation9 + $0x18] sm:$0xff]
    %v6367 = vld [vmem:[#allocation9 + $0x20] sm:$0xff]
    %v6368 = vld [vmem:[#allocation9 + $0x28] sm:$0xff]
    %v6369 = vld [vmem:[#allocation9 + $0x30] sm:$0xff]
    %v6370 = vld [vmem:[#allocation9 + $0x38] sm:$0xff]
    %v6371 = vld [vmem:[#allocation9 + $0x40] sm:$0xff]
    %v6372 = vld [vmem:[#allocation9 + $0x48] sm:$0xff]
    %v6373 = vld [vmem:[#allocation9 + $0x50] sm:$0xff]
    %v6374 = vld [vmem:[#allocation9 + $0x58] sm:$0xff]
    %v6375 = vld [vmem:[#allocation9 + $0x60] sm:$0xff]
    %v6376 = vld [vmem:[#allocation9 + $0x68] sm:$0xff]
    %v6377 = vld [vmem:[#allocation9 + $0x70] sm:$0xff]
    %v6378 = vld [vmem:[#allocation9 + $0x78] sm:$0xff]
    %v6379 = vld [vmem:[#allocation9 + $0x80] sm:$0xff]
    %v6380 = vld [vmem:[#allocation9 + $0x88] sm:$0xff]
    %v6381 = vld [vmem:[#allocation9 + $0x90] sm:$0xff]
    %v6382 = vld [vmem:[#allocation9 + $0x98] sm:$0xff]
    %v6383 = vld [vmem:[#allocation9 + $0xa0] sm:$0xff]
    %v6384 = vld [vmem:[#allocation9 + $0xa8] sm:$0xff]
    %v6385 = vld [vmem:[#allocation9 + $0xb0] sm:$0xff]
    %v6386 = vld [vmem:[#allocation9 + $0xb8] sm:$0xff]
    %v6387 = vld [vmem:[#allocation9 + $0xc0] sm:$0xff]
    %v6388 = vld [vmem:[#allocation9 + $0xc8] sm:$0xff]
    %v6389 = vld [vmem:[#allocation9 + $0xd0] sm:$0xff]
    %v6390 = vld [vmem:[#allocation9 + $0xd8] sm:$0xff]
    %v6391 = vld [vmem:[#allocation9 + $0xe0] sm:$0xff]
    %v6392 = vld [vmem:[#allocation9 + $0xe8] sm:$0xff]
    %v6393 = vld [vmem:[#allocation9 + $0xf0] sm:$0xff]
    %v6394 = vld [vmem:[#allocation9 + $0xf8] sm:$0xff]
    %v6395 = vld [vmem:[#allocation9 + $0x100] sm:$0xff]
    %v6396 = vld [vmem:[#allocation9 + $0x108] sm:$0xff]
    %v6397 = vld [vmem:[#allocation9 + $0x110] sm:$0xff]
    %v6398 = vld [vmem:[#allocation9 + $0x118] sm:$0xff]
    %v6399 = vld [vmem:[#allocation9 + $0x120] sm:$0xff]
    %v6400 = vld [vmem:[#allocation9 + $0x128] sm:$0xff]
    %v6401 = vld [vmem:[#allocation9 + $0x130] sm:$0xff]
    %v6402 = vld [vmem:[#allocation9 + $0x138] sm:$0xff]
    %v6403 = vld [vmem:[#allocation9 + $0x140] sm:$0xff]
    %v6404 = vld [vmem:[#allocation9 + $0x148] sm:$0xff]
    %v6405 = vld [vmem:[#allocation9 + $0x150] sm:$0xff]
    %v6406 = vld [vmem:[#allocation9 + $0x158] sm:$0xff]
    %v6407 = vld [vmem:[#allocation9 + $0x160] sm:$0xff]
    %v6408 = vld [vmem:[#allocation9 + $0x168] sm:$0xff]
    %v6409 = vld [vmem:[#allocation9 + $0x170] sm:$0xff]
    %v6410 = vld [vmem:[#allocation9 + $0x178] sm:$0xff]
    %v6411 = vld [vmem:[#allocation9 + $0x180] sm:$0xff]
    %v6412 = vld [vmem:[#allocation9 + $0x188] sm:$0xff]
    %v6413 = vld [vmem:[#allocation9 + $0x190] sm:$0xff]
    %v6414 = vld [vmem:[#allocation9 + $0x198] sm:$0xff]
    %v6415 = vld [vmem:[#allocation9 + $0x1a0] sm:$0xff]
    %v6416 = vld [vmem:[#allocation9 + $0x1a8] sm:$0xff]
    %v6417 = vld [vmem:[#allocation9 + $0x1b0] sm:$0xff]
    %v6418 = vld [vmem:[#allocation9 + $0x1b8] sm:$0xff]
    %v6419 = vld [vmem:[#allocation9 + $0x1c0] sm:$0xff]
    %v6420 = vld [vmem:[#allocation9 + $0x1c8] sm:$0xff]
    %v6421 = vld [vmem:[#allocation9 + $0x1d0] sm:$0xff]
    %v6422 = vld [vmem:[#allocation9 + $0x1d8] sm:$0xff]
    %v6423 = vld [vmem:[#allocation9 + $0x1e0] sm:$0xff]
    %v6424 = vld [vmem:[#allocation9 + $0x1e8] sm:$0xff]
    %v6425 = vld [vmem:[#allocation9 + $0x1f0] sm:$0xff]
    %v6426 = vld [vmem:[#allocation9 + $0x1f8] sm:$0xff]
    %6427 = vmatprep.subr.mxu0 %v6364
    %6428 = vmatpush1.msra.mxu0 %v6363
    %6429 = vmatprep.subr.mxu0 %v6368
    %6430 = vmatpush1.msra.mxu0 %v6367
    %6431 = vmatprep.subr.mxu0 %v6372
    %6432 = vmatpush1.msra.mxu0 %v6371
    %6433 = vmatprep.subr.mxu0 %v6376
    %6434 = vmatpush1.msra.mxu0 %v6375
    %6435 = vmatprep.subr.mxu0 %v6380
    %6436 = vmatpush1.msra.mxu0 %v6379
    %6437 = vmatprep.subr.mxu0 %v6384
    %6438 = vmatpush1.msra.mxu0 %v6383
    %6439 = vmatprep.subr.mxu0 %v6388
    %6440 = vmatpush1.msra.mxu0 %v6387
    %6441 = vmatprep.subr.mxu0 %v6392
    %6442 = vmatpush1.msra.mxu0 %v6391
    %6443 = vmatprep.subr.mxu0 %v6396
    %6444 = vmatpush1.msra.mxu0 %v6395
    %6445 = vmatprep.subr.mxu0 %v6400
    %6446 = vmatpush1.msra.mxu0 %v6399
    %6447 = vmatprep.subr.mxu0 %v6404
    %6448 = vmatpush1.msra.mxu0 %v6403
    %6449 = vmatprep.subr.mxu0 %v6408
    %6450 = vmatpush1.msra.mxu0 %v6407
    %6451 = vmatprep.subr.mxu0 %v6412
    %6452 = vmatpush1.msra.mxu0 %v6411
    %6453 = vmatprep.subr.mxu0 %v6416
    %6454 = vmatpush1.msra.mxu0 %v6415
    %6455 = vmatprep.subr.mxu0 %v6420
    %6456 = vmatpush1.msra.mxu0 %v6419
    %6457 = vmatprep.subr.mxu0 %v6424
    %6458 = vmatpush1.msra.mxu0 %v6423
    %6459 = vmatprep.subr.mxu0 0.0
    %6460 = vmatpush1.msra.mxu0 0.0
    %6461 = vmatprep.subr.mxu0 0.0
    %6462 = vmatpush1.msra.mxu0 0.0
    %6463 = vmatprep.subr.mxu0 0.0
    %6464 = vmatpush1.msra.mxu0 0.0
    %6465 = vmatprep.subr.mxu0 0.0
    %6466 = vmatpush1.msra.mxu0 0.0
    %6467 = vmatprep.subr.mxu0 0.0
    %6468 = vmatpush1.msra.mxu0 0.0
    %6469 = vmatprep.subr.mxu0 0.0
    %6470 = vmatpush1.msra.mxu0 0.0
    %6471 = vmatprep.subr.mxu0 0.0
    %6472 = vmatpush1.msra.mxu0 0.0
    %6473 = vmatprep.subr.mxu0 0.0
    %6474 = vmatpush1.msra.mxu0 0.0
    %6475 = vmatprep.subr.mxu0 0.0
    %6476 = vmatpush1.msra.mxu0 0.0
    %6477 = vmatprep.subr.mxu0 0.0
    %6478 = vmatpush1.msra.mxu0 0.0
    %6479 = vmatprep.subr.mxu0 0.0
    %6480 = vmatpush1.msra.mxu0 0.0
    %6481 = vmatprep.subr.mxu0 0.0
    %6482 = vmatpush1.msra.mxu0 0.0
    %6483 = vmatprep.subr.mxu0 0.0
    %6484 = vmatpush1.msra.mxu0 0.0
    %6485 = vmatprep.subr.mxu0 0.0
    %6486 = vmatpush1.msra.mxu0 0.0
    %6487 = vmatprep.subr.mxu0 0.0
    %6488 = vmatpush1.msra.mxu0 0.0
    %6489 = vmatprep.subr.mxu0 0.0
    %6490 = vmatpush1.msra.mxu0 0.0
    %6491 = vmatprep.mubr.f32.mxu0 0.0
    %6492 = vmatmul.mubr.f32.gmra.mrb[0].mxu0 %v5830
    %v6493 = vpop.f32.mrb[0].mxu0
    %v6494 = vadd.f32 0.0, %v6493
    %v6495 = vpop.f32.mrb[0].mxu0
    %v6496 = vadd.f32 0.0, %v6495
    %6497 = vdwg.mxu0
    %6498 = vmatprep.subr.mxu0 %v6366
    %6499 = vmatpush1.msra.mxu0 %v6365
    %6500 = vmatprep.subr.mxu0 %v6370
    %6501 = vmatpush1.msra.mxu0 %v6369
    %6502 = vmatprep.subr.mxu0 %v6374
    %6503 = vmatpush1.msra.mxu0 %v6373
    %6504 = vmatprep.subr.mxu0 %v6378
    %6505 = vmatpush1.msra.mxu0 %v6377
    %6506 = vmatprep.subr.mxu0 %v6382
    %6507 = vmatpush1.msra.mxu0 %v6381
    %6508 = vmatprep.subr.mxu0 %v6386
    %6509 = vmatpush1.msra.mxu0 %v6385
    %6510 = vmatprep.subr.mxu0 %v6390
    %6511 = vmatpush1.msra.mxu0 %v6389
    %6512 = vmatprep.subr.mxu0 %v6394
    %6513 = vmatpush1.msra.mxu0 %v6393
    %6514 = vmatprep.subr.mxu0 %v6398
    %6515 = vmatpush1.msra.mxu0 %v6397
    %6516 = vmatprep.subr.mxu0 %v6402
    %6517 = vmatpush1.msra.mxu0 %v6401
    %6518 = vmatprep.subr.mxu0 %v6406
    %6519 = vmatpush1.msra.mxu0 %v6405
    %6520 = vmatprep.subr.mxu0 %v6410
    %6521 = vmatpush1.msra.mxu0 %v6409
    %6522 = vmatprep.subr.mxu0 %v6414
    %6523 = vmatpush1.msra.mxu0 %v6413
    %6524 = vmatprep.subr.mxu0 %v6418
    %6525 = vmatpush1.msra.mxu0 %v6417
    %6526 = vmatprep.subr.mxu0 %v6422
    %6527 = vmatpush1.msra.mxu0 %v6421
    %6528 = vmatprep.subr.mxu0 %v6426
    %6529 = vmatpush1.msra.mxu0 %v6425
    %6530 = vmatprep.subr.mxu0 0.0
    %6531 = vmatpush1.msra.mxu0 0.0
    %6532 = vmatprep.subr.mxu0 0.0
    %6533 = vmatpush1.msra.mxu0 0.0
    %6534 = vmatprep.subr.mxu0 0.0
    %6535 = vmatpush1.msra.mxu0 0.0
    %6536 = vmatprep.subr.mxu0 0.0
    %6537 = vmatpush1.msra.mxu0 0.0
    %6538 = vmatprep.subr.mxu0 0.0
    %6539 = vmatpush1.msra.mxu0 0.0
    %6540 = vmatprep.subr.mxu0 0.0
    %6541 = vmatpush1.msra.mxu0 0.0
    %6542 = vmatprep.subr.mxu0 0.0
    %6543 = vmatpush1.msra.mxu0 0.0
    %6544 = vmatprep.subr.mxu0 0.0
    %6545 = vmatpush1.msra.mxu0 0.0
    %6546 = vmatprep.subr.mxu0 0.0
    %6547 = vmatpush1.msra.mxu0 0.0
    %6548 = vmatprep.subr.mxu0 0.0
    %6549 = vmatpush1.msra.mxu0 0.0
    %6550 = vmatprep.subr.mxu0 0.0
    %6551 = vmatpush1.msra.mxu0 0.0
    %6552 = vmatprep.subr.mxu0 0.0
    %6553 = vmatpush1.msra.mxu0 0.0
    %6554 = vmatprep.subr.mxu0 0.0
    %6555 = vmatpush1.msra.mxu0 0.0
    %6556 = vmatprep.subr.mxu0 0.0
    %6557 = vmatpush1.msra.mxu0 0.0
    %6558 = vmatprep.subr.mxu0 0.0
    %6559 = vmatpush1.msra.mxu0 0.0
    %6560 = vmatprep.subr.mxu0 0.0
    %6561 = vmatpush1.msra.mxu0 0.0
    %6562 = vmatprep.mubr.f32.mxu0 0.0
    %6563 = vmatmul.mubr.f32.gmra.mrb[0].mxu0 %v5830
    %v6564 = vpop.f32.mrb[0].mxu0
    %v6565 = vadd.f32 0.0, %v6564
    %v6566 = vpop.f32.mrb[0].mxu0
    %v6567 = vadd.f32 0.0, %v6566
    %6568 = vdwg.mxu0
    %6569 = vmatprep.subr.mxu0 %v6300
    %6570 = vmatpush1.msra.mxu0 %v6299
    %6571 = vmatprep.subr.mxu0 %v6304
    %6572 = vmatpush1.msra.mxu0 %v6303
    %6573 = vmatprep.subr.mxu0 %v6308
    %6574 = vmatpush1.msra.mxu0 %v6307
    %6575 = vmatprep.subr.mxu0 %v6312
    %6576 = vmatpush1.msra.mxu0 %v6311
    %6577 = vmatprep.subr.mxu0 %v6316
    %6578 = vmatpush1.msra.mxu0 %v6315
    %6579 = vmatprep.subr.mxu0 %v6320
    %6580 = vmatpush1.msra.mxu0 %v6319
    %6581 = vmatprep.subr.mxu0 %v6324
    %6582 = vmatpush1.msra.mxu0 %v6323
    %6583 = vmatprep.subr.mxu0 %v6328
    %6584 = vmatpush1.msra.mxu0 %v6327
    %6585 = vmatprep.subr.mxu0 %v6332
    %6586 = vmatpush1.msra.mxu0 %v6331
    %6587 = vmatprep.subr.mxu0 %v6336
    %6588 = vmatpush1.msra.mxu0 %v6335
    %6589 = vmatprep.subr.mxu0 %v6340
    %6590 = vmatpush1.msra.mxu0 %v6339
    %6591 = vmatprep.subr.mxu0 %v6344
    %6592 = vmatpush1.msra.mxu0 %v6343
    %6593 = vmatprep.subr.mxu0 %v6348
    %6594 = vmatpush1.msra.mxu0 %v6347
    %6595 = vmatprep.subr.mxu0 %v6352
    %6596 = vmatpush1.msra.mxu0 %v6351
    %6597 = vmatprep.subr.mxu0 %v6356
    %6598 = vmatpush1.msra.mxu0 %v6355
    %6599 = vmatprep.subr.mxu0 %v6360
    %6600 = vmatpush1.msra.mxu0 %v6359
    %6601 = vmatprep.subr.mxu0 0.0
    %6602 = vmatpush1.msra.mxu0 0.0
    %6603 = vmatprep.subr.mxu0 0.0
    %6604 = vmatpush1.msra.mxu0 0.0
    %6605 = vmatprep.subr.mxu0 0.0
    %6606 = vmatpush1.msra.mxu0 0.0
    %6607 = vmatprep.subr.mxu0 0.0
    %6608 = vmatpush1.msra.mxu0 0.0
    %6609 = vmatprep.subr.mxu0 0.0
    %6610 = vmatpush1.msra.mxu0 0.0
    %6611 = vmatprep.subr.mxu0 0.0
    %6612 = vmatpush1.msra.mxu0 0.0
    %6613 = vmatprep.subr.mxu0 0.0
    %6614 = vmatpush1.msra.mxu0 0.0
    %6615 = vmatprep.subr.mxu0 0.0
    %6616 = vmatpush1.msra.mxu0 0.0
    %6617 = vmatprep.subr.mxu0 0.0
    %6618 = vmatpush1.msra.mxu0 0.0
    %6619 = vmatprep.subr.mxu0 0.0
    %6620 = vmatpush1.msra.mxu0 0.0
    %6621 = vmatprep.subr.mxu0 0.0
    %6622 = vmatpush1.msra.mxu0 0.0
    %6623 = vmatprep.subr.mxu0 0.0
    %6624 = vmatpush1.msra.mxu0 0.0
    %6625 = vmatprep.subr.mxu0 0.0
    %6626 = vmatpush1.msra.mxu0 0.0
    %6627 = vmatprep.subr.mxu0 0.0
    %6628 = vmatpush1.msra.mxu0 0.0
    %6629 = vmatprep.subr.mxu0 0.0
    %6630 = vmatpush1.msra.mxu0 0.0
    %6631 = vmatprep.subr.mxu0 0.0
    %6632 = vmatpush1.msra.mxu0 0.0
    %6633 = vmatprep.mubr.f32.mxu0 0.0
    %6634 = vmatmul.mubr.f32.gmra.mrb[0].mxu0 %v6298
    %v6635 = vpop.f32.mrb[0].mxu0
    %v6636 = vadd.f32 %v6494, %v6635
    %v6637 = vpop.f32.mrb[0].mxu0
    %v6638 = vadd.f32 %v6496, %v6637
    %6639 = vdwg.mxu0
    %6640 = vmatprep.subr.mxu0 %v6302
    %6641 = vmatpush1.msra.mxu0 %v6301
    %6642 = vmatprep.subr.mxu0 %v6306
    %6643 = vmatpush1.msra.mxu0 %v6305
    %6644 = vmatprep.subr.mxu0 %v6310
    %6645 = vmatpush1.msra.mxu0 %v6309
    %6646 = vmatprep.subr.mxu0 %v6314
    %6647 = vmatpush1.msra.mxu0 %v6313
    %6648 = vmatprep.subr.mxu0 %v6318
    %6649 = vmatpush1.msra.mxu0 %v6317
    %6650 = vmatprep.subr.mxu0 %v6322
    %6651 = vmatpush1.msra.mxu0 %v6321
    %6652 = vmatprep.subr.mxu0 %v6326
    %6653 = vmatpush1.msra.mxu0 %v6325
    %6654 = vmatprep.subr.mxu0 %v6330
    %6655 = vmatpush1.msra.mxu0 %v6329
    %6656 = vmatprep.subr.mxu0 %v6334
    %6657 = vmatpush1.msra.mxu0 %v6333
    %6658 = vmatprep.subr.mxu0 %v6338
    %6659 = vmatpush1.msra.mxu0 %v6337
    %6660 = vmatprep.subr.mxu0 %v6342
    %6661 = vmatpush1.msra.mxu0 %v6341
    %6662 = vmatprep.subr.mxu0 %v6346
    %6663 = vmatpush1.msra.mxu0 %v6345
    %6664 = vmatprep.subr.mxu0 %v6350
    %6665 = vmatpush1.msra.mxu0 %v6349
    %6666 = vmatprep.subr.mxu0 %v6354
    %6667 = vmatpush1.msra.mxu0 %v6353
    %6668 = vmatprep.subr.mxu0 %v6358
    %6669 = vmatpush1.msra.mxu0 %v6357
    %6670 = vmatprep.subr.mxu0 %v6362
    %6671 = vmatpush1.msra.mxu0 %v6361
    %6672 = vmatprep.subr.mxu0 0.0
    %6673 = vmatpush1.msra.mxu0 0.0
    %6674 = vmatprep.subr.mxu0 0.0
    %6675 = vmatpush1.msra.mxu0 0.0
    %6676 = vmatprep.subr.mxu0 0.0
    %6677 = vmatpush1.msra.mxu0 0.0
    %6678 = vmatprep.subr.mxu0 0.0
    %6679 = vmatpush1.msra.mxu0 0.0
    %6680 = vmatprep.subr.mxu0 0.0
    %6681 = vmatpush1.msra.mxu0 0.0
    %6682 = vmatprep.subr.mxu0 0.0
    %6683 = vmatpush1.msra.mxu0 0.0
    %6684 = vmatprep.subr.mxu0 0.0
    %6685 = vmatpush1.msra.mxu0 0.0
    %6686 = vmatprep.subr.mxu0 0.0
    %6687 = vmatpush1.msra.mxu0 0.0
    %6688 = vmatprep.subr.mxu0 0.0
    %6689 = vmatpush1.msra.mxu0 0.0
    %6690 = vmatprep.subr.mxu0 0.0
    %6691 = vmatpush1.msra.mxu0 0.0
    %6692 = vmatprep.subr.mxu0 0.0
    %6693 = vmatpush1.msra.mxu0 0.0
    %6694 = vmatprep.subr.mxu0 0.0
    %6695 = vmatpush1.msra.mxu0 0.0
    %6696 = vmatprep.subr.mxu0 0.0
    %6697 = vmatpush1.msra.mxu0 0.0
    %6698 = vmatprep.subr.mxu0 0.0
    %6699 = vmatpush1.msra.mxu0 0.0
    %6700 = vmatprep.subr.mxu0 0.0
    %6701 = vmatpush1.msra.mxu0 0.0
    %6702 = vmatprep.subr.mxu0 0.0
    %6703 = vmatpush1.msra.mxu0 0.0
    %6704 = vmatprep.mubr.f32.mxu0 0.0
    %6705 = vmatmul.mubr.f32.gmra.mrb[0].mxu0 %v6298
    %v6706 = vpop.f32.mrb[0].mxu0
    %v6707 = vadd.f32 %v6565, %v6706
    %v6708 = vpop.f32.mrb[0].mxu0
    %v6709 = vadd.f32 %v6567, %v6708
    %6710 = vdwg.mxu0
    %v6711 = vadd.f32 %v6636, %v100
    %v6712 = vadd.f32 %v6638, %v104
    %v6713 = vadd.f32 %v6707, %v108
    %v6714 = vadd.f32 %v6709, %v112
    %v6715 = vxor.u32 %v6711, 2147483648
    %v6716 = vxor.u32 %v6712, 2147483648
    %v6717 = vxor.u32 %v6713, 2147483648
    %v6718 = vmul.f32 %v6715, 1.442695
    %v6719 = vpow.pop %v6718
    %v6720 = vmul.f32 %v6716, 1.442695
    %v6721 = vpow.pop %v6720
    %v6722 = vmul.f32 %v6717, 1.442695
    %v6723 = vpow.pop %v6722
    %v6724 = vadd.f32 %v6719, 1.0
    %v6725 = vadd.f32 %v6721, 1.0
    %v6726 = vadd.f32 %v6723, 1.0
    %v6727 = vrcp.pop %v6724
    %v6728 = vmul.f32 1.0, %v6727
    %v6729 = vrcp.pop %v6725
    %v6730 = vmul.f32 1.0, %v6729
    %v6731 = vrcp.pop %v6726
    %v6732 = vmul.f32 1.0, %v6731
    %v6733 = vtanh.pop %v6714
    %v6734 = vmul.f32 %v6730, %v5828
    %v6735 = vmul.f32 %v6728, %v6733
    %v6736 = vadd.f32 %v6734, %v6735
    %v6737 = vtanh.pop %v6736
    %v6738 = vmul.f32 %v6732, %v6737
    %s6739 = scalar_lea.vmem [#allocation3], 32
    %6740 = vst [vmem:[%s6739] sm:$0xf] %v6738
    %v6741 = vld [vmem:[#allocation10] sm:$0xff]
    %v6742 = vld [vmem:[#allocation10 + $0x8] sm:$0xff]
    %v6743 = vld [vmem:[#allocation10 + $0x10] sm:$0xff]
    %v6744 = vld [vmem:[#allocation10 + $0x18] sm:$0xff]
    %v6745 = vld [vmem:[#allocation10 + $0x20] sm:$0xff]
    %v6746 = vld [vmem:[#allocation10 + $0x28] sm:$0xff]
    %v6747 = vld [vmem:[#allocation10 + $0x30] sm:$0xff]
    %v6748 = vld [vmem:[#allocation10 + $0x38] sm:$0xff]
    %v6749 = vld [vmem:[#allocation10 + $0x40] sm:$0xff]
    %v6750 = vld [vmem:[#allocation10 + $0x48] sm:$0xff]
    %v6751 = vld [vmem:[#allocation10 + $0x50] sm:$0xff]
    %v6752 = vld [vmem:[#allocation10 + $0x58] sm:$0xff]
    %v6753 = vld [vmem:[#allocation10 + $0x60] sm:$0xff]
    %v6754 = vld [vmem:[#allocation10 + $0x68] sm:$0xff]
    %v6755 = vld [vmem:[#allocation10 + $0x70] sm:$0xff]
    %v6756 = vld [vmem:[#allocation10 + $0x78] sm:$0xff]
    %v6757 = vld [vmem:[#allocation10 + $0x80] sm:$0xff]
    %v6758 = vld [vmem:[#allocation10 + $0x88] sm:$0xff]
    %v6759 = vld [vmem:[#allocation10 + $0x90] sm:$0xff]
    %v6760 = vld [vmem:[#allocation10 + $0x98] sm:$0xff]
    %v6761 = vld [vmem:[#allocation10 + $0xa0] sm:$0xff]
    %v6762 = vld [vmem:[#allocation10 + $0xa8] sm:$0xff]
    %v6763 = vld [vmem:[#allocation10 + $0xb0] sm:$0xff]
    %v6764 = vld [vmem:[#allocation10 + $0xb8] sm:$0xff]
    %v6765 = vld [vmem:[#allocation10 + $0xc0] sm:$0xff]
    %v6766 = vld [vmem:[#allocation10 + $0xc8] sm:$0xff]
    %v6767 = vld [vmem:[#allocation10 + $0xd0] sm:$0xff]
    %v6768 = vld [vmem:[#allocation10 + $0xd8] sm:$0xff]
    %v6769 = vld [vmem:[#allocation10 + $0xe0] sm:$0xff]
    %v6770 = vld [vmem:[#allocation10 + $0xe8] sm:$0xff]
    %v6771 = vld [vmem:[#allocation10 + $0xf0] sm:$0xff]
    %v6772 = vld [vmem:[#allocation10 + $0xf8] sm:$0xff]
    %v6773 = vld [vmem:[#allocation10 + $0x100] sm:$0xff]
    %v6774 = vld [vmem:[#allocation10 + $0x108] sm:$0xff]
    %v6775 = vld [vmem:[#allocation10 + $0x110] sm:$0xff]
    %v6776 = vld [vmem:[#allocation10 + $0x118] sm:$0xff]
    %v6777 = vld [vmem:[#allocation10 + $0x120] sm:$0xff]
    %v6778 = vld [vmem:[#allocation10 + $0x128] sm:$0xff]
    %v6779 = vld [vmem:[#allocation10 + $0x130] sm:$0xff]
    %v6780 = vld [vmem:[#allocation10 + $0x138] sm:$0xff]
    %v6781 = vld [vmem:[#allocation10 + $0x140] sm:$0xff]
    %v6782 = vld [vmem:[#allocation10 + $0x148] sm:$0xff]
    %v6783 = vld [vmem:[#allocation10 + $0x150] sm:$0xff]
    %v6784 = vld [vmem:[#allocation10 + $0x158] sm:$0xff]
    %v6785 = vld [vmem:[#allocation10 + $0x160] sm:$0xff]
    %v6786 = vld [vmem:[#allocation10 + $0x168] sm:$0xff]
    %v6787 = vld [vmem:[#allocation10 + $0x170] sm:$0xff]
    %v6788 = vld [vmem:[#allocation10 + $0x178] sm:$0xff]
    %v6789 = vld [vmem:[#allocation10 + $0x180] sm:$0xff]
    %v6790 = vld [vmem:[#allocation10 + $0x188] sm:$0xff]
    %v6791 = vld [vmem:[#allocation10 + $0x190] sm:$0xff]
    %v6792 = vld [vmem:[#allocation10 + $0x198] sm:$0xff]
    %v6793 = vld [vmem:[#allocation10 + $0x1a0] sm:$0xff]
    %v6794 = vld [vmem:[#allocation10 + $0x1a8] sm:$0xff]
    %v6795 = vld [vmem:[#allocation10 + $0x1b0] sm:$0xff]
    %v6796 = vld [vmem:[#allocation10 + $0x1b8] sm:$0xff]
    %v6797 = vld [vmem:[#allocation10 + $0x1c0] sm:$0xff]
    %v6798 = vld [vmem:[#allocation10 + $0x1c8] sm:$0xff]
    %v6799 = vld [vmem:[#allocation10 + $0x1d0] sm:$0xff]
    %v6800 = vld [vmem:[#allocation10 + $0x1d8] sm:$0xff]
    %v6801 = vld [vmem:[#allocation10 + $0x1e0] sm:$0xff]
    %v6802 = vld [vmem:[#allocation10 + $0x1e8] sm:$0xff]
    %v6803 = vld [vmem:[#allocation10 + $0x1f0] sm:$0xff]
    %v6804 = vld [vmem:[#allocation10 + $0x1f8] sm:$0xff]
    %6805 = vmatprep.subr.mxu0 %v6742
    %6806 = vmatpush1.msra.mxu0 %v6741
    %6807 = vmatprep.subr.mxu0 %v6746
    %6808 = vmatpush1.msra.mxu0 %v6745
    %6809 = vmatprep.subr.mxu0 %v6750
    %6810 = vmatpush1.msra.mxu0 %v6749
    %6811 = vmatprep.subr.mxu0 %v6754
    %6812 = vmatpush1.msra.mxu0 %v6753
    %6813 = vmatprep.subr.mxu0 %v6758
    %6814 = vmatpush1.msra.mxu0 %v6757
    %6815 = vmatprep.subr.mxu0 %v6762
    %6816 = vmatpush1.msra.mxu0 %v6761
    %6817 = vmatprep.subr.mxu0 %v6766
    %6818 = vmatpush1.msra.mxu0 %v6765
    %6819 = vmatprep.subr.mxu0 %v6770
    %6820 = vmatpush1.msra.mxu0 %v6769
    %6821 = vmatprep.subr.mxu0 %v6774
    %6822 = vmatpush1.msra.mxu0 %v6773
    %6823 = vmatprep.subr.mxu0 %v6778
    %6824 = vmatpush1.msra.mxu0 %v6777
    %6825 = vmatprep.subr.mxu0 %v6782
    %6826 = vmatpush1.msra.mxu0 %v6781
    %6827 = vmatprep.subr.mxu0 %v6786
    %6828 = vmatpush1.msra.mxu0 %v6785
    %6829 = vmatprep.subr.mxu0 %v6790
    %6830 = vmatpush1.msra.mxu0 %v6789
    %6831 = vmatprep.subr.mxu0 %v6794
    %6832 = vmatpush1.msra.mxu0 %v6793
    %6833 = vmatprep.subr.mxu0 %v6798
    %6834 = vmatpush1.msra.mxu0 %v6797
    %6835 = vmatprep.subr.mxu0 %v6802
    %6836 = vmatpush1.msra.mxu0 %v6801
    %6837 = vmatprep.subr.mxu0 0.0
    %6838 = vmatpush1.msra.mxu0 0.0
    %6839 = vmatprep.subr.mxu0 0.0
    %6840 = vmatpush1.msra.mxu0 0.0
    %6841 = vmatprep.subr.mxu0 0.0
    %6842 = vmatpush1.msra.mxu0 0.0
    %6843 = vmatprep.subr.mxu0 0.0
    %6844 = vmatpush1.msra.mxu0 0.0
    %6845 = vmatprep.subr.mxu0 0.0
    %6846 = vmatpush1.msra.mxu0 0.0
    %6847 = vmatprep.subr.mxu0 0.0
    %6848 = vmatpush1.msra.mxu0 0.0
    %6849 = vmatprep.subr.mxu0 0.0
    %6850 = vmatpush1.msra.mxu0 0.0
    %6851 = vmatprep.subr.mxu0 0.0
    %6852 = vmatpush1.msra.mxu0 0.0
    %6853 = vmatprep.subr.mxu0 0.0
    %6854 = vmatpush1.msra.mxu0 0.0
    %6855 = vmatprep.subr.mxu0 0.0
    %6856 = vmatpush1.msra.mxu0 0.0
    %6857 = vmatprep.subr.mxu0 0.0
    %6858 = vmatpush1.msra.mxu0 0.0
    %6859 = vmatprep.subr.mxu0 0.0
    %6860 = vmatpush1.msra.mxu0 0.0
    %6861 = vmatprep.subr.mxu0 0.0
    %6862 = vmatpush1.msra.mxu0 0.0
    %6863 = vmatprep.subr.mxu0 0.0
    %6864 = vmatpush1.msra.mxu0 0.0
    %6865 = vmatprep.subr.mxu0 0.0
    %6866 = vmatpush1.msra.mxu0 0.0
    %6867 = vmatprep.subr.mxu0 0.0
    %6868 = vmatpush1.msra.mxu0 0.0
    %6869 = vmatprep.mubr.f32.mxu0 0.0
    %6870 = vmatmul.mubr.f32.gmra.mrb[0].mxu0 %v6738
    %v6871 = vpop.f32.mrb[0].mxu0
    %v6872 = vadd.f32 0.0, %v6871
    %v6873 = vpop.f32.mrb[0].mxu0
    %v6874 = vadd.f32 0.0, %v6873
    %6875 = vdwg.mxu0
    %6876 = vmatprep.subr.mxu0 %v6744
    %6877 = vmatpush1.msra.mxu0 %v6743
    %6878 = vmatprep.subr.mxu0 %v6748
    %6879 = vmatpush1.msra.mxu0 %v6747
    %6880 = vmatprep.subr.mxu0 %v6752
    %6881 = vmatpush1.msra.mxu0 %v6751
    %6882 = vmatprep.subr.mxu0 %v6756
    %6883 = vmatpush1.msra.mxu0 %v6755
    %6884 = vmatprep.subr.mxu0 %v6760
    %6885 = vmatpush1.msra.mxu0 %v6759
    %6886 = vmatprep.subr.mxu0 %v6764
    %6887 = vmatpush1.msra.mxu0 %v6763
    %6888 = vmatprep.subr.mxu0 %v6768
    %6889 = vmatpush1.msra.mxu0 %v6767
    %6890 = vmatprep.subr.mxu0 %v6772
    %6891 = vmatpush1.msra.mxu0 %v6771
    %6892 = vmatprep.subr.mxu0 %v6776
    %6893 = vmatpush1.msra.mxu0 %v6775
    %6894 = vmatprep.subr.mxu0 %v6780
    %6895 = vmatpush1.msra.mxu0 %v6779
    %6896 = vmatprep.subr.mxu0 %v6784
    %6897 = vmatpush1.msra.mxu0 %v6783
    %6898 = vmatprep.subr.mxu0 %v6788
    %6899 = vmatpush1.msra.mxu0 %v6787
    %6900 = vmatprep.subr.mxu0 %v6792
    %6901 = vmatpush1.msra.mxu0 %v6791
    %6902 = vmatprep.subr.mxu0 %v6796
    %6903 = vmatpush1.msra.mxu0 %v6795
    %6904 = vmatprep.subr.mxu0 %v6800
    %6905 = vmatpush1.msra.mxu0 %v6799
    %6906 = vmatprep.subr.mxu0 %v6804
    %6907 = vmatpush1.msra.mxu0 %v6803
    %6908 = vmatprep.subr.mxu0 0.0
    %6909 = vmatpush1.msra.mxu0 0.0
    %6910 = vmatprep.subr.mxu0 0.0
    %6911 = vmatpush1.msra.mxu0 0.0
    %6912 = vmatprep.subr.mxu0 0.0
    %6913 = vmatpush1.msra.mxu0 0.0
    %6914 = vmatprep.subr.mxu0 0.0
    %6915 = vmatpush1.msra.mxu0 0.0
    %6916 = vmatprep.subr.mxu0 0.0
    %6917 = vmatpush1.msra.mxu0 0.0
    %6918 = vmatprep.subr.mxu0 0.0
    %6919 = vmatpush1.msra.mxu0 0.0
    %6920 = vmatprep.subr.mxu0 0.0
    %6921 = vmatpush1.msra.mxu0 0.0
    %6922 = vmatprep.subr.mxu0 0.0
    %6923 = vmatpush1.msra.mxu0 0.0
    %6924 = vmatprep.subr.mxu0 0.0
    %6925 = vmatpush1.msra.mxu0 0.0
    %6926 = vmatprep.subr.mxu0 0.0
    %6927 = vmatpush1.msra.mxu0 0.0
    %6928 = vmatprep.subr.mxu0 0.0
    %6929 = vmatpush1.msra.mxu0 0.0
    %6930 = vmatprep.subr.mxu0 0.0
    %6931 = vmatpush1.msra.mxu0 0.0
    %6932 = vmatprep.subr.mxu0 0.0
    %6933 = vmatpush1.msra.mxu0 0.0
    %6934 = vmatprep.subr.mxu0 0.0
    %6935 = vmatpush1.msra.mxu0 0.0
    %6936 = vmatprep.subr.mxu0 0.0
    %6937 = vmatpush1.msra.mxu0 0.0
    %6938 = vmatprep.subr.mxu0 0.0
    %6939 = vmatpush1.msra.mxu0 0.0
    %6940 = vmatprep.mubr.f32.mxu0 0.0
    %6941 = vmatmul.mubr.f32.gmra.mrb[0].mxu0 %v6738
    %v6942 = vpop.f32.mrb[0].mxu0
    %v6943 = vadd.f32 0.0, %v6942
    %v6944 = vpop.f32.mrb[0].mxu0
    %v6945 = vadd.f32 0.0, %v6944
    %6946 = vdwg.mxu0
    %v6947 = vadd.f32 %v5838, %v6872
    %v6948 = vadd.f32 %v5842, %v6874
    %v6949 = vadd.f32 %v5846, %v6943
    %v6950 = vadd.f32 %v5850, %v6945
    %v6951 = vld [vmem:[#allocation5] sm:$0xff]
    %v6952 = vld [vmem:[#allocation5 + $0x8] sm:$0xff]
    %v6953 = vld [vmem:[#allocation5 + $0x10] sm:$0xff]
    %v6954 = vld [vmem:[#allocation5 + $0x18] sm:$0xff]
    %v6955 = vld [vmem:[#allocation5 + $0x20] sm:$0xff]
    %v6956 = vld [vmem:[#allocation5 + $0x28] sm:$0xff]
    %v6957 = vld [vmem:[#allocation5 + $0x30] sm:$0xff]
    %v6958 = vld [vmem:[#allocation5 + $0x38] sm:$0xff]
    %v6959 = vld [vmem:[#allocation5 + $0x40] sm:$0xff]
    %v6960 = vld [vmem:[#allocation5 + $0x48] sm:$0xff]
    %v6961 = vld [vmem:[#allocation5 + $0x50] sm:$0xff]
    %v6962 = vld [vmem:[#allocation5 + $0x58] sm:$0xff]
    %v6963 = vld [vmem:[#allocation5 + $0x60] sm:$0xff]
    %v6964 = vld [vmem:[#allocation5 + $0x68] sm:$0xff]
    %v6965 = vld [vmem:[#allocation5 + $0x70] sm:$0xff]
    %v6966 = vld [vmem:[#allocation5 + $0x78] sm:$0xff]
    %v6967 = vld [vmem:[#allocation5 + $0x80] sm:$0xff]
    %v6968 = vld [vmem:[#allocation5 + $0x88] sm:$0xff]
    %v6969 = vld [vmem:[#allocation5 + $0x90] sm:$0xff]
    %v6970 = vld [vmem:[#allocation5 + $0x98] sm:$0xff]
    %v6971 = vld [vmem:[#allocation5 + $0xa0] sm:$0xff]
    %v6972 = vld [vmem:[#allocation5 + $0xa8] sm:$0xff]
    %v6973 = vld [vmem:[#allocation5 + $0xb0] sm:$0xff]
    %v6974 = vld [vmem:[#allocation5 + $0xb8] sm:$0xff]
    %v6975 = vld [vmem:[#allocation5 + $0xc0] sm:$0xff]
    %v6976 = vld [vmem:[#allocation5 + $0xc8] sm:$0xff]
    %v6977 = vld [vmem:[#allocation5 + $0xd0] sm:$0xff]
    %v6978 = vld [vmem:[#allocation5 + $0xd8] sm:$0xff]
    %v6979 = vld [vmem:[#allocation5 + $0xe0] sm:$0xff]
    %v6980 = vld [vmem:[#allocation5 + $0xe8] sm:$0xff]
    %v6981 = vld [vmem:[#allocation5 + $0xf0] sm:$0xff]
    %v6982 = vld [vmem:[#allocation5 + $0xf8] sm:$0xff]
    %v6983 = vld [vmem:[#allocation5 + $0x100] sm:$0xff]
    %v6984 = vld [vmem:[#allocation5 + $0x108] sm:$0xff]
    %v6985 = vld [vmem:[#allocation5 + $0x110] sm:$0xff]
    %v6986 = vld [vmem:[#allocation5 + $0x118] sm:$0xff]
    %v6987 = vld [vmem:[#allocation5 + $0x120] sm:$0xff]
    %v6988 = vld [vmem:[#allocation5 + $0x128] sm:$0xff]
    %v6989 = vld [vmem:[#allocation5 + $0x130] sm:$0xff]
    %v6990 = vld [vmem:[#allocation5 + $0x138] sm:$0xff]
    %v6991 = vld [vmem:[#allocation5 + $0x140] sm:$0xff]
    %v6992 = vld [vmem:[#allocation5 + $0x148] sm:$0xff]
    %v6993 = vld [vmem:[#allocation5 + $0x150] sm:$0xff]
    %v6994 = vld [vmem:[#allocation5 + $0x158] sm:$0xff]
    %v6995 = vld [vmem:[#allocation5 + $0x160] sm:$0xff]
    %v6996 = vld [vmem:[#allocation5 + $0x168] sm:$0xff]
    %v6997 = vld [vmem:[#allocation5 + $0x170] sm:$0xff]
    %v6998 = vld [vmem:[#allocation5 + $0x178] sm:$0xff]
    %v6999 = vld [vmem:[#allocation5 + $0x180] sm:$0xff]
    %v7000 = vld [vmem:[#allocation5 + $0x188] sm:$0xff]
    %v7001 = vld [vmem:[#allocation5 + $0x190] sm:$0xff]
    %v7002 = vld [vmem:[#allocation5 + $0x198] sm:$0xff]
    %v7003 = vld [vmem:[#allocation5 + $0x1a0] sm:$0xff]
    %v7004 = vld [vmem:[#allocation5 + $0x1a8] sm:$0xff]
    %v7005 = vld [vmem:[#allocation5 + $0x1b0] sm:$0xff]
    %v7006 = vld [vmem:[#allocation5 + $0x1b8] sm:$0xff]
    %v7007 = vld [vmem:[#allocation5 + $0x1c0] sm:$0xff]
    %v7008 = vld [vmem:[#allocation5 + $0x1c8] sm:$0xff]
    %v7009 = vld [vmem:[#allocation5 + $0x1d0] sm:$0xff]
    %v7010 = vld [vmem:[#allocation5 + $0x1d8] sm:$0xff]
    %v7011 = vld [vmem:[#allocation5 + $0x1e0] sm:$0xff]
    %v7012 = vld [vmem:[#allocation5 + $0x1e8] sm:$0xff]
    %v7013 = vld [vmem:[#allocation5 + $0x1f0] sm:$0xff]
    %v7014 = vld [vmem:[#allocation5 + $0x1f8] sm:$0xff]
    %7015 = vmatprep.subr.mxu0 %v6952
    %7016 = vmatpush1.msra.mxu0 %v6951
    %7017 = vmatprep.subr.mxu0 %v6956
    %7018 = vmatpush1.msra.mxu0 %v6955
    %7019 = vmatprep.subr.mxu0 %v6960
    %7020 = vmatpush1.msra.mxu0 %v6959
    %7021 = vmatprep.subr.mxu0 %v6964
    %7022 = vmatpush1.msra.mxu0 %v6963
    %7023 = vmatprep.subr.mxu0 %v6968
    %7024 = vmatpush1.msra.mxu0 %v6967
    %7025 = vmatprep.subr.mxu0 %v6972
    %7026 = vmatpush1.msra.mxu0 %v6971
    %7027 = vmatprep.subr.mxu0 %v6976
    %7028 = vmatpush1.msra.mxu0 %v6975
    %7029 = vmatprep.subr.mxu0 %v6980
    %7030 = vmatpush1.msra.mxu0 %v6979
    %7031 = vmatprep.subr.mxu0 %v6984
    %7032 = vmatpush1.msra.mxu0 %v6983
    %7033 = vmatprep.subr.mxu0 %v6988
    %7034 = vmatpush1.msra.mxu0 %v6987
    %7035 = vmatprep.subr.mxu0 %v6992
    %7036 = vmatpush1.msra.mxu0 %v6991
    %7037 = vmatprep.subr.mxu0 %v6996
    %7038 = vmatpush1.msra.mxu0 %v6995
    %7039 = vmatprep.subr.mxu0 %v7000
    %7040 = vmatpush1.msra.mxu0 %v6999
    %7041 = vmatprep.subr.mxu0 %v7004
    %7042 = vmatpush1.msra.mxu0 %v7003
    %7043 = vmatprep.subr.mxu0 %v7008
    %7044 = vmatpush1.msra.mxu0 %v7007
    %7045 = vmatprep.subr.mxu0 %v7012
    %7046 = vmatpush1.msra.mxu0 %v7011
    %7047 = vmatprep.subr.mxu0 0.0
    %7048 = vmatpush1.msra.mxu0 0.0
    %7049 = vmatprep.subr.mxu0 0.0
    %7050 = vmatpush1.msra.mxu0 0.0
    %7051 = vmatprep.subr.mxu0 0.0
    %7052 = vmatpush1.msra.mxu0 0.0
    %7053 = vmatprep.subr.mxu0 0.0
    %7054 = vmatpush1.msra.mxu0 0.0
    %7055 = vmatprep.subr.mxu0 0.0
    %7056 = vmatpush1.msra.mxu0 0.0
    %7057 = vmatprep.subr.mxu0 0.0
    %7058 = vmatpush1.msra.mxu0 0.0
    %7059 = vmatprep.subr.mxu0 0.0
    %7060 = vmatpush1.msra.mxu0 0.0
    %7061 = vmatprep.subr.mxu0 0.0
    %7062 = vmatpush1.msra.mxu0 0.0
    %7063 = vmatprep.subr.mxu0 0.0
    %7064 = vmatpush1.msra.mxu0 0.0
    %7065 = vmatprep.subr.mxu0 0.0
    %7066 = vmatpush1.msra.mxu0 0.0
    %7067 = vmatprep.subr.mxu0 0.0
    %7068 = vmatpush1.msra.mxu0 0.0
    %7069 = vmatprep.subr.mxu0 0.0
    %7070 = vmatpush1.msra.mxu0 0.0
    %7071 = vmatprep.subr.mxu0 0.0
    %7072 = vmatpush1.msra.mxu0 0.0
    %7073 = vmatprep.subr.mxu0 0.0
    %7074 = vmatpush1.msra.mxu0 0.0
    %7075 = vmatprep.subr.mxu0 0.0
    %7076 = vmatpush1.msra.mxu0 0.0
    %7077 = vmatprep.subr.mxu0 0.0
    %7078 = vmatpush1.msra.mxu0 0.0
    %7079 = vmatprep.mubr.f32.mxu0 0.0
    %7080 = vmatmul.mubr.f32.gmra.mrb[0].mxu0 %v6298
    %v7081 = vpop.f32.mrb[0].mxu0
    %v7082 = vadd.f32 0.0, %v7081
    %v7083 = vpop.f32.mrb[0].mxu0
    %v7084 = vadd.f32 0.0, %v7083
    %7085 = vdwg.mxu0
    %7086 = vmatprep.subr.mxu0 %v6954
    %7087 = vmatpush1.msra.mxu0 %v6953
    %7088 = vmatprep.subr.mxu0 %v6958
    %7089 = vmatpush1.msra.mxu0 %v6957
    %7090 = vmatprep.subr.mxu0 %v6962
    %7091 = vmatpush1.msra.mxu0 %v6961
    %7092 = vmatprep.subr.mxu0 %v6966
    %7093 = vmatpush1.msra.mxu0 %v6965
    %7094 = vmatprep.subr.mxu0 %v6970
    %7095 = vmatpush1.msra.mxu0 %v6969
    %7096 = vmatprep.subr.mxu0 %v6974
    %7097 = vmatpush1.msra.mxu0 %v6973
    %7098 = vmatprep.subr.mxu0 %v6978
    %7099 = vmatpush1.msra.mxu0 %v6977
    %7100 = vmatprep.subr.mxu0 %v6982
    %7101 = vmatpush1.msra.mxu0 %v6981
    %7102 = vmatprep.subr.mxu0 %v6986
    %7103 = vmatpush1.msra.mxu0 %v6985
    %7104 = vmatprep.subr.mxu0 %v6990
    %7105 = vmatpush1.msra.mxu0 %v6989
    %7106 = vmatprep.subr.mxu0 %v6994
    %7107 = vmatpush1.msra.mxu0 %v6993
    %7108 = vmatprep.subr.mxu0 %v6998
    %7109 = vmatpush1.msra.mxu0 %v6997
    %7110 = vmatprep.subr.mxu0 %v7002
    %7111 = vmatpush1.msra.mxu0 %v7001
    %7112 = vmatprep.subr.mxu0 %v7006
    %7113 = vmatpush1.msra.mxu0 %v7005
    %7114 = vmatprep.subr.mxu0 %v7010
    %7115 = vmatpush1.msra.mxu0 %v7009
    %7116 = vmatprep.subr.mxu0 %v7014
    %7117 = vmatpush1.msra.mxu0 %v7013
    %7118 = vmatprep.subr.mxu0 0.0
    %7119 = vmatpush1.msra.mxu0 0.0
    %7120 = vmatprep.subr.mxu0 0.0
    %7121 = vmatpush1.msra.mxu0 0.0
    %7122 = vmatprep.subr.mxu0 0.0
    %7123 = vmatpush1.msra.mxu0 0.0
    %7124 = vmatprep.subr.mxu0 0.0
    %7125 = vmatpush1.msra.mxu0 0.0
    %7126 = vmatprep.subr.mxu0 0.0
    %7127 = vmatpush1.msra.mxu0 0.0
    %7128 = vmatprep.subr.mxu0 0.0
    %7129 = vmatpush1.msra.mxu0 0.0
    %7130 = vmatprep.subr.mxu0 0.0
    %7131 = vmatpush1.msra.mxu0 0.0
    %7132 = vmatprep.subr.mxu0 0.0
    %7133 = vmatpush1.msra.mxu0 0.0
    %7134 = vmatprep.subr.mxu0 0.0
    %7135 = vmatpush1.msra.mxu0 0.0
    %7136 = vmatprep.subr.mxu0 0.0
    %7137 = vmatpush1.msra.mxu0 0.0
    %7138 = vmatprep.subr.mxu0 0.0
    %7139 = vmatpush1.msra.mxu0 0.0
    %7140 = vmatprep.subr.mxu0 0.0
    %7141 = vmatpush1.msra.mxu0 0.0
    %7142 = vmatprep.subr.mxu0 0.0
    %7143 = vmatpush1.msra.mxu0 0.0
    %7144 = vmatprep.subr.mxu0 0.0
    %7145 = vmatpush1.msra.mxu0 0.0
    %7146 = vmatprep.subr.mxu0 0.0
    %7147 = vmatpush1.msra.mxu0 0.0
    %7148 = vmatprep.subr.mxu0 0.0
    %7149 = vmatpush1.msra.mxu0 0.0
    %7150 = vmatprep.mubr.f32.mxu0 0.0
    %7151 = vmatmul.mubr.f32.gmra.mrb[0].mxu0 %v6298
    %v7152 = vpop.f32.mrb[0].mxu0
    %v7153 = vadd.f32 0.0, %v7152
    %v7154 = vpop.f32.mrb[0].mxu0
    %v7155 = vadd.f32 0.0, %v7154
    %7156 = vdwg.mxu0
    %v7157 = vadd.f32 %v6947, %v7082
    %v7158 = vadd.f32 %v6948, %v7084
    %v7159 = vadd.f32 %v6949, %v7153
    %v7160 = vadd.f32 %v6950, %v7155
    %v7161 = vxor.u32 %v7157, 2147483648
    %v7162 = vxor.u32 %v7158, 2147483648
    %v7163 = vxor.u32 %v7159, 2147483648
    %v7164 = vmul.f32 %v7161, 1.442695
    %v7165 = vpow.pop %v7164
    %v7166 = vmul.f32 %v7162, 1.442695
    %v7167 = vpow.pop %v7166
    %v7168 = vmul.f32 %v7163, 1.442695
    %v7169 = vpow.pop %v7168
    %v7170 = vadd.f32 %v7165, 1.0
    %v7171 = vadd.f32 %v7167, 1.0
    %v7172 = vadd.f32 %v7169, 1.0
    %v7173 = vrcp.pop %v7170
    %v7174 = vmul.f32 1.0, %v7173
    %v7175 = vrcp.pop %v7171
    %v7176 = vmul.f32 1.0, %v7175
    %v7177 = vrcp.pop %v7172
    %v7178 = vmul.f32 1.0, %v7177
    %v7179 = vtanh.pop %v7160
    %v7180 = vmul.f32 %v7176, %v6296
    %v7181 = vmul.f32 %v7174, %v7179
    %v7182 = vadd.f32 %v7180, %v7181
    %v7183 = vtanh.pop %v7182
    %v7184 = vmul.f32 %v7178, %v7183
    %v7185 = vld [vmem:[#allocation7] sm:$0xff]
    %v7186 = vld [vmem:[#allocation7 + $0x8] sm:$0xff]
    %v7187 = vld [vmem:[#allocation7 + $0x10] sm:$0xff]
    %v7188 = vld [vmem:[#allocation7 + $0x18] sm:$0xff]
    %v7189 = vld [vmem:[#allocation7 + $0x20] sm:$0xff]
    %v7190 = vld [vmem:[#allocation7 + $0x28] sm:$0xff]
    %v7191 = vld [vmem:[#allocation7 + $0x30] sm:$0xff]
    %v7192 = vld [vmem:[#allocation7 + $0x38] sm:$0xff]
    %v7193 = vld [vmem:[#allocation7 + $0x40] sm:$0xff]
    %v7194 = vld [vmem:[#allocation7 + $0x48] sm:$0xff]
    %v7195 = vld [vmem:[#allocation7 + $0x50] sm:$0xff]
    %v7196 = vld [vmem:[#allocation7 + $0x58] sm:$0xff]
    %v7197 = vld [vmem:[#allocation7 + $0x60] sm:$0xff]
    %v7198 = vld [vmem:[#allocation7 + $0x68] sm:$0xff]
    %v7199 = vld [vmem:[#allocation7 + $0x70] sm:$0xff]
    %v7200 = vld [vmem:[#allocation7 + $0x78] sm:$0xff]
    %v7201 = vld [vmem:[#allocation7 + $0x80] sm:$0xff]
    %v7202 = vld [vmem:[#allocation7 + $0x88] sm:$0xff]
    %v7203 = vld [vmem:[#allocation7 + $0x90] sm:$0xff]
    %v7204 = vld [vmem:[#allocation7 + $0x98] sm:$0xff]
    %v7205 = vld [vmem:[#allocation7 + $0xa0] sm:$0xff]
    %v7206 = vld [vmem:[#allocation7 + $0xa8] sm:$0xff]
    %v7207 = vld [vmem:[#allocation7 + $0xb0] sm:$0xff]
    %v7208 = vld [vmem:[#allocation7 + $0xb8] sm:$0xff]
    %v7209 = vld [vmem:[#allocation7 + $0xc0] sm:$0xff]
    %v7210 = vld [vmem:[#allocation7 + $0xc8] sm:$0xff]
    %v7211 = vld [vmem:[#allocation7 + $0xd0] sm:$0xff]
    %v7212 = vld [vmem:[#allocation7 + $0xd8] sm:$0xff]
    %v7213 = vld [vmem:[#allocation7 + $0xe0] sm:$0xff]
    %v7214 = vld [vmem:[#allocation7 + $0xe8] sm:$0xff]
    %v7215 = vld [vmem:[#allocation7 + $0xf0] sm:$0xff]
    %v7216 = vld [vmem:[#allocation7 + $0xf8] sm:$0xff]
    %v7217 = vld [vmem:[#allocation7 + $0x100] sm:$0xff]
    %v7218 = vld [vmem:[#allocation7 + $0x108] sm:$0xff]
    %v7219 = vld [vmem:[#allocation7 + $0x110] sm:$0xff]
    %v7220 = vld [vmem:[#allocation7 + $0x118] sm:$0xff]
    %v7221 = vld [vmem:[#allocation7 + $0x120] sm:$0xff]
    %v7222 = vld [vmem:[#allocation7 + $0x128] sm:$0xff]
    %v7223 = vld [vmem:[#allocation7 + $0x130] sm:$0xff]
    %v7224 = vld [vmem:[#allocation7 + $0x138] sm:$0xff]
    %v7225 = vld [vmem:[#allocation7 + $0x140] sm:$0xff]
    %v7226 = vld [vmem:[#allocation7 + $0x148] sm:$0xff]
    %v7227 = vld [vmem:[#allocation7 + $0x150] sm:$0xff]
    %v7228 = vld [vmem:[#allocation7 + $0x158] sm:$0xff]
    %v7229 = vld [vmem:[#allocation7 + $0x160] sm:$0xff]
    %v7230 = vld [vmem:[#allocation7 + $0x168] sm:$0xff]
    %v7231 = vld [vmem:[#allocation7 + $0x170] sm:$0xff]
    %v7232 = vld [vmem:[#allocation7 + $0x178] sm:$0xff]
    %v7233 = vld [vmem:[#allocation7 + $0x180] sm:$0xff]
    %v7234 = vld [vmem:[#allocation7 + $0x188] sm:$0xff]
    %v7235 = vld [vmem:[#allocation7 + $0x190] sm:$0xff]
    %v7236 = vld [vmem:[#allocation7 + $0x198] sm:$0xff]
    %v7237 = vld [vmem:[#allocation7 + $0x1a0] sm:$0xff]
    %v7238 = vld [vmem:[#allocation7 + $0x1a8] sm:$0xff]
    %v7239 = vld [vmem:[#allocation7 + $0x1b0] sm:$0xff]
    %v7240 = vld [vmem:[#allocation7 + $0x1b8] sm:$0xff]
    %v7241 = vld [vmem:[#allocation7 + $0x1c0] sm:$0xff]
    %v7242 = vld [vmem:[#allocation7 + $0x1c8] sm:$0xff]
    %v7243 = vld [vmem:[#allocation7 + $0x1d0] sm:$0xff]
    %v7244 = vld [vmem:[#allocation7 + $0x1d8] sm:$0xff]
    %v7245 = vld [vmem:[#allocation7 + $0x1e0] sm:$0xff]
    %v7246 = vld [vmem:[#allocation7 + $0x1e8] sm:$0xff]
    %v7247 = vld [vmem:[#allocation7 + $0x1f0] sm:$0xff]
    %v7248 = vld [vmem:[#allocation7 + $0x1f8] sm:$0xff]
    %v7249 = vld [vmem:[#allocation9] sm:$0xff]
    %v7250 = vld [vmem:[#allocation9 + $0x8] sm:$0xff]
    %v7251 = vld [vmem:[#allocation9 + $0x10] sm:$0xff]
    %v7252 = vld [vmem:[#allocation9 + $0x18] sm:$0xff]
    %v7253 = vld [vmem:[#allocation9 + $0x20] sm:$0xff]
    %v7254 = vld [vmem:[#allocation9 + $0x28] sm:$0xff]
    %v7255 = vld [vmem:[#allocation9 + $0x30] sm:$0xff]
    %v7256 = vld [vmem:[#allocation9 + $0x38] sm:$0xff]
    %v7257 = vld [vmem:[#allocation9 + $0x40] sm:$0xff]
    %v7258 = vld [vmem:[#allocation9 + $0x48] sm:$0xff]
    %v7259 = vld [vmem:[#allocation9 + $0x50] sm:$0xff]
    %v7260 = vld [vmem:[#allocation9 + $0x58] sm:$0xff]
    %v7261 = vld [vmem:[#allocation9 + $0x60] sm:$0xff]
    %v7262 = vld [vmem:[#allocation9 + $0x68] sm:$0xff]
    %v7263 = vld [vmem:[#allocation9 + $0x70] sm:$0xff]
    %v7264 = vld [vmem:[#allocation9 + $0x78] sm:$0xff]
    %v7265 = vld [vmem:[#allocation9 + $0x80] sm:$0xff]
    %v7266 = vld [vmem:[#allocation9 + $0x88] sm:$0xff]
    %v7267 = vld [vmem:[#allocation9 + $0x90] sm:$0xff]
    %v7268 = vld [vmem:[#allocation9 + $0x98] sm:$0xff]
    %v7269 = vld [vmem:[#allocation9 + $0xa0] sm:$0xff]
    %v7270 = vld [vmem:[#allocation9 + $0xa8] sm:$0xff]
    %v7271 = vld [vmem:[#allocation9 + $0xb0] sm:$0xff]
    %v7272 = vld [vmem:[#allocation9 + $0xb8] sm:$0xff]
    %v7273 = vld [vmem:[#allocation9 + $0xc0] sm:$0xff]
    %v7274 = vld [vmem:[#allocation9 + $0xc8] sm:$0xff]
    %v7275 = vld [vmem:[#allocation9 + $0xd0] sm:$0xff]
    %v7276 = vld [vmem:[#allocation9 + $0xd8] sm:$0xff]
    %v7277 = vld [vmem:[#allocation9 + $0xe0] sm:$0xff]
    %v7278 = vld [vmem:[#allocation9 + $0xe8] sm:$0xff]
    %v7279 = vld [vmem:[#allocation9 + $0xf0] sm:$0xff]
    %v7280 = vld [vmem:[#allocation9 + $0xf8] sm:$0xff]
    %v7281 = vld [vmem:[#allocation9 + $0x100] sm:$0xff]
    %v7282 = vld [vmem:[#allocation9 + $0x108] sm:$0xff]
    %v7283 = vld [vmem:[#allocation9 + $0x110] sm:$0xff]
    %v7284 = vld [vmem:[#allocation9 + $0x118] sm:$0xff]
    %v7285 = vld [vmem:[#allocation9 + $0x120] sm:$0xff]
    %v7286 = vld [vmem:[#allocation9 + $0x128] sm:$0xff]
    %v7287 = vld [vmem:[#allocation9 + $0x130] sm:$0xff]
    %v7288 = vld [vmem:[#allocation9 + $0x138] sm:$0xff]
    %v7289 = vld [vmem:[#allocation9 + $0x140] sm:$0xff]
    %v7290 = vld [vmem:[#allocation9 + $0x148] sm:$0xff]
    %v7291 = vld [vmem:[#allocation9 + $0x150] sm:$0xff]
    %v7292 = vld [vmem:[#allocation9 + $0x158] sm:$0xff]
    %v7293 = vld [vmem:[#allocation9 + $0x160] sm:$0xff]
    %v7294 = vld [vmem:[#allocation9 + $0x168] sm:$0xff]
    %v7295 = vld [vmem:[#allocation9 + $0x170] sm:$0xff]
    %v7296 = vld [vmem:[#allocation9 + $0x178] sm:$0xff]
    %v7297 = vld [vmem:[#allocation9 + $0x180] sm:$0xff]
    %v7298 = vld [vmem:[#allocation9 + $0x188] sm:$0xff]
    %v7299 = vld [vmem:[#allocation9 + $0x190] sm:$0xff]
    %v7300 = vld [vmem:[#allocation9 + $0x198] sm:$0xff]
    %v7301 = vld [vmem:[#allocation9 + $0x1a0] sm:$0xff]
    %v7302 = vld [vmem:[#allocation9 + $0x1a8] sm:$0xff]
    %v7303 = vld [vmem:[#allocation9 + $0x1b0] sm:$0xff]
    %v7304 = vld [vmem:[#allocation9 + $0x1b8] sm:$0xff]
    %v7305 = vld [vmem:[#allocation9 + $0x1c0] sm:$0xff]
    %v7306 = vld [vmem:[#allocation9 + $0x1c8] sm:$0xff]
    %v7307 = vld [vmem:[#allocation9 + $0x1d0] sm:$0xff]
    %v7308 = vld [vmem:[#allocation9 + $0x1d8] sm:$0xff]
    %v7309 = vld [vmem:[#allocation9 + $0x1e0] sm:$0xff]
    %v7310 = vld [vmem:[#allocation9 + $0x1e8] sm:$0xff]
    %v7311 = vld [vmem:[#allocation9 + $0x1f0] sm:$0xff]
    %v7312 = vld [vmem:[#allocation9 + $0x1f8] sm:$0xff]
    %7313 = vmatprep.subr.mxu0 %v7250
    %7314 = vmatpush1.msra.mxu0 %v7249
    %7315 = vmatprep.subr.mxu0 %v7254
    %7316 = vmatpush1.msra.mxu0 %v7253
    %7317 = vmatprep.subr.mxu0 %v7258
    %7318 = vmatpush1.msra.mxu0 %v7257
    %7319 = vmatprep.subr.mxu0 %v7262
    %7320 = vmatpush1.msra.mxu0 %v7261
    %7321 = vmatprep.subr.mxu0 %v7266
    %7322 = vmatpush1.msra.mxu0 %v7265
    %7323 = vmatprep.subr.mxu0 %v7270
    %7324 = vmatpush1.msra.mxu0 %v7269
    %7325 = vmatprep.subr.mxu0 %v7274
    %7326 = vmatpush1.msra.mxu0 %v7273
    %7327 = vmatprep.subr.mxu0 %v7278
    %7328 = vmatpush1.msra.mxu0 %v7277
    %7329 = vmatprep.subr.mxu0 %v7282
    %7330 = vmatpush1.msra.mxu0 %v7281
    %7331 = vmatprep.subr.mxu0 %v7286
    %7332 = vmatpush1.msra.mxu0 %v7285
    %7333 = vmatprep.subr.mxu0 %v7290
    %7334 = vmatpush1.msra.mxu0 %v7289
    %7335 = vmatprep.subr.mxu0 %v7294
    %7336 = vmatpush1.msra.mxu0 %v7293
    %7337 = vmatprep.subr.mxu0 %v7298
    %7338 = vmatpush1.msra.mxu0 %v7297
    %7339 = vmatprep.subr.mxu0 %v7302
    %7340 = vmatpush1.msra.mxu0 %v7301
    %7341 = vmatprep.subr.mxu0 %v7306
    %7342 = vmatpush1.msra.mxu0 %v7305
    %7343 = vmatprep.subr.mxu0 %v7310
    %7344 = vmatpush1.msra.mxu0 %v7309
    %7345 = vmatprep.subr.mxu0 0.0
    %7346 = vmatpush1.msra.mxu0 0.0
    %7347 = vmatprep.subr.mxu0 0.0
    %7348 = vmatpush1.msra.mxu0 0.0
    %7349 = vmatprep.subr.mxu0 0.0
    %7350 = vmatpush1.msra.mxu0 0.0
    %7351 = vmatprep.subr.mxu0 0.0
    %7352 = vmatpush1.msra.mxu0 0.0
    %7353 = vmatprep.subr.mxu0 0.0
    %7354 = vmatpush1.msra.mxu0 0.0
    %7355 = vmatprep.subr.mxu0 0.0
    %7356 = vmatpush1.msra.mxu0 0.0
    %7357 = vmatprep.subr.mxu0 0.0
    %7358 = vmatpush1.msra.mxu0 0.0
    %7359 = vmatprep.subr.mxu0 0.0
    %7360 = vmatpush1.msra.mxu0 0.0
    %7361 = vmatprep.subr.mxu0 0.0
    %7362 = vmatpush1.msra.mxu0 0.0
    %7363 = vmatprep.subr.mxu0 0.0
    %7364 = vmatpush1.msra.mxu0 0.0
    %7365 = vmatprep.subr.mxu0 0.0
    %7366 = vmatpush1.msra.mxu0 0.0
    %7367 = vmatprep.subr.mxu0 0.0
    %7368 = vmatpush1.msra.mxu0 0.0
    %7369 = vmatprep.subr.mxu0 0.0
    %7370 = vmatpush1.msra.mxu0 0.0
    %7371 = vmatprep.subr.mxu0 0.0
    %7372 = vmatpush1.msra.mxu0 0.0
    %7373 = vmatprep.subr.mxu0 0.0
    %7374 = vmatpush1.msra.mxu0 0.0
    %7375 = vmatprep.subr.mxu0 0.0
    %7376 = vmatpush1.msra.mxu0 0.0
    %7377 = vmatprep.mubr.f32.mxu0 0.0
    %7378 = vmatmul.mubr.f32.gmra.mrb[0].mxu0 %v6738
    %v7379 = vpop.f32.mrb[0].mxu0
    %v7380 = vadd.f32 0.0, %v7379
    %v7381 = vpop.f32.mrb[0].mxu0
    %v7382 = vadd.f32 0.0, %v7381
    %7383 = vdwg.mxu0
    %7384 = vmatprep.subr.mxu0 %v7252
    %7385 = vmatpush1.msra.mxu0 %v7251
    %7386 = vmatprep.subr.mxu0 %v7256
    %7387 = vmatpush1.msra.mxu0 %v7255
    %7388 = vmatprep.subr.mxu0 %v7260
    %7389 = vmatpush1.msra.mxu0 %v7259
    %7390 = vmatprep.subr.mxu0 %v7264
    %7391 = vmatpush1.msra.mxu0 %v7263
    %7392 = vmatprep.subr.mxu0 %v7268
    %7393 = vmatpush1.msra.mxu0 %v7267
    %7394 = vmatprep.subr.mxu0 %v7272
    %7395 = vmatpush1.msra.mxu0 %v7271
    %7396 = vmatprep.subr.mxu0 %v7276
    %7397 = vmatpush1.msra.mxu0 %v7275
    %7398 = vmatprep.subr.mxu0 %v7280
    %7399 = vmatpush1.msra.mxu0 %v7279
    %7400 = vmatprep.subr.mxu0 %v7284
    %7401 = vmatpush1.msra.mxu0 %v7283
    %7402 = vmatprep.subr.mxu0 %v7288
    %7403 = vmatpush1.msra.mxu0 %v7287
    %7404 = vmatprep.subr.mxu0 %v7292
    %7405 = vmatpush1.msra.mxu0 %v7291
    %7406 = vmatprep.subr.mxu0 %v7296
    %7407 = vmatpush1.msra.mxu0 %v7295
    %7408 = vmatprep.subr.mxu0 %v7300
    %7409 = vmatpush1.msra.mxu0 %v7299
    %7410 = vmatprep.subr.mxu0 %v7304
    %7411 = vmatpush1.msra.mxu0 %v7303
    %7412 = vmatprep.subr.mxu0 %v7308
    %7413 = vmatpush1.msra.mxu0 %v7307
    %7414 = vmatprep.subr.mxu0 %v7312
    %7415 = vmatpush1.msra.mxu0 %v7311
    %7416 = vmatprep.subr.mxu0 0.0
    %7417 = vmatpush1.msra.mxu0 0.0
    %7418 = vmatprep.subr.mxu0 0.0
    %7419 = vmatpush1.msra.mxu0 0.0
    %7420 = vmatprep.subr.mxu0 0.0
    %7421 = vmatpush1.msra.mxu0 0.0
    %7422 = vmatprep.subr.mxu0 0.0
    %7423 = vmatpush1.msra.mxu0 0.0
    %7424 = vmatprep.subr.mxu0 0.0
    %7425 = vmatpush1.msra.mxu0 0.0
    %7426 = vmatprep.subr.mxu0 0.0
    %7427 = vmatpush1.msra.mxu0 0.0
    %7428 = vmatprep.subr.mxu0 0.0
    %7429 = vmatpush1.msra.mxu0 0.0
    %7430 = vmatprep.subr.mxu0 0.0
    %7431 = vmatpush1.msra.mxu0 0.0
    %7432 = vmatprep.subr.mxu0 0.0
    %7433 = vmatpush1.msra.mxu0 0.0
    %7434 = vmatprep.subr.mxu0 0.0
    %7435 = vmatpush1.msra.mxu0 0.0
    %7436 = vmatprep.subr.mxu0 0.0
    %7437 = vmatpush1.msra.mxu0 0.0
    %7438 = vmatprep.subr.mxu0 0.0
    %7439 = vmatpush1.msra.mxu0 0.0
    %7440 = vmatprep.subr.mxu0 0.0
    %7441 = vmatpush1.msra.mxu0 0.0
    %7442 = vmatprep.subr.mxu0 0.0
    %7443 = vmatpush1.msra.mxu0 0.0
    %7444 = vmatprep.subr.mxu0 0.0
    %7445 = vmatpush1.msra.mxu0 0.0
    %7446 = vmatprep.subr.mxu0 0.0
    %7447 = vmatpush1.msra.mxu0 0.0
    %7448 = vmatprep.mubr.f32.mxu0 0.0
    %7449 = vmatmul.mubr.f32.gmra.mrb[0].mxu0 %v6738
    %v7450 = vpop.f32.mrb[0].mxu0
    %v7451 = vadd.f32 0.0, %v7450
    %v7452 = vpop.f32.mrb[0].mxu0
    %v7453 = vadd.f32 0.0, %v7452
    %7454 = vdwg.mxu0
    %7455 = vmatprep.subr.mxu0 %v7186
    %7456 = vmatpush1.msra.mxu0 %v7185
    %7457 = vmatprep.subr.mxu0 %v7190
    %7458 = vmatpush1.msra.mxu0 %v7189
    %7459 = vmatprep.subr.mxu0 %v7194
    %7460 = vmatpush1.msra.mxu0 %v7193
    %7461 = vmatprep.subr.mxu0 %v7198
    %7462 = vmatpush1.msra.mxu0 %v7197
    %7463 = vmatprep.subr.mxu0 %v7202
    %7464 = vmatpush1.msra.mxu0 %v7201
    %7465 = vmatprep.subr.mxu0 %v7206
    %7466 = vmatpush1.msra.mxu0 %v7205
    %7467 = vmatprep.subr.mxu0 %v7210
    %7468 = vmatpush1.msra.mxu0 %v7209
    %7469 = vmatprep.subr.mxu0 %v7214
    %7470 = vmatpush1.msra.mxu0 %v7213
    %7471 = vmatprep.subr.mxu0 %v7218
    %7472 = vmatpush1.msra.mxu0 %v7217
    %7473 = vmatprep.subr.mxu0 %v7222
    %7474 = vmatpush1.msra.mxu0 %v7221
    %7475 = vmatprep.subr.mxu0 %v7226
    %7476 = vmatpush1.msra.mxu0 %v7225
    %7477 = vmatprep.subr.mxu0 %v7230
    %7478 = vmatpush1.msra.mxu0 %v7229
    %7479 = vmatprep.subr.mxu0 %v7234
    %7480 = vmatpush1.msra.mxu0 %v7233
    %7481 = vmatprep.subr.mxu0 %v7238
    %7482 = vmatpush1.msra.mxu0 %v7237
    %7483 = vmatprep.subr.mxu0 %v7242
    %7484 = vmatpush1.msra.mxu0 %v7241
    %7485 = vmatprep.subr.mxu0 %v7246
    %7486 = vmatpush1.msra.mxu0 %v7245
    %7487 = vmatprep.subr.mxu0 0.0
    %7488 = vmatpush1.msra.mxu0 0.0
    %7489 = vmatprep.subr.mxu0 0.0
    %7490 = vmatpush1.msra.mxu0 0.0
    %7491 = vmatprep.subr.mxu0 0.0
    %7492 = vmatpush1.msra.mxu0 0.0
    %7493 = vmatprep.subr.mxu0 0.0
    %7494 = vmatpush1.msra.mxu0 0.0
    %7495 = vmatprep.subr.mxu0 0.0
    %7496 = vmatpush1.msra.mxu0 0.0
    %7497 = vmatprep.subr.mxu0 0.0
    %7498 = vmatpush1.msra.mxu0 0.0
    %7499 = vmatprep.subr.mxu0 0.0
    %7500 = vmatpush1.msra.mxu0 0.0
    %7501 = vmatprep.subr.mxu0 0.0
    %7502 = vmatpush1.msra.mxu0 0.0
    %7503 = vmatprep.subr.mxu0 0.0
    %7504 = vmatpush1.msra.mxu0 0.0
    %7505 = vmatprep.subr.mxu0 0.0
    %7506 = vmatpush1.msra.mxu0 0.0
    %7507 = vmatprep.subr.mxu0 0.0
    %7508 = vmatpush1.msra.mxu0 0.0
    %7509 = vmatprep.subr.mxu0 0.0
    %7510 = vmatpush1.msra.mxu0 0.0
    %7511 = vmatprep.subr.mxu0 0.0
    %7512 = vmatpush1.msra.mxu0 0.0
    %7513 = vmatprep.subr.mxu0 0.0
    %7514 = vmatpush1.msra.mxu0 0.0
    %7515 = vmatprep.subr.mxu0 0.0
    %7516 = vmatpush1.msra.mxu0 0.0
    %7517 = vmatprep.subr.mxu0 0.0
    %7518 = vmatpush1.msra.mxu0 0.0
    %7519 = vmatprep.mubr.f32.mxu0 0.0
    %7520 = vmatmul.mubr.f32.gmra.mrb[0].mxu0 %v7184
    %v7521 = vpop.f32.mrb[0].mxu0
    %v7522 = vadd.f32 %v7380, %v7521
    %v7523 = vpop.f32.mrb[0].mxu0
    %v7524 = vadd.f32 %v7382, %v7523
    %7525 = vdwg.mxu0
    %7526 = vmatprep.subr.mxu0 %v7188
    %7527 = vmatpush1.msra.mxu0 %v7187
    %7528 = vmatprep.subr.mxu0 %v7192
    %7529 = vmatpush1.msra.mxu0 %v7191
    %7530 = vmatprep.subr.mxu0 %v7196
    %7531 = vmatpush1.msra.mxu0 %v7195
    %7532 = vmatprep.subr.mxu0 %v7200
    %7533 = vmatpush1.msra.mxu0 %v7199
    %7534 = vmatprep.subr.mxu0 %v7204
    %7535 = vmatpush1.msra.mxu0 %v7203
    %7536 = vmatprep.subr.mxu0 %v7208
    %7537 = vmatpush1.msra.mxu0 %v7207
    %7538 = vmatprep.subr.mxu0 %v7212
    %7539 = vmatpush1.msra.mxu0 %v7211
    %7540 = vmatprep.subr.mxu0 %v7216
    %7541 = vmatpush1.msra.mxu0 %v7215
    %7542 = vmatprep.subr.mxu0 %v7220
    %7543 = vmatpush1.msra.mxu0 %v7219
    %7544 = vmatprep.subr.mxu0 %v7224
    %7545 = vmatpush1.msra.mxu0 %v7223
    %7546 = vmatprep.subr.mxu0 %v7228
    %7547 = vmatpush1.msra.mxu0 %v7227
    %7548 = vmatprep.subr.mxu0 %v7232
    %7549 = vmatpush1.msra.mxu0 %v7231
    %7550 = vmatprep.subr.mxu0 %v7236
    %7551 = vmatpush1.msra.mxu0 %v7235
    %7552 = vmatprep.subr.mxu0 %v7240
    %7553 = vmatpush1.msra.mxu0 %v7239
    %7554 = vmatprep.subr.mxu0 %v7244
    %7555 = vmatpush1.msra.mxu0 %v7243
    %7556 = vmatprep.subr.mxu0 %v7248
    %7557 = vmatpush1.msra.mxu0 %v7247
    %7558 = vmatprep.subr.mxu0 0.0
    %7559 = vmatpush1.msra.mxu0 0.0
    %7560 = vmatprep.subr.mxu0 0.0
    %7561 = vmatpush1.msra.mxu0 0.0
    %7562 = vmatprep.subr.mxu0 0.0
    %7563 = vmatpush1.msra.mxu0 0.0
    %7564 = vmatprep.subr.mxu0 0.0
    %7565 = vmatpush1.msra.mxu0 0.0
    %7566 = vmatprep.subr.mxu0 0.0
    %7567 = vmatpush1.msra.mxu0 0.0
    %7568 = vmatprep.subr.mxu0 0.0
    %7569 = vmatpush1.msra.mxu0 0.0
    %7570 = vmatprep.subr.mxu0 0.0
    %7571 = vmatpush1.msra.mxu0 0.0
    %7572 = vmatprep.subr.mxu0 0.0
    %7573 = vmatpush1.msra.mxu0 0.0
    %7574 = vmatprep.subr.mxu0 0.0
    %7575 = vmatpush1.msra.mxu0 0.0
    %7576 = vmatprep.subr.mxu0 0.0
    %7577 = vmatpush1.msra.mxu0 0.0
    %7578 = vmatprep.subr.mxu0 0.0
    %7579 = vmatpush1.msra.mxu0 0.0
    %7580 = vmatprep.subr.mxu0 0.0
    %7581 = vmatpush1.msra.mxu0 0.0
    %7582 = vmatprep.subr.mxu0 0.0
    %7583 = vmatpush1.msra.mxu0 0.0
    %7584 = vmatprep.subr.mxu0 0.0
    %7585 = vmatpush1.msra.mxu0 0.0
    %7586 = vmatprep.subr.mxu0 0.0
    %7587 = vmatpush1.msra.mxu0 0.0
    %7588 = vmatprep.subr.mxu0 0.0
    %7589 = vmatpush1.msra.mxu0 0.0
    %7590 = vmatprep.mubr.f32.mxu0 0.0
    %7591 = vmatmul.mubr.f32.gmra.mrb[0].mxu0 %v7184
    %v7592 = vpop.f32.mrb[0].mxu0
    %v7593 = vadd.f32 %v7451, %v7592
    %v7594 = vpop.f32.mrb[0].mxu0
    %v7595 = vadd.f32 %v7453, %v7594
    %7596 = vdwg.mxu0
    %v7597 = vadd.f32 %v7522, %v100
    %v7598 = vadd.f32 %v7524, %v104
    %v7599 = vadd.f32 %v7593, %v108
    %v7600 = vadd.f32 %v7595, %v112
    %v7601 = vxor.u32 %v7597, 2147483648
    %v7602 = vxor.u32 %v7598, 2147483648
    %v7603 = vxor.u32 %v7599, 2147483648
    %v7604 = vmul.f32 %v7601, 1.442695
    %v7605 = vpow.pop %v7604
    %v7606 = vmul.f32 %v7602, 1.442695
    %v7607 = vpow.pop %v7606
    %v7608 = vmul.f32 %v7603, 1.442695
    %v7609 = vpow.pop %v7608
    %v7610 = vadd.f32 %v7605, 1.0
    %v7611 = vadd.f32 %v7607, 1.0
    %v7612 = vadd.f32 %v7609, 1.0
    %v7613 = vrcp.pop %v7610
    %v7614 = vmul.f32 1.0, %v7613
    %v7615 = vrcp.pop %v7611
    %v7616 = vmul.f32 1.0, %v7615
    %v7617 = vrcp.pop %v7612
    %v7618 = vmul.f32 1.0, %v7617
    %v7619 = vtanh.pop %v7600
    %v7620 = vmul.f32 %v7616, %v6736
    %v7621 = vmul.f32 %v7614, %v7619
    %v7622 = vadd.f32 %v7620, %v7621
    %v7623 = vtanh.pop %v7622
    %v7624 = vmul.f32 %v7618, %v7623
    %s7625 = scalar_lea.vmem [#allocation3], 36
    %7626 = vst [vmem:[%s7625] sm:$0xf] %v7624
    %v7627 = vld [vmem:[#allocation10] sm:$0xff]
    %v7628 = vld [vmem:[#allocation10 + $0x8] sm:$0xff]
    %v7629 = vld [vmem:[#allocation10 + $0x10] sm:$0xff]
    %v7630 = vld [vmem:[#allocation10 + $0x18] sm:$0xff]
    %v7631 = vld [vmem:[#allocation10 + $0x20] sm:$0xff]
    %v7632 = vld [vmem:[#allocation10 + $0x28] sm:$0xff]
    %v7633 = vld [vmem:[#allocation10 + $0x30] sm:$0xff]
    %v7634 = vld [vmem:[#allocation10 + $0x38] sm:$0xff]
    %v7635 = vld [vmem:[#allocation10 + $0x40] sm:$0xff]
    %v7636 = vld [vmem:[#allocation10 + $0x48] sm:$0xff]
    %v7637 = vld [vmem:[#allocation10 + $0x50] sm:$0xff]
    %v7638 = vld [vmem:[#allocation10 + $0x58] sm:$0xff]
    %v7639 = vld [vmem:[#allocation10 + $0x60] sm:$0xff]
    %v7640 = vld [vmem:[#allocation10 + $0x68] sm:$0xff]
    %v7641 = vld [vmem:[#allocation10 + $0x70] sm:$0xff]
    %v7642 = vld [vmem:[#allocation10 + $0x78] sm:$0xff]
    %v7643 = vld [vmem:[#allocation10 + $0x80] sm:$0xff]
    %v7644 = vld [vmem:[#allocation10 + $0x88] sm:$0xff]
    %v7645 = vld [vmem:[#allocation10 + $0x90] sm:$0xff]
    %v7646 = vld [vmem:[#allocation10 + $0x98] sm:$0xff]
    %v7647 = vld [vmem:[#allocation10 + $0xa0] sm:$0xff]
    %v7648 = vld [vmem:[#allocation10 + $0xa8] sm:$0xff]
    %v7649 = vld [vmem:[#allocation10 + $0xb0] sm:$0xff]
    %v7650 = vld [vmem:[#allocation10 + $0xb8] sm:$0xff]
    %v7651 = vld [vmem:[#allocation10 + $0xc0] sm:$0xff]
    %v7652 = vld [vmem:[#allocation10 + $0xc8] sm:$0xff]
    %v7653 = vld [vmem:[#allocation10 + $0xd0] sm:$0xff]
    %v7654 = vld [vmem:[#allocation10 + $0xd8] sm:$0xff]
    %v7655 = vld [vmem:[#allocation10 + $0xe0] sm:$0xff]
    %v7656 = vld [vmem:[#allocation10 + $0xe8] sm:$0xff]
    %v7657 = vld [vmem:[#allocation10 + $0xf0] sm:$0xff]
    %v7658 = vld [vmem:[#allocation10 + $0xf8] sm:$0xff]
    %v7659 = vld [vmem:[#allocation10 + $0x100] sm:$0xff]
    %v7660 = vld [vmem:[#allocation10 + $0x108] sm:$0xff]
    %v7661 = vld [vmem:[#allocation10 + $0x110] sm:$0xff]
    %v7662 = vld [vmem:[#allocation10 + $0x118] sm:$0xff]
    %v7663 = vld [vmem:[#allocation10 + $0x120] sm:$0xff]
    %v7664 = vld [vmem:[#allocation10 + $0x128] sm:$0xff]
    %v7665 = vld [vmem:[#allocation10 + $0x130] sm:$0xff]
    %v7666 = vld [vmem:[#allocation10 + $0x138] sm:$0xff]
    %v7667 = vld [vmem:[#allocation10 + $0x140] sm:$0xff]
    %v7668 = vld [vmem:[#allocation10 + $0x148] sm:$0xff]
    %v7669 = vld [vmem:[#allocation10 + $0x150] sm:$0xff]
    %v7670 = vld [vmem:[#allocation10 + $0x158] sm:$0xff]
    %v7671 = vld [vmem:[#allocation10 + $0x160] sm:$0xff]
    %v7672 = vld [vmem:[#allocation10 + $0x168] sm:$0xff]
    %v7673 = vld [vmem:[#allocation10 + $0x170] sm:$0xff]
    %v7674 = vld [vmem:[#allocation10 + $0x178] sm:$0xff]
    %v7675 = vld [vmem:[#allocation10 + $0x180] sm:$0xff]
    %v7676 = vld [vmem:[#allocation10 + $0x188] sm:$0xff]
    %v7677 = vld [vmem:[#allocation10 + $0x190] sm:$0xff]
    %v7678 = vld [vmem:[#allocation10 + $0x198] sm:$0xff]
    %v7679 = vld [vmem:[#allocation10 + $0x1a0] sm:$0xff]
    %v7680 = vld [vmem:[#allocation10 + $0x1a8] sm:$0xff]
    %v7681 = vld [vmem:[#allocation10 + $0x1b0] sm:$0xff]
    %v7682 = vld [vmem:[#allocation10 + $0x1b8] sm:$0xff]
    %v7683 = vld [vmem:[#allocation10 + $0x1c0] sm:$0xff]
    %v7684 = vld [vmem:[#allocation10 + $0x1c8] sm:$0xff]
    %v7685 = vld [vmem:[#allocation10 + $0x1d0] sm:$0xff]
    %v7686 = vld [vmem:[#allocation10 + $0x1d8] sm:$0xff]
    %v7687 = vld [vmem:[#allocation10 + $0x1e0] sm:$0xff]
    %v7688 = vld [vmem:[#allocation10 + $0x1e8] sm:$0xff]
    %v7689 = vld [vmem:[#allocation10 + $0x1f0] sm:$0xff]
    %v7690 = vld [vmem:[#allocation10 + $0x1f8] sm:$0xff]
    %7691 = vmatprep.subr.mxu0 %v7628
    %7692 = vmatpush1.msra.mxu0 %v7627
    %7693 = vmatprep.subr.mxu0 %v7632
    %7694 = vmatpush1.msra.mxu0 %v7631
    %7695 = vmatprep.subr.mxu0 %v7636
    %7696 = vmatpush1.msra.mxu0 %v7635
    %7697 = vmatprep.subr.mxu0 %v7640
    %7698 = vmatpush1.msra.mxu0 %v7639
    %7699 = vmatprep.subr.mxu0 %v7644
    %7700 = vmatpush1.msra.mxu0 %v7643
    %7701 = vmatprep.subr.mxu0 %v7648
    %7702 = vmatpush1.msra.mxu0 %v7647
    %7703 = vmatprep.subr.mxu0 %v7652
    %7704 = vmatpush1.msra.mxu0 %v7651
    %7705 = vmatprep.subr.mxu0 %v7656
    %7706 = vmatpush1.msra.mxu0 %v7655
    %7707 = vmatprep.subr.mxu0 %v7660
    %7708 = vmatpush1.msra.mxu0 %v7659
    %7709 = vmatprep.subr.mxu0 %v7664
    %7710 = vmatpush1.msra.mxu0 %v7663
    %7711 = vmatprep.subr.mxu0 %v7668
    %7712 = vmatpush1.msra.mxu0 %v7667
    %7713 = vmatprep.subr.mxu0 %v7672
    %7714 = vmatpush1.msra.mxu0 %v7671
    %7715 = vmatprep.subr.mxu0 %v7676
    %7716 = vmatpush1.msra.mxu0 %v7675
    %7717 = vmatprep.subr.mxu0 %v7680
    %7718 = vmatpush1.msra.mxu0 %v7679
    %7719 = vmatprep.subr.mxu0 %v7684
    %7720 = vmatpush1.msra.mxu0 %v7683
    %7721 = vmatprep.subr.mxu0 %v7688
    %7722 = vmatpush1.msra.mxu0 %v7687
    %7723 = vmatprep.subr.mxu0 0.0
    %7724 = vmatpush1.msra.mxu0 0.0
    %7725 = vmatprep.subr.mxu0 0.0
    %7726 = vmatpush1.msra.mxu0 0.0
    %7727 = vmatprep.subr.mxu0 0.0
    %7728 = vmatpush1.msra.mxu0 0.0
    %7729 = vmatprep.subr.mxu0 0.0
    %7730 = vmatpush1.msra.mxu0 0.0
    %7731 = vmatprep.subr.mxu0 0.0
    %7732 = vmatpush1.msra.mxu0 0.0
    %7733 = vmatprep.subr.mxu0 0.0
    %7734 = vmatpush1.msra.mxu0 0.0
    %7735 = vmatprep.subr.mxu0 0.0
    %7736 = vmatpush1.msra.mxu0 0.0
    %7737 = vmatprep.subr.mxu0 0.0
    %7738 = vmatpush1.msra.mxu0 0.0
    %7739 = vmatprep.subr.mxu0 0.0
    %7740 = vmatpush1.msra.mxu0 0.0
    %7741 = vmatprep.subr.mxu0 0.0
    %7742 = vmatpush1.msra.mxu0 0.0
    %7743 = vmatprep.subr.mxu0 0.0
    %7744 = vmatpush1.msra.mxu0 0.0
    %7745 = vmatprep.subr.mxu0 0.0
    %7746 = vmatpush1.msra.mxu0 0.0
    %7747 = vmatprep.subr.mxu0 0.0
    %7748 = vmatpush1.msra.mxu0 0.0
    %7749 = vmatprep.subr.mxu0 0.0
    %7750 = vmatpush1.msra.mxu0 0.0
    %7751 = vmatprep.subr.mxu0 0.0
    %7752 = vmatpush1.msra.mxu0 0.0
    %7753 = vmatprep.subr.mxu0 0.0
    %7754 = vmatpush1.msra.mxu0 0.0
    %7755 = vmatprep.mubr.f32.mxu0 0.0
    %7756 = vmatmul.mubr.f32.gmra.mrb[0].mxu0 %v7624
    %v7757 = vpop.f32.mrb[0].mxu0
    %v7758 = vadd.f32 0.0, %v7757
    %v7759 = vpop.f32.mrb[0].mxu0
    %v7760 = vadd.f32 0.0, %v7759
    %7761 = vdwg.mxu0
    %7762 = vmatprep.subr.mxu0 %v7630
    %7763 = vmatpush1.msra.mxu0 %v7629
    %7764 = vmatprep.subr.mxu0 %v7634
    %7765 = vmatpush1.msra.mxu0 %v7633
    %7766 = vmatprep.subr.mxu0 %v7638
    %7767 = vmatpush1.msra.mxu0 %v7637
    %7768 = vmatprep.subr.mxu0 %v7642
    %7769 = vmatpush1.msra.mxu0 %v7641
    %7770 = vmatprep.subr.mxu0 %v7646
    %7771 = vmatpush1.msra.mxu0 %v7645
    %7772 = vmatprep.subr.mxu0 %v7650
    %7773 = vmatpush1.msra.mxu0 %v7649
    %7774 = vmatprep.subr.mxu0 %v7654
    %7775 = vmatpush1.msra.mxu0 %v7653
    %7776 = vmatprep.subr.mxu0 %v7658
    %7777 = vmatpush1.msra.mxu0 %v7657
    %7778 = vmatprep.subr.mxu0 %v7662
    %7779 = vmatpush1.msra.mxu0 %v7661
    %7780 = vmatprep.subr.mxu0 %v7666
    %7781 = vmatpush1.msra.mxu0 %v7665
    %7782 = vmatprep.subr.mxu0 %v7670
    %7783 = vmatpush1.msra.mxu0 %v7669
    %7784 = vmatprep.subr.mxu0 %v7674
    %7785 = vmatpush1.msra.mxu0 %v7673
    %7786 = vmatprep.subr.mxu0 %v7678
    %7787 = vmatpush1.msra.mxu0 %v7677
    %7788 = vmatprep.subr.mxu0 %v7682
    %7789 = vmatpush1.msra.mxu0 %v7681
    %7790 = vmatprep.subr.mxu0 %v7686
    %7791 = vmatpush1.msra.mxu0 %v7685
    %7792 = vmatprep.subr.mxu0 %v7690
    %7793 = vmatpush1.msra.mxu0 %v7689
    %7794 = vmatprep.subr.mxu0 0.0
    %7795 = vmatpush1.msra.mxu0 0.0
    %7796 = vmatprep.subr.mxu0 0.0
    %7797 = vmatpush1.msra.mxu0 0.0
    %7798 = vmatprep.subr.mxu0 0.0
    %7799 = vmatpush1.msra.mxu0 0.0
    %7800 = vmatprep.subr.mxu0 0.0
    %7801 = vmatpush1.msra.mxu0 0.0
    %7802 = vmatprep.subr.mxu0 0.0
    %7803 = vmatpush1.msra.mxu0 0.0
    %7804 = vmatprep.subr.mxu0 0.0
    %7805 = vmatpush1.msra.mxu0 0.0
    %7806 = vmatprep.subr.mxu0 0.0
    %7807 = vmatpush1.msra.mxu0 0.0
    %7808 = vmatprep.subr.mxu0 0.0
    %7809 = vmatpush1.msra.mxu0 0.0
    %7810 = vmatprep.subr.mxu0 0.0
    %7811 = vmatpush1.msra.mxu0 0.0
    %7812 = vmatprep.subr.mxu0 0.0
    %7813 = vmatpush1.msra.mxu0 0.0
    %7814 = vmatprep.subr.mxu0 0.0
    %7815 = vmatpush1.msra.mxu0 0.0
    %7816 = vmatprep.subr.mxu0 0.0
    %7817 = vmatpush1.msra.mxu0 0.0
    %7818 = vmatprep.subr.mxu0 0.0
    %7819 = vmatpush1.msra.mxu0 0.0
    %7820 = vmatprep.subr.mxu0 0.0
    %7821 = vmatpush1.msra.mxu0 0.0
    %7822 = vmatprep.subr.mxu0 0.0
    %7823 = vmatpush1.msra.mxu0 0.0
    %7824 = vmatprep.subr.mxu0 0.0
    %7825 = vmatpush1.msra.mxu0 0.0
    %7826 = vmatprep.mubr.f32.mxu0 0.0
    %7827 = vmatmul.mubr.f32.gmra.mrb[0].mxu0 %v7624
    %v7828 = vpop.f32.mrb[0].mxu0
    %v7829 = vadd.f32 0.0, %v7828
    %v7830 = vpop.f32.mrb[0].mxu0
    %v7831 = vadd.f32 0.0, %v7830
    %7832 = vdwg.mxu0
    %v7833 = vadd.f32 %v5838, %v7758
    %v7834 = vadd.f32 %v5842, %v7760
    %v7835 = vadd.f32 %v5846, %v7829
    %v7836 = vadd.f32 %v5850, %v7831
    %v7837 = vld [vmem:[#allocation5] sm:$0xff]
    %v7838 = vld [vmem:[#allocation5 + $0x8] sm:$0xff]
    %v7839 = vld [vmem:[#allocation5 + $0x10] sm:$0xff]
    %v7840 = vld [vmem:[#allocation5 + $0x18] sm:$0xff]
    %v7841 = vld [vmem:[#allocation5 + $0x20] sm:$0xff]
    %v7842 = vld [vmem:[#allocation5 + $0x28] sm:$0xff]
    %v7843 = vld [vmem:[#allocation5 + $0x30] sm:$0xff]
    %v7844 = vld [vmem:[#allocation5 + $0x38] sm:$0xff]
    %v7845 = vld [vmem:[#allocation5 + $0x40] sm:$0xff]
    %v7846 = vld [vmem:[#allocation5 + $0x48] sm:$0xff]
    %v7847 = vld [vmem:[#allocation5 + $0x50] sm:$0xff]
    %v7848 = vld [vmem:[#allocation5 + $0x58] sm:$0xff]
    %v7849 = vld [vmem:[#allocation5 + $0x60] sm:$0xff]
    %v7850 = vld [vmem:[#allocation5 + $0x68] sm:$0xff]
    %v7851 = vld [vmem:[#allocation5 + $0x70] sm:$0xff]
    %v7852 = vld [vmem:[#allocation5 + $0x78] sm:$0xff]
    %v7853 = vld [vmem:[#allocation5 + $0x80] sm:$0xff]
    %v7854 = vld [vmem:[#allocation5 + $0x88] sm:$0xff]
    %v7855 = vld [vmem:[#allocation5 + $0x90] sm:$0xff]
    %v7856 = vld [vmem:[#allocation5 + $0x98] sm:$0xff]
    %v7857 = vld [vmem:[#allocation5 + $0xa0] sm:$0xff]
    %v7858 = vld [vmem:[#allocation5 + $0xa8] sm:$0xff]
    %v7859 = vld [vmem:[#allocation5 + $0xb0] sm:$0xff]
    %v7860 = vld [vmem:[#allocation5 + $0xb8] sm:$0xff]
    %v7861 = vld [vmem:[#allocation5 + $0xc0] sm:$0xff]
    %v7862 = vld [vmem:[#allocation5 + $0xc8] sm:$0xff]
    %v7863 = vld [vmem:[#allocation5 + $0xd0] sm:$0xff]
    %v7864 = vld [vmem:[#allocation5 + $0xd8] sm:$0xff]
    %v7865 = vld [vmem:[#allocation5 + $0xe0] sm:$0xff]
    %v7866 = vld [vmem:[#allocation5 + $0xe8] sm:$0xff]
    %v7867 = vld [vmem:[#allocation5 + $0xf0] sm:$0xff]
    %v7868 = vld [vmem:[#allocation5 + $0xf8] sm:$0xff]
    %v7869 = vld [vmem:[#allocation5 + $0x100] sm:$0xff]
    %v7870 = vld [vmem:[#allocation5 + $0x108] sm:$0xff]
    %v7871 = vld [vmem:[#allocation5 + $0x110] sm:$0xff]
    %v7872 = vld [vmem:[#allocation5 + $0x118] sm:$0xff]
    %v7873 = vld [vmem:[#allocation5 + $0x120] sm:$0xff]
    %v7874 = vld [vmem:[#allocation5 + $0x128] sm:$0xff]
    %v7875 = vld [vmem:[#allocation5 + $0x130] sm:$0xff]
    %v7876 = vld [vmem:[#allocation5 + $0x138] sm:$0xff]
    %v7877 = vld [vmem:[#allocation5 + $0x140] sm:$0xff]
    %v7878 = vld [vmem:[#allocation5 + $0x148] sm:$0xff]
    %v7879 = vld [vmem:[#allocation5 + $0x150] sm:$0xff]
    %v7880 = vld [vmem:[#allocation5 + $0x158] sm:$0xff]
    %v7881 = vld [vmem:[#allocation5 + $0x160] sm:$0xff]
    %v7882 = vld [vmem:[#allocation5 + $0x168] sm:$0xff]
    %v7883 = vld [vmem:[#allocation5 + $0x170] sm:$0xff]
    %v7884 = vld [vmem:[#allocation5 + $0x178] sm:$0xff]
    %v7885 = vld [vmem:[#allocation5 + $0x180] sm:$0xff]
    %v7886 = vld [vmem:[#allocation5 + $0x188] sm:$0xff]
    %v7887 = vld [vmem:[#allocation5 + $0x190] sm:$0xff]
    %v7888 = vld [vmem:[#allocation5 + $0x198] sm:$0xff]
    %v7889 = vld [vmem:[#allocation5 + $0x1a0] sm:$0xff]
    %v7890 = vld [vmem:[#allocation5 + $0x1a8] sm:$0xff]
    %v7891 = vld [vmem:[#allocation5 + $0x1b0] sm:$0xff]
    %v7892 = vld [vmem:[#allocation5 + $0x1b8] sm:$0xff]
    %v7893 = vld [vmem:[#allocation5 + $0x1c0] sm:$0xff]
    %v7894 = vld [vmem:[#allocation5 + $0x1c8] sm:$0xff]
    %v7895 = vld [vmem:[#allocation5 + $0x1d0] sm:$0xff]
    %v7896 = vld [vmem:[#allocation5 + $0x1d8] sm:$0xff]
    %v7897 = vld [vmem:[#allocation5 + $0x1e0] sm:$0xff]
    %v7898 = vld [vmem:[#allocation5 + $0x1e8] sm:$0xff]
    %v7899 = vld [vmem:[#allocation5 + $0x1f0] sm:$0xff]
    %v7900 = vld [vmem:[#allocation5 + $0x1f8] sm:$0xff]
    %7901 = vmatprep.subr.mxu0 %v7838
    %7902 = vmatpush1.msra.mxu0 %v7837
    %7903 = vmatprep.subr.mxu0 %v7842
    %7904 = vmatpush1.msra.mxu0 %v7841
    %7905 = vmatprep.subr.mxu0 %v7846
    %7906 = vmatpush1.msra.mxu0 %v7845
    %7907 = vmatprep.subr.mxu0 %v7850
    %7908 = vmatpush1.msra.mxu0 %v7849
    %7909 = vmatprep.subr.mxu0 %v7854
    %7910 = vmatpush1.msra.mxu0 %v7853
    %7911 = vmatprep.subr.mxu0 %v7858
    %7912 = vmatpush1.msra.mxu0 %v7857
    %7913 = vmatprep.subr.mxu0 %v7862
    %7914 = vmatpush1.msra.mxu0 %v7861
    %7915 = vmatprep.subr.mxu0 %v7866
    %7916 = vmatpush1.msra.mxu0 %v7865
    %7917 = vmatprep.subr.mxu0 %v7870
    %7918 = vmatpush1.msra.mxu0 %v7869
    %7919 = vmatprep.subr.mxu0 %v7874
    %7920 = vmatpush1.msra.mxu0 %v7873
    %7921 = vmatprep.subr.mxu0 %v7878
    %7922 = vmatpush1.msra.mxu0 %v7877
    %7923 = vmatprep.subr.mxu0 %v7882
    %7924 = vmatpush1.msra.mxu0 %v7881
    %7925 = vmatprep.subr.mxu0 %v7886
    %7926 = vmatpush1.msra.mxu0 %v7885
    %7927 = vmatprep.subr.mxu0 %v7890
    %7928 = vmatpush1.msra.mxu0 %v7889
    %7929 = vmatprep.subr.mxu0 %v7894
    %7930 = vmatpush1.msra.mxu0 %v7893
    %7931 = vmatprep.subr.mxu0 %v7898
    %7932 = vmatpush1.msra.mxu0 %v7897
    %7933 = vmatprep.subr.mxu0 0.0
    %7934 = vmatpush1.msra.mxu0 0.0
    %7935 = vmatprep.subr.mxu0 0.0
    %7936 = vmatpush1.msra.mxu0 0.0
    %7937 = vmatprep.subr.mxu0 0.0
    %7938 = vmatpush1.msra.mxu0 0.0
    %7939 = vmatprep.subr.mxu0 0.0
    %7940 = vmatpush1.msra.mxu0 0.0
    %7941 = vmatprep.subr.mxu0 0.0
    %7942 = vmatpush1.msra.mxu0 0.0
    %7943 = vmatprep.subr.mxu0 0.0
    %7944 = vmatpush1.msra.mxu0 0.0
    %7945 = vmatprep.subr.mxu0 0.0
    %7946 = vmatpush1.msra.mxu0 0.0
    %7947 = vmatprep.subr.mxu0 0.0
    %7948 = vmatpush1.msra.mxu0 0.0
    %7949 = vmatprep.subr.mxu0 0.0
    %7950 = vmatpush1.msra.mxu0 0.0
    %7951 = vmatprep.subr.mxu0 0.0
    %7952 = vmatpush1.msra.mxu0 0.0
    %7953 = vmatprep.subr.mxu0 0.0
    %7954 = vmatpush1.msra.mxu0 0.0
    %7955 = vmatprep.subr.mxu0 0.0
    %7956 = vmatpush1.msra.mxu0 0.0
    %7957 = vmatprep.subr.mxu0 0.0
    %7958 = vmatpush1.msra.mxu0 0.0
    %7959 = vmatprep.subr.mxu0 0.0
    %7960 = vmatpush1.msra.mxu0 0.0
    %7961 = vmatprep.subr.mxu0 0.0
    %7962 = vmatpush1.msra.mxu0 0.0
    %7963 = vmatprep.subr.mxu0 0.0
    %7964 = vmatpush1.msra.mxu0 0.0
    %7965 = vmatprep.mubr.f32.mxu0 0.0
    %7966 = vmatmul.mubr.f32.gmra.mrb[0].mxu0 %v7184
    %v7967 = vpop.f32.mrb[0].mxu0
    %v7968 = vadd.f32 0.0, %v7967
    %v7969 = vpop.f32.mrb[0].mxu0
    %v7970 = vadd.f32 0.0, %v7969
    %7971 = vdwg.mxu0
    %7972 = vmatprep.subr.mxu0 %v7840
    %7973 = vmatpush1.msra.mxu0 %v7839
    %7974 = vmatprep.subr.mxu0 %v7844
    %7975 = vmatpush1.msra.mxu0 %v7843
    %7976 = vmatprep.subr.mxu0 %v7848
    %7977 = vmatpush1.msra.mxu0 %v7847
    %7978 = vmatprep.subr.mxu0 %v7852
    %7979 = vmatpush1.msra.mxu0 %v7851
    %7980 = vmatprep.subr.mxu0 %v7856
    %7981 = vmatpush1.msra.mxu0 %v7855
    %7982 = vmatprep.subr.mxu0 %v7860
    %7983 = vmatpush1.msra.mxu0 %v7859
    %7984 = vmatprep.subr.mxu0 %v7864
    %7985 = vmatpush1.msra.mxu0 %v7863
    %7986 = vmatprep.subr.mxu0 %v7868
    %7987 = vmatpush1.msra.mxu0 %v7867
    %7988 = vmatprep.subr.mxu0 %v7872
    %7989 = vmatpush1.msra.mxu0 %v7871
    %7990 = vmatprep.subr.mxu0 %v7876
    %7991 = vmatpush1.msra.mxu0 %v7875
    %7992 = vmatprep.subr.mxu0 %v7880
    %7993 = vmatpush1.msra.mxu0 %v7879
    %7994 = vmatprep.subr.mxu0 %v7884
    %7995 = vmatpush1.msra.mxu0 %v7883
    %7996 = vmatprep.subr.mxu0 %v7888
    %7997 = vmatpush1.msra.mxu0 %v7887
    %7998 = vmatprep.subr.mxu0 %v7892
    %7999 = vmatpush1.msra.mxu0 %v7891
    %8000 = vmatprep.subr.mxu0 %v7896
    %8001 = vmatpush1.msra.mxu0 %v7895
    %8002 = vmatprep.subr.mxu0 %v7900
    %8003 = vmatpush1.msra.mxu0 %v7899
    %8004 = vmatprep.subr.mxu0 0.0
    %8005 = vmatpush1.msra.mxu0 0.0
    %8006 = vmatprep.subr.mxu0 0.0
    %8007 = vmatpush1.msra.mxu0 0.0
    %8008 = vmatprep.subr.mxu0 0.0
    %8009 = vmatpush1.msra.mxu0 0.0
    %8010 = vmatprep.subr.mxu0 0.0
    %8011 = vmatpush1.msra.mxu0 0.0
    %8012 = vmatprep.subr.mxu0 0.0
    %8013 = vmatpush1.msra.mxu0 0.0
    %8014 = vmatprep.subr.mxu0 0.0
    %8015 = vmatpush1.msra.mxu0 0.0
    %8016 = vmatprep.subr.mxu0 0.0
    %8017 = vmatpush1.msra.mxu0 0.0
    %8018 = vmatprep.subr.mxu0 0.0
    %8019 = vmatpush1.msra.mxu0 0.0
    %8020 = vmatprep.subr.mxu0 0.0
    %8021 = vmatpush1.msra.mxu0 0.0
    %8022 = vmatprep.subr.mxu0 0.0
    %8023 = vmatpush1.msra.mxu0 0.0
    %8024 = vmatprep.subr.mxu0 0.0
    %8025 = vmatpush1.msra.mxu0 0.0
    %8026 = vmatprep.subr.mxu0 0.0
    %8027 = vmatpush1.msra.mxu0 0.0
    %8028 = vmatprep.subr.mxu0 0.0
    %8029 = vmatpush1.msra.mxu0 0.0
    %8030 = vmatprep.subr.mxu0 0.0
    %8031 = vmatpush1.msra.mxu0 0.0
    %8032 = vmatprep.subr.mxu0 0.0
    %8033 = vmatpush1.msra.mxu0 0.0
    %8034 = vmatprep.subr.mxu0 0.0
    %8035 = vmatpush1.msra.mxu0 0.0
    %8036 = vmatprep.mubr.f32.mxu0 0.0
    %8037 = vmatmul.mubr.f32.gmra.mrb[0].mxu0 %v7184
    %v8038 = vpop.f32.mrb[0].mxu0
    %v8039 = vadd.f32 0.0, %v8038
    %v8040 = vpop.f32.mrb[0].mxu0
    %v8041 = vadd.f32 0.0, %v8040
    %8042 = vdwg.mxu0
    %v8043 = vadd.f32 %v7833, %v7968
    %v8044 = vadd.f32 %v7834, %v7970
    %v8045 = vadd.f32 %v7835, %v8039
    %v8046 = vadd.f32 %v7836, %v8041
    %v8047 = vxor.u32 %v8043, 2147483648
    %v8048 = vxor.u32 %v8044, 2147483648
    %v8049 = vxor.u32 %v8045, 2147483648
    %v8050 = vmul.f32 %v8047, 1.442695
    %v8051 = vpow.pop %v8050
    %v8052 = vmul.f32 %v8048, 1.442695
    %v8053 = vpow.pop %v8052
    %v8054 = vmul.f32 %v8049, 1.442695
    %v8055 = vpow.pop %v8054
    %v8056 = vadd.f32 %v8051, 1.0
    %v8057 = vadd.f32 %v8053, 1.0
    %v8058 = vadd.f32 %v8055, 1.0
    %v8059 = vrcp.pop %v8056
    %v8060 = vmul.f32 1.0, %v8059
    %v8061 = vrcp.pop %v8057
    %v8062 = vmul.f32 1.0, %v8061
    %v8063 = vrcp.pop %v8058
    %v8064 = vmul.f32 1.0, %v8063
    %v8065 = vtanh.pop %v8046
    %v8066 = vmul.f32 %v8062, %v7182
    %v8067 = vmul.f32 %v8060, %v8065
    %v8068 = vadd.f32 %v8066, %v8067
    %v8069 = vtanh.pop %v8068
    %v8070 = vmul.f32 %v8064, %v8069
    %v8071 = vld [vmem:[#allocation7] sm:$0xff]
    %v8072 = vld [vmem:[#allocation7 + $0x8] sm:$0xff]
    %v8073 = vld [vmem:[#allocation7 + $0x10] sm:$0xff]
    %v8074 = vld [vmem:[#allocation7 + $0x18] sm:$0xff]
    %v8075 = vld [vmem:[#allocation7 + $0x20] sm:$0xff]
    %v8076 = vld [vmem:[#allocation7 + $0x28] sm:$0xff]
    %v8077 = vld [vmem:[#allocation7 + $0x30] sm:$0xff]
    %v8078 = vld [vmem:[#allocation7 + $0x38] sm:$0xff]
    %v8079 = vld [vmem:[#allocation7 + $0x40] sm:$0xff]
    %v8080 = vld [vmem:[#allocation7 + $0x48] sm:$0xff]
    %v8081 = vld [vmem:[#allocation7 + $0x50] sm:$0xff]
    %v8082 = vld [vmem:[#allocation7 + $0x58] sm:$0xff]
    %v8083 = vld [vmem:[#allocation7 + $0x60] sm:$0xff]
    %v8084 = vld [vmem:[#allocation7 + $0x68] sm:$0xff]
    %v8085 = vld [vmem:[#allocation7 + $0x70] sm:$0xff]
    %v8086 = vld [vmem:[#allocation7 + $0x78] sm:$0xff]
    %v8087 = vld [vmem:[#allocation7 + $0x80] sm:$0xff]
    %v8088 = vld [vmem:[#allocation7 + $0x88] sm:$0xff]
    %v8089 = vld [vmem:[#allocation7 + $0x90] sm:$0xff]
    %v8090 = vld [vmem:[#allocation7 + $0x98] sm:$0xff]
    %v8091 = vld [vmem:[#allocation7 + $0xa0] sm:$0xff]
    %v8092 = vld [vmem:[#allocation7 + $0xa8] sm:$0xff]
    %v8093 = vld [vmem:[#allocation7 + $0xb0] sm:$0xff]
    %v8094 = vld [vmem:[#allocation7 + $0xb8] sm:$0xff]
    %v8095 = vld [vmem:[#allocation7 + $0xc0] sm:$0xff]
    %v8096 = vld [vmem:[#allocation7 + $0xc8] sm:$0xff]
    %v8097 = vld [vmem:[#allocation7 + $0xd0] sm:$0xff]
    %v8098 = vld [vmem:[#allocation7 + $0xd8] sm:$0xff]
    %v8099 = vld [vmem:[#allocation7 + $0xe0] sm:$0xff]
    %v8100 = vld [vmem:[#allocation7 + $0xe8] sm:$0xff]
    %v8101 = vld [vmem:[#allocation7 + $0xf0] sm:$0xff]
    %v8102 = vld [vmem:[#allocation7 + $0xf8] sm:$0xff]
    %v8103 = vld [vmem:[#allocation7 + $0x100] sm:$0xff]
    %v8104 = vld [vmem:[#allocation7 + $0x108] sm:$0xff]
    %v8105 = vld [vmem:[#allocation7 + $0x110] sm:$0xff]
    %v8106 = vld [vmem:[#allocation7 + $0x118] sm:$0xff]
    %v8107 = vld [vmem:[#allocation7 + $0x120] sm:$0xff]
    %v8108 = vld [vmem:[#allocation7 + $0x128] sm:$0xff]
    %v8109 = vld [vmem:[#allocation7 + $0x130] sm:$0xff]
    %v8110 = vld [vmem:[#allocation7 + $0x138] sm:$0xff]
    %v8111 = vld [vmem:[#allocation7 + $0x140] sm:$0xff]
    %v8112 = vld [vmem:[#allocation7 + $0x148] sm:$0xff]
    %v8113 = vld [vmem:[#allocation7 + $0x150] sm:$0xff]
    %v8114 = vld [vmem:[#allocation7 + $0x158] sm:$0xff]
    %v8115 = vld [vmem:[#allocation7 + $0x160] sm:$0xff]
    %v8116 = vld [vmem:[#allocation7 + $0x168] sm:$0xff]
    %v8117 = vld [vmem:[#allocation7 + $0x170] sm:$0xff]
    %v8118 = vld [vmem:[#allocation7 + $0x178] sm:$0xff]
    %v8119 = vld [vmem:[#allocation7 + $0x180] sm:$0xff]
    %v8120 = vld [vmem:[#allocation7 + $0x188] sm:$0xff]
    %v8121 = vld [vmem:[#allocation7 + $0x190] sm:$0xff]
    %v8122 = vld [vmem:[#allocation7 + $0x198] sm:$0xff]
    %v8123 = vld [vmem:[#allocation7 + $0x1a0] sm:$0xff]
    %v8124 = vld [vmem:[#allocation7 + $0x1a8] sm:$0xff]
    %v8125 = vld [vmem:[#allocation7 + $0x1b0] sm:$0xff]
    %v8126 = vld [vmem:[#allocation7 + $0x1b8] sm:$0xff]
    %v8127 = vld [vmem:[#allocation7 + $0x1c0] sm:$0xff]
    %v8128 = vld [vmem:[#allocation7 + $0x1c8] sm:$0xff]
    %v8129 = vld [vmem:[#allocation7 + $0x1d0] sm:$0xff]
    %v8130 = vld [vmem:[#allocation7 + $0x1d8] sm:$0xff]
    %v8131 = vld [vmem:[#allocation7 + $0x1e0] sm:$0xff]
    %v8132 = vld [vmem:[#allocation7 + $0x1e8] sm:$0xff]
    %v8133 = vld [vmem:[#allocation7 + $0x1f0] sm:$0xff]
    %v8134 = vld [vmem:[#allocation7 + $0x1f8] sm:$0xff]
    %v8135 = vld [vmem:[#allocation9] sm:$0xff]
    %v8136 = vld [vmem:[#allocation9 + $0x8] sm:$0xff]
    %v8137 = vld [vmem:[#allocation9 + $0x10] sm:$0xff]
    %v8138 = vld [vmem:[#allocation9 + $0x18] sm:$0xff]
    %v8139 = vld [vmem:[#allocation9 + $0x20] sm:$0xff]
    %v8140 = vld [vmem:[#allocation9 + $0x28] sm:$0xff]
    %v8141 = vld [vmem:[#allocation9 + $0x30] sm:$0xff]
    %v8142 = vld [vmem:[#allocation9 + $0x38] sm:$0xff]
    %v8143 = vld [vmem:[#allocation9 + $0x40] sm:$0xff]
    %v8144 = vld [vmem:[#allocation9 + $0x48] sm:$0xff]
    %v8145 = vld [vmem:[#allocation9 + $0x50] sm:$0xff]
    %v8146 = vld [vmem:[#allocation9 + $0x58] sm:$0xff]
    %v8147 = vld [vmem:[#allocation9 + $0x60] sm:$0xff]
    %v8148 = vld [vmem:[#allocation9 + $0x68] sm:$0xff]
    %v8149 = vld [vmem:[#allocation9 + $0x70] sm:$0xff]
    %v8150 = vld [vmem:[#allocation9 + $0x78] sm:$0xff]
    %v8151 = vld [vmem:[#allocation9 + $0x80] sm:$0xff]
    %v8152 = vld [vmem:[#allocation9 + $0x88] sm:$0xff]
    %v8153 = vld [vmem:[#allocation9 + $0x90] sm:$0xff]
    %v8154 = vld [vmem:[#allocation9 + $0x98] sm:$0xff]
    %v8155 = vld [vmem:[#allocation9 + $0xa0] sm:$0xff]
    %v8156 = vld [vmem:[#allocation9 + $0xa8] sm:$0xff]
    %v8157 = vld [vmem:[#allocation9 + $0xb0] sm:$0xff]
    %v8158 = vld [vmem:[#allocation9 + $0xb8] sm:$0xff]
    %v8159 = vld [vmem:[#allocation9 + $0xc0] sm:$0xff]
    %v8160 = vld [vmem:[#allocation9 + $0xc8] sm:$0xff]
    %v8161 = vld [vmem:[#allocation9 + $0xd0] sm:$0xff]
    %v8162 = vld [vmem:[#allocation9 + $0xd8] sm:$0xff]
    %v8163 = vld [vmem:[#allocation9 + $0xe0] sm:$0xff]
    %v8164 = vld [vmem:[#allocation9 + $0xe8] sm:$0xff]
    %v8165 = vld [vmem:[#allocation9 + $0xf0] sm:$0xff]
    %v8166 = vld [vmem:[#allocation9 + $0xf8] sm:$0xff]
    %v8167 = vld [vmem:[#allocation9 + $0x100] sm:$0xff]
    %v8168 = vld [vmem:[#allocation9 + $0x108] sm:$0xff]
    %v8169 = vld [vmem:[#allocation9 + $0x110] sm:$0xff]
    %v8170 = vld [vmem:[#allocation9 + $0x118] sm:$0xff]
    %v8171 = vld [vmem:[#allocation9 + $0x120] sm:$0xff]
    %v8172 = vld [vmem:[#allocation9 + $0x128] sm:$0xff]
    %v8173 = vld [vmem:[#allocation9 + $0x130] sm:$0xff]
    %v8174 = vld [vmem:[#allocation9 + $0x138] sm:$0xff]
    %v8175 = vld [vmem:[#allocation9 + $0x140] sm:$0xff]
    %v8176 = vld [vmem:[#allocation9 + $0x148] sm:$0xff]
    %v8177 = vld [vmem:[#allocation9 + $0x150] sm:$0xff]
    %v8178 = vld [vmem:[#allocation9 + $0x158] sm:$0xff]
    %v8179 = vld [vmem:[#allocation9 + $0x160] sm:$0xff]
    %v8180 = vld [vmem:[#allocation9 + $0x168] sm:$0xff]
    %v8181 = vld [vmem:[#allocation9 + $0x170] sm:$0xff]
    %v8182 = vld [vmem:[#allocation9 + $0x178] sm:$0xff]
    %v8183 = vld [vmem:[#allocation9 + $0x180] sm:$0xff]
    %v8184 = vld [vmem:[#allocation9 + $0x188] sm:$0xff]
    %v8185 = vld [vmem:[#allocation9 + $0x190] sm:$0xff]
    %v8186 = vld [vmem:[#allocation9 + $0x198] sm:$0xff]
    %v8187 = vld [vmem:[#allocation9 + $0x1a0] sm:$0xff]
    %v8188 = vld [vmem:[#allocation9 + $0x1a8] sm:$0xff]
    %v8189 = vld [vmem:[#allocation9 + $0x1b0] sm:$0xff]
    %v8190 = vld [vmem:[#allocation9 + $0x1b8] sm:$0xff]
    %v8191 = vld [vmem:[#allocation9 + $0x1c0] sm:$0xff]
    %v8192 = vld [vmem:[#allocation9 + $0x1c8] sm:$0xff]
    %v8193 = vld [vmem:[#allocation9 + $0x1d0] sm:$0xff]
    %v8194 = vld [vmem:[#allocation9 + $0x1d8] sm:$0xff]
    %v8195 = vld [vmem:[#allocation9 + $0x1e0] sm:$0xff]
    %v8196 = vld [vmem:[#allocation9 + $0x1e8] sm:$0xff]
    %v8197 = vld [vmem:[#allocation9 + $0x1f0] sm:$0xff]
    %v8198 = vld [vmem:[#allocation9 + $0x1f8] sm:$0xff]
    %8199 = vmatprep.subr.mxu0 %v8136
    %8200 = vmatpush1.msra.mxu0 %v8135
    %8201 = vmatprep.subr.mxu0 %v8140
    %8202 = vmatpush1.msra.mxu0 %v8139
    %8203 = vmatprep.subr.mxu0 %v8144
    %8204 = vmatpush1.msra.mxu0 %v8143
    %8205 = vmatprep.subr.mxu0 %v8148
    %8206 = vmatpush1.msra.mxu0 %v8147
    %8207 = vmatprep.subr.mxu0 %v8152
    %8208 = vmatpush1.msra.mxu0 %v8151
    %8209 = vmatprep.subr.mxu0 %v8156
    %8210 = vmatpush1.msra.mxu0 %v8155
    %8211 = vmatprep.subr.mxu0 %v8160
    %8212 = vmatpush1.msra.mxu0 %v8159
    %8213 = vmatprep.subr.mxu0 %v8164
    %8214 = vmatpush1.msra.mxu0 %v8163
    %8215 = vmatprep.subr.mxu0 %v8168
    %8216 = vmatpush1.msra.mxu0 %v8167
    %8217 = vmatprep.subr.mxu0 %v8172
    %8218 = vmatpush1.msra.mxu0 %v8171
    %8219 = vmatprep.subr.mxu0 %v8176
    %8220 = vmatpush1.msra.mxu0 %v8175
    %8221 = vmatprep.subr.mxu0 %v8180
    %8222 = vmatpush1.msra.mxu0 %v8179
    %8223 = vmatprep.subr.mxu0 %v8184
    %8224 = vmatpush1.msra.mxu0 %v8183
    %8225 = vmatprep.subr.mxu0 %v8188
    %8226 = vmatpush1.msra.mxu0 %v8187
    %8227 = vmatprep.subr.mxu0 %v8192
    %8228 = vmatpush1.msra.mxu0 %v8191
    %8229 = vmatprep.subr.mxu0 %v8196
    %8230 = vmatpush1.msra.mxu0 %v8195
    %8231 = vmatprep.subr.mxu0 0.0
    %8232 = vmatpush1.msra.mxu0 0.0
    %8233 = vmatprep.subr.mxu0 0.0
    %8234 = vmatpush1.msra.mxu0 0.0
    %8235 = vmatprep.subr.mxu0 0.0
    %8236 = vmatpush1.msra.mxu0 0.0
    %8237 = vmatprep.subr.mxu0 0.0
    %8238 = vmatpush1.msra.mxu0 0.0
    %8239 = vmatprep.subr.mxu0 0.0
    %8240 = vmatpush1.msra.mxu0 0.0
    %8241 = vmatprep.subr.mxu0 0.0
    %8242 = vmatpush1.msra.mxu0 0.0
    %8243 = vmatprep.subr.mxu0 0.0
    %8244 = vmatpush1.msra.mxu0 0.0
    %8245 = vmatprep.subr.mxu0 0.0
    %8246 = vmatpush1.msra.mxu0 0.0
    %8247 = vmatprep.subr.mxu0 0.0
    %8248 = vmatpush1.msra.mxu0 0.0
    %8249 = vmatprep.subr.mxu0 0.0
    %8250 = vmatpush1.msra.mxu0 0.0
    %8251 = vmatprep.subr.mxu0 0.0
    %8252 = vmatpush1.msra.mxu0 0.0
    %8253 = vmatprep.subr.mxu0 0.0
    %8254 = vmatpush1.msra.mxu0 0.0
    %8255 = vmatprep.subr.mxu0 0.0
    %8256 = vmatpush1.msra.mxu0 0.0
    %8257 = vmatprep.subr.mxu0 0.0
    %8258 = vmatpush1.msra.mxu0 0.0
    %8259 = vmatprep.subr.mxu0 0.0
    %8260 = vmatpush1.msra.mxu0 0.0
    %8261 = vmatprep.subr.mxu0 0.0
    %8262 = vmatpush1.msra.mxu0 0.0
    %8263 = vmatprep.mubr.f32.mxu0 0.0
    %8264 = vmatmul.mubr.f32.gmra.mrb[0].mxu0 %v7624
    %v8265 = vpop.f32.mrb[0].mxu0
    %v8266 = vadd.f32 0.0, %v8265
    %v8267 = vpop.f32.mrb[0].mxu0
    %v8268 = vadd.f32 0.0, %v8267
    %8269 = vdwg.mxu0
    %8270 = vmatprep.subr.mxu0 %v8138
    %8271 = vmatpush1.msra.mxu0 %v8137
    %8272 = vmatprep.subr.mxu0 %v8142
    %8273 = vmatpush1.msra.mxu0 %v8141
    %8274 = vmatprep.subr.mxu0 %v8146
    %8275 = vmatpush1.msra.mxu0 %v8145
    %8276 = vmatprep.subr.mxu0 %v8150
    %8277 = vmatpush1.msra.mxu0 %v8149
    %8278 = vmatprep.subr.mxu0 %v8154
    %8279 = vmatpush1.msra.mxu0 %v8153
    %8280 = vmatprep.subr.mxu0 %v8158
    %8281 = vmatpush1.msra.mxu0 %v8157
    %8282 = vmatprep.subr.mxu0 %v8162
    %8283 = vmatpush1.msra.mxu0 %v8161
    %8284 = vmatprep.subr.mxu0 %v8166
    %8285 = vmatpush1.msra.mxu0 %v8165
    %8286 = vmatprep.subr.mxu0 %v8170
    %8287 = vmatpush1.msra.mxu0 %v8169
    %8288 = vmatprep.subr.mxu0 %v8174
    %8289 = vmatpush1.msra.mxu0 %v8173
    %8290 = vmatprep.subr.mxu0 %v8178
    %8291 = vmatpush1.msra.mxu0 %v8177
    %8292 = vmatprep.subr.mxu0 %v8182
    %8293 = vmatpush1.msra.mxu0 %v8181
    %8294 = vmatprep.subr.mxu0 %v8186
    %8295 = vmatpush1.msra.mxu0 %v8185
    %8296 = vmatprep.subr.mxu0 %v8190
    %8297 = vmatpush1.msra.mxu0 %v8189
    %8298 = vmatprep.subr.mxu0 %v8194
    %8299 = vmatpush1.msra.mxu0 %v8193
    %8300 = vmatprep.subr.mxu0 %v8198
    %8301 = vmatpush1.msra.mxu0 %v8197
    %8302 = vmatprep.subr.mxu0 0.0
    %8303 = vmatpush1.msra.mxu0 0.0
    %8304 = vmatprep.subr.mxu0 0.0
    %8305 = vmatpush1.msra.mxu0 0.0
    %8306 = vmatprep.subr.mxu0 0.0
    %8307 = vmatpush1.msra.mxu0 0.0
    %8308 = vmatprep.subr.mxu0 0.0
    %8309 = vmatpush1.msra.mxu0 0.0
    %8310 = vmatprep.subr.mxu0 0.0
    %8311 = vmatpush1.msra.mxu0 0.0
    %8312 = vmatprep.subr.mxu0 0.0
    %8313 = vmatpush1.msra.mxu0 0.0
    %8314 = vmatprep.subr.mxu0 0.0
    %8315 = vmatpush1.msra.mxu0 0.0
    %8316 = vmatprep.subr.mxu0 0.0
    %8317 = vmatpush1.msra.mxu0 0.0
    %8318 = vmatprep.subr.mxu0 0.0
    %8319 = vmatpush1.msra.mxu0 0.0
    %8320 = vmatprep.subr.mxu0 0.0
    %8321 = vmatpush1.msra.mxu0 0.0
    %8322 = vmatprep.subr.mxu0 0.0
    %8323 = vmatpush1.msra.mxu0 0.0
    %8324 = vmatprep.subr.mxu0 0.0
    %8325 = vmatpush1.msra.mxu0 0.0
    %8326 = vmatprep.subr.mxu0 0.0
    %8327 = vmatpush1.msra.mxu0 0.0
    %8328 = vmatprep.subr.mxu0 0.0
    %8329 = vmatpush1.msra.mxu0 0.0
    %8330 = vmatprep.subr.mxu0 0.0
    %8331 = vmatpush1.msra.mxu0 0.0
    %8332 = vmatprep.subr.mxu0 0.0
    %8333 = vmatpush1.msra.mxu0 0.0
    %8334 = vmatprep.mubr.f32.mxu0 0.0
    %8335 = vmatmul.mubr.f32.gmra.mrb[0].mxu0 %v7624
    %v8336 = vpop.f32.mrb[0].mxu0
    %v8337 = vadd.f32 0.0, %v8336
    %v8338 = vpop.f32.mrb[0].mxu0
    %v8339 = vadd.f32 0.0, %v8338
    %8340 = vdwg.mxu0
    %8341 = vmatprep.subr.mxu0 %v8072
    %8342 = vmatpush1.msra.mxu0 %v8071
    %8343 = vmatprep.subr.mxu0 %v8076
    %8344 = vmatpush1.msra.mxu0 %v8075
    %8345 = vmatprep.subr.mxu0 %v8080
    %8346 = vmatpush1.msra.mxu0 %v8079
    %8347 = vmatprep.subr.mxu0 %v8084
    %8348 = vmatpush1.msra.mxu0 %v8083
    %8349 = vmatprep.subr.mxu0 %v8088
    %8350 = vmatpush1.msra.mxu0 %v8087
    %8351 = vmatprep.subr.mxu0 %v8092
    %8352 = vmatpush1.msra.mxu0 %v8091
    %8353 = vmatprep.subr.mxu0 %v8096
    %8354 = vmatpush1.msra.mxu0 %v8095
    %8355 = vmatprep.subr.mxu0 %v8100
    %8356 = vmatpush1.msra.mxu0 %v8099
    %8357 = vmatprep.subr.mxu0 %v8104
    %8358 = vmatpush1.msra.mxu0 %v8103
    %8359 = vmatprep.subr.mxu0 %v8108
    %8360 = vmatpush1.msra.mxu0 %v8107
    %8361 = vmatprep.subr.mxu0 %v8112
    %8362 = vmatpush1.msra.mxu0 %v8111
    %8363 = vmatprep.subr.mxu0 %v8116
    %8364 = vmatpush1.msra.mxu0 %v8115
    %8365 = vmatprep.subr.mxu0 %v8120
    %8366 = vmatpush1.msra.mxu0 %v8119
    %8367 = vmatprep.subr.mxu0 %v8124
    %8368 = vmatpush1.msra.mxu0 %v8123
    %8369 = vmatprep.subr.mxu0 %v8128
    %8370 = vmatpush1.msra.mxu0 %v8127
    %8371 = vmatprep.subr.mxu0 %v8132
    %8372 = vmatpush1.msra.mxu0 %v8131
    %8373 = vmatprep.subr.mxu0 0.0
    %8374 = vmatpush1.msra.mxu0 0.0
    %8375 = vmatprep.subr.mxu0 0.0
    %8376 = vmatpush1.msra.mxu0 0.0
    %8377 = vmatprep.subr.mxu0 0.0
    %8378 = vmatpush1.msra.mxu0 0.0
    %8379 = vmatprep.subr.mxu0 0.0
    %8380 = vmatpush1.msra.mxu0 0.0
    %8381 = vmatprep.subr.mxu0 0.0
    %8382 = vmatpush1.msra.mxu0 0.0
    %8383 = vmatprep.subr.mxu0 0.0
    %8384 = vmatpush1.msra.mxu0 0.0
    %8385 = vmatprep.subr.mxu0 0.0
    %8386 = vmatpush1.msra.mxu0 0.0
    %8387 = vmatprep.subr.mxu0 0.0
    %8388 = vmatpush1.msra.mxu0 0.0
    %8389 = vmatprep.subr.mxu0 0.0
    %8390 = vmatpush1.msra.mxu0 0.0
    %8391 = vmatprep.subr.mxu0 0.0
    %8392 = vmatpush1.msra.mxu0 0.0
    %8393 = vmatprep.subr.mxu0 0.0
    %8394 = vmatpush1.msra.mxu0 0.0
    %8395 = vmatprep.subr.mxu0 0.0
    %8396 = vmatpush1.msra.mxu0 0.0
    %8397 = vmatprep.subr.mxu0 0.0
    %8398 = vmatpush1.msra.mxu0 0.0
    %8399 = vmatprep.subr.mxu0 0.0
    %8400 = vmatpush1.msra.mxu0 0.0
    %8401 = vmatprep.subr.mxu0 0.0
    %8402 = vmatpush1.msra.mxu0 0.0
    %8403 = vmatprep.subr.mxu0 0.0
    %8404 = vmatpush1.msra.mxu0 0.0
    %8405 = vmatprep.mubr.f32.mxu0 0.0
    %8406 = vmatmul.mubr.f32.gmra.mrb[0].mxu0 %v8070
    %v8407 = vpop.f32.mrb[0].mxu0
    %v8408 = vadd.f32 %v8266, %v8407
    %v8409 = vpop.f32.mrb[0].mxu0
    %v8410 = vadd.f32 %v8268, %v8409
    %8411 = vdwg.mxu0
    %8412 = vmatprep.subr.mxu0 %v8074
    %8413 = vmatpush1.msra.mxu0 %v8073
    %8414 = vmatprep.subr.mxu0 %v8078
    %8415 = vmatpush1.msra.mxu0 %v8077
    %8416 = vmatprep.subr.mxu0 %v8082
    %8417 = vmatpush1.msra.mxu0 %v8081
    %8418 = vmatprep.subr.mxu0 %v8086
    %8419 = vmatpush1.msra.mxu0 %v8085
    %8420 = vmatprep.subr.mxu0 %v8090
    %8421 = vmatpush1.msra.mxu0 %v8089
    %8422 = vmatprep.subr.mxu0 %v8094
    %8423 = vmatpush1.msra.mxu0 %v8093
    %8424 = vmatprep.subr.mxu0 %v8098
    %8425 = vmatpush1.msra.mxu0 %v8097
    %8426 = vmatprep.subr.mxu0 %v8102
    %8427 = vmatpush1.msra.mxu0 %v8101
    %8428 = vmatprep.subr.mxu0 %v8106
    %8429 = vmatpush1.msra.mxu0 %v8105
    %8430 = vmatprep.subr.mxu0 %v8110
    %8431 = vmatpush1.msra.mxu0 %v8109
    %8432 = vmatprep.subr.mxu0 %v8114
    %8433 = vmatpush1.msra.mxu0 %v8113
    %8434 = vmatprep.subr.mxu0 %v8118
    %8435 = vmatpush1.msra.mxu0 %v8117
    %8436 = vmatprep.subr.mxu0 %v8122
    %8437 = vmatpush1.msra.mxu0 %v8121
    %8438 = vmatprep.subr.mxu0 %v8126
    %8439 = vmatpush1.msra.mxu0 %v8125
    %8440 = vmatprep.subr.mxu0 %v8130
    %8441 = vmatpush1.msra.mxu0 %v8129
    %8442 = vmatprep.subr.mxu0 %v8134
    %8443 = vmatpush1.msra.mxu0 %v8133
    %8444 = vmatprep.subr.mxu0 0.0
    %8445 = vmatpush1.msra.mxu0 0.0
    %8446 = vmatprep.subr.mxu0 0.0
    %8447 = vmatpush1.msra.mxu0 0.0
    %8448 = vmatprep.subr.mxu0 0.0
    %8449 = vmatpush1.msra.mxu0 0.0
    %8450 = vmatprep.subr.mxu0 0.0
    %8451 = vmatpush1.msra.mxu0 0.0
    %8452 = vmatprep.subr.mxu0 0.0
    %8453 = vmatpush1.msra.mxu0 0.0
    %8454 = vmatprep.subr.mxu0 0.0
    %8455 = vmatpush1.msra.mxu0 0.0
    %8456 = vmatprep.subr.mxu0 0.0
    %8457 = vmatpush1.msra.mxu0 0.0
    %8458 = vmatprep.subr.mxu0 0.0
    %8459 = vmatpush1.msra.mxu0 0.0
    %8460 = vmatprep.subr.mxu0 0.0
    %8461 = vmatpush1.msra.mxu0 0.0
    %8462 = vmatprep.subr.mxu0 0.0
    %8463 = vmatpush1.msra.mxu0 0.0
    %8464 = vmatprep.subr.mxu0 0.0
    %8465 = vmatpush1.msra.mxu0 0.0
    %8466 = vmatprep.subr.mxu0 0.0
    %8467 = vmatpush1.msra.mxu0 0.0
    %8468 = vmatprep.subr.mxu0 0.0
    %8469 = vmatpush1.msra.mxu0 0.0
    %8470 = vmatprep.subr.mxu0 0.0
    %8471 = vmatpush1.msra.mxu0 0.0
    %8472 = vmatprep.subr.mxu0 0.0
    %8473 = vmatpush1.msra.mxu0 0.0
    %8474 = vmatprep.subr.mxu0 0.0
    %8475 = vmatpush1.msra.mxu0 0.0
    %8476 = vmatprep.mubr.f32.mxu0 0.0
    %8477 = vmatmul.mubr.f32.gmra.mrb[0].mxu0 %v8070
    %v8478 = vpop.f32.mrb[0].mxu0
    %v8479 = vadd.f32 %v8337, %v8478
    %v8480 = vpop.f32.mrb[0].mxu0
    %v8481 = vadd.f32 %v8339, %v8480
    %8482 = vdwg.mxu0
    %v8483 = vadd.f32 %v8408, %v100
    %v8484 = vadd.f32 %v8410, %v104
    %v8485 = vadd.f32 %v8479, %v108
    %v8486 = vadd.f32 %v8481, %v112
    %v8487 = vxor.u32 %v8483, 2147483648
    %v8488 = vxor.u32 %v8484, 2147483648
    %v8489 = vxor.u32 %v8485, 2147483648
    %v8490 = vmul.f32 %v8487, 1.442695
    %v8491 = vpow.pop %v8490
    %v8492 = vmul.f32 %v8488, 1.442695
    %v8493 = vpow.pop %v8492
    %v8494 = vmul.f32 %v8489, 1.442695
    %v8495 = vpow.pop %v8494
    %v8496 = vadd.f32 %v8491, 1.0
    %v8497 = vadd.f32 %v8493, 1.0
    %v8498 = vadd.f32 %v8495, 1.0
    %v8499 = vrcp.pop %v8496
    %v8500 = vmul.f32 1.0, %v8499
    %v8501 = vrcp.pop %v8497
    %v8502 = vmul.f32 1.0, %v8501
    %v8503 = vrcp.pop %v8498
    %v8504 = vmul.f32 1.0, %v8503
    %v8505 = vtanh.pop %v8486
    %v8506 = vmul.f32 %v8502, %v7622
    %v8507 = vmul.f32 %v8500, %v8505
    %v8508 = vadd.f32 %v8506, %v8507
    %v8509 = vtanh.pop %v8508
    %v8510 = vmul.f32 %v8504, %v8509
    %s8511 = scalar_lea.vmem [#allocation3], 40
    %8512 = vst [vmem:[%s8511] sm:$0xf] %v8510
    %v8513 = vld [vmem:[#allocation3] sm:$0xf]
    %v8514 = vld [vmem:[#allocation3 + $0x4] sm:$0xf]
    %v8515 = vld [vmem:[#allocation3 + $0x8] sm:$0xf]
    %v8516 = vld [vmem:[#allocation3 + $0xc] sm:$0xf]
    %v8517 = vld [vmem:[#allocation3 + $0x10] sm:$0xf]
    %v8518 = vld [vmem:[#allocation3 + $0x14] sm:$0xf]
    %v8519 = vld [vmem:[#allocation3 + $0x18] sm:$0xf]
    %v8520 = vld [vmem:[#allocation3 + $0x1c] sm:$0xf]
    %v8521 = vld [vmem:[#allocation3 + $0x20] sm:$0xf]
    %v8522 = vld [vmem:[#allocation3 + $0x24] sm:$0xf]
    %v8523 = vld [vmem:[#allocation3 + $0x28] sm:$0xf]
    %v8525 = vlaneseq
    %v8526 = vshrl.u32 %v8525, 7
    %v8527 = vsub.s32 0, %v8526
    %v8528 = vrot.slane %v117, %v8527
    %v8530 = vmul.f32 %v8513, %v8528
    %v8531 = vmul.f32 %v8514, %v8528
    %v8532 = vmul.f32 %v8515, %v8528
    %v8533 = vmul.f32 %v8516, %v8528
    %v8534 = vmul.f32 %v8517, %v8528
    %v8535 = vmul.f32 %v8518, %v8528
    %v8536 = vmul.f32 %v8519, %v8528
    %v8537 = vmul.f32 %v8520, %v8528
    %v8538 = vmul.f32 %v8521, %v8528
    %v8539 = vmul.f32 %v8522, %v8528
    %v8540 = vmul.f32 %v8523, %v8528
    %vm8541 = vcmask 1043456
    %v8542 = vsel %vm8541, %v8530, 0.0
    %8543 = vadd.xlane.f32.xlu0 %v8542
    %v8544 = vpop.xlane.xlu0 %8543
    %v8545 = vsel %vm8541, %v8531, 0.0
    %8546 = vadd.xlane.f32.xlu0 %v8545
    %v8547 = vpop.xlane.xlu0 %8546
    %v8548 = vsel %vm8541, %v8532, 0.0
    %8549 = vadd.xlane.f32.xlu0 %v8548
    %v8550 = vpop.xlane.xlu0 %8549
    %v8551 = vsel %vm8541, %v8533, 0.0
    %8552 = vadd.xlane.f32.xlu0 %v8551
    %v8553 = vpop.xlane.xlu0 %8552
    %v8554 = vsel %vm8541, %v8534, 0.0
    %8555 = vadd.xlane.f32.xlu0 %v8554
    %v8556 = vpop.xlane.xlu0 %8555
    %v8557 = vsel %vm8541, %v8535, 0.0
    %8558 = vadd.xlane.f32.xlu0 %v8557
    %v8559 = vpop.xlane.xlu0 %8558
    %v8560 = vsel %vm8541, %v8536, 0.0
    %8561 = vadd.xlane.f32.xlu0 %v8560
    %v8562 = vpop.xlane.xlu0 %8561
    %v8563 = vsel %vm8541, %v8537, 0.0
    %8564 = vadd.xlane.f32.xlu0 %v8563
    %v8565 = vpop.xlane.xlu0 %8564
    %v8566 = vsel %vm8541, %v8538, 0.0
    %8567 = vadd.xlane.f32.xlu0 %v8566
    %v8568 = vpop.xlane.xlu0 %8567
    %v8569 = vsel %vm8541, %v8539, 0.0
    %8570 = vadd.xlane.f32.xlu0 %v8569
    %v8571 = vpop.xlane.xlu0 %8570
    %v8572 = vsel %vm8541, %v8540, 0.0
    %8573 = vadd.xlane.f32.xlu0 %v8572
    %v8574 = vpop.xlane.xlu0 %8573
    %v8576 = vlaneseq
    %v8577 = vshrl.u32 %v8576, 7
    %v8578 = vsub.s32 0, %v8577
    %v8579 = vrot.slane %v118, %v8578
    %8580 = vset.pattern.permute.xlu0 0
    %8581 = vperm.xlu0 %8580, %v8579
    %v8582 = vpop.permute.xlu0 %8581
    %v8584 = vadd.f32 %v8544, %v8582
    %v8585 = vadd.f32 %v8547, %v8582
    %v8586 = vadd.f32 %v8550, %v8582
    %v8587 = vadd.f32 %v8553, %v8582
    %v8588 = vadd.f32 %v8556, %v8582
    %v8589 = vadd.f32 %v8559, %v8582
    %v8590 = vadd.f32 %v8562, %v8582
    %v8591 = vadd.f32 %v8565, %v8582
    %v8592 = vadd.f32 %v8568, %v8582
    %v8593 = vadd.f32 %v8571, %v8582
    %v8594 = vadd.f32 %v8574, %v8582
    %v8606 = vlaneseq
    %v8607 = vand.u32 %v8606, 127
    %v8608 = vlaneseq
    %v8609 = vshrl.u32 %v8608, 7
    %v8610 = vsub.s32 %v8607, %v8609
    %v8611 = vrot.slane %v8584, %v8610
    %v8612 = vlaneseq
    %v8613 = vshrl.u32 %v8612, 7
    %v8614 = vsub.s32 %v8607, %v8613
    %v8615 = vrot.slane %v8585, %v8614
    %v8616 = vlaneseq
    %v8617 = vshrl.u32 %v8616, 7
    %v8618 = vsub.s32 %v8607, %v8617
    %v8619 = vrot.slane %v8586, %v8618
    %v8620 = vlaneseq
    %v8621 = vshrl.u32 %v8620, 7
    %v8622 = vsub.s32 %v8607, %v8621
    %v8623 = vrot.slane %v8587, %v8622
    %v8624 = vlaneseq
    %v8625 = vshrl.u32 %v8624, 7
    %v8626 = vsub.s32 %v8607, %v8625
    %v8627 = vrot.slane %v8588, %v8626
    %v8628 = vlaneseq
    %v8629 = vshrl.u32 %v8628, 7
    %v8630 = vsub.s32 %v8607, %v8629
    %v8631 = vrot.slane %v8589, %v8630
    %v8632 = vlaneseq
    %v8633 = vshrl.u32 %v8632, 7
    %v8634 = vsub.s32 %v8607, %v8633
    %v8635 = vrot.slane %v8590, %v8634
    %v8636 = vlaneseq
    %v8637 = vshrl.u32 %v8636, 7
    %v8638 = vsub.s32 %v8607, %v8637
    %v8639 = vrot.slane %v8591, %v8638
    %v8640 = vlaneseq
    %v8641 = vshrl.u32 %v8640, 7
    %v8642 = vsub.s32 %v8607, %v8641
    %v8643 = vrot.slane %v8592, %v8642
    %v8644 = vlaneseq
    %v8645 = vshrl.u32 %v8644, 7
    %v8646 = vsub.s32 %v8607, %v8645
    %v8647 = vrot.slane %v8593, %v8646
    %v8648 = vlaneseq
    %v8649 = vshrl.u32 %v8648, 7
    %v8650 = vsub.s32 %v8607, %v8649
    %v8651 = vrot.slane %v8594, %v8650
    %vm8652 = vcmask 1041409
    %v8653 = vsel %vm8652, %v8615, %v8611
    %vm8654 = vcmask 1042434
    %v8655 = vsel %vm8654, %v8619, %v8653
    %vm8656 = vcmask 1043459
    %v8657 = vsel %vm8656, %v8623, %v8655
    %vm8658 = vcmask 1044484
    %v8659 = vsel %vm8658, %v8627, %v8657
    %vm8660 = vcmask 1045509
    %v8661 = vsel %vm8660, %v8631, %v8659
    %vm8662 = vcmask 1046534
    %v8663 = vsel %vm8662, %v8635, %v8661
    %vm8664 = vcmask 1047559
    %v8665 = vsel %vm8664, %v8639, %v8663
    %v8666 = vsel %vm8652, %v8647, %v8643
    %v8667 = vsel %vm8654, %v8651, %v8666
    %vm8670 = vcmask 31744
    %8671 = vst.msk [vmem:[%s11] sm:$0xff] %vm8670, %v8665
    %vm8672 = vcmask 26624
    %8673 = vst.msk [vmem:[%s11 + $0x8] sm:$0x7] %vm8672, %v8667
    // Predicated region
    $region62: #{tpu_custom_call.1} parent=1 // pred_check
      _
    $region63: #{tpu_custom_call.1} parent=1 // pred_check_branch
      %8675 = sbr.rel (0) target = $region65
    $region64: #{tpu_custom_call.1} parent=1 // pred_region
      _
    $region65: #{tpu_custom_call.1} parent=1 // pred_fallthru
      _
    // Predicated region
    $region66: #{tpu_custom_call.1} parent=1 // pred_check
      _
    $region67: #{tpu_custom_call.1} parent=1 // pred_check_branch
      %8677 = sbr.rel (0) target = $region69
    $region68: #{tpu_custom_call.1} parent=1 // pred_region
      _
    $region69: #{tpu_custom_call.1} parent=1 // pred_fallthru
      _
    %8678 = vsyncpa [#allocation6], 1
    %8679 = vsyncpa [#allocation8], 1
    %8680 = vsyncpa [#allocation11], 1

</llo_original>
